<compile_context>
chip_gen: v5e
topology: v5e:2x2
jax: 0.10.0
libtpu: 0.0.40
codegen_flags: <defaults>
</compile_context>

<pallas_src>
import functools

import jax
import jax.numpy as jnp
from jax import lax
from jax.experimental import pallas as pl
from jax.experimental.pallas import tpu as pltpu


# ----------------------------------------------------------------------------
# Fused 3x (Conv3x3 VALID + bias + ReLU) kernel. One image per grid step.
# ----------------------------------------------------------------------------
def _fused_convs_kernel(x_ref, w1_ref, b1_ref, w2_ref, b2_ref, w3_ref, b3_ref,
                        o_ref, *, H, W):
    def conv_layer(a, w_ref, b_ref, R):
        # a: (rows, Cin) f32 on the W-wide row grid.
        rows = a.shape[0]
        a16 = a.astype(jnp.bfloat16)                   # cast once, slice after
        L = rows - 2
        # kw shifts folded into lanes: (L, 3*Cin), col = kw*Cin + ci.
        wide = jnp.concatenate([a16[0:L], a16[1:1 + L], a16[2:2 + L]], axis=1)
        # kh taps (sublane-aligned offsets kh*W) folded into lanes:
        # (R, 9*Cin), col = kh*3*Cin + kw*Cin + ci  == HWIO-reshaped weight rows.
        col = jnp.concatenate([wide[0:R], wide[W:W + R], wide[2 * W:2 * W + R]],
                              axis=1)
        z = jnp.dot(col, w_ref[...],                   # one MXU matmul / layer
                    preferred_element_type=jnp.float32)
        return jnp.maximum(z + b_ref[...], 0.0)        # bias + ReLU in f32

    a = x_ref[...]                                     # (H*W, Cin) f32
    Ho, Wo = H, W
    for (w_ref, b_ref) in ((w1_ref, b1_ref), (w2_ref, b2_ref), (w3_ref, b3_ref)):
        Ho, Wo = Ho - 2, Wo - 2
        R = (Ho - 1) * W + Wo                          # rows covering valid outputs
        a = conv_layer(a, w_ref, b_ref, R)
    o_ref[...] = a                                     # single lane-dense slab store


def fused_convs(x2d, w1, b1, w2, b2, w3, b3, *, H, W):
    """x2d: (N, H*W, Cin) f32 (NHWC rows); w*: (9*Cin, Cout) bf16; b*: (1, Cout) f32.
    Returns the W-wide output slab (N, R3, Cout_last) f32 (junk cols included)."""
    N, _, C = x2d.shape
    Cout = w3.shape[-1]
    # Trace-time bounds checks: every im2col slice must stay in-bounds.
    rows, ho, wo = H * W, H, W
    for _ in range(3):
        ho, wo = ho - 2, wo - 2
        R = (ho - 1) * W + wo
        assert R + 2 * W + 2 <= rows, (R, W, rows)
        rows = R
    R3 = rows

    kern = functools.partial(_fused_convs_kernel, H=H, W=W)

    def wspec(shape):
        nd = len(shape)
        return pl.BlockSpec(shape, lambda n, _nd=nd: (0,) * _nd)

    return pl.pallas_call(
        kern,
        out_shape=jax.ShapeDtypeStruct((N, R3, Cout), jnp.float32),
        grid_spec=pltpu.PrefetchScalarGridSpec(
            num_scalar_prefetch=0,
            grid=(N,),
            in_specs=[pl.BlockSpec((None, H * W, C), lambda n: (n, 0, 0)),
                      wspec(w1.shape), wspec(b1.shape),
                      wspec(w2.shape), wspec(b2.shape),
                      wspec(w3.shape), wspec(b3.shape)],
            out_specs=pl.BlockSpec((None, R3, Cout), lambda n: (n, 0, 0)),
        ),
        compiler_params=pltpu.CompilerParams(dimension_semantics=("parallel",)),
    )(x2d, w1, b1, w2, b2, w3, b3)


# ----------------------------------------------------------------------------
# Linear kernel: whole batch in one step, whole problem in VMEM.
# ----------------------------------------------------------------------------
def _linear_kernel(x_ref, w_ref, b_ref, o_ref):
    o_ref[...] = (jnp.dot(x_ref[...].astype(jnp.bfloat16), w_ref[...],
                          preferred_element_type=jnp.float32)
                  + b_ref[...])


def linear(x, w, b):
    """x: (N, F) f32, w: (F, K) bf16 (grid-row x padded-channel order), b: (1, K) f32."""
    N, F = x.shape
    K = w.shape[-1]
    return pl.pallas_call(
        _linear_kernel,
        out_shape=jax.ShapeDtypeStruct((N, K), jnp.float32),
        grid_spec=pltpu.PrefetchScalarGridSpec(
            num_scalar_prefetch=0,
            grid=(1,),
            in_specs=[
                pl.BlockSpec((N, F), lambda i: (0, 0)),
                pl.BlockSpec((F, K), lambda i: (0, 0)),
                pl.BlockSpec((1, K), lambda i: (0, 0)),
            ],
            out_specs=pl.BlockSpec((N, K), lambda i: (0, 0)),
        ),
    )(x, w, b)


# ----------------------------------------------------------------------------
# One-time host-side parameter repack for the kernels.
# ----------------------------------------------------------------------------
def prepare_kernel_params(params, obs_space_shape, n_conv_layers=3, cout_pad=128):
    """Conv weights -> (9*Cin, Cout) bf16 im2col order (last layer Cout zero-padded
    to `cout_pad`); Linear weight rows permuted from PyTorch NCHW-flatten order to
    the kernel's (grid-row, padded-channel) order with zero rows at junk positions."""
    C, H, W = obs_space_shape
    Ho, Wo = H - 2 * n_conv_layers, W - 2 * n_conv_layers
    R3 = (Ho - 1) * W + Wo
    kp = {}
    for i in range(1, n_conv_layers + 1):
        w = params[f"w{i}"].astype(jnp.float32)          # (3,3,Cin,Cout) HWIO
        b = params[f"b{i}"].astype(jnp.float32)          # (1,Cout)
        cin, cout = w.shape[2], w.shape[3]
        if i == n_conv_layers and cout < cout_pad:
            w = jnp.pad(w, ((0, 0), (0, 0), (0, 0), (0, cout_pad - cout)))
            b = jnp.pad(b, ((0, 0), (0, cout_pad - cout)))
        kp[f"w{i}"] = w.reshape(9 * cin, w.shape[-1]).astype(jnp.bfloat16)
        kp[f"b{i}"] = b
    c_last = params[f"w{n_conv_layers}"].shape[-1]       # real channels (64)
    wl = params["wl"].astype(jnp.float32)                # (c_last*Ho*Wo, K), NCHW rows
    K = wl.shape[-1]
    wl_hw = wl.reshape(c_last, Ho, Wo, K).transpose(1, 2, 0, 3)        # (Ho,Wo,c,K)
    wl_hw = jnp.pad(wl_hw, ((0, 0), (0, W - Wo),                       # junk cols -> 0
                            (0, cout_pad - c_last), (0, 0)))           # pad chans -> 0
    wl_grid = wl_hw.reshape(Ho * W, cout_pad, K)[:R3]                  # (R3, 128, K)
    kp["wl"] = wl_grid.reshape(R3 * cout_pad, K).astype(jnp.bfloat16)
    kp["bl"] = params["bl"].astype(jnp.float32)
    return kp


# ----------------------------------------------------------------------------
# Full FeatureExtractor forward.
# ----------------------------------------------------------------------------
def feature_extractor_forward(x_nchw, kp):
    N, C, H, W = x_nchw.shape
    # NCHW -> NHWC and flatten the spatial grid to rows (cheap / metadata).
    x2d = jnp.transpose(x_nchw, (0, 2, 3, 1)).reshape(N, H * W, C)
    x2d = x2d.astype(jnp.float32)
    conv_out = fused_convs(x2d, kp["w1"], kp["b1"], kp["w2"], kp["b2"],
                           kp["w3"], kp["b3"], H=H, W=W)      # (N, R3, 128)
    x_lin = conv_out.reshape(N, -1)      # free row-major reshape between calls
    return linear(x_lin, kp["wl"], kp["bl"])


# Pure-JAX reference for correctness checking (uses the original f32 params).
def reference_forward(x_nchw, params):
    x = jnp.transpose(x_nchw, (0, 2, 3, 1)).astype(jnp.float32)
    for wk, bk in (("w1", "b1"), ("w2", "b2"), ("w3", "b3")):
        x = lax.conv_general_dilated(
            x, params[wk], window_strides=(1, 1), padding="VALID",
            dimension_numbers=("NHWC", "HWIO", "NHWC"),
            precision=lax.Precision.HIGHEST)
        x = jnp.maximum(x + params[bk].reshape(1, 1, 1, -1), 0.0)
    x = jnp.transpose(x, (0, 3, 1, 2)).reshape(x.shape[0], -1)   # NCHW flatten
    return jnp.dot(x, params["wl"], precision=lax.Precision.HIGHEST) + params["bl"]


if __name__ == "__main__":
    obs_space_shape = (4, 16, 16)     # (C, H, W), like PyTorch obs_space_shape
    num_of_features = 32
    batch = 2

    C, H, W = obs_space_shape
    Ho, Wo = H - 6, W - 6             # after three VALID 3x3 convs
    cnn_out_size = 64 * Ho * Wo

    key = jax.random.PRNGKey(0)
    ks = jax.random.split(key, 9)
    params = {
        "w1": jax.random.normal(ks[0], (3, 3, C, 16), jnp.float32) * 0.1,
        "b1": jax.random.normal(ks[1], (1, 16), jnp.float32) * 0.1,
        "w2": jax.random.normal(ks[2], (3, 3, 16, 32), jnp.float32) * 0.1,
        "b2": jax.random.normal(ks[3], (1, 32), jnp.float32) * 0.1,
        "w3": jax.random.normal(ks[4], (3, 3, 32, 64), jnp.float32) * 0.1,
        "b3": jax.random.normal(ks[5], (1, 64), jnp.float32) * 0.1,
        "wl": jax.random.normal(ks[6], (cnn_out_size, num_of_features), jnp.float32) * 0.01,
        "bl": jax.random.normal(ks[7], (1, num_of_features), jnp.float32) * 0.01,
    }
    x = jax.random.normal(ks[8], (batch, C, H, W), jnp.float32)

    kp = prepare_kernel_params(params, obs_space_shape)   # one-time repack

    fwd = jax.jit(feature_extractor_forward)
    out = jax.block_until_ready(fwd(x, kp))

    ref = reference_forward(x, params)
    assert out.shape == (batch, num_of_features), out.shape
    assert bool(jnp.allclose(out, ref, rtol=2e-2, atol=2e-2)), \
        float(jnp.max(jnp.abs(out - ref)))

    print("KERNEL_OK")
</pallas_src>

<mosaic_0001>
module attributes {stable_mosaic.version = 11 : i64} {
  func.func @_fused_convs_kernel(%arg0: i32, %arg1: memref<1x256x4xf32, #tpu.memory_space<vmem>>, %arg2: memref<36x16xbf16, #tpu.memory_space<vmem>>, %arg3: memref<1x16xf32, #tpu.memory_space<vmem>>, %arg4: memref<144x32xbf16, #tpu.memory_space<vmem>>, %arg5: memref<1x32xf32, #tpu.memory_space<vmem>>, %arg6: memref<288x128xbf16, #tpu.memory_space<vmem>>, %arg7: memref<1x128xf32, #tpu.memory_space<vmem>>, %arg8: memref<1x154x128xf32, #tpu.memory_space<vmem>>) attributes {dimension_semantics = [#tpu.dimension_semantics<parallel>], iteration_bounds = array<i64: 2>, scalar_prefetch = 0 : i64, scratch_operands = 0 : i64, tpu.core_type = #tpu.core_type<tc>, window_params = [{transform_indices = @transform_0, window_bounds = array<i64: 1, 256, 4>}, {pipeline_mode = #tpu.pipeline_mode<synchronous>, transform_indices = @transform_1, window_bounds = array<i64: 36, 16>}, {pipeline_mode = #tpu.pipeline_mode<synchronous>, transform_indices = @transform_2, window_bounds = array<i64: 1, 16>}, {pipeline_mode = #tpu.pipeline_mode<synchronous>, transform_indices = @transform_3, window_bounds = array<i64: 144, 32>}, {pipeline_mode = #tpu.pipeline_mode<synchronous>, transform_indices = @transform_4, window_bounds = array<i64: 1, 32>}, {pipeline_mode = #tpu.pipeline_mode<synchronous>, transform_indices = @transform_5, window_bounds = array<i64: 288, 128>}, {pipeline_mode = #tpu.pipeline_mode<synchronous>, transform_indices = @transform_6, window_bounds = array<i64: 1, 128>}, {transform_indices = @transform_7, window_bounds = array<i64: 1, 154, 128>}]} {
    %c0 = arith.constant 0 : index
    %c0_0 = arith.constant 0 : index
    %c0_1 = arith.constant 0 : index
    %0 = vector.load %arg1[%c0, %c0_0, %c0_1] : memref<1x256x4xf32, #tpu.memory_space<vmem>>, vector<1x256x4xf32>
    %1 = vector.shape_cast %0 : vector<1x256x4xf32> to vector<256x4xf32>
    %2 = arith.truncf %1 : vector<256x4xf32> to vector<256x4xbf16>
    %3 = vector.extract_strided_slice %2 {offsets = [0, 0], sizes = [254, 4], strides = [1, 1]} : vector<256x4xbf16> to vector<254x4xbf16>
    %4 = vector.extract_strided_slice %2 {offsets = [1, 0], sizes = [254, 4], strides = [1, 1]} : vector<256x4xbf16> to vector<254x4xbf16>
    %5 = vector.extract_strided_slice %2 {offsets = [2, 0], sizes = [254, 4], strides = [1, 1]} : vector<256x4xbf16> to vector<254x4xbf16>
    %6 = tpu.concatenate %3, %4, %5 in 1 : vector<254x4xbf16>, vector<254x4xbf16>, vector<254x4xbf16> -> vector<254x12xbf16>
    %7 = vector.extract_strided_slice %6 {offsets = [0, 0], sizes = [222, 12], strides = [1, 1]} : vector<254x12xbf16> to vector<222x12xbf16>
    %8 = vector.extract_strided_slice %6 {offsets = [16, 0], sizes = [222, 12], strides = [1, 1]} : vector<254x12xbf16> to vector<222x12xbf16>
    %9 = vector.extract_strided_slice %6 {offsets = [32, 0], sizes = [222, 12], strides = [1, 1]} : vector<254x12xbf16> to vector<222x12xbf16>
    %10 = tpu.concatenate %7, %8, %9 in 1 : vector<222x12xbf16>, vector<222x12xbf16>, vector<222x12xbf16> -> vector<222x36xbf16>
    %c0_2 = arith.constant 0 : index
    %c0_3 = arith.constant 0 : index
    %11 = vector.load %arg2[%c0_2, %c0_3] : memref<36x16xbf16, #tpu.memory_space<vmem>>, vector<36x16xbf16>
    %cst = arith.constant dense<0.000000e+00> : vector<222x16xf32>
    %12 = tpu.matmul %10, %11, %cst {dimension_numbers = #tpu.dot_dimension_numbers<[1], [0], [0], [1], [0, 0, 1, 1], [], []>} : vector<222x36xbf16>, vector<36x16xbf16>, vector<222x16xf32> -> vector<222x16xf32>
    %c0_4 = arith.constant 0 : index
    %c0_5 = arith.constant 0 : index
    %13 = vector.load %arg3[%c0_4, %c0_5] : memref<1x16xf32, #tpu.memory_space<vmem>>, vector<1x16xf32>
    %14 = vector.broadcast %13 : vector<1x16xf32> to vector<222x16xf32>
    %15 = arith.addf %12, %14 : vector<222x16xf32>
    %cst_6 = arith.constant 0.000000e+00 : f32
    %16 = vector.broadcast %cst_6 : f32 to vector<222x16xf32>
    %17 = arith.maximumf %15, %16 : vector<222x16xf32>
    %18 = arith.truncf %17 : vector<222x16xf32> to vector<222x16xbf16>
    %19 = vector.extract_strided_slice %18 {offsets = [0, 0], sizes = [220, 16], strides = [1, 1]} : vector<222x16xbf16> to vector<220x16xbf16>
    %20 = vector.extract_strided_slice %18 {offsets = [1, 0], sizes = [220, 16], strides = [1, 1]} : vector<222x16xbf16> to vector<220x16xbf16>
    %21 = vector.extract_strided_slice %18 {offsets = [2, 0], sizes = [220, 16], strides = [1, 1]} : vector<222x16xbf16> to vector<220x16xbf16>
    %22 = tpu.concatenate %19, %20, %21 in 1 : vector<220x16xbf16>, vector<220x16xbf16>, vector<220x16xbf16> -> vector<220x48xbf16>
    %23 = vector.extract_strided_slice %22 {offsets = [0, 0], sizes = [188, 48], strides = [1, 1]} : vector<220x48xbf16> to vector<188x48xbf16>
    %24 = vector.extract_strided_slice %22 {offsets = [16, 0], sizes = [188, 48], strides = [1, 1]} : vector<220x48xbf16> to vector<188x48xbf16>
    %25 = vector.extract_strided_slice %22 {offsets = [32, 0], sizes = [188, 48], strides = [1, 1]} : vector<220x48xbf16> to vector<188x48xbf16>
    %26 = tpu.concatenate %23, %24, %25 in 1 : vector<188x48xbf16>, vector<188x48xbf16>, vector<188x48xbf16> -> vector<188x144xbf16>
    %c0_7 = arith.constant 0 : index
    %c0_8 = arith.constant 0 : index
    %27 = vector.load %arg4[%c0_7, %c0_8] : memref<144x32xbf16, #tpu.memory_space<vmem>>, vector<144x32xbf16>
    %cst_9 = arith.constant dense<0.000000e+00> : vector<188x32xf32>
    %28 = tpu.matmul %26, %27, %cst_9 {dimension_numbers = #tpu.dot_dimension_numbers<[1], [0], [0], [1], [0, 0, 1, 1], [], []>} : vector<188x144xbf16>, vector<144x32xbf16>, vector<188x32xf32> -> vector<188x32xf32>
    %c0_10 = arith.constant 0 : index
    %c0_11 = arith.constant 0 : index
    %29 = vector.load %arg5[%c0_10, %c0_11] : memref<1x32xf32, #tpu.memory_space<vmem>>, vector<1x32xf32>
    %30 = vector.broadcast %29 : vector<1x32xf32> to vector<188x32xf32>
    %31 = arith.addf %28, %30 : vector<188x32xf32>
    %cst_12 = arith.constant 0.000000e+00 : f32
    %32 = vector.broadcast %cst_12 : f32 to vector<188x32xf32>
    %33 = arith.maximumf %31, %32 : vector<188x32xf32>
    %34 = arith.truncf %33 : vector<188x32xf32> to vector<188x32xbf16>
    %35 = vector.extract_strided_slice %34 {offsets = [0, 0], sizes = [186, 32], strides = [1, 1]} : vector<188x32xbf16> to vector<186x32xbf16>
    %36 = vector.extract_strided_slice %34 {offsets = [1, 0], sizes = [186, 32], strides = [1, 1]} : vector<188x32xbf16> to vector<186x32xbf16>
    %37 = vector.extract_strided_slice %34 {offsets = [2, 0], sizes = [186, 32], strides = [1, 1]} : vector<188x32xbf16> to vector<186x32xbf16>
    %38 = tpu.concatenate %35, %36, %37 in 1 : vector<186x32xbf16>, vector<186x32xbf16>, vector<186x32xbf16> -> vector<186x96xbf16>
    %39 = vector.extract_strided_slice %38 {offsets = [0, 0], sizes = [154, 96], strides = [1, 1]} : vector<186x96xbf16> to vector<154x96xbf16>
    %40 = vector.extract_strided_slice %38 {offsets = [16, 0], sizes = [154, 96], strides = [1, 1]} : vector<186x96xbf16> to vector<154x96xbf16>
    %41 = vector.extract_strided_slice %38 {offsets = [32, 0], sizes = [154, 96], strides = [1, 1]} : vector<186x96xbf16> to vector<154x96xbf16>
    %42 = tpu.concatenate %39, %40, %41 in 1 : vector<154x96xbf16>, vector<154x96xbf16>, vector<154x96xbf16> -> vector<154x288xbf16>
    %c0_13 = arith.constant 0 : index
    %c0_14 = arith.constant 0 : index
    %43 = vector.load %arg6[%c0_13, %c0_14] : memref<288x128xbf16, #tpu.memory_space<vmem>>, vector<288x128xbf16>
    %cst_15 = arith.constant dense<0.000000e+00> : vector<154x128xf32>
    %44 = tpu.matmul %42, %43, %cst_15 {dimension_numbers = #tpu.dot_dimension_numbers<[1], [0], [0], [1], [0, 0, 1, 1], [], []>} : vector<154x288xbf16>, vector<288x128xbf16>, vector<154x128xf32> -> vector<154x128xf32>
    %c0_16 = arith.constant 0 : index
    %c0_17 = arith.constant 0 : index
    %45 = vector.load %arg7[%c0_16, %c0_17] : memref<1x128xf32, #tpu.memory_space<vmem>>, vector<1x128xf32>
    %46 = vector.broadcast %45 : vector<1x128xf32> to vector<154x128xf32>
    %47 = arith.addf %44, %46 : vector<154x128xf32>
    %cst_18 = arith.constant 0.000000e+00 : f32
    %48 = vector.broadcast %cst_18 : f32 to vector<154x128xf32>
    %49 = arith.maximumf %47, %48 : vector<154x128xf32>
    %c0_19 = arith.constant 0 : index
    %c0_20 = arith.constant 0 : index
    %c0_21 = arith.constant 0 : index
    %50 = vector.load %arg8[%c0_19, %c0_20, %c0_21] : memref<1x154x128xf32, #tpu.memory_space<vmem>>, vector<1x154x128xf32>
    %51 = vector.shape_cast %50 : vector<1x154x128xf32> to vector<154x128xf32>
    %52 = vector.shape_cast %49 : vector<154x128xf32> to vector<1x154x128xf32>
    tpu.vector_store %arg8[%c0_19, %c0_20, %c0_21], %52 {strides = array<i32>} : memref<1x154x128xf32, #tpu.memory_space<vmem>>, vector<1x154x128xf32>,
    return
  }
  func.func @transform_0(%arg0: i32) -> (i32, i32, i32) {
    %c0_i32 = arith.constant 0 : i32
    %c0_i32_0 = arith.constant 0 : i32
    %c0_i32_1 = arith.constant 0 : i32
    return %arg0, %c0_i32, %c0_i32_0 : i32, i32, i32
  }
  func.func @transform_1(%arg0: i32) -> (i32, i32) {
    %c0_i32 = arith.constant 0 : i32
    %c0_i32_0 = arith.constant 0 : i32
    %c0_i32_1 = arith.constant 0 : i32
    return %c0_i32, %c0_i32_0 : i32, i32
  }
  func.func @transform_2(%arg0: i32) -> (i32, i32) {
    %c0_i32 = arith.constant 0 : i32
    %c0_i32_0 = arith.constant 0 : i32
    %c0_i32_1 = arith.constant 0 : i32
    return %c0_i32, %c0_i32_0 : i32, i32
  }
  func.func @transform_3(%arg0: i32) -> (i32, i32) {
    %c0_i32 = arith.constant 0 : i32
    %c0_i32_0 = arith.constant 0 : i32
    %c0_i32_1 = arith.constant 0 : i32
    return %c0_i32, %c0_i32_0 : i32, i32
  }
  func.func @transform_4(%arg0: i32) -> (i32, i32) {
    %c0_i32 = arith.constant 0 : i32
    %c0_i32_0 = arith.constant 0 : i32
    %c0_i32_1 = arith.constant 0 : i32
    return %c0_i32, %c0_i32_0 : i32, i32
  }
  func.func @transform_5(%arg0: i32) -> (i32, i32) {
    %c0_i32 = arith.constant 0 : i32
    %c0_i32_0 = arith.constant 0 : i32
    %c0_i32_1 = arith.constant 0 : i32
    return %c0_i32, %c0_i32_0 : i32, i32
  }
  func.func @transform_6(%arg0: i32) -> (i32, i32) {
    %c0_i32 = arith.constant 0 : i32
    %c0_i32_0 = arith.constant 0 : i32
    %c0_i32_1 = arith.constant 0 : i32
    return %c0_i32, %c0_i32_0 : i32, i32
  }
  func.func @transform_7(%arg0: i32) -> (i32, i32, i32) {
    %c0_i32 = arith.constant 0 : i32
    %c0_i32_0 = arith.constant 0 : i32
    %c0_i32_1 = arith.constant 0 : i32
    return %arg0, %c0_i32, %c0_i32_0 : i32, i32, i32
  }
}

module attributes {stable_mosaic.version = 11 : i64} {
  func.func @_linear_kernel(%arg0: i32, %arg1: memref<2x19712xf32, #tpu.memory_space<vmem>>, %arg2: memref<19712x32xbf16, #tpu.memory_space<vmem>>, %arg3: memref<1x32xf32, #tpu.memory_space<vmem>>, %arg4: memref<2x32xf32, #tpu.memory_space<vmem>>) attributes {dimension_semantics = [#tpu.dimension_semantics<arbitrary>], iteration_bounds = array<i64: 1>, scalar_prefetch = 0 : i64, scratch_operands = 0 : i64, tpu.core_type = #tpu.core_type<tc>, window_params = [{pipeline_mode = #tpu.pipeline_mode<synchronous>, transform_indices = @transform_0, window_bounds = array<i64: 2, 19712>}, {pipeline_mode = #tpu.pipeline_mode<synchronous>, transform_indices = @transform_1, window_bounds = array<i64: 19712, 32>}, {pipeline_mode = #tpu.pipeline_mode<synchronous>, transform_indices = @transform_2, window_bounds = array<i64: 1, 32>}, {pipeline_mode = #tpu.pipeline_mode<synchronous>, transform_indices = @transform_3, window_bounds = array<i64: 2, 32>}]} {
    %c0 = arith.constant 0 : index
    %c0_0 = arith.constant 0 : index
    %0 = vector.load %arg1[%c0, %c0_0] : memref<2x19712xf32, #tpu.memory_space<vmem>>, vector<2x19712xf32>
    %1 = arith.truncf %0 : vector<2x19712xf32> to vector<2x19712xbf16>
    %c0_1 = arith.constant 0 : index
    %c0_2 = arith.constant 0 : index
    %2 = vector.load %arg2[%c0_1, %c0_2] : memref<19712x32xbf16, #tpu.memory_space<vmem>>, vector<19712x32xbf16>
    %cst = arith.constant dense<0.000000e+00> : vector<2x32xf32>
    %3 = tpu.matmul %1, %2, %cst {dimension_numbers = #tpu.dot_dimension_numbers<[1], [0], [0], [1], [0, 0, 1, 1], [], []>} : vector<2x19712xbf16>, vector<19712x32xbf16>, vector<2x32xf32> -> vector<2x32xf32>
    %c0_3 = arith.constant 0 : index
    %c0_4 = arith.constant 0 : index
    %4 = vector.load %arg3[%c0_3, %c0_4] : memref<1x32xf32, #tpu.memory_space<vmem>>, vector<1x32xf32>
    %5 = vector.broadcast %4 : vector<1x32xf32> to vector<2x32xf32>
    %6 = arith.addf %3, %5 : vector<2x32xf32>
    %c0_5 = arith.constant 0 : index
    %c0_6 = arith.constant 0 : index
    %7 = vector.load %arg4[%c0_5, %c0_6] : memref<2x32xf32, #tpu.memory_space<vmem>>, vector<2x32xf32>
    tpu.vector_store %arg4[%c0_5, %c0_6], %6 {strides = array<i32>} : memref<2x32xf32, #tpu.memory_space<vmem>>, vector<2x32xf32>,
    return
  }
  func.func @transform_0(%arg0: i32) -> (i32, i32) {
    %c0_i32 = arith.constant 0 : i32
    %c0_i32_0 = arith.constant 0 : i32
    %c0_i32_1 = arith.constant 0 : i32
    return %c0_i32, %c0_i32_0 : i32, i32
  }
  func.func @transform_1(%arg0: i32) -> (i32, i32) {
    %c0_i32 = arith.constant 0 : i32
    %c0_i32_0 = arith.constant 0 : i32
    %c0_i32_1 = arith.constant 0 : i32
    return %c0_i32, %c0_i32_0 : i32, i32
  }
  func.func @transform_2(%arg0: i32) -> (i32, i32) {
    %c0_i32 = arith.constant 0 : i32
    %c0_i32_0 = arith.constant 0 : i32
    %c0_i32_1 = arith.constant 0 : i32
    return %c0_i32, %c0_i32_0 : i32, i32
  }
  func.func @transform_3(%arg0: i32) -> (i32, i32) {
    %c0_i32 = arith.constant 0 : i32
    %c0_i32_0 = arith.constant 0 : i32
    %c0_i32_1 = arith.constant 0 : i32
    return %c0_i32, %c0_i32_0 : i32, i32
  }
}

</mosaic_0001>

<llo_original>
// kernel: feature_extractor_forward.2
$region0: #{feature_extractor_forward.2}
  #allocation0 [shape = 'u32[]', space=smem, size = 0x4, offset = 0x4, fixed_abs, tag = 'smem constant byte address 0x4 - core index']
  #allocation1 [shape = 'u32[72,128]{1,0:T(1,128)}', space=vmem, size = 0x9000, scoped, tag = 'internal scratch']
  %s0 = inlined_call_operand.vmem [shape: f32[2,256,4], index: 0, kind: input, shape index: {}]
  %s1 = inlined_call_operand.vmem [shape: bf16[36,16], index: 1, kind: input, shape index: {}]
  %s2 = inlined_call_operand.hbm [shape: f32[1,16], index: 2, kind: input, shape index: {}]
  %s3 = inlined_call_operand.vmem [shape: bf16[144,32], index: 3, kind: input, shape index: {}]
  %s4 = inlined_call_operand.hbm [shape: f32[1,32], index: 4, kind: input, shape index: {}]
  %s5 = inlined_call_operand.hbm [shape: bf16[288,128], index: 5, kind: input, shape index: {}]
  %s6 = inlined_call_operand.hbm [shape: f32[1,128], index: 6, kind: input, shape index: {}]
  %s7 = inlined_call_operand.vmem [shape: f32[2,154,128], index: 7, kind: output, shape index: {}]
  %s8 = sld [smem:[#allocation0]]
  $region77: #{feature_extractor_forward.2} parent=0
    _
  %s10 = ssub.s32 1, %s8
  %s11 = scalar_select 0, %s10, %s8
  $region1: #{feature_extractor_forward.2} parent=0
    #allocation2 [shape = 'u8[512]{0}', space=vmem, size = 0x400, scoped, tag = 'input window, operand 2, single buffered']
    #allocation3 [shape = 's32[2]{0}', space=sflag, size = 0x8, scoped, tag = 'scoped memory for feature_extractor_forward.2']
    #allocation4 [shape = 'u8[512]{0}', space=vmem, size = 0x400, scoped, tag = 'input window, operand 4, single buffered']
    #allocation5 [shape = 's32[1]{0}', space=sflag, size = 0x4, scoped, tag = 'scoped memory for feature_extractor_forward.2']
    #allocation6 [shape = 'u8[73728]{0}', space=vmem, size = 0x12000, scoped, tag = 'input window, operand 5, single buffered']
    #allocation7 [shape = 'u8[512]{0}', space=vmem, size = 0x400, scoped, tag = 'input window, operand 6, single buffered']
    #allocation8 [shape = 's32[1]{0}', space=sflag, size = 0x4, scoped, tag = 'scoped memory for feature_extractor_forward.2']
    %12 = vsyncpa [#allocation3], 0
    %13 = vsyncpa [#allocation5], 0
    %14 = vsyncpa [#allocation8], 0
    loop: start=0, step=1, limit=4
    $region2: #{feature_extractor_forward.2} parent=1 // loop_pre_header
      _
    $region3: #{feature_extractor_forward.2} parent=1 // loop_header
      %s16 = sphi 0, %s20
      %p17 = scmp.ge.s32.totalorder %s16, 4
      %s26 = sphi 0, %s28
      %s29 = sphi 0, %s26
      %s30 = sphi 0, %s29
      %s46 = sphi 0, %s30
      %s50 = sphi 0, %s50
      %s52 = sphi 0, %s50
      %s53 = sphi 0, %s52
      %s67 = sphi 0, %s53
      %s71 = sphi 0, %s71
      %s73 = sphi 0, %s71
      %s74 = sphi 0, %s73
      %s88 = sphi 0, %s74
      %s92 = sphi 0, %s92
      %s94 = sphi 0, %s92
      %s95 = sphi 0, %s94
      %s109 = sphi 0, %s95
      %s113 = sphi 0, %s113
      %s115 = sphi 0, %s113
      %s116 = sphi 0, %s115
      %s130 = sphi 0, %s116
      %s134 = sphi 0, %s134
      %s136 = sphi 0, %s134
      %s137 = sphi 0, %s136
      %s151 = sphi 0, %s137
      %s155 = sphi 0, %s155
      %s157 = sphi 0, %s155
      %s158 = sphi 0, %s157
      %s172 = sphi 0, %s158
      %s178 = sphi 0, %s180
      %s181 = sphi 0, %s178
      %s182 = sphi 0, %s181
      %s198 = sphi 0, %s182
    $region4: #{feature_extractor_forward.2} parent=1 // loop_header_branch
      %19 = sbr.rel (%p17) target = $region8
    $region5: #{feature_extractor_forward.2} parent=1 // loop_body
      %s21 = ssub.s32 %s16, 1
      %s22 = ssub.s32 %s16, 2
      %s23 = sadd.s32 %s16, 1
      %s24 = ssub.s32 %s16, %s23
      %p25 = scmp.eq.s32.totalorder %s24, 0
      %s27 = sadd.s32 %s26, 1
      %s28 = scalar_select %p25, %s26, %s27
      %p31 = pneg %p25
      %p32 = scmp.eq.s32.totalorder %s16, 1
      %p33 = por %p31, %p32
      %p34 = scmp.ne.s32.totalorder %s26, %s29
      %p35 = scmp.eq.s32.totalorder %s16, 0
      %p36 = por %p34, %p35
      %p37 = scmp.ne.s32.totalorder %s26, %s29
      %p38 = scmp.eq.s32.totalorder %s21, 1
      %p39 = por %p37, %p38
      %p40 = scmp.ne.s32.totalorder %s29, %s30
      %p41 = scmp.eq.s32.totalorder %s21, 0
      %p42 = por %p40, %p41
      %p43 = scmp.ne.s32.totalorder %s29, %s30
      %p44 = scmp.eq.s32.totalorder %s22, 1
      %p45 = por %p43, %p44
      %p47 = scmp.ne.s32.totalorder %s30, %s46
      %p48 = scmp.eq.s32.totalorder %s22, 0
      %p49 = por %p47, %p48
      %s51 = sadd.s32 %s50, 1
      %p54 = scmp.eq.s32.totalorder %s16, 1
      %p55 = scmp.ne.s32.totalorder %s50, %s52
      %p56 = scmp.eq.s32.totalorder %s16, 0
      %p57 = por %p55, %p56
      %p58 = scmp.ne.s32.totalorder %s50, %s52
      %p59 = scmp.eq.s32.totalorder %s21, 1
      %p60 = por %p58, %p59
      %p61 = scmp.ne.s32.totalorder %s52, %s53
      %p62 = scmp.eq.s32.totalorder %s21, 0
      %p63 = por %p61, %p62
      %p64 = scmp.ne.s32.totalorder %s52, %s53
      %p65 = scmp.eq.s32.totalorder %s22, 1
      %p66 = por %p64, %p65
      %p68 = scmp.ne.s32.totalorder %s53, %s67
      %p69 = scmp.eq.s32.totalorder %s22, 0
      %p70 = por %p68, %p69
      %s72 = sadd.s32 %s71, 1
      %p75 = scmp.eq.s32.totalorder %s16, 1
      %p76 = scmp.ne.s32.totalorder %s71, %s73
      %p77 = scmp.eq.s32.totalorder %s16, 0
      %p78 = por %p76, %p77
      %p79 = scmp.ne.s32.totalorder %s71, %s73
      %p80 = scmp.eq.s32.totalorder %s21, 1
      %p81 = por %p79, %p80
      %p82 = scmp.ne.s32.totalorder %s73, %s74
      %p83 = scmp.eq.s32.totalorder %s21, 0
      %p84 = por %p82, %p83
      %p85 = scmp.ne.s32.totalorder %s73, %s74
      %p86 = scmp.eq.s32.totalorder %s22, 1
      %p87 = por %p85, %p86
      %p89 = scmp.ne.s32.totalorder %s74, %s88
      %p90 = scmp.eq.s32.totalorder %s22, 0
      %p91 = por %p89, %p90
      %s93 = sadd.s32 %s92, 1
      %p96 = scmp.eq.s32.totalorder %s16, 1
      %p97 = scmp.ne.s32.totalorder %s92, %s94
      %p98 = scmp.eq.s32.totalorder %s16, 0
      %p99 = por %p97, %p98
      %p100 = scmp.ne.s32.totalorder %s92, %s94
      %p101 = scmp.eq.s32.totalorder %s21, 1
      %p102 = por %p100, %p101
      %p103 = scmp.ne.s32.totalorder %s94, %s95
      %p104 = scmp.eq.s32.totalorder %s21, 0
      %p105 = por %p103, %p104
      %p106 = scmp.ne.s32.totalorder %s94, %s95
      %p107 = scmp.eq.s32.totalorder %s22, 1
      %p108 = por %p106, %p107
      %p110 = scmp.ne.s32.totalorder %s95, %s109
      %p111 = scmp.eq.s32.totalorder %s22, 0
      %p112 = por %p110, %p111
      %s114 = sadd.s32 %s113, 1
      %p117 = scmp.eq.s32.totalorder %s16, 1
      %p118 = scmp.ne.s32.totalorder %s113, %s115
      %p119 = scmp.eq.s32.totalorder %s16, 0
      %p120 = por %p118, %p119
      %p121 = scmp.ne.s32.totalorder %s113, %s115
      %p122 = scmp.eq.s32.totalorder %s21, 1
      %p123 = por %p121, %p122
      %p124 = scmp.ne.s32.totalorder %s115, %s116
      %p125 = scmp.eq.s32.totalorder %s21, 0
      %p126 = por %p124, %p125
      %p127 = scmp.ne.s32.totalorder %s115, %s116
      %p128 = scmp.eq.s32.totalorder %s22, 1
      %p129 = por %p127, %p128
      %p131 = scmp.ne.s32.totalorder %s116, %s130
      %p132 = scmp.eq.s32.totalorder %s22, 0
      %p133 = por %p131, %p132
      %s135 = sadd.s32 %s134, 1
      %p138 = scmp.eq.s32.totalorder %s16, 1
      %p139 = scmp.ne.s32.totalorder %s134, %s136
      %p140 = scmp.eq.s32.totalorder %s16, 0
      %p141 = por %p139, %p140
      %p142 = scmp.ne.s32.totalorder %s134, %s136
      %p143 = scmp.eq.s32.totalorder %s21, 1
      %p144 = por %p142, %p143
      %p145 = scmp.ne.s32.totalorder %s136, %s137
      %p146 = scmp.eq.s32.totalorder %s21, 0
      %p147 = por %p145, %p146
      %p148 = scmp.ne.s32.totalorder %s136, %s137
      %p149 = scmp.eq.s32.totalorder %s22, 1
      %p150 = por %p148, %p149
      %p152 = scmp.ne.s32.totalorder %s137, %s151
      %p153 = scmp.eq.s32.totalorder %s22, 0
      %p154 = por %p152, %p153
      %s156 = sadd.s32 %s155, 1
      %p159 = scmp.eq.s32.totalorder %s16, 1
      %p160 = scmp.ne.s32.totalorder %s155, %s157
      %p161 = scmp.eq.s32.totalorder %s16, 0
      %p162 = por %p160, %p161
      %p163 = scmp.ne.s32.totalorder %s155, %s157
      %p164 = scmp.eq.s32.totalorder %s21, 1
      %p165 = por %p163, %p164
      %p166 = scmp.ne.s32.totalorder %s157, %s158
      %p167 = scmp.eq.s32.totalorder %s21, 0
      %p168 = por %p166, %p167
      %p169 = scmp.ne.s32.totalorder %s157, %s158
      %p170 = scmp.eq.s32.totalorder %s22, 1
      %p171 = por %p169, %p170
      %p173 = scmp.ne.s32.totalorder %s158, %s172
      %p174 = scmp.eq.s32.totalorder %s22, 0
      %p175 = por %p173, %p174
      %s176 = ssub.s32 %s16, %s23
      %p177 = scmp.eq.s32.totalorder %s176, 0
      %s179 = sadd.s32 %s178, 1
      %s180 = scalar_select %p177, %s178, %s179
      %p183 = pneg %p177
      %p184 = scmp.eq.s32.totalorder %s16, 1
      %p185 = por %p183, %p184
      %p186 = scmp.ne.s32.totalorder %s178, %s181
      %p187 = scmp.eq.s32.totalorder %s16, 0
      %p188 = por %p186, %p187
      %p189 = scmp.ne.s32.totalorder %s178, %s181
      %p190 = scmp.eq.s32.totalorder %s21, 1
      %p191 = por %p189, %p190
      %p192 = scmp.ne.s32.totalorder %s181, %s182
      %p193 = scmp.eq.s32.totalorder %s21, 0
      %p194 = por %p192, %p193
      %p195 = scmp.ne.s32.totalorder %s181, %s182
      %p196 = scmp.eq.s32.totalorder %s22, 1
      %p197 = por %p195, %p196
      %p199 = scmp.ne.s32.totalorder %s182, %s198
      %p200 = scmp.eq.s32.totalorder %s22, 0
      %p201 = por %p199, %p200
      %p202 = scmp.le.s32.totalorder 1, %s16
      %p203 = scmp.lt.s32.totalorder %s16, 3
      %p204 = pnand %p202, %p203
      %p205 = pneg %p204
      // Predicated region
      $region9: #{feature_extractor_forward.2} parent=5 // pred_check
        _
      $region10: #{feature_extractor_forward.2} parent=5 // pred_check_branch
        %207 = sbr.rel (%p204) target = $region12
      $region11: #{feature_extractor_forward.2} parent=5 // pred_region
        %s208 = ssub.s32 %s16, 1
        // Predicated region
        $region13: #{feature_extractor_forward.2} parent=11 // pred_check
          %p209 = pneg %p63
        $region14: #{feature_extractor_forward.2} parent=11 // pred_check_branch
          %211 = sbr.rel (%p209) target = $region16
        $region15: #{feature_extractor_forward.2} parent=11 // pred_region
          _
        $region16: #{feature_extractor_forward.2} parent=11 // pred_fallthru
          _
        // Predicated region
        $region17: #{feature_extractor_forward.2} parent=11 // pred_check
          %p212 = pneg %p84
        $region18: #{feature_extractor_forward.2} parent=11 // pred_check_branch
          %214 = sbr.rel (%p212) target = $region20
        $region19: #{feature_extractor_forward.2} parent=11 // pred_region
          %216 = vsyncadd [#allocation3], 0
          %s218 = sshll.u32 %s2, 4
          %s219 = int_to_ptr.hbm [resolvable:$true] %s218
          %s220 = sshll.u32 [#allocation2], 4
          %s221 = int_to_ptr.vmem [resolvable:$true] %s220
          %223 = dma.hbm_to_vmem [thread:$0]  %s219, 16, %s221, [#allocation3]
        $region20: #{feature_extractor_forward.2} parent=11 // pred_fallthru
          _
        // Predicated region
        $region21: #{feature_extractor_forward.2} parent=11 // pred_check
          %p224 = pneg %p105
        $region22: #{feature_extractor_forward.2} parent=11 // pred_check_branch
          %226 = sbr.rel (%p224) target = $region24
        $region23: #{feature_extractor_forward.2} parent=11 // pred_region
          _
        $region24: #{feature_extractor_forward.2} parent=11 // pred_fallthru
          _
        // Predicated region
        $region25: #{feature_extractor_forward.2} parent=11 // pred_check
          %p227 = pneg %p126
        $region26: #{feature_extractor_forward.2} parent=11 // pred_check_branch
          %229 = sbr.rel (%p227) target = $region28
        $region27: #{feature_extractor_forward.2} parent=11 // pred_region
          %231 = vsyncadd [#allocation5], 0
          %s233 = sshll.u32 %s4, 4
          %s234 = int_to_ptr.hbm [resolvable:$true] %s233
          %s235 = sshll.u32 [#allocation4], 4
          %s236 = int_to_ptr.vmem [resolvable:$true] %s235
          %238 = dma.hbm_to_vmem [thread:$0]  %s234, 16, %s236, [#allocation5]
        $region28: #{feature_extractor_forward.2} parent=11 // pred_fallthru
          _
        // Predicated region
        $region29: #{feature_extractor_forward.2} parent=11 // pred_check
          %p239 = pneg %p147
        $region30: #{feature_extractor_forward.2} parent=11 // pred_check_branch
          %241 = sbr.rel (%p239) target = $region32
        $region31: #{feature_extractor_forward.2} parent=11 // pred_region
          %243 = vsyncadd [#allocation5], 0
          %s244 = sshll.u32 %s5, 4
          %s245 = int_to_ptr.hbm [resolvable:$true] %s244
          %s246 = sshll.u32 [#allocation6], 4
          %s247 = int_to_ptr.vmem [resolvable:$true] %s246
          %252 = dma.hbm_to_vmem [thread:$0]  %s245, 2304, %s247, [#allocation5], 64, 64, 4
        $region32: #{feature_extractor_forward.2} parent=11 // pred_fallthru
          _
        // Predicated region
        $region33: #{feature_extractor_forward.2} parent=11 // pred_check
          %p253 = pneg %p168
        $region34: #{feature_extractor_forward.2} parent=11 // pred_check_branch
          %255 = sbr.rel (%p253) target = $region36
        $region35: #{feature_extractor_forward.2} parent=11 // pred_region
          %257 = vsyncadd [#allocation8], 0
          %s259 = sshll.u32 %s6, 4
          %s260 = int_to_ptr.hbm [resolvable:$true] %s259
          %s261 = sshll.u32 [#allocation7], 4
          %s262 = int_to_ptr.vmem [resolvable:$true] %s261
          %264 = dma.hbm_to_vmem [thread:$0]  %s260, 16, %s262, [#allocation8]
        $region36: #{feature_extractor_forward.2} parent=11 // pred_fallthru
          _
      $region12: #{feature_extractor_forward.2} parent=5 // pred_fallthru
        _
      %p265 = scmp.lt.s32.totalorder %s16, 2
      // Predicated region
      $region37: #{feature_extractor_forward.2} parent=5 // pred_check
        %p266 = pneg %p265
      $region38: #{feature_extractor_forward.2} parent=5 // pred_check_branch
        %268 = sbr.rel (%p266) target = $region40
      $region39: #{feature_extractor_forward.2} parent=5 // pred_region
        // Predicated region
        $region41: #{feature_extractor_forward.2} parent=39 // pred_check
          %p269 = pneg %p36
        $region42: #{feature_extractor_forward.2} parent=39 // pred_check_branch
          %271 = sbr.rel (%p269) target = $region44
        $region43: #{feature_extractor_forward.2} parent=39 // pred_region
          %p272 = scmp.lt.s32.totalorder %s16, 1
          %s273 = scalar_select %p272, %s16, 1
          %s274 = smul.addr %s273, 32
          %s275 = smul.addr %s274, 8
          %s276 = scalar_lea.vmem %s0, %s275
        $region44: #{feature_extractor_forward.2} parent=39 // pred_fallthru
          _
      $region40: #{feature_extractor_forward.2} parent=5 // pred_fallthru
        _
      %p277 = scmp.le.s32.totalorder 1, %s16
      %p278 = scmp.lt.s32.totalorder %s16, 3
      %p279 = pnand %p277, %p278
      %p280 = pneg %p279
      // Predicated region
      $region45: #{feature_extractor_forward.2} parent=5 // pred_check
        _
      $region46: #{feature_extractor_forward.2} parent=5 // pred_check_branch
        %282 = sbr.rel (%p279) target = $region48
      $region47: #{feature_extractor_forward.2} parent=5 // pred_region
        %s283 = ssub.s32 %s16, 1
        // Predicated region
        $region49: #{feature_extractor_forward.2} parent=47 // pred_check
          %p284 = pneg %p84
        $region50: #{feature_extractor_forward.2} parent=47 // pred_check_branch
          %286 = sbr.rel (%p284) target = $region52
        $region51: #{feature_extractor_forward.2} parent=47 // pred_region
          %288 = dma.done [#allocation3], 16
        $region52: #{feature_extractor_forward.2} parent=47 // pred_fallthru
          _
        // Predicated region
        $region53: #{feature_extractor_forward.2} parent=47 // pred_check
          %p289 = pneg %p126
        $region54: #{feature_extractor_forward.2} parent=47 // pred_check_branch
          %291 = sbr.rel (%p289) target = $region56
        $region55: #{feature_extractor_forward.2} parent=47 // pred_region
          %293 = dma.done [#allocation5], 16
        $region56: #{feature_extractor_forward.2} parent=47 // pred_fallthru
          _
        // Predicated region
        $region57: #{feature_extractor_forward.2} parent=47 // pred_check
          %p294 = pneg %p147
        $region58: #{feature_extractor_forward.2} parent=47 // pred_check_branch
          %296 = sbr.rel (%p294) target = $region60
        $region59: #{feature_extractor_forward.2} parent=47 // pred_region
          %298 = dma.done [#allocation5], 2304
        $region60: #{feature_extractor_forward.2} parent=47 // pred_fallthru
          _
        // Predicated region
        $region61: #{feature_extractor_forward.2} parent=47 // pred_check
          %p299 = pneg %p168
        $region62: #{feature_extractor_forward.2} parent=47 // pred_check_branch
          %301 = sbr.rel (%p299) target = $region64
        $region63: #{feature_extractor_forward.2} parent=47 // pred_region
          %303 = dma.done [#allocation8], 16
        $region64: #{feature_extractor_forward.2} parent=47 // pred_fallthru
          _
        %p304 = scmp.lt.s32.totalorder %s21, 1
        %s305 = scalar_select %p304, %s21, 1
        %s306 = smul.addr %s305, 32
        %s307 = smul.addr %s306, 8
        %s308 = scalar_lea.vmem %s0, %s307
        %p309 = pneg %p42
        %p310 = pneg %p39
        %p311 = pneg %p63
        %p312 = pneg %p60
        %p313 = pneg %p84
        %p314 = pneg %p81
        %p315 = pneg %p105
        %p316 = pneg %p102
        %p317 = pneg %p126
        %p318 = pneg %p123
        %p319 = pneg %p147
        %p320 = pneg %p144
        %p321 = pneg %p168
        %p322 = pneg %p165
        %p323 = pneg %p194
        %p324 = pneg %p191
        %p325 = scmp.lt.s32.totalorder %s21, 1
        %s326 = scalar_select %p325, %s21, 1
        %s327 = smul.addr %s326, 20
        %s328 = smul.addr %s327, 8
        %s329 = scalar_lea.vmem %s7, %s328
        %p330 = scmp.lt.s32.totalorder %s21, 1
        %s331 = scalar_select %p330, %s21, 1
        %s332 = smul.addr %s331, 32
        %s333 = smul.addr %s332, 8
        %s334 = scalar_lea.vmem %s0, %s333
        %p335 = scmp.lt.s32.totalorder %s21, 1
        %s336 = scalar_select %p335, %s21, 1
        %s337 = smul.addr %s336, 20
        %s338 = smul.addr %s337, 8
        %s339 = scalar_lea.vmem %s7, %s338
        %v341 = vld [vmem:[%s334] sm:$0xff]
        %v342 = vld [vmem:[%s334 + $0x8] sm:$0xff]
        %v343 = vld [vmem:[%s334 + $0x10] sm:$0xff]
        %v344 = vld [vmem:[%s334 + $0x18] sm:$0xff]
        %v345 = vld [vmem:[%s334 + $0x20] sm:$0xff]
        %v346 = vld [vmem:[%s334 + $0x28] sm:$0xff]
        %v347 = vld [vmem:[%s334 + $0x30] sm:$0xff]
        %v348 = vld [vmem:[%s334 + $0x38] sm:$0xff]
        %v349 = vld [vmem:[%s334 + $0x40] sm:$0xff]
        %v350 = vld [vmem:[%s334 + $0x48] sm:$0xff]
        %v351 = vld [vmem:[%s334 + $0x50] sm:$0xff]
        %v352 = vld [vmem:[%s334 + $0x58] sm:$0xff]
        %v353 = vld [vmem:[%s334 + $0x60] sm:$0xff]
        %v354 = vld [vmem:[%s334 + $0x68] sm:$0xff]
        %v355 = vld [vmem:[%s334 + $0x70] sm:$0xff]
        %v356 = vld [vmem:[%s334 + $0x78] sm:$0xff]
        %v357 = vld [vmem:[%s334 + $0x80] sm:$0xff]
        %v358 = vld [vmem:[%s334 + $0x88] sm:$0xff]
        %v359 = vld [vmem:[%s334 + $0x90] sm:$0xff]
        %v360 = vld [vmem:[%s334 + $0x98] sm:$0xff]
        %v361 = vld [vmem:[%s334 + $0xa0] sm:$0xff]
        %v362 = vld [vmem:[%s334 + $0xa8] sm:$0xff]
        %v363 = vld [vmem:[%s334 + $0xb0] sm:$0xff]
        %v364 = vld [vmem:[%s334 + $0xb8] sm:$0xff]
        %v365 = vld [vmem:[%s334 + $0xc0] sm:$0xff]
        %v366 = vld [vmem:[%s334 + $0xc8] sm:$0xff]
        %v367 = vld [vmem:[%s334 + $0xd0] sm:$0xff]
        %v368 = vld [vmem:[%s334 + $0xd8] sm:$0xff]
        %v369 = vld [vmem:[%s334 + $0xe0] sm:$0xff]
        %v370 = vld [vmem:[%s334 + $0xe8] sm:$0xff]
        %v371 = vld [vmem:[%s334 + $0xf0] sm:$0xff]
        %v372 = vld [vmem:[%s334 + $0xf8] sm:$0xff]
        %v373 = vpack.c.bf16 %v341, %v341
        %v374 = vpack.c.bf16 %v342, %v342
        %v375 = vpack.c.bf16 %v343, %v343
        %v376 = vpack.c.bf16 %v344, %v344
        %v377 = vpack.c.bf16 %v345, %v345
        %v378 = vpack.c.bf16 %v346, %v346
        %v379 = vpack.c.bf16 %v347, %v347
        %v380 = vpack.c.bf16 %v348, %v348
        %v381 = vpack.c.bf16 %v349, %v349
        %v382 = vpack.c.bf16 %v350, %v350
        %v383 = vpack.c.bf16 %v351, %v351
        %v384 = vpack.c.bf16 %v352, %v352
        %v385 = vpack.c.bf16 %v353, %v353
        %v386 = vpack.c.bf16 %v354, %v354
        %v387 = vpack.c.bf16 %v355, %v355
        %v388 = vpack.c.bf16 %v356, %v356
        %v389 = vpack.c.bf16 %v357, %v357
        %v390 = vpack.c.bf16 %v358, %v358
        %v391 = vpack.c.bf16 %v359, %v359
        %v392 = vpack.c.bf16 %v360, %v360
        %v393 = vpack.c.bf16 %v361, %v361
        %v394 = vpack.c.bf16 %v362, %v362
        %v395 = vpack.c.bf16 %v363, %v363
        %v396 = vpack.c.bf16 %v364, %v364
        %v397 = vpack.c.bf16 %v365, %v365
        %v398 = vpack.c.bf16 %v366, %v366
        %v399 = vpack.c.bf16 %v367, %v367
        %v400 = vpack.c.bf16 %v368, %v368
        %v401 = vpack.c.bf16 %v369, %v369
        %v402 = vpack.c.bf16 %v370, %v370
        %v403 = vpack.c.bf16 %v371, %v371
        %v404 = vpack.c.bf16 %v372, %v372
        %v437 = vunpack.c.l.b16 %v373
        %v438 = vunpack.c.l.b16 %v374
        %v439 = vunpack.c.l.b16 %v375
        %v440 = vunpack.c.l.b16 %v376
        %v441 = vunpack.c.l.b16 %v377
        %v442 = vunpack.c.l.b16 %v378
        %v443 = vunpack.c.l.b16 %v379
        %v444 = vunpack.c.l.b16 %v380
        %v445 = vunpack.c.l.b16 %v381
        %v446 = vunpack.c.l.b16 %v382
        %v447 = vunpack.c.l.b16 %v383
        %v448 = vunpack.c.l.b16 %v384
        %v449 = vunpack.c.l.b16 %v385
        %v450 = vunpack.c.l.b16 %v386
        %v451 = vunpack.c.l.b16 %v387
        %v452 = vunpack.c.l.b16 %v388
        %v453 = vunpack.c.l.b16 %v389
        %v454 = vunpack.c.l.b16 %v390
        %v455 = vunpack.c.l.b16 %v391
        %v456 = vunpack.c.l.b16 %v392
        %v457 = vunpack.c.l.b16 %v393
        %v458 = vunpack.c.l.b16 %v394
        %v459 = vunpack.c.l.b16 %v395
        %v460 = vunpack.c.l.b16 %v396
        %v461 = vunpack.c.l.b16 %v397
        %v462 = vunpack.c.l.b16 %v398
        %v463 = vunpack.c.l.b16 %v399
        %v464 = vunpack.c.l.b16 %v400
        %v465 = vunpack.c.l.b16 %v401
        %v466 = vunpack.c.l.b16 %v402
        %v467 = vunpack.c.l.b16 %v403
        %v468 = vunpack.c.l.b16 %v404
        %v469 = vpack.c.b16 %v438, %v437
        %v470 = vpack.c.b16 %v440, %v439
        %v471 = vpack.c.b16 %v442, %v441
        %v472 = vpack.c.b16 %v444, %v443
        %v473 = vpack.c.b16 %v446, %v445
        %v474 = vpack.c.b16 %v448, %v447
        %v475 = vpack.c.b16 %v450, %v449
        %v476 = vpack.c.b16 %v452, %v451
        %v477 = vpack.c.b16 %v454, %v453
        %v478 = vpack.c.b16 %v456, %v455
        %v479 = vpack.c.b16 %v458, %v457
        %v480 = vpack.c.b16 %v460, %v459
        %v481 = vpack.c.b16 %v462, %v461
        %v482 = vpack.c.b16 %v464, %v463
        %v483 = vpack.c.b16 %v466, %v465
        %v484 = vpack.c.b16 %v468, %v467
        %vm485 = vsmask.f32 7424
        %v487 = vshrl.u32 %v469, 16
        %v489 = vshll.u32 %v469, 16
        %v491 = vrot.slane %v489, 1
        %v492 = vor.u32 %v487, %v491
        %v494 = vshll.u32 %v470, 16
        %v496 = vrot.slane %v494, 1
        %v497 = vsel %vm485, %v492, %v496
        %v498 = vshrl.u32 %v470, 16
        %v500 = vor.u32 %v498, %v496
        %v502 = vshll.u32 %v471, 16
        %v504 = vrot.slane %v502, 1
        %v505 = vsel %vm485, %v500, %v504
        %v506 = vshrl.u32 %v471, 16
        %v508 = vor.u32 %v506, %v504
        %v510 = vshll.u32 %v472, 16
        %v512 = vrot.slane %v510, 1
        %v513 = vsel %vm485, %v508, %v512
        %v514 = vshrl.u32 %v472, 16
        %v516 = vor.u32 %v514, %v512
        %v518 = vshll.u32 %v473, 16
        %v520 = vrot.slane %v518, 1
        %v521 = vsel %vm485, %v516, %v520
        %v522 = vshrl.u32 %v473, 16
        %v524 = vor.u32 %v522, %v520
        %v526 = vshll.u32 %v474, 16
        %v528 = vrot.slane %v526, 1
        %v529 = vsel %vm485, %v524, %v528
        %v530 = vshrl.u32 %v474, 16
        %v532 = vor.u32 %v530, %v528
        %v534 = vshll.u32 %v475, 16
        %v536 = vrot.slane %v534, 1
        %v537 = vsel %vm485, %v532, %v536
        %v538 = vshrl.u32 %v475, 16
        %v540 = vor.u32 %v538, %v536
        %v542 = vshll.u32 %v476, 16
        %v544 = vrot.slane %v542, 1
        %v545 = vsel %vm485, %v540, %v544
        %v546 = vshrl.u32 %v476, 16
        %v548 = vor.u32 %v546, %v544
        %v550 = vshll.u32 %v477, 16
        %v552 = vrot.slane %v550, 1
        %v553 = vsel %vm485, %v548, %v552
        %v554 = vshrl.u32 %v477, 16
        %v556 = vor.u32 %v554, %v552
        %v558 = vshll.u32 %v478, 16
        %v560 = vrot.slane %v558, 1
        %v561 = vsel %vm485, %v556, %v560
        %v562 = vshrl.u32 %v478, 16
        %v564 = vor.u32 %v562, %v560
        %v566 = vshll.u32 %v479, 16
        %v568 = vrot.slane %v566, 1
        %v569 = vsel %vm485, %v564, %v568
        %v570 = vshrl.u32 %v479, 16
        %v572 = vor.u32 %v570, %v568
        %v574 = vshll.u32 %v480, 16
        %v576 = vrot.slane %v574, 1
        %v577 = vsel %vm485, %v572, %v576
        %v578 = vshrl.u32 %v480, 16
        %v580 = vor.u32 %v578, %v576
        %v582 = vshll.u32 %v481, 16
        %v584 = vrot.slane %v582, 1
        %v585 = vsel %vm485, %v580, %v584
        %v586 = vshrl.u32 %v481, 16
        %v588 = vor.u32 %v586, %v584
        %v590 = vshll.u32 %v482, 16
        %v592 = vrot.slane %v590, 1
        %v593 = vsel %vm485, %v588, %v592
        %v594 = vshrl.u32 %v482, 16
        %v596 = vor.u32 %v594, %v592
        %v598 = vshll.u32 %v483, 16
        %v600 = vrot.slane %v598, 1
        %v601 = vsel %vm485, %v596, %v600
        %v602 = vshrl.u32 %v483, 16
        %v604 = vor.u32 %v602, %v600
        %v606 = vshll.u32 %v484, 16
        %v608 = vrot.slane %v606, 1
        %v609 = vsel %vm485, %v604, %v608
        %v610 = vshrl.u32 %v484, 16
        %v612 = vor.u32 %v610, %v608
        %613 = vrot.lane.b32.xlu0 %v497, 4
        %v614 = vpop.permute.xlu0 %613
        %615 = vrot.lane.b32.xlu0 %v505, 4
        %v616 = vpop.permute.xlu0 %615
        %617 = vrot.lane.b32.xlu0 %v513, 4
        %v618 = vpop.permute.xlu0 %617
        %619 = vrot.lane.b32.xlu0 %v521, 4
        %v620 = vpop.permute.xlu0 %619
        %621 = vrot.lane.b32.xlu0 %v529, 4
        %v622 = vpop.permute.xlu0 %621
        %623 = vrot.lane.b32.xlu0 %v537, 4
        %v624 = vpop.permute.xlu0 %623
        %625 = vrot.lane.b32.xlu0 %v545, 4
        %v626 = vpop.permute.xlu0 %625
        %627 = vrot.lane.b32.xlu0 %v553, 4
        %v628 = vpop.permute.xlu0 %627
        %629 = vrot.lane.b32.xlu0 %v561, 4
        %v630 = vpop.permute.xlu0 %629
        %631 = vrot.lane.b32.xlu0 %v569, 4
        %v632 = vpop.permute.xlu0 %631
        %633 = vrot.lane.b32.xlu0 %v577, 4
        %v634 = vpop.permute.xlu0 %633
        %635 = vrot.lane.b32.xlu0 %v585, 4
        %v636 = vpop.permute.xlu0 %635
        %637 = vrot.lane.b32.xlu0 %v593, 4
        %v638 = vpop.permute.xlu0 %637
        %639 = vrot.lane.b32.xlu0 %v601, 4
        %v640 = vpop.permute.xlu0 %639
        %641 = vrot.lane.b32.xlu0 %v609, 4
        %v642 = vpop.permute.xlu0 %641
        %643 = vrot.lane.b32.xlu0 %v612, 4
        %v644 = vpop.permute.xlu0 %643
        %vm645 = vcmask 1046528
        %v646 = vrot.slane %v469, 1
        %v647 = vrot.slane %v470, 1
        %v648 = vsel %vm645, %v646, %v647
        %v649 = vrot.slane %v471, 1
        %v650 = vsel %vm645, %v647, %v649
        %v651 = vrot.slane %v472, 1
        %v652 = vsel %vm645, %v649, %v651
        %v653 = vrot.slane %v473, 1
        %v654 = vsel %vm645, %v651, %v653
        %v655 = vrot.slane %v474, 1
        %v656 = vsel %vm645, %v653, %v655
        %v657 = vrot.slane %v475, 1
        %v658 = vsel %vm645, %v655, %v657
        %v659 = vrot.slane %v476, 1
        %v660 = vsel %vm645, %v657, %v659
        %v661 = vrot.slane %v477, 1
        %v662 = vsel %vm645, %v659, %v661
        %v663 = vrot.slane %v478, 1
        %v664 = vsel %vm645, %v661, %v663
        %v665 = vrot.slane %v479, 1
        %v666 = vsel %vm645, %v663, %v665
        %v667 = vrot.slane %v480, 1
        %v668 = vsel %vm645, %v665, %v667
        %v669 = vrot.slane %v481, 1
        %v670 = vsel %vm645, %v667, %v669
        %v671 = vrot.slane %v482, 1
        %v672 = vsel %vm645, %v669, %v671
        %v673 = vrot.slane %v483, 1
        %v674 = vsel %vm645, %v671, %v673
        %v675 = vrot.slane %v484, 1
        %v676 = vsel %vm645, %v673, %v675
        %677 = vrot.lane.b32.xlu0 %v648, 8
        %v678 = vpop.permute.xlu0 %677
        %679 = vrot.lane.b32.xlu0 %v650, 8
        %v680 = vpop.permute.xlu0 %679
        %681 = vrot.lane.b32.xlu0 %v652, 8
        %v682 = vpop.permute.xlu0 %681
        %683 = vrot.lane.b32.xlu0 %v654, 8
        %v684 = vpop.permute.xlu0 %683
        %685 = vrot.lane.b32.xlu0 %v656, 8
        %v686 = vpop.permute.xlu0 %685
        %687 = vrot.lane.b32.xlu0 %v658, 8
        %v688 = vpop.permute.xlu0 %687
        %689 = vrot.lane.b32.xlu0 %v660, 8
        %v690 = vpop.permute.xlu0 %689
        %691 = vrot.lane.b32.xlu0 %v662, 8
        %v692 = vpop.permute.xlu0 %691
        %693 = vrot.lane.b32.xlu0 %v664, 8
        %v694 = vpop.permute.xlu0 %693
        %695 = vrot.lane.b32.xlu0 %v666, 8
        %v696 = vpop.permute.xlu0 %695
        %697 = vrot.lane.b32.xlu0 %v668, 8
        %v698 = vpop.permute.xlu0 %697
        %699 = vrot.lane.b32.xlu0 %v670, 8
        %v700 = vpop.permute.xlu0 %699
        %701 = vrot.lane.b32.xlu0 %v672, 8
        %v702 = vpop.permute.xlu0 %701
        %703 = vrot.lane.b32.xlu0 %v674, 8
        %v704 = vpop.permute.xlu0 %703
        %705 = vrot.lane.b32.xlu0 %v676, 8
        %v706 = vpop.permute.xlu0 %705
        %707 = vrot.lane.b32.xlu0 %v675, 8
        %v708 = vpop.permute.xlu0 %707
        %vm709 = vcmask 31744
        %v711 = vsel %vm709, %v469, %v614
        %v713 = vsel %vm709, %v470, %v616
        %v715 = vsel %vm709, %v471, %v618
        %v717 = vsel %vm709, %v472, %v620
        %v719 = vsel %vm709, %v473, %v622
        %v721 = vsel %vm709, %v474, %v624
        %v723 = vsel %vm709, %v475, %v626
        %v725 = vsel %vm709, %v476, %v628
        %v727 = vsel %vm709, %v477, %v630
        %v729 = vsel %vm709, %v478, %v632
        %v731 = vsel %vm709, %v479, %v634
        %v733 = vsel %vm709, %v480, %v636
        %v735 = vsel %vm709, %v481, %v638
        %v737 = vsel %vm709, %v482, %v640
        %v739 = vsel %vm709, %v483, %v642
        %v741 = vsel %vm709, %v484, %v644
        %vm742 = vcmask 64512
        %v744 = vsel %vm742, %v711, %v678
        %v746 = vsel %vm742, %v713, %v680
        %v748 = vsel %vm742, %v715, %v682
        %v750 = vsel %vm742, %v717, %v684
        %v752 = vsel %vm742, %v719, %v686
        %v754 = vsel %vm742, %v721, %v688
        %v756 = vsel %vm742, %v723, %v690
        %v758 = vsel %vm742, %v725, %v692
        %v760 = vsel %vm742, %v727, %v694
        %v762 = vsel %vm742, %v729, %v696
        %v764 = vsel %vm742, %v731, %v698
        %v766 = vsel %vm742, %v733, %v700
        %v768 = vsel %vm742, %v735, %v702
        %v770 = vsel %vm742, %v737, %v704
        %v772 = vsel %vm742, %v739, %v706
        %v774 = vsel %vm742, %v741, %v708
        %789 = vrot.lane.b32.xlu0 %v746, 12
        %v790 = vpop.permute.xlu0 %789
        %791 = vrot.lane.b32.xlu0 %v748, 12
        %v792 = vpop.permute.xlu0 %791
        %793 = vrot.lane.b32.xlu0 %v750, 12
        %v794 = vpop.permute.xlu0 %793
        %795 = vrot.lane.b32.xlu0 %v752, 12
        %v796 = vpop.permute.xlu0 %795
        %797 = vrot.lane.b32.xlu0 %v754, 12
        %v798 = vpop.permute.xlu0 %797
        %799 = vrot.lane.b32.xlu0 %v756, 12
        %v800 = vpop.permute.xlu0 %799
        %801 = vrot.lane.b32.xlu0 %v758, 12
        %v802 = vpop.permute.xlu0 %801
        %803 = vrot.lane.b32.xlu0 %v760, 12
        %v804 = vpop.permute.xlu0 %803
        %805 = vrot.lane.b32.xlu0 %v762, 12
        %v806 = vpop.permute.xlu0 %805
        %807 = vrot.lane.b32.xlu0 %v764, 12
        %v808 = vpop.permute.xlu0 %807
        %809 = vrot.lane.b32.xlu0 %v766, 12
        %v810 = vpop.permute.xlu0 %809
        %811 = vrot.lane.b32.xlu0 %v768, 12
        %v812 = vpop.permute.xlu0 %811
        %813 = vrot.lane.b32.xlu0 %v770, 12
        %v814 = vpop.permute.xlu0 %813
        %815 = vrot.lane.b32.xlu0 %v772, 12
        %v816 = vpop.permute.xlu0 %815
        %818 = vrot.lane.b32.xlu0 %v748, 24
        %v819 = vpop.permute.xlu0 %818
        %820 = vrot.lane.b32.xlu0 %v750, 24
        %v821 = vpop.permute.xlu0 %820
        %822 = vrot.lane.b32.xlu0 %v752, 24
        %v823 = vpop.permute.xlu0 %822
        %824 = vrot.lane.b32.xlu0 %v754, 24
        %v825 = vpop.permute.xlu0 %824
        %826 = vrot.lane.b32.xlu0 %v756, 24
        %v827 = vpop.permute.xlu0 %826
        %828 = vrot.lane.b32.xlu0 %v758, 24
        %v829 = vpop.permute.xlu0 %828
        %830 = vrot.lane.b32.xlu0 %v760, 24
        %v831 = vpop.permute.xlu0 %830
        %832 = vrot.lane.b32.xlu0 %v762, 24
        %v833 = vpop.permute.xlu0 %832
        %834 = vrot.lane.b32.xlu0 %v764, 24
        %v835 = vpop.permute.xlu0 %834
        %836 = vrot.lane.b32.xlu0 %v766, 24
        %v837 = vpop.permute.xlu0 %836
        %838 = vrot.lane.b32.xlu0 %v768, 24
        %v839 = vpop.permute.xlu0 %838
        %840 = vrot.lane.b32.xlu0 %v770, 24
        %v841 = vpop.permute.xlu0 %840
        %842 = vrot.lane.b32.xlu0 %v772, 24
        %v843 = vpop.permute.xlu0 %842
        %844 = vrot.lane.b32.xlu0 %v774, 24
        %v845 = vpop.permute.xlu0 %844
        %vm846 = vcmask 97280
        %v848 = vsel %vm846, %v744, %v790
        %v850 = vsel %vm846, %v746, %v792
        %v852 = vsel %vm846, %v748, %v794
        %v854 = vsel %vm846, %v750, %v796
        %v856 = vsel %vm846, %v752, %v798
        %v858 = vsel %vm846, %v754, %v800
        %v860 = vsel %vm846, %v756, %v802
        %v862 = vsel %vm846, %v758, %v804
        %v864 = vsel %vm846, %v760, %v806
        %v866 = vsel %vm846, %v762, %v808
        %v868 = vsel %vm846, %v764, %v810
        %v870 = vsel %vm846, %v766, %v812
        %v872 = vsel %vm846, %v768, %v814
        %v874 = vsel %vm846, %v770, %v816
        %vm875 = vcmask 195584
        %v877 = vsel %vm875, %v848, %v819
        %v879 = vsel %vm875, %v850, %v821
        %v881 = vsel %vm875, %v852, %v823
        %v883 = vsel %vm875, %v854, %v825
        %v885 = vsel %vm875, %v856, %v827
        %v887 = vsel %vm875, %v858, %v829
        %v889 = vsel %vm875, %v860, %v831
        %v891 = vsel %vm875, %v862, %v833
        %v893 = vsel %vm875, %v864, %v835
        %v895 = vsel %vm875, %v866, %v837
        %v897 = vsel %vm875, %v868, %v839
        %v899 = vsel %vm875, %v870, %v841
        %v901 = vsel %vm875, %v872, %v843
        %v903 = vsel %vm875, %v874, %v845
        %v904 = vld [vmem:[%s1] sm:$0xf]
        %v905 = vld [vmem:[%s1 + $0x4] sm:$0xf]
        %v906 = vld [vmem:[%s1 + $0x8] sm:$0xf]
        %v907 = vld [vmem:[%s1 + $0xc] sm:$0xf]
        %v908 = vld [vmem:[%s1 + $0x10] sm:$0x3]
        %v909 = vld [vmem:[#allocation2] sm:$0x1]
        %v911 = vperm.slane %v909, 0
        %v918 = vunpack.c.l.b16 %v904
        %v919 = vunpack.c.l.b16 %v905
        %v920 = vunpack.c.l.b16 %v906
        %v921 = vunpack.c.l.b16 %v907
        %v922 = vunpack.c.l.b16 %v908
        %v923 = vpack.c.b16 %v919, %v918
        %v924 = vpack.c.b16 %v921, %v920
        %v925 = vpack.c.b16 %v922, %v922
        %vm928 = vcmask 293888
        %v929 = vsel %vm928, %v877, 0
        %v931 = vsel %vm928, %v879, 0
        %v933 = vsel %vm928, %v881, 0
        %v935 = vsel %vm928, %v883, 0
        %v937 = vsel %vm928, %v885, 0
        %v939 = vsel %vm928, %v887, 0
        %v941 = vsel %vm928, %v889, 0
        %v943 = vsel %vm928, %v891, 0
        %v945 = vsel %vm928, %v893, 0
        %v947 = vsel %vm928, %v895, 0
        %v949 = vsel %vm928, %v897, 0
        %v951 = vsel %vm928, %v899, 0
        %v953 = vsel %vm928, %v901, 0
        %v955 = vsel %vm928, %v903, 0
        %vm957 = vcmask 1041408
        %v959 = vsel %vm957, %v925, 0
        %961 = vmatpush.bf16.msra.mxu0 0
        %962 = vmatpush.bf16.msra.mxu0 0
        %963 = vmatpush.bf16.msra.mxu0 0
        %964 = vmatpush.bf16.msra.mxu0 0
        %965 = vmatpush.bf16.msra.mxu0 0
        %966 = vmatpush.bf16.msra.mxu0 %v959
        %967 = vmatpush.bf16.msra.mxu0 %v924
        %968 = vmatpush.bf16.msra.mxu0 %v923
        %969 = vmatmul.bf16.gmra.mxu0 %v929
        %v970 = vpop.f32.mrf.mxu0
        %v971 = vadd.f32 %v911, %v970
        %v972 = vpop.f32.mrf.mxu0
        %v973 = vadd.f32 %v911, %v972
        %974 = vmatmul.bf16.gmra.mxu0 %v931
        %v975 = vpop.f32.mrf.mxu0
        %v976 = vadd.f32 %v911, %v975
        %v977 = vpop.f32.mrf.mxu0
        %v978 = vadd.f32 %v911, %v977
        %979 = vmatmul.bf16.gmra.mxu0 %v933
        %v980 = vpop.f32.mrf.mxu0
        %v981 = vadd.f32 %v911, %v980
        %v982 = vpop.f32.mrf.mxu0
        %v983 = vadd.f32 %v911, %v982
        %984 = vmatmul.bf16.gmra.mxu0 %v935
        %v985 = vpop.f32.mrf.mxu0
        %v986 = vadd.f32 %v911, %v985
        %v987 = vpop.f32.mrf.mxu0
        %v988 = vadd.f32 %v911, %v987
        %989 = vmatmul.bf16.gmra.mxu0 %v937
        %v990 = vpop.f32.mrf.mxu0
        %v991 = vadd.f32 %v911, %v990
        %v992 = vpop.f32.mrf.mxu0
        %v993 = vadd.f32 %v911, %v992
        %994 = vmatmul.bf16.gmra.mxu0 %v939
        %v995 = vpop.f32.mrf.mxu0
        %v996 = vadd.f32 %v911, %v995
        %v997 = vpop.f32.mrf.mxu0
        %v998 = vadd.f32 %v911, %v997
        %999 = vmatmul.bf16.gmra.mxu0 %v941
        %v1000 = vpop.f32.mrf.mxu0
        %v1001 = vadd.f32 %v911, %v1000
        %v1002 = vpop.f32.mrf.mxu0
        %v1003 = vadd.f32 %v911, %v1002
        %1004 = vmatmul.bf16.gmra.mxu0 %v943
        %v1005 = vpop.f32.mrf.mxu0
        %v1006 = vadd.f32 %v911, %v1005
        %v1007 = vpop.f32.mrf.mxu0
        %v1008 = vadd.f32 %v911, %v1007
        %1009 = vmatmul.bf16.gmra.mxu0 %v945
        %v1010 = vpop.f32.mrf.mxu0
        %v1011 = vadd.f32 %v911, %v1010
        %v1012 = vpop.f32.mrf.mxu0
        %v1013 = vadd.f32 %v911, %v1012
        %1014 = vmatmul.bf16.gmra.mxu0 %v947
        %v1015 = vpop.f32.mrf.mxu0
        %v1016 = vadd.f32 %v911, %v1015
        %v1017 = vpop.f32.mrf.mxu0
        %v1018 = vadd.f32 %v911, %v1017
        %1019 = vmatmul.bf16.gmra.mxu0 %v949
        %v1020 = vpop.f32.mrf.mxu0
        %v1021 = vadd.f32 %v911, %v1020
        %v1022 = vpop.f32.mrf.mxu0
        %v1023 = vadd.f32 %v911, %v1022
        %1024 = vmatmul.bf16.gmra.mxu0 %v951
        %v1025 = vpop.f32.mrf.mxu0
        %v1026 = vadd.f32 %v911, %v1025
        %v1027 = vpop.f32.mrf.mxu0
        %v1028 = vadd.f32 %v911, %v1027
        %1029 = vmatmul.bf16.gmra.mxu0 %v953
        %v1030 = vpop.f32.mrf.mxu0
        %v1031 = vadd.f32 %v911, %v1030
        %v1032 = vpop.f32.mrf.mxu0
        %v1033 = vadd.f32 %v911, %v1032
        %1034 = vmatmul.bf16.gmra.mxu0 %v955
        %v1035 = vpop.f32.mrf.mxu0
        %v1036 = vadd.f32 %v911, %v1035
        %v1037 = vpop.f32.mrf.mxu0
        %v1038 = vadd.f32 %v911, %v1037
        %1039 = vdwg.mxu0
        %v1040 = vmax.f32 %v971, 0.0
        %v1041 = vmax.f32 %v973, 0.0
        %v1042 = vmax.f32 %v976, 0.0
        %v1043 = vmax.f32 %v978, 0.0
        %v1044 = vmax.f32 %v981, 0.0
        %v1045 = vmax.f32 %v983, 0.0
        %v1046 = vmax.f32 %v986, 0.0
        %v1047 = vmax.f32 %v988, 0.0
        %v1048 = vmax.f32 %v991, 0.0
        %v1049 = vmax.f32 %v993, 0.0
        %v1050 = vmax.f32 %v996, 0.0
        %v1051 = vmax.f32 %v998, 0.0
        %v1052 = vmax.f32 %v1001, 0.0
        %v1053 = vmax.f32 %v1003, 0.0
        %v1054 = vmax.f32 %v1006, 0.0
        %v1055 = vmax.f32 %v1008, 0.0
        %v1056 = vmax.f32 %v1011, 0.0
        %v1057 = vmax.f32 %v1013, 0.0
        %v1058 = vmax.f32 %v1016, 0.0
        %v1059 = vmax.f32 %v1018, 0.0
        %v1060 = vmax.f32 %v1021, 0.0
        %v1061 = vmax.f32 %v1023, 0.0
        %v1062 = vmax.f32 %v1026, 0.0
        %v1063 = vmax.f32 %v1028, 0.0
        %v1064 = vmax.f32 %v1031, 0.0
        %v1065 = vmax.f32 %v1033, 0.0
        %v1066 = vmax.f32 %v1036, 0.0
        %v1067 = vmax.f32 %v1038, 0.0
        %v1068 = vpack.c.bf16 %v1040, %v1040
        %v1069 = vpack.c.bf16 %v1041, %v1041
        %v1070 = vpack.c.bf16 %v1042, %v1042
        %v1071 = vpack.c.bf16 %v1043, %v1043
        %v1072 = vpack.c.bf16 %v1044, %v1044
        %v1073 = vpack.c.bf16 %v1045, %v1045
        %v1074 = vpack.c.bf16 %v1046, %v1046
        %v1075 = vpack.c.bf16 %v1047, %v1047
        %v1076 = vpack.c.bf16 %v1048, %v1048
        %v1077 = vpack.c.bf16 %v1049, %v1049
        %v1078 = vpack.c.bf16 %v1050, %v1050
        %v1079 = vpack.c.bf16 %v1051, %v1051
        %v1080 = vpack.c.bf16 %v1052, %v1052
        %v1081 = vpack.c.bf16 %v1053, %v1053
        %v1082 = vpack.c.bf16 %v1054, %v1054
        %v1083 = vpack.c.bf16 %v1055, %v1055
        %v1084 = vpack.c.bf16 %v1056, %v1056
        %v1085 = vpack.c.bf16 %v1057, %v1057
        %v1086 = vpack.c.bf16 %v1058, %v1058
        %v1087 = vpack.c.bf16 %v1059, %v1059
        %v1088 = vpack.c.bf16 %v1060, %v1060
        %v1089 = vpack.c.bf16 %v1061, %v1061
        %v1090 = vpack.c.bf16 %v1062, %v1062
        %v1091 = vpack.c.bf16 %v1063, %v1063
        %v1092 = vpack.c.bf16 %v1064, %v1064
        %v1093 = vpack.c.bf16 %v1065, %v1065
        %v1094 = vpack.c.bf16 %v1066, %v1066
        %v1095 = vpack.c.bf16 %v1067, %v1067
        %v1124 = vunpack.c.l.b16 %v1068
        %v1125 = vunpack.c.l.b16 %v1069
        %v1126 = vunpack.c.l.b16 %v1070
        %v1127 = vunpack.c.l.b16 %v1071
        %v1128 = vunpack.c.l.b16 %v1072
        %v1129 = vunpack.c.l.b16 %v1073
        %v1130 = vunpack.c.l.b16 %v1074
        %v1131 = vunpack.c.l.b16 %v1075
        %v1132 = vunpack.c.l.b16 %v1076
        %v1133 = vunpack.c.l.b16 %v1077
        %v1134 = vunpack.c.l.b16 %v1078
        %v1135 = vunpack.c.l.b16 %v1079
        %v1136 = vunpack.c.l.b16 %v1080
        %v1137 = vunpack.c.l.b16 %v1081
        %v1138 = vunpack.c.l.b16 %v1082
        %v1139 = vunpack.c.l.b16 %v1083
        %v1140 = vunpack.c.l.b16 %v1084
        %v1141 = vunpack.c.l.b16 %v1085
        %v1142 = vunpack.c.l.b16 %v1086
        %v1143 = vunpack.c.l.b16 %v1087
        %v1144 = vunpack.c.l.b16 %v1088
        %v1145 = vunpack.c.l.b16 %v1089
        %v1146 = vunpack.c.l.b16 %v1090
        %v1147 = vunpack.c.l.b16 %v1091
        %v1148 = vunpack.c.l.b16 %v1092
        %v1149 = vunpack.c.l.b16 %v1093
        %v1150 = vunpack.c.l.b16 %v1094
        %v1151 = vunpack.c.l.b16 %v1095
        %v1152 = vpack.c.b16 %v1125, %v1124
        %v1153 = vpack.c.b16 %v1127, %v1126
        %v1154 = vpack.c.b16 %v1129, %v1128
        %v1155 = vpack.c.b16 %v1131, %v1130
        %v1156 = vpack.c.b16 %v1133, %v1132
        %v1157 = vpack.c.b16 %v1135, %v1134
        %v1158 = vpack.c.b16 %v1137, %v1136
        %v1159 = vpack.c.b16 %v1139, %v1138
        %v1160 = vpack.c.b16 %v1141, %v1140
        %v1161 = vpack.c.b16 %v1143, %v1142
        %v1162 = vpack.c.b16 %v1145, %v1144
        %v1163 = vpack.c.b16 %v1147, %v1146
        %v1164 = vpack.c.b16 %v1149, %v1148
        %v1165 = vpack.c.b16 %v1151, %v1150
        %v1167 = vshrl.u32 %v1152, 16
        %v1169 = vshll.u32 %v1152, 16
        %v1171 = vrot.slane %v1169, 1
        %v1172 = vor.u32 %v1167, %v1171
        %v1174 = vshll.u32 %v1153, 16
        %v1176 = vrot.slane %v1174, 1
        %v1177 = vsel %vm485, %v1172, %v1176
        %v1178 = vshrl.u32 %v1153, 16
        %v1180 = vor.u32 %v1178, %v1176
        %v1182 = vshll.u32 %v1154, 16
        %v1184 = vrot.slane %v1182, 1
        %v1185 = vsel %vm485, %v1180, %v1184
        %v1186 = vshrl.u32 %v1154, 16
        %v1188 = vor.u32 %v1186, %v1184
        %v1190 = vshll.u32 %v1155, 16
        %v1192 = vrot.slane %v1190, 1
        %v1193 = vsel %vm485, %v1188, %v1192
        %v1194 = vshrl.u32 %v1155, 16
        %v1196 = vor.u32 %v1194, %v1192
        %v1198 = vshll.u32 %v1156, 16
        %v1200 = vrot.slane %v1198, 1
        %v1201 = vsel %vm485, %v1196, %v1200
        %v1202 = vshrl.u32 %v1156, 16
        %v1204 = vor.u32 %v1202, %v1200
        %v1206 = vshll.u32 %v1157, 16
        %v1208 = vrot.slane %v1206, 1
        %v1209 = vsel %vm485, %v1204, %v1208
        %v1210 = vshrl.u32 %v1157, 16
        %v1212 = vor.u32 %v1210, %v1208
        %v1214 = vshll.u32 %v1158, 16
        %v1216 = vrot.slane %v1214, 1
        %v1217 = vsel %vm485, %v1212, %v1216
        %v1218 = vshrl.u32 %v1158, 16
        %v1220 = vor.u32 %v1218, %v1216
        %v1222 = vshll.u32 %v1159, 16
        %v1224 = vrot.slane %v1222, 1
        %v1225 = vsel %vm485, %v1220, %v1224
        %v1226 = vshrl.u32 %v1159, 16
        %v1228 = vor.u32 %v1226, %v1224
        %v1230 = vshll.u32 %v1160, 16
        %v1232 = vrot.slane %v1230, 1
        %v1233 = vsel %vm485, %v1228, %v1232
        %v1234 = vshrl.u32 %v1160, 16
        %v1236 = vor.u32 %v1234, %v1232
        %v1238 = vshll.u32 %v1161, 16
        %v1240 = vrot.slane %v1238, 1
        %v1241 = vsel %vm485, %v1236, %v1240
        %v1242 = vshrl.u32 %v1161, 16
        %v1244 = vor.u32 %v1242, %v1240
        %v1246 = vshll.u32 %v1162, 16
        %v1248 = vrot.slane %v1246, 1
        %v1249 = vsel %vm485, %v1244, %v1248
        %v1250 = vshrl.u32 %v1162, 16
        %v1252 = vor.u32 %v1250, %v1248
        %v1254 = vshll.u32 %v1163, 16
        %v1256 = vrot.slane %v1254, 1
        %v1257 = vsel %vm485, %v1252, %v1256
        %v1258 = vshrl.u32 %v1163, 16
        %v1260 = vor.u32 %v1258, %v1256
        %v1262 = vshll.u32 %v1164, 16
        %v1264 = vrot.slane %v1262, 1
        %v1265 = vsel %vm485, %v1260, %v1264
        %v1266 = vshrl.u32 %v1164, 16
        %v1268 = vor.u32 %v1266, %v1264
        %v1270 = vshll.u32 %v1165, 16
        %v1272 = vrot.slane %v1270, 1
        %v1273 = vsel %vm485, %v1268, %v1272
        %v1274 = vshrl.u32 %v1165, 16
        %v1276 = vor.u32 %v1274, %v1272
        %1277 = vrot.lane.b32.xlu0 %v1177, 16
        %v1278 = vpop.permute.xlu0 %1277
        %1279 = vrot.lane.b32.xlu0 %v1185, 16
        %v1280 = vpop.permute.xlu0 %1279
        %1281 = vrot.lane.b32.xlu0 %v1193, 16
        %v1282 = vpop.permute.xlu0 %1281
        %1283 = vrot.lane.b32.xlu0 %v1201, 16
        %v1284 = vpop.permute.xlu0 %1283
        %1285 = vrot.lane.b32.xlu0 %v1209, 16
        %v1286 = vpop.permute.xlu0 %1285
        %1287 = vrot.lane.b32.xlu0 %v1217, 16
        %v1288 = vpop.permute.xlu0 %1287
        %1289 = vrot.lane.b32.xlu0 %v1225, 16
        %v1290 = vpop.permute.xlu0 %1289
        %1291 = vrot.lane.b32.xlu0 %v1233, 16
        %v1292 = vpop.permute.xlu0 %1291
        %1293 = vrot.lane.b32.xlu0 %v1241, 16
        %v1294 = vpop.permute.xlu0 %1293
        %1295 = vrot.lane.b32.xlu0 %v1249, 16
        %v1296 = vpop.permute.xlu0 %1295
        %1297 = vrot.lane.b32.xlu0 %v1257, 16
        %v1298 = vpop.permute.xlu0 %1297
        %1299 = vrot.lane.b32.xlu0 %v1265, 16
        %v1300 = vpop.permute.xlu0 %1299
        %1301 = vrot.lane.b32.xlu0 %v1273, 16
        %v1302 = vpop.permute.xlu0 %1301
        %1303 = vrot.lane.b32.xlu0 %v1276, 16
        %v1304 = vpop.permute.xlu0 %1303
        %v1305 = vrot.slane %v1152, 1
        %v1306 = vrot.slane %v1153, 1
        %v1307 = vsel %vm645, %v1305, %v1306
        %v1308 = vrot.slane %v1154, 1
        %v1309 = vsel %vm645, %v1306, %v1308
        %v1310 = vrot.slane %v1155, 1
        %v1311 = vsel %vm645, %v1308, %v1310
        %v1312 = vrot.slane %v1156, 1
        %v1313 = vsel %vm645, %v1310, %v1312
        %v1314 = vrot.slane %v1157, 1
        %v1315 = vsel %vm645, %v1312, %v1314
        %v1316 = vrot.slane %v1158, 1
        %v1317 = vsel %vm645, %v1314, %v1316
        %v1318 = vrot.slane %v1159, 1
        %v1319 = vsel %vm645, %v1316, %v1318
        %v1320 = vrot.slane %v1160, 1
        %v1321 = vsel %vm645, %v1318, %v1320
        %v1322 = vrot.slane %v1161, 1
        %v1323 = vsel %vm645, %v1320, %v1322
        %v1324 = vrot.slane %v1162, 1
        %v1325 = vsel %vm645, %v1322, %v1324
        %v1326 = vrot.slane %v1163, 1
        %v1327 = vsel %vm645, %v1324, %v1326
        %v1328 = vrot.slane %v1164, 1
        %v1329 = vsel %vm645, %v1326, %v1328
        %v1330 = vrot.slane %v1165, 1
        %v1331 = vsel %vm645, %v1328, %v1330
        %1332 = vrot.lane.b32.xlu0 %v1307, 32
        %v1333 = vpop.permute.xlu0 %1332
        %1334 = vrot.lane.b32.xlu0 %v1309, 32
        %v1335 = vpop.permute.xlu0 %1334
        %1336 = vrot.lane.b32.xlu0 %v1311, 32
        %v1337 = vpop.permute.xlu0 %1336
        %1338 = vrot.lane.b32.xlu0 %v1313, 32
        %v1339 = vpop.permute.xlu0 %1338
        %1340 = vrot.lane.b32.xlu0 %v1315, 32
        %v1341 = vpop.permute.xlu0 %1340
        %1342 = vrot.lane.b32.xlu0 %v1317, 32
        %v1343 = vpop.permute.xlu0 %1342
        %1344 = vrot.lane.b32.xlu0 %v1319, 32
        %v1345 = vpop.permute.xlu0 %1344
        %1346 = vrot.lane.b32.xlu0 %v1321, 32
        %v1347 = vpop.permute.xlu0 %1346
        %1348 = vrot.lane.b32.xlu0 %v1323, 32
        %v1349 = vpop.permute.xlu0 %1348
        %1350 = vrot.lane.b32.xlu0 %v1325, 32
        %v1351 = vpop.permute.xlu0 %1350
        %1352 = vrot.lane.b32.xlu0 %v1327, 32
        %v1353 = vpop.permute.xlu0 %1352
        %1354 = vrot.lane.b32.xlu0 %v1329, 32
        %v1355 = vpop.permute.xlu0 %1354
        %1356 = vrot.lane.b32.xlu0 %v1331, 32
        %v1357 = vpop.permute.xlu0 %1356
        %1358 = vrot.lane.b32.xlu0 %v1330, 32
        %v1359 = vpop.permute.xlu0 %1358
        %vm1360 = vcmask 130048
        %v1362 = vsel %vm1360, %v1152, %v1278
        %v1364 = vsel %vm1360, %v1153, %v1280
        %v1366 = vsel %vm1360, %v1154, %v1282
        %v1368 = vsel %vm1360, %v1155, %v1284
        %v1370 = vsel %vm1360, %v1156, %v1286
        %v1372 = vsel %vm1360, %v1157, %v1288
        %v1374 = vsel %vm1360, %v1158, %v1290
        %v1376 = vsel %vm1360, %v1159, %v1292
        %v1378 = vsel %vm1360, %v1160, %v1294
        %v1380 = vsel %vm1360, %v1161, %v1296
        %v1382 = vsel %vm1360, %v1162, %v1298
        %v1384 = vsel %vm1360, %v1163, %v1300
        %v1386 = vsel %vm1360, %v1164, %v1302
        %v1388 = vsel %vm1360, %v1165, %v1304
        %vm1389 = vcmask 261120
        %v1391 = vsel %vm1389, %v1362, %v1333
        %v1393 = vsel %vm1389, %v1364, %v1335
        %v1395 = vsel %vm1389, %v1366, %v1337
        %v1397 = vsel %vm1389, %v1368, %v1339
        %v1399 = vsel %vm1389, %v1370, %v1341
        %v1401 = vsel %vm1389, %v1372, %v1343
        %v1403 = vsel %vm1389, %v1374, %v1345
        %v1405 = vsel %vm1389, %v1376, %v1347
        %v1407 = vsel %vm1389, %v1378, %v1349
        %v1409 = vsel %vm1389, %v1380, %v1351
        %v1411 = vsel %vm1389, %v1382, %v1353
        %v1413 = vsel %vm1389, %v1384, %v1355
        %v1415 = vsel %vm1389, %v1386, %v1357
        %v1417 = vsel %vm1389, %v1388, %v1359
        %1430 = vrot.lane.b32.xlu0 %v1393, 48
        %v1431 = vpop.permute.xlu0 %1430
        %1432 = vrot.lane.b32.xlu0 %v1395, 48
        %v1433 = vpop.permute.xlu0 %1432
        %1434 = vrot.lane.b32.xlu0 %v1397, 48
        %v1435 = vpop.permute.xlu0 %1434
        %1436 = vrot.lane.b32.xlu0 %v1399, 48
        %v1437 = vpop.permute.xlu0 %1436
        %1438 = vrot.lane.b32.xlu0 %v1401, 48
        %v1439 = vpop.permute.xlu0 %1438
        %1440 = vrot.lane.b32.xlu0 %v1403, 48
        %v1441 = vpop.permute.xlu0 %1440
        %1442 = vrot.lane.b32.xlu0 %v1405, 48
        %v1443 = vpop.permute.xlu0 %1442
        %1444 = vrot.lane.b32.xlu0 %v1407, 48
        %v1445 = vpop.permute.xlu0 %1444
        %1446 = vrot.lane.b32.xlu0 %v1409, 48
        %v1447 = vpop.permute.xlu0 %1446
        %1448 = vrot.lane.b32.xlu0 %v1411, 48
        %v1449 = vpop.permute.xlu0 %1448
        %1450 = vrot.lane.b32.xlu0 %v1413, 48
        %v1451 = vpop.permute.xlu0 %1450
        %1452 = vrot.lane.b32.xlu0 %v1415, 48
        %v1453 = vpop.permute.xlu0 %1452
        %1455 = vrot.lane.b32.xlu0 %v1395, 96
        %v1456 = vpop.permute.xlu0 %1455
        %1457 = vrot.lane.b32.xlu0 %v1397, 96
        %v1458 = vpop.permute.xlu0 %1457
        %1459 = vrot.lane.b32.xlu0 %v1399, 96
        %v1460 = vpop.permute.xlu0 %1459
        %1461 = vrot.lane.b32.xlu0 %v1401, 96
        %v1462 = vpop.permute.xlu0 %1461
        %1463 = vrot.lane.b32.xlu0 %v1403, 96
        %v1464 = vpop.permute.xlu0 %1463
        %1465 = vrot.lane.b32.xlu0 %v1405, 96
        %v1466 = vpop.permute.xlu0 %1465
        %1467 = vrot.lane.b32.xlu0 %v1407, 96
        %v1468 = vpop.permute.xlu0 %1467
        %1469 = vrot.lane.b32.xlu0 %v1409, 96
        %v1470 = vpop.permute.xlu0 %1469
        %1471 = vrot.lane.b32.xlu0 %v1411, 96
        %v1472 = vpop.permute.xlu0 %1471
        %1473 = vrot.lane.b32.xlu0 %v1413, 96
        %v1474 = vpop.permute.xlu0 %1473
        %1475 = vrot.lane.b32.xlu0 %v1415, 96
        %v1476 = vpop.permute.xlu0 %1475
        %1477 = vrot.lane.b32.xlu0 %v1417, 96
        %v1478 = vpop.permute.xlu0 %1477
        %vm1479 = vcmask 392192
        %v1481 = vsel %vm1479, %v1391, %v1431
        %v1483 = vsel %vm1479, %v1393, %v1433
        %v1485 = vsel %vm1479, %v1395, %v1435
        %v1487 = vsel %vm1479, %v1397, %v1437
        %v1489 = vsel %vm1479, %v1399, %v1439
        %v1491 = vsel %vm1479, %v1401, %v1441
        %v1493 = vsel %vm1479, %v1403, %v1443
        %v1495 = vsel %vm1479, %v1405, %v1445
        %v1497 = vsel %vm1479, %v1407, %v1447
        %v1499 = vsel %vm1479, %v1409, %v1449
        %v1501 = vsel %vm1479, %v1411, %v1451
        %v1503 = vsel %vm1479, %v1413, %v1453
        %vm1504 = vcmask 785408
        %v1506 = vsel %vm1504, %v1481, %v1456
        %v1509 = vsel %vm1504, %v1483, %v1458
        %v1512 = vsel %vm1504, %v1485, %v1460
        %v1515 = vsel %vm1504, %v1487, %v1462
        %v1518 = vsel %vm1504, %v1489, %v1464
        %v1521 = vsel %vm1504, %v1491, %v1466
        %v1524 = vsel %vm1504, %v1493, %v1468
        %v1527 = vsel %vm1504, %v1495, %v1470
        %v1530 = vsel %vm1504, %v1497, %v1472
        %v1533 = vsel %vm1504, %v1499, %v1474
        %v1536 = vsel %vm1504, %v1501, %v1476
        %v1539 = vsel %vm1504, %v1503, %v1478
        %v1541 = vld [vmem:[%s3] sm:$0xf]
        %v1542 = vld [vmem:[%s3 + $0x4] sm:$0xf]
        %v1543 = vld [vmem:[%s3 + $0x8] sm:$0xf]
        %v1544 = vld [vmem:[%s3 + $0xc] sm:$0xf]
        %v1545 = vld [vmem:[%s3 + $0x10] sm:$0xf]
        %v1546 = vld [vmem:[%s3 + $0x14] sm:$0xf]
        %v1547 = vld [vmem:[%s3 + $0x18] sm:$0xf]
        %v1548 = vld [vmem:[%s3 + $0x1c] sm:$0xf]
        %v1549 = vld [vmem:[%s3 + $0x20] sm:$0xf]
        %v1550 = vld [vmem:[%s3 + $0x24] sm:$0xf]
        %v1551 = vld [vmem:[%s3 + $0x28] sm:$0xf]
        %v1552 = vld [vmem:[%s3 + $0x2c] sm:$0xf]
        %v1553 = vld [vmem:[%s3 + $0x30] sm:$0xf]
        %v1554 = vld [vmem:[%s3 + $0x34] sm:$0xf]
        %v1555 = vld [vmem:[%s3 + $0x38] sm:$0xf]
        %v1556 = vld [vmem:[%s3 + $0x3c] sm:$0xf]
        %v1557 = vld [vmem:[%s3 + $0x40] sm:$0xf]
        %v1558 = vld [vmem:[%s3 + $0x44] sm:$0xf]
        %v1559 = vld [vmem:[#allocation4] sm:$0x1]
        %v1561 = vperm.slane %v1559, 0
        %v1581 = vunpack.c.l.b16 %v1541
        %v1582 = vunpack.c.l.b16 %v1542
        %v1583 = vunpack.c.l.b16 %v1543
        %v1584 = vunpack.c.l.b16 %v1544
        %v1585 = vunpack.c.l.b16 %v1545
        %v1586 = vunpack.c.l.b16 %v1546
        %v1587 = vunpack.c.l.b16 %v1547
        %v1588 = vunpack.c.l.b16 %v1548
        %v1589 = vunpack.c.l.b16 %v1549
        %v1590 = vunpack.c.l.b16 %v1550
        %v1591 = vunpack.c.l.b16 %v1551
        %v1592 = vunpack.c.l.b16 %v1552
        %v1593 = vunpack.c.l.b16 %v1553
        %v1594 = vunpack.c.l.b16 %v1554
        %v1595 = vunpack.c.l.b16 %v1555
        %v1596 = vunpack.c.l.b16 %v1556
        %v1597 = vunpack.c.l.b16 %v1557
        %v1598 = vunpack.c.l.b16 %v1558
        %v1599 = vpack.c.b16 %v1582, %v1581
        %v1600 = vpack.c.b16 %v1584, %v1583
        %v1601 = vpack.c.b16 %v1586, %v1585
        %v1602 = vpack.c.b16 %v1588, %v1587
        %v1603 = vpack.c.b16 %v1590, %v1589
        %v1604 = vpack.c.b16 %v1592, %v1591
        %v1605 = vpack.c.b16 %v1594, %v1593
        %v1606 = vpack.c.b16 %v1596, %v1595
        %v1607 = vpack.c.b16 %v1598, %v1597
        %v1617 = vsel %vm1360, %v1456, 0
        %v1619 = vsel %vm1360, %v1458, 0
        %v1621 = vsel %vm1360, %v1460, 0
        %v1623 = vsel %vm1360, %v1462, 0
        %v1625 = vsel %vm1360, %v1464, 0
        %v1627 = vsel %vm1360, %v1466, 0
        %v1629 = vsel %vm1360, %v1468, 0
        %v1631 = vsel %vm1360, %v1470, 0
        %v1633 = vsel %vm1360, %v1472, 0
        %v1635 = vsel %vm1360, %v1474, 0
        %v1637 = vsel %vm1360, %v1476, 0
        %v1639 = vsel %vm1360, %v1478, 0
        %1641 = vmatpush.bf16.msra.mxu0 %v1606
        %1642 = vmatpush.bf16.msra.mxu0 %v1605
        %1643 = vmatpush.bf16.msra.mxu0 %v1604
        %1644 = vmatpush.bf16.msra.mxu0 %v1603
        %1645 = vmatpush.bf16.msra.mxu0 %v1602
        %1646 = vmatpush.bf16.msra.mxu0 %v1601
        %1647 = vmatpush.bf16.msra.mxu0 %v1600
        %1648 = vmatpush.bf16.msra.mxu0 %v1599
        %1649 = vmatmul.bf16.gmra.mxu0 %v1506
        %v1650 = vpop.f32.mrf.mxu0
        %v1651 = vadd.f32 %v1561, %v1650
        %v1652 = vpop.f32.mrf.mxu0
        %v1653 = vadd.f32 %v1561, %v1652
        %1654 = vmatmul.bf16.gmra.mxu0 %v1509
        %v1655 = vpop.f32.mrf.mxu0
        %v1656 = vadd.f32 %v1561, %v1655
        %v1657 = vpop.f32.mrf.mxu0
        %v1658 = vadd.f32 %v1561, %v1657
        %1659 = vmatmul.bf16.gmra.mxu0 %v1512
        %v1660 = vpop.f32.mrf.mxu0
        %v1661 = vadd.f32 %v1561, %v1660
        %v1662 = vpop.f32.mrf.mxu0
        %v1663 = vadd.f32 %v1561, %v1662
        %1664 = vmatmul.bf16.gmra.mxu0 %v1515
        %v1665 = vpop.f32.mrf.mxu0
        %v1666 = vadd.f32 %v1561, %v1665
        %v1667 = vpop.f32.mrf.mxu0
        %v1668 = vadd.f32 %v1561, %v1667
        %1669 = vmatmul.bf16.gmra.mxu0 %v1518
        %v1670 = vpop.f32.mrf.mxu0
        %v1671 = vadd.f32 %v1561, %v1670
        %v1672 = vpop.f32.mrf.mxu0
        %v1673 = vadd.f32 %v1561, %v1672
        %1674 = vmatmul.bf16.gmra.mxu0 %v1521
        %v1675 = vpop.f32.mrf.mxu0
        %v1676 = vadd.f32 %v1561, %v1675
        %v1677 = vpop.f32.mrf.mxu0
        %v1678 = vadd.f32 %v1561, %v1677
        %1679 = vmatmul.bf16.gmra.mxu0 %v1524
        %v1680 = vpop.f32.mrf.mxu0
        %v1681 = vadd.f32 %v1561, %v1680
        %v1682 = vpop.f32.mrf.mxu0
        %v1683 = vadd.f32 %v1561, %v1682
        %1684 = vmatmul.bf16.gmra.mxu0 %v1527
        %v1685 = vpop.f32.mrf.mxu0
        %v1686 = vadd.f32 %v1561, %v1685
        %v1687 = vpop.f32.mrf.mxu0
        %v1688 = vadd.f32 %v1561, %v1687
        %1689 = vmatmul.bf16.gmra.mxu0 %v1530
        %v1690 = vpop.f32.mrf.mxu0
        %v1691 = vadd.f32 %v1561, %v1690
        %v1692 = vpop.f32.mrf.mxu0
        %v1693 = vadd.f32 %v1561, %v1692
        %1694 = vmatmul.bf16.gmra.mxu0 %v1533
        %v1695 = vpop.f32.mrf.mxu0
        %v1696 = vadd.f32 %v1561, %v1695
        %v1697 = vpop.f32.mrf.mxu0
        %v1698 = vadd.f32 %v1561, %v1697
        %1699 = vmatmul.bf16.gmra.mxu0 %v1536
        %v1700 = vpop.f32.mrf.mxu0
        %v1701 = vadd.f32 %v1561, %v1700
        %v1702 = vpop.f32.mrf.mxu0
        %v1703 = vadd.f32 %v1561, %v1702
        %1704 = vmatmul.bf16.gmra.mxu0 %v1539
        %v1705 = vpop.f32.mrf.mxu0
        %v1706 = vadd.f32 %v1561, %v1705
        %v1707 = vpop.f32.mrf.mxu0
        %v1708 = vadd.f32 %v1561, %v1707
        %1709 = vdwg.mxu0
        %1710 = vmatpush.bf16.msra.mxu0 0
        %1711 = vmatpush.bf16.msra.mxu0 0
        %1712 = vmatpush.bf16.msra.mxu0 0
        %1713 = vmatpush.bf16.msra.mxu0 0
        %1714 = vmatpush.bf16.msra.mxu0 0
        %1715 = vmatpush.bf16.msra.mxu0 0
        %1716 = vmatpush.bf16.msra.mxu0 0
        %1717 = vmatpush.bf16.msra.mxu0 %v1607
        %1718 = vmatmul.bf16.gmra.mxu0 %v1617
        %v1719 = vpop.f32.mrf.mxu0
        %v1720 = vadd.f32 %v1651, %v1719
        %v1721 = vpop.f32.mrf.mxu0
        %v1722 = vadd.f32 %v1653, %v1721
        %1723 = vmatmul.bf16.gmra.mxu0 %v1619
        %v1724 = vpop.f32.mrf.mxu0
        %v1725 = vadd.f32 %v1656, %v1724
        %v1726 = vpop.f32.mrf.mxu0
        %v1727 = vadd.f32 %v1658, %v1726
        %1728 = vmatmul.bf16.gmra.mxu0 %v1621
        %v1729 = vpop.f32.mrf.mxu0
        %v1730 = vadd.f32 %v1661, %v1729
        %v1731 = vpop.f32.mrf.mxu0
        %v1732 = vadd.f32 %v1663, %v1731
        %1733 = vmatmul.bf16.gmra.mxu0 %v1623
        %v1734 = vpop.f32.mrf.mxu0
        %v1735 = vadd.f32 %v1666, %v1734
        %v1736 = vpop.f32.mrf.mxu0
        %v1737 = vadd.f32 %v1668, %v1736
        %1738 = vmatmul.bf16.gmra.mxu0 %v1625
        %v1739 = vpop.f32.mrf.mxu0
        %v1740 = vadd.f32 %v1671, %v1739
        %v1741 = vpop.f32.mrf.mxu0
        %v1742 = vadd.f32 %v1673, %v1741
        %1743 = vmatmul.bf16.gmra.mxu0 %v1627
        %v1744 = vpop.f32.mrf.mxu0
        %v1745 = vadd.f32 %v1676, %v1744
        %v1746 = vpop.f32.mrf.mxu0
        %v1747 = vadd.f32 %v1678, %v1746
        %1748 = vmatmul.bf16.gmra.mxu0 %v1629
        %v1749 = vpop.f32.mrf.mxu0
        %v1750 = vadd.f32 %v1681, %v1749
        %v1751 = vpop.f32.mrf.mxu0
        %v1752 = vadd.f32 %v1683, %v1751
        %1753 = vmatmul.bf16.gmra.mxu0 %v1631
        %v1754 = vpop.f32.mrf.mxu0
        %v1755 = vadd.f32 %v1686, %v1754
        %v1756 = vpop.f32.mrf.mxu0
        %v1757 = vadd.f32 %v1688, %v1756
        %1758 = vmatmul.bf16.gmra.mxu0 %v1633
        %v1759 = vpop.f32.mrf.mxu0
        %v1760 = vadd.f32 %v1691, %v1759
        %v1761 = vpop.f32.mrf.mxu0
        %v1762 = vadd.f32 %v1693, %v1761
        %1763 = vmatmul.bf16.gmra.mxu0 %v1635
        %v1764 = vpop.f32.mrf.mxu0
        %v1765 = vadd.f32 %v1696, %v1764
        %v1766 = vpop.f32.mrf.mxu0
        %v1767 = vadd.f32 %v1698, %v1766
        %1768 = vmatmul.bf16.gmra.mxu0 %v1637
        %v1769 = vpop.f32.mrf.mxu0
        %v1770 = vadd.f32 %v1701, %v1769
        %v1771 = vpop.f32.mrf.mxu0
        %v1772 = vadd.f32 %v1703, %v1771
        %1773 = vmatmul.bf16.gmra.mxu0 %v1639
        %v1774 = vpop.f32.mrf.mxu0
        %v1775 = vadd.f32 %v1706, %v1774
        %v1776 = vpop.f32.mrf.mxu0
        %v1777 = vadd.f32 %v1708, %v1776
        %1778 = vdwg.mxu0
        %v1779 = vmax.f32 %v1720, 0.0
        %v1780 = vmax.f32 %v1722, 0.0
        %v1781 = vmax.f32 %v1725, 0.0
        %v1782 = vmax.f32 %v1727, 0.0
        %v1783 = vmax.f32 %v1730, 0.0
        %v1784 = vmax.f32 %v1732, 0.0
        %v1785 = vmax.f32 %v1735, 0.0
        %v1786 = vmax.f32 %v1737, 0.0
        %v1787 = vmax.f32 %v1740, 0.0
        %v1788 = vmax.f32 %v1742, 0.0
        %v1789 = vmax.f32 %v1745, 0.0
        %v1790 = vmax.f32 %v1747, 0.0
        %v1791 = vmax.f32 %v1750, 0.0
        %v1792 = vmax.f32 %v1752, 0.0
        %v1793 = vmax.f32 %v1755, 0.0
        %v1794 = vmax.f32 %v1757, 0.0
        %v1795 = vmax.f32 %v1760, 0.0
        %v1796 = vmax.f32 %v1762, 0.0
        %v1797 = vmax.f32 %v1765, 0.0
        %v1798 = vmax.f32 %v1767, 0.0
        %v1799 = vmax.f32 %v1770, 0.0
        %v1800 = vmax.f32 %v1772, 0.0
        %v1801 = vmax.f32 %v1775, 0.0
        %v1802 = vmax.f32 %v1777, 0.0
        %v1803 = vpack.c.bf16 %v1779, %v1779
        %v1804 = vpack.c.bf16 %v1780, %v1780
        %v1805 = vpack.c.bf16 %v1781, %v1781
        %v1806 = vpack.c.bf16 %v1782, %v1782
        %v1807 = vpack.c.bf16 %v1783, %v1783
        %v1808 = vpack.c.bf16 %v1784, %v1784
        %v1809 = vpack.c.bf16 %v1785, %v1785
        %v1810 = vpack.c.bf16 %v1786, %v1786
        %v1811 = vpack.c.bf16 %v1787, %v1787
        %v1812 = vpack.c.bf16 %v1788, %v1788
        %v1813 = vpack.c.bf16 %v1789, %v1789
        %v1814 = vpack.c.bf16 %v1790, %v1790
        %v1815 = vpack.c.bf16 %v1791, %v1791
        %v1816 = vpack.c.bf16 %v1792, %v1792
        %v1817 = vpack.c.bf16 %v1793, %v1793
        %v1818 = vpack.c.bf16 %v1794, %v1794
        %v1819 = vpack.c.bf16 %v1795, %v1795
        %v1820 = vpack.c.bf16 %v1796, %v1796
        %v1821 = vpack.c.bf16 %v1797, %v1797
        %v1822 = vpack.c.bf16 %v1798, %v1798
        %v1823 = vpack.c.bf16 %v1799, %v1799
        %v1824 = vpack.c.bf16 %v1800, %v1800
        %v1825 = vpack.c.bf16 %v1801, %v1801
        %v1826 = vpack.c.bf16 %v1802, %v1802
        %v1851 = vunpack.c.l.b16 %v1803
        %v1852 = vunpack.c.l.b16 %v1804
        %v1853 = vunpack.c.l.b16 %v1805
        %v1854 = vunpack.c.l.b16 %v1806
        %v1855 = vunpack.c.l.b16 %v1807
        %v1856 = vunpack.c.l.b16 %v1808
        %v1857 = vunpack.c.l.b16 %v1809
        %v1858 = vunpack.c.l.b16 %v1810
        %v1859 = vunpack.c.l.b16 %v1811
        %v1860 = vunpack.c.l.b16 %v1812
        %v1861 = vunpack.c.l.b16 %v1813
        %v1862 = vunpack.c.l.b16 %v1814
        %v1863 = vunpack.c.l.b16 %v1815
        %v1864 = vunpack.c.l.b16 %v1816
        %v1865 = vunpack.c.l.b16 %v1817
        %v1866 = vunpack.c.l.b16 %v1818
        %v1867 = vunpack.c.l.b16 %v1819
        %v1868 = vunpack.c.l.b16 %v1820
        %v1869 = vunpack.c.l.b16 %v1821
        %v1870 = vunpack.c.l.b16 %v1822
        %v1871 = vunpack.c.l.b16 %v1823
        %v1872 = vunpack.c.l.b16 %v1824
        %v1873 = vunpack.c.l.b16 %v1825
        %v1874 = vunpack.c.l.b16 %v1826
        %v1875 = vpack.c.b16 %v1852, %v1851
        %v1876 = vpack.c.b16 %v1854, %v1853
        %v1877 = vpack.c.b16 %v1856, %v1855
        %v1878 = vpack.c.b16 %v1858, %v1857
        %v1879 = vpack.c.b16 %v1860, %v1859
        %v1880 = vpack.c.b16 %v1862, %v1861
        %v1881 = vpack.c.b16 %v1864, %v1863
        %v1882 = vpack.c.b16 %v1866, %v1865
        %v1883 = vpack.c.b16 %v1868, %v1867
        %v1884 = vpack.c.b16 %v1870, %v1869
        %v1885 = vpack.c.b16 %v1872, %v1871
        %v1886 = vpack.c.b16 %v1874, %v1873
        %v1888 = vshrl.u32 %v1875, 16
        %v1890 = vshll.u32 %v1875, 16
        %v1892 = vrot.slane %v1890, 1
        %v1893 = vor.u32 %v1888, %v1892
        %v1895 = vshll.u32 %v1876, 16
        %v1897 = vrot.slane %v1895, 1
        %v1898 = vsel %vm485, %v1893, %v1897
        %v1899 = vshrl.u32 %v1876, 16
        %v1901 = vor.u32 %v1899, %v1897
        %v1903 = vshll.u32 %v1877, 16
        %v1905 = vrot.slane %v1903, 1
        %v1906 = vsel %vm485, %v1901, %v1905
        %v1907 = vshrl.u32 %v1877, 16
        %v1909 = vor.u32 %v1907, %v1905
        %v1911 = vshll.u32 %v1878, 16
        %v1913 = vrot.slane %v1911, 1
        %v1914 = vsel %vm485, %v1909, %v1913
        %v1915 = vshrl.u32 %v1878, 16
        %v1917 = vor.u32 %v1915, %v1913
        %v1919 = vshll.u32 %v1879, 16
        %v1921 = vrot.slane %v1919, 1
        %v1922 = vsel %vm485, %v1917, %v1921
        %v1923 = vshrl.u32 %v1879, 16
        %v1925 = vor.u32 %v1923, %v1921
        %v1927 = vshll.u32 %v1880, 16
        %v1929 = vrot.slane %v1927, 1
        %v1930 = vsel %vm485, %v1925, %v1929
        %v1931 = vshrl.u32 %v1880, 16
        %v1933 = vor.u32 %v1931, %v1929
        %v1935 = vshll.u32 %v1881, 16
        %v1937 = vrot.slane %v1935, 1
        %v1938 = vsel %vm485, %v1933, %v1937
        %v1939 = vshrl.u32 %v1881, 16
        %v1941 = vor.u32 %v1939, %v1937
        %v1943 = vshll.u32 %v1882, 16
        %v1945 = vrot.slane %v1943, 1
        %v1946 = vsel %vm485, %v1941, %v1945
        %v1947 = vshrl.u32 %v1882, 16
        %v1949 = vor.u32 %v1947, %v1945
        %v1951 = vshll.u32 %v1883, 16
        %v1953 = vrot.slane %v1951, 1
        %v1954 = vsel %vm485, %v1949, %v1953
        %v1955 = vshrl.u32 %v1883, 16
        %v1957 = vor.u32 %v1955, %v1953
        %v1959 = vshll.u32 %v1884, 16
        %v1961 = vrot.slane %v1959, 1
        %v1962 = vsel %vm485, %v1957, %v1961
        %v1963 = vshrl.u32 %v1884, 16
        %v1965 = vor.u32 %v1963, %v1961
        %v1967 = vshll.u32 %v1885, 16
        %v1969 = vrot.slane %v1967, 1
        %v1970 = vsel %vm485, %v1965, %v1969
        %v1971 = vshrl.u32 %v1885, 16
        %v1973 = vor.u32 %v1971, %v1969
        %v1975 = vshll.u32 %v1886, 16
        %v1977 = vrot.slane %v1975, 1
        %v1978 = vsel %vm485, %v1973, %v1977
        %v1979 = vshrl.u32 %v1886, 16
        %v1981 = vor.u32 %v1979, %v1977
        %1982 = vrot.lane.b32.xlu0 %v1898, 32
        %v1983 = vpop.permute.xlu0 %1982
        %1984 = vrot.lane.b32.xlu0 %v1906, 32
        %v1985 = vpop.permute.xlu0 %1984
        %1986 = vrot.lane.b32.xlu0 %v1914, 32
        %v1987 = vpop.permute.xlu0 %1986
        %1988 = vrot.lane.b32.xlu0 %v1922, 32
        %v1989 = vpop.permute.xlu0 %1988
        %1990 = vrot.lane.b32.xlu0 %v1930, 32
        %v1991 = vpop.permute.xlu0 %1990
        %1992 = vrot.lane.b32.xlu0 %v1938, 32
        %v1993 = vpop.permute.xlu0 %1992
        %1994 = vrot.lane.b32.xlu0 %v1946, 32
        %v1995 = vpop.permute.xlu0 %1994
        %1996 = vrot.lane.b32.xlu0 %v1954, 32
        %v1997 = vpop.permute.xlu0 %1996
        %1998 = vrot.lane.b32.xlu0 %v1962, 32
        %v1999 = vpop.permute.xlu0 %1998
        %2000 = vrot.lane.b32.xlu0 %v1970, 32
        %v2001 = vpop.permute.xlu0 %2000
        %2002 = vrot.lane.b32.xlu0 %v1978, 32
        %v2003 = vpop.permute.xlu0 %2002
        %2004 = vrot.lane.b32.xlu0 %v1981, 32
        %v2005 = vpop.permute.xlu0 %2004
        %v2006 = vrot.slane %v1875, 1
        %v2007 = vrot.slane %v1876, 1
        %v2008 = vsel %vm645, %v2006, %v2007
        %v2009 = vrot.slane %v1877, 1
        %v2010 = vsel %vm645, %v2007, %v2009
        %v2011 = vrot.slane %v1878, 1
        %v2012 = vsel %vm645, %v2009, %v2011
        %v2013 = vrot.slane %v1879, 1
        %v2014 = vsel %vm645, %v2011, %v2013
        %v2015 = vrot.slane %v1880, 1
        %v2016 = vsel %vm645, %v2013, %v2015
        %v2017 = vrot.slane %v1881, 1
        %v2018 = vsel %vm645, %v2015, %v2017
        %v2019 = vrot.slane %v1882, 1
        %v2020 = vsel %vm645, %v2017, %v2019
        %v2021 = vrot.slane %v1883, 1
        %v2022 = vsel %vm645, %v2019, %v2021
        %v2023 = vrot.slane %v1884, 1
        %v2024 = vsel %vm645, %v2021, %v2023
        %v2025 = vrot.slane %v1885, 1
        %v2026 = vsel %vm645, %v2023, %v2025
        %v2027 = vrot.slane %v1886, 1
        %v2028 = vsel %vm645, %v2025, %v2027
        %2029 = vrot.lane.b32.xlu0 %v2008, 64
        %v2030 = vpop.permute.xlu0 %2029
        %2031 = vrot.lane.b32.xlu0 %v2010, 64
        %v2032 = vpop.permute.xlu0 %2031
        %2033 = vrot.lane.b32.xlu0 %v2012, 64
        %v2034 = vpop.permute.xlu0 %2033
        %2035 = vrot.lane.b32.xlu0 %v2014, 64
        %v2036 = vpop.permute.xlu0 %2035
        %2037 = vrot.lane.b32.xlu0 %v2016, 64
        %v2038 = vpop.permute.xlu0 %2037
        %2039 = vrot.lane.b32.xlu0 %v2018, 64
        %v2040 = vpop.permute.xlu0 %2039
        %2041 = vrot.lane.b32.xlu0 %v2020, 64
        %v2042 = vpop.permute.xlu0 %2041
        %2043 = vrot.lane.b32.xlu0 %v2022, 64
        %v2044 = vpop.permute.xlu0 %2043
        %2045 = vrot.lane.b32.xlu0 %v2024, 64
        %v2046 = vpop.permute.xlu0 %2045
        %2047 = vrot.lane.b32.xlu0 %v2026, 64
        %v2048 = vpop.permute.xlu0 %2047
        %2049 = vrot.lane.b32.xlu0 %v2028, 64
        %v2050 = vpop.permute.xlu0 %2049
        %2051 = vrot.lane.b32.xlu0 %v2027, 64
        %v2052 = vpop.permute.xlu0 %2051
        %v2054 = vsel %vm1389, %v1875, %v1983
        %v2056 = vsel %vm1389, %v1876, %v1985
        %v2058 = vsel %vm1389, %v1877, %v1987
        %v2060 = vsel %vm1389, %v1878, %v1989
        %v2062 = vsel %vm1389, %v1879, %v1991
        %v2064 = vsel %vm1389, %v1880, %v1993
        %v2066 = vsel %vm1389, %v1881, %v1995
        %v2068 = vsel %vm1389, %v1882, %v1997
        %v2070 = vsel %vm1389, %v1883, %v1999
        %v2072 = vsel %vm1389, %v1884, %v2001
        %v2074 = vsel %vm1389, %v1885, %v2003
        %v2076 = vsel %vm1389, %v1886, %v2005
        %vm2077 = vcmask 523264
        %v2079 = vsel %vm2077, %v2054, %v2030
        %v2081 = vsel %vm2077, %v2056, %v2032
        %v2083 = vsel %vm2077, %v2058, %v2034
        %v2085 = vsel %vm2077, %v2060, %v2036
        %v2087 = vsel %vm2077, %v2062, %v2038
        %v2089 = vsel %vm2077, %v2064, %v2040
        %v2091 = vsel %vm2077, %v2066, %v2042
        %v2093 = vsel %vm2077, %v2068, %v2044
        %v2095 = vsel %vm2077, %v2070, %v2046
        %v2097 = vsel %vm2077, %v2072, %v2048
        %v2099 = vsel %vm2077, %v2074, %v2050
        %v2101 = vsel %vm2077, %v2076, %v2052
        %2112 = vrot.lane.b32.xlu0 %v2081, 96
        %v2113 = vpop.permute.xlu0 %2112
        %2114 = vrot.lane.b32.xlu0 %v2083, 96
        %v2115 = vpop.permute.xlu0 %2114
        %2116 = vrot.lane.b32.xlu0 %v2085, 96
        %v2117 = vpop.permute.xlu0 %2116
        %2118 = vrot.lane.b32.xlu0 %v2087, 96
        %v2119 = vpop.permute.xlu0 %2118
        %2120 = vrot.lane.b32.xlu0 %v2089, 96
        %v2121 = vpop.permute.xlu0 %2120
        %2122 = vrot.lane.b32.xlu0 %v2091, 96
        %v2123 = vpop.permute.xlu0 %2122
        %2124 = vrot.lane.b32.xlu0 %v2093, 96
        %v2125 = vpop.permute.xlu0 %2124
        %2126 = vrot.lane.b32.xlu0 %v2095, 96
        %v2127 = vpop.permute.xlu0 %2126
        %2128 = vrot.lane.b32.xlu0 %v2097, 96
        %v2129 = vpop.permute.xlu0 %2128
        %2130 = vrot.lane.b32.xlu0 %v2099, 96
        %v2131 = vpop.permute.xlu0 %2130
        %2133 = vrot.lane.b32.xlu0 %v2083, 64
        %v2134 = vpop.permute.xlu0 %2133
        %2135 = vrot.lane.b32.xlu0 %v2085, 64
        %v2136 = vpop.permute.xlu0 %2135
        %2137 = vrot.lane.b32.xlu0 %v2087, 64
        %v2138 = vpop.permute.xlu0 %2137
        %2139 = vrot.lane.b32.xlu0 %v2089, 64
        %v2140 = vpop.permute.xlu0 %2139
        %2141 = vrot.lane.b32.xlu0 %v2091, 64
        %v2142 = vpop.permute.xlu0 %2141
        %2143 = vrot.lane.b32.xlu0 %v2093, 64
        %v2144 = vpop.permute.xlu0 %2143
        %2145 = vrot.lane.b32.xlu0 %v2095, 64
        %v2146 = vpop.permute.xlu0 %2145
        %2147 = vrot.lane.b32.xlu0 %v2097, 64
        %v2148 = vpop.permute.xlu0 %2147
        %2149 = vrot.lane.b32.xlu0 %v2099, 64
        %v2150 = vpop.permute.xlu0 %2149
        %2151 = vrot.lane.b32.xlu0 %v2101, 64
        %v2152 = vpop.permute.xlu0 %2151
        %v2154 = vsel %vm1504, %v2079, %v2113
        %v2157 = vsel %vm1504, %v2081, %v2115
        %v2160 = vsel %vm1504, %v2083, %v2117
        %v2163 = vsel %vm1504, %v2085, %v2119
        %v2166 = vsel %vm1504, %v2087, %v2121
        %v2169 = vsel %vm1504, %v2089, %v2123
        %v2172 = vsel %vm1504, %v2091, %v2125
        %v2175 = vsel %vm1504, %v2093, %v2127
        %v2178 = vsel %vm1504, %v2095, %v2129
        %v2181 = vsel %vm1504, %v2097, %v2131
        %v2184 = vsel %vm2077, %v2113, %v2134
        %v2187 = vsel %vm2077, %v2115, %v2136
        %v2190 = vsel %vm2077, %v2117, %v2138
        %v2193 = vsel %vm2077, %v2119, %v2140
        %v2196 = vsel %vm2077, %v2121, %v2142
        %v2199 = vsel %vm2077, %v2123, %v2144
        %v2202 = vsel %vm2077, %v2125, %v2146
        %v2205 = vsel %vm2077, %v2127, %v2148
        %v2208 = vsel %vm2077, %v2129, %v2150
        %v2211 = vsel %vm2077, %v2131, %v2152
        %v2213 = vld [vmem:[#allocation6] sm:$0xf]
        %v2214 = vld [vmem:[#allocation6 + $0x4] sm:$0xf]
        %v2215 = vld [vmem:[#allocation6 + $0x8] sm:$0xf]
        %v2216 = vld [vmem:[#allocation6 + $0xc] sm:$0xf]
        %v2217 = vld [vmem:[#allocation6 + $0x10] sm:$0xf]
        %v2218 = vld [vmem:[#allocation6 + $0x14] sm:$0xf]
        %v2219 = vld [vmem:[#allocation6 + $0x18] sm:$0xf]
        %v2220 = vld [vmem:[#allocation6 + $0x1c] sm:$0xf]
        %v2221 = vld [vmem:[#allocation6 + $0x20] sm:$0xf]
        %v2222 = vld [vmem:[#allocation6 + $0x24] sm:$0xf]
        %v2223 = vld [vmem:[#allocation6 + $0x28] sm:$0xf]
        %v2224 = vld [vmem:[#allocation6 + $0x2c] sm:$0xf]
        %v2225 = vld [vmem:[#allocation6 + $0x30] sm:$0xf]
        %v2226 = vld [vmem:[#allocation6 + $0x34] sm:$0xf]
        %v2227 = vld [vmem:[#allocation6 + $0x38] sm:$0xf]
        %v2228 = vld [vmem:[#allocation6 + $0x3c] sm:$0xf]
        %v2229 = vld [vmem:[#allocation6 + $0x40] sm:$0xf]
        %v2230 = vld [vmem:[#allocation6 + $0x44] sm:$0xf]
        %v2231 = vld [vmem:[#allocation6 + $0x48] sm:$0xf]
        %v2232 = vld [vmem:[#allocation6 + $0x4c] sm:$0xf]
        %v2233 = vld [vmem:[#allocation6 + $0x50] sm:$0xf]
        %v2234 = vld [vmem:[#allocation6 + $0x54] sm:$0xf]
        %v2235 = vld [vmem:[#allocation6 + $0x58] sm:$0xf]
        %v2236 = vld [vmem:[#allocation6 + $0x5c] sm:$0xf]
        %v2237 = vld [vmem:[#allocation6 + $0x60] sm:$0xf]
        %v2238 = vld [vmem:[#allocation6 + $0x64] sm:$0xf]
        %v2239 = vld [vmem:[#allocation6 + $0x68] sm:$0xf]
        %v2240 = vld [vmem:[#allocation6 + $0x6c] sm:$0xf]
        %v2241 = vld [vmem:[#allocation6 + $0x70] sm:$0xf]
        %v2242 = vld [vmem:[#allocation6 + $0x74] sm:$0xf]
        %v2243 = vld [vmem:[#allocation6 + $0x78] sm:$0xf]
        %v2244 = vld [vmem:[#allocation6 + $0x7c] sm:$0xf]
        %v2245 = vld [vmem:[#allocation6 + $0x80] sm:$0xf]
        %v2246 = vld [vmem:[#allocation6 + $0x84] sm:$0xf]
        %v2247 = vld [vmem:[#allocation6 + $0x88] sm:$0xf]
        %v2248 = vld [vmem:[#allocation6 + $0x8c] sm:$0xf]
        %v2249 = vld [vmem:[#allocation7] sm:$0x1]
        %v2251 = vperm.slane %v2249, 0
        %v2289 = vunpack.c.l.b16 %v2213
        %v2290 = vunpack.c.l.b16 %v2214
        %v2291 = vunpack.c.l.b16 %v2215
        %v2292 = vunpack.c.l.b16 %v2216
        %v2293 = vunpack.c.l.b16 %v2217
        %v2294 = vunpack.c.l.b16 %v2218
        %v2295 = vunpack.c.l.b16 %v2219
        %v2296 = vunpack.c.l.b16 %v2220
        %v2297 = vunpack.c.l.b16 %v2221
        %v2298 = vunpack.c.l.b16 %v2222
        %v2299 = vunpack.c.l.b16 %v2223
        %v2300 = vunpack.c.l.b16 %v2224
        %v2301 = vunpack.c.l.b16 %v2225
        %v2302 = vunpack.c.l.b16 %v2226
        %v2303 = vunpack.c.l.b16 %v2227
        %v2304 = vunpack.c.l.b16 %v2228
        %v2305 = vunpack.c.l.b16 %v2229
        %v2306 = vunpack.c.l.b16 %v2230
        %v2307 = vunpack.c.l.b16 %v2231
        %v2308 = vunpack.c.l.b16 %v2232
        %v2309 = vunpack.c.l.b16 %v2233
        %v2310 = vunpack.c.l.b16 %v2234
        %v2311 = vunpack.c.l.b16 %v2235
        %v2312 = vunpack.c.l.b16 %v2236
        %v2313 = vunpack.c.l.b16 %v2237
        %v2314 = vunpack.c.l.b16 %v2238
        %v2315 = vunpack.c.l.b16 %v2239
        %v2316 = vunpack.c.l.b16 %v2240
        %v2317 = vunpack.c.l.b16 %v2241
        %v2318 = vunpack.c.l.b16 %v2242
        %v2319 = vunpack.c.l.b16 %v2243
        %v2320 = vunpack.c.l.b16 %v2244
        %v2321 = vunpack.c.l.b16 %v2245
        %v2322 = vunpack.c.l.b16 %v2246
        %v2323 = vunpack.c.l.b16 %v2247
        %v2324 = vunpack.c.l.b16 %v2248
        %v2325 = vpack.c.b16 %v2290, %v2289
        %v2326 = vpack.c.b16 %v2292, %v2291
        %v2327 = vpack.c.b16 %v2294, %v2293
        %v2328 = vpack.c.b16 %v2296, %v2295
        %v2329 = vpack.c.b16 %v2298, %v2297
        %v2330 = vpack.c.b16 %v2300, %v2299
        %v2331 = vpack.c.b16 %v2302, %v2301
        %v2332 = vpack.c.b16 %v2304, %v2303
        %v2333 = vpack.c.b16 %v2306, %v2305
        %v2334 = vpack.c.b16 %v2308, %v2307
        %v2335 = vpack.c.b16 %v2310, %v2309
        %v2336 = vpack.c.b16 %v2312, %v2311
        %v2337 = vpack.c.b16 %v2314, %v2313
        %v2338 = vpack.c.b16 %v2316, %v2315
        %v2339 = vpack.c.b16 %v2318, %v2317
        %v2340 = vpack.c.b16 %v2320, %v2319
        %v2341 = vpack.c.b16 %v2322, %v2321
        %v2342 = vpack.c.b16 %v2324, %v2323
        %v2361 = vsel %vm1389, %v2134, 0
        %v2363 = vsel %vm1389, %v2136, 0
        %v2365 = vsel %vm1389, %v2138, 0
        %v2367 = vsel %vm1389, %v2140, 0
        %v2369 = vsel %vm1389, %v2142, 0
        %v2371 = vsel %vm1389, %v2144, 0
        %v2373 = vsel %vm1389, %v2146, 0
        %v2375 = vsel %vm1389, %v2148, 0
        %v2377 = vsel %vm1389, %v2150, 0
        %v2379 = vsel %vm1389, %v2152, 0
        %2381 = vmatpush.bf16.msra.mxu0 %v2332
        %2382 = vmatpush.bf16.msra.mxu0 %v2331
        %2383 = vmatpush.bf16.msra.mxu0 %v2330
        %2384 = vmatpush.bf16.msra.mxu0 %v2329
        %2385 = vmatpush.bf16.msra.mxu0 %v2328
        %2386 = vmatpush.bf16.msra.mxu0 %v2327
        %2387 = vmatpush.bf16.msra.mxu0 %v2326
        %2388 = vmatpush.bf16.msra.mxu0 %v2325
        %2389 = vmatmul.bf16.gmra.mxu0 %v2154
        %v2390 = vpop.f32.mrf.mxu0
        %v2391 = vadd.f32 %v2251, %v2390
        %v2392 = vpop.f32.mrf.mxu0
        %v2393 = vadd.f32 %v2251, %v2392
        %2394 = vmatmul.bf16.gmra.mxu0 %v2157
        %v2395 = vpop.f32.mrf.mxu0
        %v2396 = vadd.f32 %v2251, %v2395
        %v2397 = vpop.f32.mrf.mxu0
        %v2398 = vadd.f32 %v2251, %v2397
        %2399 = vmatmul.bf16.gmra.mxu0 %v2160
        %v2400 = vpop.f32.mrf.mxu0
        %v2401 = vadd.f32 %v2251, %v2400
        %v2402 = vpop.f32.mrf.mxu0
        %v2403 = vadd.f32 %v2251, %v2402
        %2404 = vmatmul.bf16.gmra.mxu0 %v2163
        %v2405 = vpop.f32.mrf.mxu0
        %v2406 = vadd.f32 %v2251, %v2405
        %v2407 = vpop.f32.mrf.mxu0
        %v2408 = vadd.f32 %v2251, %v2407
        %2409 = vmatmul.bf16.gmra.mxu0 %v2166
        %v2410 = vpop.f32.mrf.mxu0
        %v2411 = vadd.f32 %v2251, %v2410
        %v2412 = vpop.f32.mrf.mxu0
        %v2413 = vadd.f32 %v2251, %v2412
        %2414 = vmatmul.bf16.gmra.mxu0 %v2169
        %v2415 = vpop.f32.mrf.mxu0
        %v2416 = vadd.f32 %v2251, %v2415
        %v2417 = vpop.f32.mrf.mxu0
        %v2418 = vadd.f32 %v2251, %v2417
        %2419 = vmatmul.bf16.gmra.mxu0 %v2172
        %v2420 = vpop.f32.mrf.mxu0
        %v2421 = vadd.f32 %v2251, %v2420
        %v2422 = vpop.f32.mrf.mxu0
        %v2423 = vadd.f32 %v2251, %v2422
        %2424 = vmatmul.bf16.gmra.mxu0 %v2175
        %v2425 = vpop.f32.mrf.mxu0
        %v2426 = vadd.f32 %v2251, %v2425
        %v2427 = vpop.f32.mrf.mxu0
        %v2428 = vadd.f32 %v2251, %v2427
        %2429 = vmatmul.bf16.gmra.mxu0 %v2178
        %v2430 = vpop.f32.mrf.mxu0
        %v2431 = vadd.f32 %v2251, %v2430
        %v2432 = vpop.f32.mrf.mxu0
        %v2433 = vadd.f32 %v2251, %v2432
        %2434 = vmatmul.bf16.gmra.mxu0 %v2181
        %v2435 = vpop.f32.mrf.mxu0
        %v2436 = vadd.f32 %v2251, %v2435
        %v2437 = vpop.f32.mrf.mxu0
        %v2438 = vadd.f32 %v2251, %v2437
        %2439 = vdwg.mxu0
        %2440 = vmatpush.bf16.msra.mxu0 %v2340
        %2441 = vmatpush.bf16.msra.mxu0 %v2339
        %2442 = vmatpush.bf16.msra.mxu0 %v2338
        %2443 = vmatpush.bf16.msra.mxu0 %v2337
        %2444 = vmatpush.bf16.msra.mxu0 %v2336
        %2445 = vmatpush.bf16.msra.mxu0 %v2335
        %2446 = vmatpush.bf16.msra.mxu0 %v2334
        %2447 = vmatpush.bf16.msra.mxu0 %v2333
        %2448 = vmatmul.bf16.gmra.mxu0 %v2184
        %v2449 = vpop.f32.mrf.mxu0
        %v2450 = vadd.f32 %v2391, %v2449
        %v2451 = vpop.f32.mrf.mxu0
        %v2452 = vadd.f32 %v2393, %v2451
        %2453 = vmatmul.bf16.gmra.mxu0 %v2187
        %v2454 = vpop.f32.mrf.mxu0
        %v2455 = vadd.f32 %v2396, %v2454
        %v2456 = vpop.f32.mrf.mxu0
        %v2457 = vadd.f32 %v2398, %v2456
        %2458 = vmatmul.bf16.gmra.mxu0 %v2190
        %v2459 = vpop.f32.mrf.mxu0
        %v2460 = vadd.f32 %v2401, %v2459
        %v2461 = vpop.f32.mrf.mxu0
        %v2462 = vadd.f32 %v2403, %v2461
        %2463 = vmatmul.bf16.gmra.mxu0 %v2193
        %v2464 = vpop.f32.mrf.mxu0
        %v2465 = vadd.f32 %v2406, %v2464
        %v2466 = vpop.f32.mrf.mxu0
        %v2467 = vadd.f32 %v2408, %v2466
        %2468 = vmatmul.bf16.gmra.mxu0 %v2196
        %v2469 = vpop.f32.mrf.mxu0
        %v2470 = vadd.f32 %v2411, %v2469
        %v2471 = vpop.f32.mrf.mxu0
        %v2472 = vadd.f32 %v2413, %v2471
        %2473 = vmatmul.bf16.gmra.mxu0 %v2199
        %v2474 = vpop.f32.mrf.mxu0
        %v2475 = vadd.f32 %v2416, %v2474
        %v2476 = vpop.f32.mrf.mxu0
        %v2477 = vadd.f32 %v2418, %v2476
        %2478 = vmatmul.bf16.gmra.mxu0 %v2202
        %v2479 = vpop.f32.mrf.mxu0
        %v2480 = vadd.f32 %v2421, %v2479
        %v2481 = vpop.f32.mrf.mxu0
        %v2482 = vadd.f32 %v2423, %v2481
        %2483 = vmatmul.bf16.gmra.mxu0 %v2205
        %v2484 = vpop.f32.mrf.mxu0
        %v2485 = vadd.f32 %v2426, %v2484
        %v2486 = vpop.f32.mrf.mxu0
        %v2487 = vadd.f32 %v2428, %v2486
        %2488 = vmatmul.bf16.gmra.mxu0 %v2208
        %v2489 = vpop.f32.mrf.mxu0
        %v2490 = vadd.f32 %v2431, %v2489
        %v2491 = vpop.f32.mrf.mxu0
        %v2492 = vadd.f32 %v2433, %v2491
        %2493 = vmatmul.bf16.gmra.mxu0 %v2211
        %v2494 = vpop.f32.mrf.mxu0
        %v2495 = vadd.f32 %v2436, %v2494
        %v2496 = vpop.f32.mrf.mxu0
        %v2497 = vadd.f32 %v2438, %v2496
        %2498 = vdwg.mxu0
        %2499 = vmatpush.bf16.msra.mxu0 0
        %2500 = vmatpush.bf16.msra.mxu0 0
        %2501 = vmatpush.bf16.msra.mxu0 0
        %2502 = vmatpush.bf16.msra.mxu0 0
        %2503 = vmatpush.bf16.msra.mxu0 0
        %2504 = vmatpush.bf16.msra.mxu0 0
        %2505 = vmatpush.bf16.msra.mxu0 %v2342
        %2506 = vmatpush.bf16.msra.mxu0 %v2341
        %2507 = vmatmul.bf16.gmra.mxu0 %v2361
        %v2508 = vpop.f32.mrf.mxu0
        %v2509 = vadd.f32 %v2450, %v2508
        %v2510 = vpop.f32.mrf.mxu0
        %v2511 = vadd.f32 %v2452, %v2510
        %2512 = vmatmul.bf16.gmra.mxu0 %v2363
        %v2513 = vpop.f32.mrf.mxu0
        %v2514 = vadd.f32 %v2455, %v2513
        %v2515 = vpop.f32.mrf.mxu0
        %v2516 = vadd.f32 %v2457, %v2515
        %2517 = vmatmul.bf16.gmra.mxu0 %v2365
        %v2518 = vpop.f32.mrf.mxu0
        %v2519 = vadd.f32 %v2460, %v2518
        %v2520 = vpop.f32.mrf.mxu0
        %v2521 = vadd.f32 %v2462, %v2520
        %2522 = vmatmul.bf16.gmra.mxu0 %v2367
        %v2523 = vpop.f32.mrf.mxu0
        %v2524 = vadd.f32 %v2465, %v2523
        %v2525 = vpop.f32.mrf.mxu0
        %v2526 = vadd.f32 %v2467, %v2525
        %2527 = vmatmul.bf16.gmra.mxu0 %v2369
        %v2528 = vpop.f32.mrf.mxu0
        %v2529 = vadd.f32 %v2470, %v2528
        %v2530 = vpop.f32.mrf.mxu0
        %v2531 = vadd.f32 %v2472, %v2530
        %2532 = vmatmul.bf16.gmra.mxu0 %v2371
        %v2533 = vpop.f32.mrf.mxu0
        %v2534 = vadd.f32 %v2475, %v2533
        %v2535 = vpop.f32.mrf.mxu0
        %v2536 = vadd.f32 %v2477, %v2535
        %2537 = vmatmul.bf16.gmra.mxu0 %v2373
        %v2538 = vpop.f32.mrf.mxu0
        %v2539 = vadd.f32 %v2480, %v2538
        %v2540 = vpop.f32.mrf.mxu0
        %v2541 = vadd.f32 %v2482, %v2540
        %2542 = vmatmul.bf16.gmra.mxu0 %v2375
        %v2543 = vpop.f32.mrf.mxu0
        %v2544 = vadd.f32 %v2485, %v2543
        %v2545 = vpop.f32.mrf.mxu0
        %v2546 = vadd.f32 %v2487, %v2545
        %2547 = vmatmul.bf16.gmra.mxu0 %v2377
        %v2548 = vpop.f32.mrf.mxu0
        %v2549 = vadd.f32 %v2490, %v2548
        %v2550 = vpop.f32.mrf.mxu0
        %v2551 = vadd.f32 %v2492, %v2550
        %2552 = vmatmul.bf16.gmra.mxu0 %v2379
        %v2553 = vpop.f32.mrf.mxu0
        %v2554 = vadd.f32 %v2495, %v2553
        %v2555 = vpop.f32.mrf.mxu0
        %v2556 = vadd.f32 %v2497, %v2555
        %2557 = vdwg.mxu0
        %v2558 = vmax.f32 %v2509, 0.0
        %v2559 = vmax.f32 %v2511, 0.0
        %v2560 = vmax.f32 %v2514, 0.0
        %v2561 = vmax.f32 %v2516, 0.0
        %v2562 = vmax.f32 %v2519, 0.0
        %v2563 = vmax.f32 %v2521, 0.0
        %v2564 = vmax.f32 %v2524, 0.0
        %v2565 = vmax.f32 %v2526, 0.0
        %v2566 = vmax.f32 %v2529, 0.0
        %v2567 = vmax.f32 %v2531, 0.0
        %v2568 = vmax.f32 %v2534, 0.0
        %v2569 = vmax.f32 %v2536, 0.0
        %v2570 = vmax.f32 %v2539, 0.0
        %v2571 = vmax.f32 %v2541, 0.0
        %v2572 = vmax.f32 %v2544, 0.0
        %v2573 = vmax.f32 %v2546, 0.0
        %v2574 = vmax.f32 %v2549, 0.0
        %v2575 = vmax.f32 %v2551, 0.0
        %v2576 = vmax.f32 %v2554, 0.0
        %v2577 = vmax.f32 %v2556, 0.0
        %2578 = vst [vmem:[%s339] sm:$0xff] %v2558
        %2579 = vst [vmem:[%s339 + $0x8] sm:$0xff] %v2559
        %2580 = vst [vmem:[%s339 + $0x10] sm:$0xff] %v2560
        %2581 = vst [vmem:[%s339 + $0x18] sm:$0xff] %v2561
        %2582 = vst [vmem:[%s339 + $0x20] sm:$0xff] %v2562
        %2583 = vst [vmem:[%s339 + $0x28] sm:$0xff] %v2563
        %2584 = vst [vmem:[%s339 + $0x30] sm:$0xff] %v2564
        %2585 = vst [vmem:[%s339 + $0x38] sm:$0xff] %v2565
        %2586 = vst [vmem:[%s339 + $0x40] sm:$0xff] %v2566
        %2587 = vst [vmem:[%s339 + $0x48] sm:$0xff] %v2567
        %2588 = vst [vmem:[%s339 + $0x50] sm:$0xff] %v2568
        %2589 = vst [vmem:[%s339 + $0x58] sm:$0xff] %v2569
        %2590 = vst [vmem:[%s339 + $0x60] sm:$0xff] %v2570
        %2591 = vst [vmem:[%s339 + $0x68] sm:$0xff] %v2571
        %2592 = vst [vmem:[%s339 + $0x70] sm:$0xff] %v2572
        %2593 = vst [vmem:[%s339 + $0x78] sm:$0xff] %v2573
        %2594 = vst [vmem:[%s339 + $0x80] sm:$0xff] %v2574
        %2595 = vst [vmem:[%s339 + $0x88] sm:$0xff] %v2575
        %2596 = vst [vmem:[%s339 + $0x90] sm:$0xff] %v2576
        %2597 = vst [vmem:[%s339 + $0x98] sm:$0x3] %v2577
        %p2598 = scmp.lt.s32.totalorder %s21, 1
        %s2599 = scalar_select %p2598, %s21, 1
        %s2600 = smul.addr %s2599, 20
        %s2601 = smul.addr %s2600, 8
        %s2602 = scalar_lea.vmem %s7, %s2601
        // Predicated region
        $region65: #{feature_extractor_forward.2} parent=47 // pred_check
          %p2603 = pneg %p191
        $region66: #{feature_extractor_forward.2} parent=47 // pred_check_branch
          %2605 = sbr.rel (%p2603) target = $region68
        $region67: #{feature_extractor_forward.2} parent=47 // pred_region
          _
        $region68: #{feature_extractor_forward.2} parent=47 // pred_fallthru
          _
      $region48: #{feature_extractor_forward.2} parent=5 // pred_fallthru
        _
      %p2606 = scmp.le.s32.totalorder 2, %s16
      // Predicated region
      $region69: #{feature_extractor_forward.2} parent=5 // pred_check
        %p2607 = pneg %p2606
      $region70: #{feature_extractor_forward.2} parent=5 // pred_check_branch
        %2609 = sbr.rel (%p2607) target = $region72
      $region71: #{feature_extractor_forward.2} parent=5 // pred_region
        %s2610 = ssub.s32 %s16, 2
        // Predicated region
        $region73: #{feature_extractor_forward.2} parent=71 // pred_check
          %p2611 = pneg %p197
        $region74: #{feature_extractor_forward.2} parent=71 // pred_check_branch
          %2613 = sbr.rel (%p2611) target = $region76
        $region75: #{feature_extractor_forward.2} parent=71 // pred_region
          %p2614 = scmp.lt.s32.totalorder %s22, 1
          %s2615 = scalar_select %p2614, %s22, 1
          %s2616 = smul.addr %s2615, 20
          %s2617 = smul.addr %s2616, 8
          %s2618 = scalar_lea.vmem %s7, %s2617
        $region76: #{feature_extractor_forward.2} parent=71 // pred_fallthru
          _
      $region72: #{feature_extractor_forward.2} parent=5 // pred_fallthru
        _
    $region6: #{feature_extractor_forward.2} parent=1 // loop_footer
      %s20 = sadd.s32 1, %s16
    $region7: #{feature_extractor_forward.2} parent=1 // loop_footer_branch
      %15 = sbr.rel target = $region3
    $region8: #{feature_extractor_forward.2} parent=1 // loop_exit
      _
    %2619 = vsyncpa [#allocation3], 1
    %s2620 = scalar_lea.sflag [#allocation3], 1
    %2621 = vsyncpa %s2620, 1
    %2622 = vsyncpa [#allocation5], 1
    %2623 = vsyncpa [#allocation8], 1

// kernel: feature_extractor_forward.3
$region0: #{feature_extractor_forward.3}
  #allocation0 [shape = 'u32[]', space=smem, size = 0x4, offset = 0x4, fixed_abs, tag = 'smem constant byte address 0x4 - core index']
  #allocation1 [shape = 'u32[72,128]{1,0:T(1,128)}', space=vmem, size = 0x9000, scoped, tag = 'internal scratch']
  %s0 = inlined_call_operand.vmem [shape: f32[2,19712], index: 0, kind: input, shape index: {}]
  %s1 = inlined_call_operand.vmem [shape: bf16[19712,32], index: 1, kind: input, shape index: {}]
  %s2 = inlined_call_operand.vmem [shape: f32[1,32], index: 2, kind: input, shape index: {}]
  %s3 = inlined_call_operand.hbm [shape: f32[2,32], index: 3, kind: output, shape index: {}]
  %s4 = sld [smem:[#allocation0]]
  $region22: #{feature_extractor_forward.3} parent=0
    _
  %s6 = ssub.s32 1, %s4
  %s7 = scalar_select 0, %s6, %s4
  $region1: #{feature_extractor_forward.3} parent=0
    #allocation2 [shape = 'u8[1024]{0}', space=vmem, size = 0x400, scoped, tag = 'output window, operand 0, single buffered']
    #allocation3 [shape = 's32[1]{0}', space=sflag, size = 0x4, scoped, tag = 'scoped memory for feature_extractor_forward.3']
    %8 = vsyncpa [#allocation3], 0
    // Predicated region
    $region2: #{feature_extractor_forward.3} parent=1 // pred_check
      _
    $region3: #{feature_extractor_forward.3} parent=1 // pred_check_branch
      %10 = sbr.rel (0) target = $region5
    $region4: #{feature_extractor_forward.3} parent=1 // pred_region
      _
    $region5: #{feature_extractor_forward.3} parent=1 // pred_fallthru
      _
    // Predicated region
    $region6: #{feature_extractor_forward.3} parent=1 // pred_check
      _
    $region7: #{feature_extractor_forward.3} parent=1 // pred_check_branch
      %12 = sbr.rel (0) target = $region9
    $region8: #{feature_extractor_forward.3} parent=1 // pred_region
      _
    $region9: #{feature_extractor_forward.3} parent=1 // pred_fallthru
      _
    // Predicated region
    $region10: #{feature_extractor_forward.3} parent=1 // pred_check
      _
    $region11: #{feature_extractor_forward.3} parent=1 // pred_check_branch
      %14 = sbr.rel (0) target = $region13
    $region12: #{feature_extractor_forward.3} parent=1 // pred_region
      _
    $region13: #{feature_extractor_forward.3} parent=1 // pred_fallthru
      _
    %v15 = vld [vmem:[%s0] sm:$0xff]
    %v16 = vld [vmem:[%s0 + $0x8] sm:$0xff]
    %v17 = vld [vmem:[%s0 + $0x10] sm:$0xff]
    %v18 = vld [vmem:[%s0 + $0x18] sm:$0xff]
    %v19 = vld [vmem:[%s0 + $0x20] sm:$0xff]
    %v20 = vld [vmem:[%s0 + $0x28] sm:$0xff]
    %v21 = vld [vmem:[%s0 + $0x30] sm:$0xff]
    %v22 = vld [vmem:[%s0 + $0x38] sm:$0xff]
    %v23 = vld [vmem:[%s0 + $0x40] sm:$0xff]
    %v24 = vld [vmem:[%s0 + $0x48] sm:$0xff]
    %v25 = vld [vmem:[%s0 + $0x50] sm:$0xff]
    %v26 = vld [vmem:[%s0 + $0x58] sm:$0xff]
    %v27 = vld [vmem:[%s0 + $0x60] sm:$0xff]
    %v28 = vld [vmem:[%s0 + $0x68] sm:$0xff]
    %v29 = vld [vmem:[%s0 + $0x70] sm:$0xff]
    %v30 = vld [vmem:[%s0 + $0x78] sm:$0xff]
    %v31 = vld [vmem:[%s0 + $0x80] sm:$0xff]
    %v32 = vld [vmem:[%s0 + $0x88] sm:$0xff]
    %v33 = vld [vmem:[%s0 + $0x90] sm:$0xff]
    %v34 = vld [vmem:[%s0 + $0x98] sm:$0xff]
    %v35 = vld [vmem:[%s0 + $0xa0] sm:$0xff]
    %v36 = vld [vmem:[%s0 + $0xa8] sm:$0xff]
    %v37 = vld [vmem:[%s0 + $0xb0] sm:$0xff]
    %v38 = vld [vmem:[%s0 + $0xb8] sm:$0xff]
    %v39 = vld [vmem:[%s0 + $0xc0] sm:$0xff]
    %v40 = vld [vmem:[%s0 + $0xc8] sm:$0xff]
    %v41 = vld [vmem:[%s0 + $0xd0] sm:$0xff]
    %v42 = vld [vmem:[%s0 + $0xd8] sm:$0xff]
    %v43 = vld [vmem:[%s0 + $0xe0] sm:$0xff]
    %v44 = vld [vmem:[%s0 + $0xe8] sm:$0xff]
    %v45 = vld [vmem:[%s0 + $0xf0] sm:$0xff]
    %v46 = vld [vmem:[%s0 + $0xf8] sm:$0xff]
    %v47 = vld [vmem:[%s0 + $0x100] sm:$0xff]
    %v48 = vld [vmem:[%s0 + $0x108] sm:$0xff]
    %v49 = vld [vmem:[%s0 + $0x110] sm:$0xff]
    %v50 = vld [vmem:[%s0 + $0x118] sm:$0xff]
    %v51 = vld [vmem:[%s0 + $0x120] sm:$0xff]
    %v52 = vld [vmem:[%s0 + $0x128] sm:$0xff]
    %v53 = vld [vmem:[%s0 + $0x130] sm:$0xf]
    %93 = vst [vmem:[#allocation1] ss:$4 sm:$0xff] %v15
    %s94 = scalar_lea.vmem [#allocation1], 32
    %95 = vst [vmem:[%s94] ss:$4 sm:$0xff] %v16
    %v96 = vld.sshfl [vmem:[#allocation1] sm:$0xff pattern:$0x73625140]
    %v97 = vld.sshfl [vmem:[#allocation1 + $0x8] sm:$0xff pattern:$0x73625140]
    %v98 = vld.sshfl [vmem:[#allocation1 + $0x10] sm:$0xff pattern:$0x73625140]
    %v99 = vld.sshfl [vmem:[#allocation1 + $0x18] sm:$0xff pattern:$0x73625140]
    %v100 = vld.sshfl [vmem:[#allocation1 + $0x20] sm:$0xff pattern:$0x73625140]
    %v101 = vld.sshfl [vmem:[#allocation1 + $0x28] sm:$0xff pattern:$0x73625140]
    %v102 = vld.sshfl [vmem:[#allocation1 + $0x30] sm:$0xff pattern:$0x73625140]
    %v103 = vld.sshfl [vmem:[#allocation1 + $0x38] sm:$0xff pattern:$0x73625140]
    %104 = vst [vmem:[#allocation1] ss:$4 sm:$0xff] %v17
    %105 = vst [vmem:[%s94] ss:$4 sm:$0xff] %v18
    %v106 = vld.sshfl [vmem:[#allocation1] sm:$0xff pattern:$0x73625140]
    %v107 = vld.sshfl [vmem:[#allocation1 + $0x8] sm:$0xff pattern:$0x73625140]
    %v108 = vld.sshfl [vmem:[#allocation1 + $0x10] sm:$0xff pattern:$0x73625140]
    %v109 = vld.sshfl [vmem:[#allocation1 + $0x18] sm:$0xff pattern:$0x73625140]
    %v110 = vld.sshfl [vmem:[#allocation1 + $0x20] sm:$0xff pattern:$0x73625140]
    %v111 = vld.sshfl [vmem:[#allocation1 + $0x28] sm:$0xff pattern:$0x73625140]
    %v112 = vld.sshfl [vmem:[#allocation1 + $0x30] sm:$0xff pattern:$0x73625140]
    %v113 = vld.sshfl [vmem:[#allocation1 + $0x38] sm:$0xff pattern:$0x73625140]
    %114 = vst [vmem:[#allocation1] ss:$4 sm:$0xff] %v19
    %115 = vst [vmem:[%s94] ss:$4 sm:$0xff] %v20
    %v116 = vld.sshfl [vmem:[#allocation1] sm:$0xff pattern:$0x73625140]
    %v117 = vld.sshfl [vmem:[#allocation1 + $0x8] sm:$0xff pattern:$0x73625140]
    %v118 = vld.sshfl [vmem:[#allocation1 + $0x10] sm:$0xff pattern:$0x73625140]
    %v119 = vld.sshfl [vmem:[#allocation1 + $0x18] sm:$0xff pattern:$0x73625140]
    %v120 = vld.sshfl [vmem:[#allocation1 + $0x20] sm:$0xff pattern:$0x73625140]
    %v121 = vld.sshfl [vmem:[#allocation1 + $0x28] sm:$0xff pattern:$0x73625140]
    %v122 = vld.sshfl [vmem:[#allocation1 + $0x30] sm:$0xff pattern:$0x73625140]
    %v123 = vld.sshfl [vmem:[#allocation1 + $0x38] sm:$0xff pattern:$0x73625140]
    %124 = vst [vmem:[#allocation1] ss:$4 sm:$0xff] %v21
    %125 = vst [vmem:[%s94] ss:$4 sm:$0xff] %v22
    %v126 = vld.sshfl [vmem:[#allocation1] sm:$0xff pattern:$0x73625140]
    %v127 = vld.sshfl [vmem:[#allocation1 + $0x8] sm:$0xff pattern:$0x73625140]
    %v128 = vld.sshfl [vmem:[#allocation1 + $0x10] sm:$0xff pattern:$0x73625140]
    %v129 = vld.sshfl [vmem:[#allocation1 + $0x18] sm:$0xff pattern:$0x73625140]
    %v130 = vld.sshfl [vmem:[#allocation1 + $0x20] sm:$0xff pattern:$0x73625140]
    %v131 = vld.sshfl [vmem:[#allocation1 + $0x28] sm:$0xff pattern:$0x73625140]
    %v132 = vld.sshfl [vmem:[#allocation1 + $0x30] sm:$0xff pattern:$0x73625140]
    %v133 = vld.sshfl [vmem:[#allocation1 + $0x38] sm:$0xff pattern:$0x73625140]
    %134 = vst [vmem:[#allocation1] ss:$4 sm:$0xff] %v23
    %135 = vst [vmem:[%s94] ss:$4 sm:$0xff] %v24
    %v136 = vld.sshfl [vmem:[#allocation1] sm:$0xff pattern:$0x73625140]
    %v137 = vld.sshfl [vmem:[#allocation1 + $0x8] sm:$0xff pattern:$0x73625140]
    %v138 = vld.sshfl [vmem:[#allocation1 + $0x10] sm:$0xff pattern:$0x73625140]
    %v139 = vld.sshfl [vmem:[#allocation1 + $0x18] sm:$0xff pattern:$0x73625140]
    %v140 = vld.sshfl [vmem:[#allocation1 + $0x20] sm:$0xff pattern:$0x73625140]
    %v141 = vld.sshfl [vmem:[#allocation1 + $0x28] sm:$0xff pattern:$0x73625140]
    %v142 = vld.sshfl [vmem:[#allocation1 + $0x30] sm:$0xff pattern:$0x73625140]
    %v143 = vld.sshfl [vmem:[#allocation1 + $0x38] sm:$0xff pattern:$0x73625140]
    %144 = vst [vmem:[#allocation1] ss:$4 sm:$0xff] %v25
    %145 = vst [vmem:[%s94] ss:$4 sm:$0xff] %v26
    %v146 = vld.sshfl [vmem:[#allocation1] sm:$0xff pattern:$0x73625140]
    %v147 = vld.sshfl [vmem:[#allocation1 + $0x8] sm:$0xff pattern:$0x73625140]
    %v148 = vld.sshfl [vmem:[#allocation1 + $0x10] sm:$0xff pattern:$0x73625140]
    %v149 = vld.sshfl [vmem:[#allocation1 + $0x18] sm:$0xff pattern:$0x73625140]
    %v150 = vld.sshfl [vmem:[#allocation1 + $0x20] sm:$0xff pattern:$0x73625140]
    %v151 = vld.sshfl [vmem:[#allocation1 + $0x28] sm:$0xff pattern:$0x73625140]
    %v152 = vld.sshfl [vmem:[#allocation1 + $0x30] sm:$0xff pattern:$0x73625140]
    %v153 = vld.sshfl [vmem:[#allocation1 + $0x38] sm:$0xff pattern:$0x73625140]
    %154 = vst [vmem:[#allocation1] ss:$4 sm:$0xff] %v27
    %155 = vst [vmem:[%s94] ss:$4 sm:$0xff] %v28
    %v156 = vld.sshfl [vmem:[#allocation1] sm:$0xff pattern:$0x73625140]
    %v157 = vld.sshfl [vmem:[#allocation1 + $0x8] sm:$0xff pattern:$0x73625140]
    %v158 = vld.sshfl [vmem:[#allocation1 + $0x10] sm:$0xff pattern:$0x73625140]
    %v159 = vld.sshfl [vmem:[#allocation1 + $0x18] sm:$0xff pattern:$0x73625140]
    %v160 = vld.sshfl [vmem:[#allocation1 + $0x20] sm:$0xff pattern:$0x73625140]
    %v161 = vld.sshfl [vmem:[#allocation1 + $0x28] sm:$0xff pattern:$0x73625140]
    %v162 = vld.sshfl [vmem:[#allocation1 + $0x30] sm:$0xff pattern:$0x73625140]
    %v163 = vld.sshfl [vmem:[#allocation1 + $0x38] sm:$0xff pattern:$0x73625140]
    %164 = vst [vmem:[#allocation1] ss:$4 sm:$0xff] %v29
    %165 = vst [vmem:[%s94] ss:$4 sm:$0xff] %v30
    %v166 = vld.sshfl [vmem:[#allocation1] sm:$0xff pattern:$0x73625140]
    %v167 = vld.sshfl [vmem:[#allocation1 + $0x8] sm:$0xff pattern:$0x73625140]
    %v168 = vld.sshfl [vmem:[#allocation1 + $0x10] sm:$0xff pattern:$0x73625140]
    %v169 = vld.sshfl [vmem:[#allocation1 + $0x18] sm:$0xff pattern:$0x73625140]
    %v170 = vld.sshfl [vmem:[#allocation1 + $0x20] sm:$0xff pattern:$0x73625140]
    %v171 = vld.sshfl [vmem:[#allocation1 + $0x28] sm:$0xff pattern:$0x73625140]
    %v172 = vld.sshfl [vmem:[#allocation1 + $0x30] sm:$0xff pattern:$0x73625140]
    %v173 = vld.sshfl [vmem:[#allocation1 + $0x38] sm:$0xff pattern:$0x73625140]
    %174 = vst [vmem:[#allocation1] ss:$4 sm:$0xff] %v31
    %175 = vst [vmem:[%s94] ss:$4 sm:$0xff] %v32
    %v176 = vld.sshfl [vmem:[#allocation1] sm:$0xff pattern:$0x73625140]
    %v177 = vld.sshfl [vmem:[#allocation1 + $0x8] sm:$0xff pattern:$0x73625140]
    %v178 = vld.sshfl [vmem:[#allocation1 + $0x10] sm:$0xff pattern:$0x73625140]
    %v179 = vld.sshfl [vmem:[#allocation1 + $0x18] sm:$0xff pattern:$0x73625140]
    %v180 = vld.sshfl [vmem:[#allocation1 + $0x20] sm:$0xff pattern:$0x73625140]
    %v181 = vld.sshfl [vmem:[#allocation1 + $0x28] sm:$0xff pattern:$0x73625140]
    %v182 = vld.sshfl [vmem:[#allocation1 + $0x30] sm:$0xff pattern:$0x73625140]
    %v183 = vld.sshfl [vmem:[#allocation1 + $0x38] sm:$0xff pattern:$0x73625140]
    %184 = vst [vmem:[#allocation1] ss:$4 sm:$0xff] %v33
    %185 = vst [vmem:[%s94] ss:$4 sm:$0xff] %v34
    %v186 = vld.sshfl [vmem:[#allocation1] sm:$0xff pattern:$0x73625140]
    %v187 = vld.sshfl [vmem:[#allocation1 + $0x8] sm:$0xff pattern:$0x73625140]
    %v188 = vld.sshfl [vmem:[#allocation1 + $0x10] sm:$0xff pattern:$0x73625140]
    %v189 = vld.sshfl [vmem:[#allocation1 + $0x18] sm:$0xff pattern:$0x73625140]
    %v190 = vld.sshfl [vmem:[#allocation1 + $0x20] sm:$0xff pattern:$0x73625140]
    %v191 = vld.sshfl [vmem:[#allocation1 + $0x28] sm:$0xff pattern:$0x73625140]
    %v192 = vld.sshfl [vmem:[#allocation1 + $0x30] sm:$0xff pattern:$0x73625140]
    %v193 = vld.sshfl [vmem:[#allocation1 + $0x38] sm:$0xff pattern:$0x73625140]
    %194 = vst [vmem:[#allocation1] ss:$4 sm:$0xff] %v35
    %195 = vst [vmem:[%s94] ss:$4 sm:$0xff] %v36
    %v196 = vld.sshfl [vmem:[#allocation1] sm:$0xff pattern:$0x73625140]
    %v197 = vld.sshfl [vmem:[#allocation1 + $0x8] sm:$0xff pattern:$0x73625140]
    %v198 = vld.sshfl [vmem:[#allocation1 + $0x10] sm:$0xff pattern:$0x73625140]
    %v199 = vld.sshfl [vmem:[#allocation1 + $0x18] sm:$0xff pattern:$0x73625140]
    %v200 = vld.sshfl [vmem:[#allocation1 + $0x20] sm:$0xff pattern:$0x73625140]
    %v201 = vld.sshfl [vmem:[#allocation1 + $0x28] sm:$0xff pattern:$0x73625140]
    %v202 = vld.sshfl [vmem:[#allocation1 + $0x30] sm:$0xff pattern:$0x73625140]
    %v203 = vld.sshfl [vmem:[#allocation1 + $0x38] sm:$0xff pattern:$0x73625140]
    %204 = vst [vmem:[#allocation1] ss:$4 sm:$0xff] %v37
    %205 = vst [vmem:[%s94] ss:$4 sm:$0xff] %v38
    %v206 = vld.sshfl [vmem:[#allocation1] sm:$0xff pattern:$0x73625140]
    %v207 = vld.sshfl [vmem:[#allocation1 + $0x8] sm:$0xff pattern:$0x73625140]
    %v208 = vld.sshfl [vmem:[#allocation1 + $0x10] sm:$0xff pattern:$0x73625140]
    %v209 = vld.sshfl [vmem:[#allocation1 + $0x18] sm:$0xff pattern:$0x73625140]
    %v210 = vld.sshfl [vmem:[#allocation1 + $0x20] sm:$0xff pattern:$0x73625140]
    %v211 = vld.sshfl [vmem:[#allocation1 + $0x28] sm:$0xff pattern:$0x73625140]
    %v212 = vld.sshfl [vmem:[#allocation1 + $0x30] sm:$0xff pattern:$0x73625140]
    %v213 = vld.sshfl [vmem:[#allocation1 + $0x38] sm:$0xff pattern:$0x73625140]
    %214 = vst [vmem:[#allocation1] ss:$4 sm:$0xff] %v39
    %215 = vst [vmem:[%s94] ss:$4 sm:$0xff] %v40
    %v216 = vld.sshfl [vmem:[#allocation1] sm:$0xff pattern:$0x73625140]
    %v217 = vld.sshfl [vmem:[#allocation1 + $0x8] sm:$0xff pattern:$0x73625140]
    %v218 = vld.sshfl [vmem:[#allocation1 + $0x10] sm:$0xff pattern:$0x73625140]
    %v219 = vld.sshfl [vmem:[#allocation1 + $0x18] sm:$0xff pattern:$0x73625140]
    %v220 = vld.sshfl [vmem:[#allocation1 + $0x20] sm:$0xff pattern:$0x73625140]
    %v221 = vld.sshfl [vmem:[#allocation1 + $0x28] sm:$0xff pattern:$0x73625140]
    %v222 = vld.sshfl [vmem:[#allocation1 + $0x30] sm:$0xff pattern:$0x73625140]
    %v223 = vld.sshfl [vmem:[#allocation1 + $0x38] sm:$0xff pattern:$0x73625140]
    %224 = vst [vmem:[#allocation1] ss:$4 sm:$0xff] %v41
    %225 = vst [vmem:[%s94] ss:$4 sm:$0xff] %v42
    %v226 = vld.sshfl [vmem:[#allocation1] sm:$0xff pattern:$0x73625140]
    %v227 = vld.sshfl [vmem:[#allocation1 + $0x8] sm:$0xff pattern:$0x73625140]
    %v228 = vld.sshfl [vmem:[#allocation1 + $0x10] sm:$0xff pattern:$0x73625140]
    %v229 = vld.sshfl [vmem:[#allocation1 + $0x18] sm:$0xff pattern:$0x73625140]
    %v230 = vld.sshfl [vmem:[#allocation1 + $0x20] sm:$0xff pattern:$0x73625140]
    %v231 = vld.sshfl [vmem:[#allocation1 + $0x28] sm:$0xff pattern:$0x73625140]
    %v232 = vld.sshfl [vmem:[#allocation1 + $0x30] sm:$0xff pattern:$0x73625140]
    %v233 = vld.sshfl [vmem:[#allocation1 + $0x38] sm:$0xff pattern:$0x73625140]
    %234 = vst [vmem:[#allocation1] ss:$4 sm:$0xff] %v43
    %235 = vst [vmem:[%s94] ss:$4 sm:$0xff] %v44
    %v236 = vld.sshfl [vmem:[#allocation1] sm:$0xff pattern:$0x73625140]
    %v237 = vld.sshfl [vmem:[#allocation1 + $0x8] sm:$0xff pattern:$0x73625140]
    %v238 = vld.sshfl [vmem:[#allocation1 + $0x10] sm:$0xff pattern:$0x73625140]
    %v239 = vld.sshfl [vmem:[#allocation1 + $0x18] sm:$0xff pattern:$0x73625140]
    %v240 = vld.sshfl [vmem:[#allocation1 + $0x20] sm:$0xff pattern:$0x73625140]
    %v241 = vld.sshfl [vmem:[#allocation1 + $0x28] sm:$0xff pattern:$0x73625140]
    %v242 = vld.sshfl [vmem:[#allocation1 + $0x30] sm:$0xff pattern:$0x73625140]
    %v243 = vld.sshfl [vmem:[#allocation1 + $0x38] sm:$0xff pattern:$0x73625140]
    %244 = vst [vmem:[#allocation1] ss:$4 sm:$0xff] %v45
    %245 = vst [vmem:[%s94] ss:$4 sm:$0xff] %v46
    %v246 = vld.sshfl [vmem:[#allocation1] sm:$0xff pattern:$0x73625140]
    %v247 = vld.sshfl [vmem:[#allocation1 + $0x8] sm:$0xff pattern:$0x73625140]
    %v248 = vld.sshfl [vmem:[#allocation1 + $0x10] sm:$0xff pattern:$0x73625140]
    %v249 = vld.sshfl [vmem:[#allocation1 + $0x18] sm:$0xff pattern:$0x73625140]
    %v250 = vld.sshfl [vmem:[#allocation1 + $0x20] sm:$0xff pattern:$0x73625140]
    %v251 = vld.sshfl [vmem:[#allocation1 + $0x28] sm:$0xff pattern:$0x73625140]
    %v252 = vld.sshfl [vmem:[#allocation1 + $0x30] sm:$0xff pattern:$0x73625140]
    %v253 = vld.sshfl [vmem:[#allocation1 + $0x38] sm:$0xff pattern:$0x73625140]
    %254 = vst [vmem:[#allocation1] ss:$4 sm:$0xff] %v47
    %255 = vst [vmem:[%s94] ss:$4 sm:$0xff] %v48
    %v256 = vld.sshfl [vmem:[#allocation1] sm:$0xff pattern:$0x73625140]
    %v257 = vld.sshfl [vmem:[#allocation1 + $0x8] sm:$0xff pattern:$0x73625140]
    %v258 = vld.sshfl [vmem:[#allocation1 + $0x10] sm:$0xff pattern:$0x73625140]
    %v259 = vld.sshfl [vmem:[#allocation1 + $0x18] sm:$0xff pattern:$0x73625140]
    %v260 = vld.sshfl [vmem:[#allocation1 + $0x20] sm:$0xff pattern:$0x73625140]
    %v261 = vld.sshfl [vmem:[#allocation1 + $0x28] sm:$0xff pattern:$0x73625140]
    %v262 = vld.sshfl [vmem:[#allocation1 + $0x30] sm:$0xff pattern:$0x73625140]
    %v263 = vld.sshfl [vmem:[#allocation1 + $0x38] sm:$0xff pattern:$0x73625140]
    %264 = vst [vmem:[#allocation1] ss:$4 sm:$0xff] %v49
    %265 = vst [vmem:[%s94] ss:$4 sm:$0xff] %v50
    %v266 = vld.sshfl [vmem:[#allocation1] sm:$0xff pattern:$0x73625140]
    %v267 = vld.sshfl [vmem:[#allocation1 + $0x8] sm:$0xff pattern:$0x73625140]
    %v268 = vld.sshfl [vmem:[#allocation1 + $0x10] sm:$0xff pattern:$0x73625140]
    %v269 = vld.sshfl [vmem:[#allocation1 + $0x18] sm:$0xff pattern:$0x73625140]
    %v270 = vld.sshfl [vmem:[#allocation1 + $0x20] sm:$0xff pattern:$0x73625140]
    %v271 = vld.sshfl [vmem:[#allocation1 + $0x28] sm:$0xff pattern:$0x73625140]
    %v272 = vld.sshfl [vmem:[#allocation1 + $0x30] sm:$0xff pattern:$0x73625140]
    %v273 = vld.sshfl [vmem:[#allocation1 + $0x38] sm:$0xff pattern:$0x73625140]
    %274 = vst [vmem:[#allocation1] ss:$4 sm:$0xff] %v51
    %275 = vst [vmem:[%s94] ss:$4 sm:$0xff] %v52
    %v276 = vld.sshfl [vmem:[#allocation1] sm:$0xff pattern:$0x73625140]
    %v277 = vld.sshfl [vmem:[#allocation1 + $0x8] sm:$0xff pattern:$0x73625140]
    %v278 = vld.sshfl [vmem:[#allocation1 + $0x10] sm:$0xff pattern:$0x73625140]
    %v279 = vld.sshfl [vmem:[#allocation1 + $0x18] sm:$0xff pattern:$0x73625140]
    %v280 = vld.sshfl [vmem:[#allocation1 + $0x20] sm:$0xff pattern:$0x73625140]
    %v281 = vld.sshfl [vmem:[#allocation1 + $0x28] sm:$0xff pattern:$0x73625140]
    %v282 = vld.sshfl [vmem:[#allocation1 + $0x30] sm:$0xff pattern:$0x73625140]
    %v283 = vld.sshfl [vmem:[#allocation1 + $0x38] sm:$0xff pattern:$0x73625140]
    %284 = vst [vmem:[#allocation1] ss:$4 sm:$0xff] %v53
    %v285 = vld.sshfl [vmem:[#allocation1] sm:$0xff pattern:$0x73625140]
    %v286 = vld.sshfl [vmem:[#allocation1 + $0x8] sm:$0xff pattern:$0x73625140]
    %v441 = vpack.c.bf16 %v96, %v96
    %v442 = vpack.c.bf16 %v97, %v97
    %v443 = vpack.c.bf16 %v98, %v98
    %v444 = vpack.c.bf16 %v99, %v99
    %v445 = vpack.c.bf16 %v100, %v100
    %v446 = vpack.c.bf16 %v101, %v101
    %v447 = vpack.c.bf16 %v102, %v102
    %v448 = vpack.c.bf16 %v103, %v103
    %v449 = vpack.c.bf16 %v106, %v106
    %v450 = vpack.c.bf16 %v107, %v107
    %v451 = vpack.c.bf16 %v108, %v108
    %v452 = vpack.c.bf16 %v109, %v109
    %v453 = vpack.c.bf16 %v110, %v110
    %v454 = vpack.c.bf16 %v111, %v111
    %v455 = vpack.c.bf16 %v112, %v112
    %v456 = vpack.c.bf16 %v113, %v113
    %v457 = vpack.c.bf16 %v116, %v116
    %v458 = vpack.c.bf16 %v117, %v117
    %v459 = vpack.c.bf16 %v118, %v118
    %v460 = vpack.c.bf16 %v119, %v119
    %v461 = vpack.c.bf16 %v120, %v120
    %v462 = vpack.c.bf16 %v121, %v121
    %v463 = vpack.c.bf16 %v122, %v122
    %v464 = vpack.c.bf16 %v123, %v123
    %v465 = vpack.c.bf16 %v126, %v126
    %v466 = vpack.c.bf16 %v127, %v127
    %v467 = vpack.c.bf16 %v128, %v128
    %v468 = vpack.c.bf16 %v129, %v129
    %v469 = vpack.c.bf16 %v130, %v130
    %v470 = vpack.c.bf16 %v131, %v131
    %v471 = vpack.c.bf16 %v132, %v132
    %v472 = vpack.c.bf16 %v133, %v133
    %v473 = vpack.c.bf16 %v136, %v136
    %v474 = vpack.c.bf16 %v137, %v137
    %v475 = vpack.c.bf16 %v138, %v138
    %v476 = vpack.c.bf16 %v139, %v139
    %v477 = vpack.c.bf16 %v140, %v140
    %v478 = vpack.c.bf16 %v141, %v141
    %v479 = vpack.c.bf16 %v142, %v142
    %v480 = vpack.c.bf16 %v143, %v143
    %v481 = vpack.c.bf16 %v146, %v146
    %v482 = vpack.c.bf16 %v147, %v147
    %v483 = vpack.c.bf16 %v148, %v148
    %v484 = vpack.c.bf16 %v149, %v149
    %v485 = vpack.c.bf16 %v150, %v150
    %v486 = vpack.c.bf16 %v151, %v151
    %v487 = vpack.c.bf16 %v152, %v152
    %v488 = vpack.c.bf16 %v153, %v153
    %v489 = vpack.c.bf16 %v156, %v156
    %v490 = vpack.c.bf16 %v157, %v157
    %v491 = vpack.c.bf16 %v158, %v158
    %v492 = vpack.c.bf16 %v159, %v159
    %v493 = vpack.c.bf16 %v160, %v160
    %v494 = vpack.c.bf16 %v161, %v161
    %v495 = vpack.c.bf16 %v162, %v162
    %v496 = vpack.c.bf16 %v163, %v163
    %v497 = vpack.c.bf16 %v166, %v166
    %v498 = vpack.c.bf16 %v167, %v167
    %v499 = vpack.c.bf16 %v168, %v168
    %v500 = vpack.c.bf16 %v169, %v169
    %v501 = vpack.c.bf16 %v170, %v170
    %v502 = vpack.c.bf16 %v171, %v171
    %v503 = vpack.c.bf16 %v172, %v172
    %v504 = vpack.c.bf16 %v173, %v173
    %v505 = vpack.c.bf16 %v176, %v176
    %v506 = vpack.c.bf16 %v177, %v177
    %v507 = vpack.c.bf16 %v178, %v178
    %v508 = vpack.c.bf16 %v179, %v179
    %v509 = vpack.c.bf16 %v180, %v180
    %v510 = vpack.c.bf16 %v181, %v181
    %v511 = vpack.c.bf16 %v182, %v182
    %v512 = vpack.c.bf16 %v183, %v183
    %v513 = vpack.c.bf16 %v186, %v186
    %v514 = vpack.c.bf16 %v187, %v187
    %v515 = vpack.c.bf16 %v188, %v188
    %v516 = vpack.c.bf16 %v189, %v189
    %v517 = vpack.c.bf16 %v190, %v190
    %v518 = vpack.c.bf16 %v191, %v191
    %v519 = vpack.c.bf16 %v192, %v192
    %v520 = vpack.c.bf16 %v193, %v193
    %v521 = vpack.c.bf16 %v196, %v196
    %v522 = vpack.c.bf16 %v197, %v197
    %v523 = vpack.c.bf16 %v198, %v198
    %v524 = vpack.c.bf16 %v199, %v199
    %v525 = vpack.c.bf16 %v200, %v200
    %v526 = vpack.c.bf16 %v201, %v201
    %v527 = vpack.c.bf16 %v202, %v202
    %v528 = vpack.c.bf16 %v203, %v203
    %v529 = vpack.c.bf16 %v206, %v206
    %v530 = vpack.c.bf16 %v207, %v207
    %v531 = vpack.c.bf16 %v208, %v208
    %v532 = vpack.c.bf16 %v209, %v209
    %v533 = vpack.c.bf16 %v210, %v210
    %v534 = vpack.c.bf16 %v211, %v211
    %v535 = vpack.c.bf16 %v212, %v212
    %v536 = vpack.c.bf16 %v213, %v213
    %v537 = vpack.c.bf16 %v216, %v216
    %v538 = vpack.c.bf16 %v217, %v217
    %v539 = vpack.c.bf16 %v218, %v218
    %v540 = vpack.c.bf16 %v219, %v219
    %v541 = vpack.c.bf16 %v220, %v220
    %v542 = vpack.c.bf16 %v221, %v221
    %v543 = vpack.c.bf16 %v222, %v222
    %v544 = vpack.c.bf16 %v223, %v223
    %v545 = vpack.c.bf16 %v226, %v226
    %v546 = vpack.c.bf16 %v227, %v227
    %v547 = vpack.c.bf16 %v228, %v228
    %v548 = vpack.c.bf16 %v229, %v229
    %v549 = vpack.c.bf16 %v230, %v230
    %v550 = vpack.c.bf16 %v231, %v231
    %v551 = vpack.c.bf16 %v232, %v232
    %v552 = vpack.c.bf16 %v233, %v233
    %v553 = vpack.c.bf16 %v236, %v236
    %v554 = vpack.c.bf16 %v237, %v237
    %v555 = vpack.c.bf16 %v238, %v238
    %v556 = vpack.c.bf16 %v239, %v239
    %v557 = vpack.c.bf16 %v240, %v240
    %v558 = vpack.c.bf16 %v241, %v241
    %v559 = vpack.c.bf16 %v242, %v242
    %v560 = vpack.c.bf16 %v243, %v243
    %v561 = vpack.c.bf16 %v246, %v246
    %v562 = vpack.c.bf16 %v247, %v247
    %v563 = vpack.c.bf16 %v248, %v248
    %v564 = vpack.c.bf16 %v249, %v249
    %v565 = vpack.c.bf16 %v250, %v250
    %v566 = vpack.c.bf16 %v251, %v251
    %v567 = vpack.c.bf16 %v252, %v252
    %v568 = vpack.c.bf16 %v253, %v253
    %v569 = vpack.c.bf16 %v256, %v256
    %v570 = vpack.c.bf16 %v257, %v257
    %v571 = vpack.c.bf16 %v258, %v258
    %v572 = vpack.c.bf16 %v259, %v259
    %v573 = vpack.c.bf16 %v260, %v260
    %v574 = vpack.c.bf16 %v261, %v261
    %v575 = vpack.c.bf16 %v262, %v262
    %v576 = vpack.c.bf16 %v263, %v263
    %v577 = vpack.c.bf16 %v266, %v266
    %v578 = vpack.c.bf16 %v267, %v267
    %v579 = vpack.c.bf16 %v268, %v268
    %v580 = vpack.c.bf16 %v269, %v269
    %v581 = vpack.c.bf16 %v270, %v270
    %v582 = vpack.c.bf16 %v271, %v271
    %v583 = vpack.c.bf16 %v272, %v272
    %v584 = vpack.c.bf16 %v273, %v273
    %v585 = vpack.c.bf16 %v276, %v276
    %v586 = vpack.c.bf16 %v277, %v277
    %v587 = vpack.c.bf16 %v278, %v278
    %v588 = vpack.c.bf16 %v279, %v279
    %v589 = vpack.c.bf16 %v280, %v280
    %v590 = vpack.c.bf16 %v281, %v281
    %v591 = vpack.c.bf16 %v282, %v282
    %v592 = vpack.c.bf16 %v283, %v283
    %v593 = vpack.c.bf16 %v285, %v285
    %v594 = vpack.c.bf16 %v286, %v286
    %v595 = vld [vmem:[%s1] sm:$0xf]
    %v596 = vld [vmem:[%s1 + $0x4] sm:$0xf]
    %v597 = vld [vmem:[%s1 + $0x8] sm:$0xf]
    %v598 = vld [vmem:[%s1 + $0xc] sm:$0xf]
    %v599 = vld [vmem:[%s1 + $0x10] sm:$0xf]
    %v600 = vld [vmem:[%s1 + $0x14] sm:$0xf]
    %v601 = vld [vmem:[%s1 + $0x18] sm:$0xf]
    %v602 = vld [vmem:[%s1 + $0x1c] sm:$0xf]
    %v603 = vld [vmem:[%s1 + $0x20] sm:$0xf]
    %v604 = vld [vmem:[%s1 + $0x24] sm:$0xf]
    %v605 = vld [vmem:[%s1 + $0x28] sm:$0xf]
    %v606 = vld [vmem:[%s1 + $0x2c] sm:$0xf]
    %v607 = vld [vmem:[%s1 + $0x30] sm:$0xf]
    %v608 = vld [vmem:[%s1 + $0x34] sm:$0xf]
    %v609 = vld [vmem:[%s1 + $0x38] sm:$0xf]
    %v610 = vld [vmem:[%s1 + $0x3c] sm:$0xf]
    %v611 = vld [vmem:[%s1 + $0x40] sm:$0xf]
    %v612 = vld [vmem:[%s1 + $0x44] sm:$0xf]
    %v613 = vld [vmem:[%s1 + $0x48] sm:$0xf]
    %v614 = vld [vmem:[%s1 + $0x4c] sm:$0xf]
    %v615 = vld [vmem:[%s1 + $0x50] sm:$0xf]
    %v616 = vld [vmem:[%s1 + $0x54] sm:$0xf]
    %v617 = vld [vmem:[%s1 + $0x58] sm:$0xf]
    %v618 = vld [vmem:[%s1 + $0x5c] sm:$0xf]
    %v619 = vld [vmem:[%s1 + $0x60] sm:$0xf]
    %v620 = vld [vmem:[%s1 + $0x64] sm:$0xf]
    %v621 = vld [vmem:[%s1 + $0x68] sm:$0xf]
    %v622 = vld [vmem:[%s1 + $0x6c] sm:$0xf]
    %v623 = vld [vmem:[%s1 + $0x70] sm:$0xf]
    %v624 = vld [vmem:[%s1 + $0x74] sm:$0xf]
    %v625 = vld [vmem:[%s1 + $0x78] sm:$0xf]
    %v626 = vld [vmem:[%s1 + $0x7c] sm:$0xf]
    %v627 = vld [vmem:[%s1 + $0x80] sm:$0xf]
    %v628 = vld [vmem:[%s1 + $0x84] sm:$0xf]
    %v629 = vld [vmem:[%s1 + $0x88] sm:$0xf]
    %v630 = vld [vmem:[%s1 + $0x8c] sm:$0xf]
    %v631 = vld [vmem:[%s1 + $0x90] sm:$0xf]
    %v632 = vld [vmem:[%s1 + $0x94] sm:$0xf]
    %v633 = vld [vmem:[%s1 + $0x98] sm:$0xf]
    %v634 = vld [vmem:[%s1 + $0x9c] sm:$0xf]
    %v635 = vld [vmem:[%s1 + $0xa0] sm:$0xf]
    %v636 = vld [vmem:[%s1 + $0xa4] sm:$0xf]
    %v637 = vld [vmem:[%s1 + $0xa8] sm:$0xf]
    %v638 = vld [vmem:[%s1 + $0xac] sm:$0xf]
    %v639 = vld [vmem:[%s1 + $0xb0] sm:$0xf]
    %v640 = vld [vmem:[%s1 + $0xb4] sm:$0xf]
    %v641 = vld [vmem:[%s1 + $0xb8] sm:$0xf]
    %v642 = vld [vmem:[%s1 + $0xbc] sm:$0xf]
    %v643 = vld [vmem:[%s1 + $0xc0] sm:$0xf]
    %v644 = vld [vmem:[%s1 + $0xc4] sm:$0xf]
    %v645 = vld [vmem:[%s1 + $0xc8] sm:$0xf]
    %v646 = vld [vmem:[%s1 + $0xcc] sm:$0xf]
    %v647 = vld [vmem:[%s1 + $0xd0] sm:$0xf]
    %v648 = vld [vmem:[%s1 + $0xd4] sm:$0xf]
    %v649 = vld [vmem:[%s1 + $0xd8] sm:$0xf]
    %v650 = vld [vmem:[%s1 + $0xdc] sm:$0xf]
    %v651 = vld [vmem:[%s1 + $0xe0] sm:$0xf]
    %v652 = vld [vmem:[%s1 + $0xe4] sm:$0xf]
    %v653 = vld [vmem:[%s1 + $0xe8] sm:$0xf]
    %v654 = vld [vmem:[%s1 + $0xec] sm:$0xf]
    %v655 = vld [vmem:[%s1 + $0xf0] sm:$0xf]
    %v656 = vld [vmem:[%s1 + $0xf4] sm:$0xf]
    %v657 = vld [vmem:[%s1 + $0xf8] sm:$0xf]
    %v658 = vld [vmem:[%s1 + $0xfc] sm:$0xf]
    %v659 = vld [vmem:[%s1 + $0x100] sm:$0xf]
    %v660 = vld [vmem:[%s1 + $0x104] sm:$0xf]
    %v661 = vld [vmem:[%s1 + $0x108] sm:$0xf]
    %v662 = vld [vmem:[%s1 + $0x10c] sm:$0xf]
    %v663 = vld [vmem:[%s1 + $0x110] sm:$0xf]
    %v664 = vld [vmem:[%s1 + $0x114] sm:$0xf]
    %v665 = vld [vmem:[%s1 + $0x118] sm:$0xf]
    %v666 = vld [vmem:[%s1 + $0x11c] sm:$0xf]
    %v667 = vld [vmem:[%s1 + $0x120] sm:$0xf]
    %v668 = vld [vmem:[%s1 + $0x124] sm:$0xf]
    %v669 = vld [vmem:[%s1 + $0x128] sm:$0xf]
    %v670 = vld [vmem:[%s1 + $0x12c] sm:$0xf]
    %v671 = vld [vmem:[%s1 + $0x130] sm:$0xf]
    %v672 = vld [vmem:[%s1 + $0x134] sm:$0xf]
    %v673 = vld [vmem:[%s1 + $0x138] sm:$0xf]
    %v674 = vld [vmem:[%s1 + $0x13c] sm:$0xf]
    %v675 = vld [vmem:[%s1 + $0x140] sm:$0xf]
    %v676 = vld [vmem:[%s1 + $0x144] sm:$0xf]
    %v677 = vld [vmem:[%s1 + $0x148] sm:$0xf]
    %v678 = vld [vmem:[%s1 + $0x14c] sm:$0xf]
    %v679 = vld [vmem:[%s1 + $0x150] sm:$0xf]
    %v680 = vld [vmem:[%s1 + $0x154] sm:$0xf]
    %v681 = vld [vmem:[%s1 + $0x158] sm:$0xf]
    %v682 = vld [vmem:[%s1 + $0x15c] sm:$0xf]
    %v683 = vld [vmem:[%s1 + $0x160] sm:$0xf]
    %v684 = vld [vmem:[%s1 + $0x164] sm:$0xf]
    %v685 = vld [vmem:[%s1 + $0x168] sm:$0xf]
    %v686 = vld [vmem:[%s1 + $0x16c] sm:$0xf]
    %v687 = vld [vmem:[%s1 + $0x170] sm:$0xf]
    %v688 = vld [vmem:[%s1 + $0x174] sm:$0xf]
    %v689 = vld [vmem:[%s1 + $0x178] sm:$0xf]
    %v690 = vld [vmem:[%s1 + $0x17c] sm:$0xf]
    %v691 = vld [vmem:[%s1 + $0x180] sm:$0xf]
    %v692 = vld [vmem:[%s1 + $0x184] sm:$0xf]
    %v693 = vld [vmem:[%s1 + $0x188] sm:$0xf]
    %v694 = vld [vmem:[%s1 + $0x18c] sm:$0xf]
    %v695 = vld [vmem:[%s1 + $0x190] sm:$0xf]
    %v696 = vld [vmem:[%s1 + $0x194] sm:$0xf]
    %v697 = vld [vmem:[%s1 + $0x198] sm:$0xf]
    %v698 = vld [vmem:[%s1 + $0x19c] sm:$0xf]
    %v699 = vld [vmem:[%s1 + $0x1a0] sm:$0xf]
    %v700 = vld [vmem:[%s1 + $0x1a4] sm:$0xf]
    %v701 = vld [vmem:[%s1 + $0x1a8] sm:$0xf]
    %v702 = vld [vmem:[%s1 + $0x1ac] sm:$0xf]
    %v703 = vld [vmem:[%s1 + $0x1b0] sm:$0xf]
    %v704 = vld [vmem:[%s1 + $0x1b4] sm:$0xf]
    %v705 = vld [vmem:[%s1 + $0x1b8] sm:$0xf]
    %v706 = vld [vmem:[%s1 + $0x1bc] sm:$0xf]
    %v707 = vld [vmem:[%s1 + $0x1c0] sm:$0xf]
    %v708 = vld [vmem:[%s1 + $0x1c4] sm:$0xf]
    %v709 = vld [vmem:[%s1 + $0x1c8] sm:$0xf]
    %v710 = vld [vmem:[%s1 + $0x1cc] sm:$0xf]
    %v711 = vld [vmem:[%s1 + $0x1d0] sm:$0xf]
    %v712 = vld [vmem:[%s1 + $0x1d4] sm:$0xf]
    %v713 = vld [vmem:[%s1 + $0x1d8] sm:$0xf]
    %v714 = vld [vmem:[%s1 + $0x1dc] sm:$0xf]
    %v715 = vld [vmem:[%s1 + $0x1e0] sm:$0xf]
    %v716 = vld [vmem:[%s1 + $0x1e4] sm:$0xf]
    %v717 = vld [vmem:[%s1 + $0x1e8] sm:$0xf]
    %v718 = vld [vmem:[%s1 + $0x1ec] sm:$0xf]
    %v719 = vld [vmem:[%s1 + $0x1f0] sm:$0xf]
    %v720 = vld [vmem:[%s1 + $0x1f4] sm:$0xf]
    %v721 = vld [vmem:[%s1 + $0x1f8] sm:$0xf]
    %v722 = vld [vmem:[%s1 + $0x1fc] sm:$0xf]
    %v723 = vld [vmem:[%s1 + $0x200] sm:$0xf]
    %v724 = vld [vmem:[%s1 + $0x204] sm:$0xf]
    %v725 = vld [vmem:[%s1 + $0x208] sm:$0xf]
    %v726 = vld [vmem:[%s1 + $0x20c] sm:$0xf]
    %v727 = vld [vmem:[%s1 + $0x210] sm:$0xf]
    %v728 = vld [vmem:[%s1 + $0x214] sm:$0xf]
    %v729 = vld [vmem:[%s1 + $0x218] sm:$0xf]
    %v730 = vld [vmem:[%s1 + $0x21c] sm:$0xf]
    %v731 = vld [vmem:[%s1 + $0x220] sm:$0xf]
    %v732 = vld [vmem:[%s1 + $0x224] sm:$0xf]
    %v733 = vld [vmem:[%s1 + $0x228] sm:$0xf]
    %v734 = vld [vmem:[%s1 + $0x22c] sm:$0xf]
    %v735 = vld [vmem:[%s1 + $0x230] sm:$0xf]
    %v736 = vld [vmem:[%s1 + $0x234] sm:$0xf]
    %v737 = vld [vmem:[%s1 + $0x238] sm:$0xf]
    %v738 = vld [vmem:[%s1 + $0x23c] sm:$0xf]
    %v739 = vld [vmem:[%s1 + $0x240] sm:$0xf]
    %v740 = vld [vmem:[%s1 + $0x244] sm:$0xf]
    %v741 = vld [vmem:[%s1 + $0x248] sm:$0xf]
    %v742 = vld [vmem:[%s1 + $0x24c] sm:$0xf]
    %v743 = vld [vmem:[%s1 + $0x250] sm:$0xf]
    %v744 = vld [vmem:[%s1 + $0x254] sm:$0xf]
    %v745 = vld [vmem:[%s1 + $0x258] sm:$0xf]
    %v746 = vld [vmem:[%s1 + $0x25c] sm:$0xf]
    %v747 = vld [vmem:[%s1 + $0x260] sm:$0xf]
    %v748 = vld [vmem:[%s1 + $0x264] sm:$0xf]
    %v749 = vld [vmem:[%s1 + $0x268] sm:$0xf]
    %v750 = vld [vmem:[%s1 + $0x26c] sm:$0xf]
    %v751 = vld [vmem:[%s1 + $0x270] sm:$0xf]
    %v752 = vld [vmem:[%s1 + $0x274] sm:$0xf]
    %v753 = vld [vmem:[%s1 + $0x278] sm:$0xf]
    %v754 = vld [vmem:[%s1 + $0x27c] sm:$0xf]
    %v755 = vld [vmem:[%s1 + $0x280] sm:$0xf]
    %v756 = vld [vmem:[%s1 + $0x284] sm:$0xf]
    %v757 = vld [vmem:[%s1 + $0x288] sm:$0xf]
    %v758 = vld [vmem:[%s1 + $0x28c] sm:$0xf]
    %v759 = vld [vmem:[%s1 + $0x290] sm:$0xf]
    %v760 = vld [vmem:[%s1 + $0x294] sm:$0xf]
    %v761 = vld [vmem:[%s1 + $0x298] sm:$0xf]
    %v762 = vld [vmem:[%s1 + $0x29c] sm:$0xf]
    %v763 = vld [vmem:[%s1 + $0x2a0] sm:$0xf]
    %v764 = vld [vmem:[%s1 + $0x2a4] sm:$0xf]
    %v765 = vld [vmem:[%s1 + $0x2a8] sm:$0xf]
    %v766 = vld [vmem:[%s1 + $0x2ac] sm:$0xf]
    %v767 = vld [vmem:[%s1 + $0x2b0] sm:$0xf]
    %v768 = vld [vmem:[%s1 + $0x2b4] sm:$0xf]
    %v769 = vld [vmem:[%s1 + $0x2b8] sm:$0xf]
    %v770 = vld [vmem:[%s1 + $0x2bc] sm:$0xf]
    %v771 = vld [vmem:[%s1 + $0x2c0] sm:$0xf]
    %v772 = vld [vmem:[%s1 + $0x2c4] sm:$0xf]
    %v773 = vld [vmem:[%s1 + $0x2c8] sm:$0xf]
    %v774 = vld [vmem:[%s1 + $0x2cc] sm:$0xf]
    %v775 = vld [vmem:[%s1 + $0x2d0] sm:$0xf]
    %v776 = vld [vmem:[%s1 + $0x2d4] sm:$0xf]
    %v777 = vld [vmem:[%s1 + $0x2d8] sm:$0xf]
    %v778 = vld [vmem:[%s1 + $0x2dc] sm:$0xf]
    %v779 = vld [vmem:[%s1 + $0x2e0] sm:$0xf]
    %v780 = vld [vmem:[%s1 + $0x2e4] sm:$0xf]
    %v781 = vld [vmem:[%s1 + $0x2e8] sm:$0xf]
    %v782 = vld [vmem:[%s1 + $0x2ec] sm:$0xf]
    %v783 = vld [vmem:[%s1 + $0x2f0] sm:$0xf]
    %v784 = vld [vmem:[%s1 + $0x2f4] sm:$0xf]
    %v785 = vld [vmem:[%s1 + $0x2f8] sm:$0xf]
    %v786 = vld [vmem:[%s1 + $0x2fc] sm:$0xf]
    %v787 = vld [vmem:[%s1 + $0x300] sm:$0xf]
    %v788 = vld [vmem:[%s1 + $0x304] sm:$0xf]
    %v789 = vld [vmem:[%s1 + $0x308] sm:$0xf]
    %v790 = vld [vmem:[%s1 + $0x30c] sm:$0xf]
    %v791 = vld [vmem:[%s1 + $0x310] sm:$0xf]
    %v792 = vld [vmem:[%s1 + $0x314] sm:$0xf]
    %v793 = vld [vmem:[%s1 + $0x318] sm:$0xf]
    %v794 = vld [vmem:[%s1 + $0x31c] sm:$0xf]
    %v795 = vld [vmem:[%s1 + $0x320] sm:$0xf]
    %v796 = vld [vmem:[%s1 + $0x324] sm:$0xf]
    %v797 = vld [vmem:[%s1 + $0x328] sm:$0xf]
    %v798 = vld [vmem:[%s1 + $0x32c] sm:$0xf]
    %v799 = vld [vmem:[%s1 + $0x330] sm:$0xf]
    %v800 = vld [vmem:[%s1 + $0x334] sm:$0xf]
    %v801 = vld [vmem:[%s1 + $0x338] sm:$0xf]
    %v802 = vld [vmem:[%s1 + $0x33c] sm:$0xf]
    %v803 = vld [vmem:[%s1 + $0x340] sm:$0xf]
    %v804 = vld [vmem:[%s1 + $0x344] sm:$0xf]
    %v805 = vld [vmem:[%s1 + $0x348] sm:$0xf]
    %v806 = vld [vmem:[%s1 + $0x34c] sm:$0xf]
    %v807 = vld [vmem:[%s1 + $0x350] sm:$0xf]
    %v808 = vld [vmem:[%s1 + $0x354] sm:$0xf]
    %v809 = vld [vmem:[%s1 + $0x358] sm:$0xf]
    %v810 = vld [vmem:[%s1 + $0x35c] sm:$0xf]
    %v811 = vld [vmem:[%s1 + $0x360] sm:$0xf]
    %v812 = vld [vmem:[%s1 + $0x364] sm:$0xf]
    %v813 = vld [vmem:[%s1 + $0x368] sm:$0xf]
    %v814 = vld [vmem:[%s1 + $0x36c] sm:$0xf]
    %v815 = vld [vmem:[%s1 + $0x370] sm:$0xf]
    %v816 = vld [vmem:[%s1 + $0x374] sm:$0xf]
    %v817 = vld [vmem:[%s1 + $0x378] sm:$0xf]
    %v818 = vld [vmem:[%s1 + $0x37c] sm:$0xf]
    %v819 = vld [vmem:[%s1 + $0x380] sm:$0xf]
    %v820 = vld [vmem:[%s1 + $0x384] sm:$0xf]
    %v821 = vld [vmem:[%s1 + $0x388] sm:$0xf]
    %v822 = vld [vmem:[%s1 + $0x38c] sm:$0xf]
    %v823 = vld [vmem:[%s1 + $0x390] sm:$0xf]
    %v824 = vld [vmem:[%s1 + $0x394] sm:$0xf]
    %v825 = vld [vmem:[%s1 + $0x398] sm:$0xf]
    %v826 = vld [vmem:[%s1 + $0x39c] sm:$0xf]
    %v827 = vld [vmem:[%s1 + $0x3a0] sm:$0xf]
    %v828 = vld [vmem:[%s1 + $0x3a4] sm:$0xf]
    %v829 = vld [vmem:[%s1 + $0x3a8] sm:$0xf]
    %v830 = vld [vmem:[%s1 + $0x3ac] sm:$0xf]
    %v831 = vld [vmem:[%s1 + $0x3b0] sm:$0xf]
    %v832 = vld [vmem:[%s1 + $0x3b4] sm:$0xf]
    %v833 = vld [vmem:[%s1 + $0x3b8] sm:$0xf]
    %v834 = vld [vmem:[%s1 + $0x3bc] sm:$0xf]
    %v835 = vld [vmem:[%s1 + $0x3c0] sm:$0xf]
    %v836 = vld [vmem:[%s1 + $0x3c4] sm:$0xf]
    %v837 = vld [vmem:[%s1 + $0x3c8] sm:$0xf]
    %v838 = vld [vmem:[%s1 + $0x3cc] sm:$0xf]
    %v839 = vld [vmem:[%s1 + $0x3d0] sm:$0xf]
    %v840 = vld [vmem:[%s1 + $0x3d4] sm:$0xf]
    %v841 = vld [vmem:[%s1 + $0x3d8] sm:$0xf]
    %v842 = vld [vmem:[%s1 + $0x3dc] sm:$0xf]
    %v843 = vld [vmem:[%s1 + $0x3e0] sm:$0xf]
    %v844 = vld [vmem:[%s1 + $0x3e4] sm:$0xf]
    %v845 = vld [vmem:[%s1 + $0x3e8] sm:$0xf]
    %v846 = vld [vmem:[%s1 + $0x3ec] sm:$0xf]
    %v847 = vld [vmem:[%s1 + $0x3f0] sm:$0xf]
    %v848 = vld [vmem:[%s1 + $0x3f4] sm:$0xf]
    %v849 = vld [vmem:[%s1 + $0x3f8] sm:$0xf]
    %v850 = vld [vmem:[%s1 + $0x3fc] sm:$0xf]
    %v851 = vld [vmem:[%s1 + $0x400] sm:$0xf]
    %v852 = vld [vmem:[%s1 + $0x404] sm:$0xf]
    %v853 = vld [vmem:[%s1 + $0x408] sm:$0xf]
    %v854 = vld [vmem:[%s1 + $0x40c] sm:$0xf]
    %v855 = vld [vmem:[%s1 + $0x410] sm:$0xf]
    %v856 = vld [vmem:[%s1 + $0x414] sm:$0xf]
    %v857 = vld [vmem:[%s1 + $0x418] sm:$0xf]
    %v858 = vld [vmem:[%s1 + $0x41c] sm:$0xf]
    %v859 = vld [vmem:[%s1 + $0x420] sm:$0xf]
    %v860 = vld [vmem:[%s1 + $0x424] sm:$0xf]
    %v861 = vld [vmem:[%s1 + $0x428] sm:$0xf]
    %v862 = vld [vmem:[%s1 + $0x42c] sm:$0xf]
    %v863 = vld [vmem:[%s1 + $0x430] sm:$0xf]
    %v864 = vld [vmem:[%s1 + $0x434] sm:$0xf]
    %v865 = vld [vmem:[%s1 + $0x438] sm:$0xf]
    %v866 = vld [vmem:[%s1 + $0x43c] sm:$0xf]
    %v867 = vld [vmem:[%s1 + $0x440] sm:$0xf]
    %v868 = vld [vmem:[%s1 + $0x444] sm:$0xf]
    %v869 = vld [vmem:[%s1 + $0x448] sm:$0xf]
    %v870 = vld [vmem:[%s1 + $0x44c] sm:$0xf]
    %v871 = vld [vmem:[%s1 + $0x450] sm:$0xf]
    %v872 = vld [vmem:[%s1 + $0x454] sm:$0xf]
    %v873 = vld [vmem:[%s1 + $0x458] sm:$0xf]
    %v874 = vld [vmem:[%s1 + $0x45c] sm:$0xf]
    %v875 = vld [vmem:[%s1 + $0x460] sm:$0xf]
    %v876 = vld [vmem:[%s1 + $0x464] sm:$0xf]
    %v877 = vld [vmem:[%s1 + $0x468] sm:$0xf]
    %v878 = vld [vmem:[%s1 + $0x46c] sm:$0xf]
    %v879 = vld [vmem:[%s1 + $0x470] sm:$0xf]
    %v880 = vld [vmem:[%s1 + $0x474] sm:$0xf]
    %v881 = vld [vmem:[%s1 + $0x478] sm:$0xf]
    %v882 = vld [vmem:[%s1 + $0x47c] sm:$0xf]
    %v883 = vld [vmem:[%s1 + $0x480] sm:$0xf]
    %v884 = vld [vmem:[%s1 + $0x484] sm:$0xf]
    %v885 = vld [vmem:[%s1 + $0x488] sm:$0xf]
    %v886 = vld [vmem:[%s1 + $0x48c] sm:$0xf]
    %v887 = vld [vmem:[%s1 + $0x490] sm:$0xf]
    %v888 = vld [vmem:[%s1 + $0x494] sm:$0xf]
    %v889 = vld [vmem:[%s1 + $0x498] sm:$0xf]
    %v890 = vld [vmem:[%s1 + $0x49c] sm:$0xf]
    %v891 = vld [vmem:[%s1 + $0x4a0] sm:$0xf]
    %v892 = vld [vmem:[%s1 + $0x4a4] sm:$0xf]
    %v893 = vld [vmem:[%s1 + $0x4a8] sm:$0xf]
    %v894 = vld [vmem:[%s1 + $0x4ac] sm:$0xf]
    %v895 = vld [vmem:[%s1 + $0x4b0] sm:$0xf]
    %v896 = vld [vmem:[%s1 + $0x4b4] sm:$0xf]
    %v897 = vld [vmem:[%s1 + $0x4b8] sm:$0xf]
    %v898 = vld [vmem:[%s1 + $0x4bc] sm:$0xf]
    %v899 = vld [vmem:[%s1 + $0x4c0] sm:$0xf]
    %v900 = vld [vmem:[%s1 + $0x4c4] sm:$0xf]
    %v901 = vld [vmem:[%s1 + $0x4c8] sm:$0xf]
    %v902 = vld [vmem:[%s1 + $0x4cc] sm:$0xf]
    %v903 = vld [vmem:[%s1 + $0x4d0] sm:$0xf]
    %v904 = vld [vmem:[%s1 + $0x4d4] sm:$0xf]
    %v905 = vld [vmem:[%s1 + $0x4d8] sm:$0xf]
    %v906 = vld [vmem:[%s1 + $0x4dc] sm:$0xf]
    %v907 = vld [vmem:[%s1 + $0x4e0] sm:$0xf]
    %v908 = vld [vmem:[%s1 + $0x4e4] sm:$0xf]
    %v909 = vld [vmem:[%s1 + $0x4e8] sm:$0xf]
    %v910 = vld [vmem:[%s1 + $0x4ec] sm:$0xf]
    %v911 = vld [vmem:[%s1 + $0x4f0] sm:$0xf]
    %v912 = vld [vmem:[%s1 + $0x4f4] sm:$0xf]
    %v913 = vld [vmem:[%s1 + $0x4f8] sm:$0xf]
    %v914 = vld [vmem:[%s1 + $0x4fc] sm:$0xf]
    %v915 = vld [vmem:[%s1 + $0x500] sm:$0xf]
    %v916 = vld [vmem:[%s1 + $0x504] sm:$0xf]
    %v917 = vld [vmem:[%s1 + $0x508] sm:$0xf]
    %v918 = vld [vmem:[%s1 + $0x50c] sm:$0xf]
    %v919 = vld [vmem:[%s1 + $0x510] sm:$0xf]
    %v920 = vld [vmem:[%s1 + $0x514] sm:$0xf]
    %v921 = vld [vmem:[%s1 + $0x518] sm:$0xf]
    %v922 = vld [vmem:[%s1 + $0x51c] sm:$0xf]
    %v923 = vld [vmem:[%s1 + $0x520] sm:$0xf]
    %v924 = vld [vmem:[%s1 + $0x524] sm:$0xf]
    %v925 = vld [vmem:[%s1 + $0x528] sm:$0xf]
    %v926 = vld [vmem:[%s1 + $0x52c] sm:$0xf]
    %v927 = vld [vmem:[%s1 + $0x530] sm:$0xf]
    %v928 = vld [vmem:[%s1 + $0x534] sm:$0xf]
    %v929 = vld [vmem:[%s1 + $0x538] sm:$0xf]
    %v930 = vld [vmem:[%s1 + $0x53c] sm:$0xf]
    %v931 = vld [vmem:[%s1 + $0x540] sm:$0xf]
    %v932 = vld [vmem:[%s1 + $0x544] sm:$0xf]
    %v933 = vld [vmem:[%s1 + $0x548] sm:$0xf]
    %v934 = vld [vmem:[%s1 + $0x54c] sm:$0xf]
    %v935 = vld [vmem:[%s1 + $0x550] sm:$0xf]
    %v936 = vld [vmem:[%s1 + $0x554] sm:$0xf]
    %v937 = vld [vmem:[%s1 + $0x558] sm:$0xf]
    %v938 = vld [vmem:[%s1 + $0x55c] sm:$0xf]
    %v939 = vld [vmem:[%s1 + $0x560] sm:$0xf]
    %v940 = vld [vmem:[%s1 + $0x564] sm:$0xf]
    %v941 = vld [vmem:[%s1 + $0x568] sm:$0xf]
    %v942 = vld [vmem:[%s1 + $0x56c] sm:$0xf]
    %v943 = vld [vmem:[%s1 + $0x570] sm:$0xf]
    %v944 = vld [vmem:[%s1 + $0x574] sm:$0xf]
    %v945 = vld [vmem:[%s1 + $0x578] sm:$0xf]
    %v946 = vld [vmem:[%s1 + $0x57c] sm:$0xf]
    %v947 = vld [vmem:[%s1 + $0x580] sm:$0xf]
    %v948 = vld [vmem:[%s1 + $0x584] sm:$0xf]
    %v949 = vld [vmem:[%s1 + $0x588] sm:$0xf]
    %v950 = vld [vmem:[%s1 + $0x58c] sm:$0xf]
    %v951 = vld [vmem:[%s1 + $0x590] sm:$0xf]
    %v952 = vld [vmem:[%s1 + $0x594] sm:$0xf]
    %v953 = vld [vmem:[%s1 + $0x598] sm:$0xf]
    %v954 = vld [vmem:[%s1 + $0x59c] sm:$0xf]
    %v955 = vld [vmem:[%s1 + $0x5a0] sm:$0xf]
    %v956 = vld [vmem:[%s1 + $0x5a4] sm:$0xf]
    %v957 = vld [vmem:[%s1 + $0x5a8] sm:$0xf]
    %v958 = vld [vmem:[%s1 + $0x5ac] sm:$0xf]
    %v959 = vld [vmem:[%s1 + $0x5b0] sm:$0xf]
    %v960 = vld [vmem:[%s1 + $0x5b4] sm:$0xf]
    %v961 = vld [vmem:[%s1 + $0x5b8] sm:$0xf]
    %v962 = vld [vmem:[%s1 + $0x5bc] sm:$0xf]
    %v963 = vld [vmem:[%s1 + $0x5c0] sm:$0xf]
    %v964 = vld [vmem:[%s1 + $0x5c4] sm:$0xf]
    %v965 = vld [vmem:[%s1 + $0x5c8] sm:$0xf]
    %v966 = vld [vmem:[%s1 + $0x5cc] sm:$0xf]
    %v967 = vld [vmem:[%s1 + $0x5d0] sm:$0xf]
    %v968 = vld [vmem:[%s1 + $0x5d4] sm:$0xf]
    %v969 = vld [vmem:[%s1 + $0x5d8] sm:$0xf]
    %v970 = vld [vmem:[%s1 + $0x5dc] sm:$0xf]
    %v971 = vld [vmem:[%s1 + $0x5e0] sm:$0xf]
    %v972 = vld [vmem:[%s1 + $0x5e4] sm:$0xf]
    %v973 = vld [vmem:[%s1 + $0x5e8] sm:$0xf]
    %v974 = vld [vmem:[%s1 + $0x5ec] sm:$0xf]
    %v975 = vld [vmem:[%s1 + $0x5f0] sm:$0xf]
    %v976 = vld [vmem:[%s1 + $0x5f4] sm:$0xf]
    %v977 = vld [vmem:[%s1 + $0x5f8] sm:$0xf]
    %v978 = vld [vmem:[%s1 + $0x5fc] sm:$0xf]
    %v979 = vld [vmem:[%s1 + $0x600] sm:$0xf]
    %v980 = vld [vmem:[%s1 + $0x604] sm:$0xf]
    %v981 = vld [vmem:[%s1 + $0x608] sm:$0xf]
    %v982 = vld [vmem:[%s1 + $0x60c] sm:$0xf]
    %v983 = vld [vmem:[%s1 + $0x610] sm:$0xf]
    %v984 = vld [vmem:[%s1 + $0x614] sm:$0xf]
    %v985 = vld [vmem:[%s1 + $0x618] sm:$0xf]
    %v986 = vld [vmem:[%s1 + $0x61c] sm:$0xf]
    %v987 = vld [vmem:[%s1 + $0x620] sm:$0xf]
    %v988 = vld [vmem:[%s1 + $0x624] sm:$0xf]
    %v989 = vld [vmem:[%s1 + $0x628] sm:$0xf]
    %v990 = vld [vmem:[%s1 + $0x62c] sm:$0xf]
    %v991 = vld [vmem:[%s1 + $0x630] sm:$0xf]
    %v992 = vld [vmem:[%s1 + $0x634] sm:$0xf]
    %v993 = vld [vmem:[%s1 + $0x638] sm:$0xf]
    %v994 = vld [vmem:[%s1 + $0x63c] sm:$0xf]
    %v995 = vld [vmem:[%s1 + $0x640] sm:$0xf]
    %v996 = vld [vmem:[%s1 + $0x644] sm:$0xf]
    %v997 = vld [vmem:[%s1 + $0x648] sm:$0xf]
    %v998 = vld [vmem:[%s1 + $0x64c] sm:$0xf]
    %v999 = vld [vmem:[%s1 + $0x650] sm:$0xf]
    %v1000 = vld [vmem:[%s1 + $0x654] sm:$0xf]
    %v1001 = vld [vmem:[%s1 + $0x658] sm:$0xf]
    %v1002 = vld [vmem:[%s1 + $0x65c] sm:$0xf]
    %v1003 = vld [vmem:[%s1 + $0x660] sm:$0xf]
    %v1004 = vld [vmem:[%s1 + $0x664] sm:$0xf]
    %v1005 = vld [vmem:[%s1 + $0x668] sm:$0xf]
    %v1006 = vld [vmem:[%s1 + $0x66c] sm:$0xf]
    %v1007 = vld [vmem:[%s1 + $0x670] sm:$0xf]
    %v1008 = vld [vmem:[%s1 + $0x674] sm:$0xf]
    %v1009 = vld [vmem:[%s1 + $0x678] sm:$0xf]
    %v1010 = vld [vmem:[%s1 + $0x67c] sm:$0xf]
    %v1011 = vld [vmem:[%s1 + $0x680] sm:$0xf]
    %v1012 = vld [vmem:[%s1 + $0x684] sm:$0xf]
    %v1013 = vld [vmem:[%s1 + $0x688] sm:$0xf]
    %v1014 = vld [vmem:[%s1 + $0x68c] sm:$0xf]
    %v1015 = vld [vmem:[%s1 + $0x690] sm:$0xf]
    %v1016 = vld [vmem:[%s1 + $0x694] sm:$0xf]
    %v1017 = vld [vmem:[%s1 + $0x698] sm:$0xf]
    %v1018 = vld [vmem:[%s1 + $0x69c] sm:$0xf]
    %v1019 = vld [vmem:[%s1 + $0x6a0] sm:$0xf]
    %v1020 = vld [vmem:[%s1 + $0x6a4] sm:$0xf]
    %v1021 = vld [vmem:[%s1 + $0x6a8] sm:$0xf]
    %v1022 = vld [vmem:[%s1 + $0x6ac] sm:$0xf]
    %v1023 = vld [vmem:[%s1 + $0x6b0] sm:$0xf]
    %v1024 = vld [vmem:[%s1 + $0x6b4] sm:$0xf]
    %v1025 = vld [vmem:[%s1 + $0x6b8] sm:$0xf]
    %v1026 = vld [vmem:[%s1 + $0x6bc] sm:$0xf]
    %v1027 = vld [vmem:[%s1 + $0x6c0] sm:$0xf]
    %v1028 = vld [vmem:[%s1 + $0x6c4] sm:$0xf]
    %v1029 = vld [vmem:[%s1 + $0x6c8] sm:$0xf]
    %v1030 = vld [vmem:[%s1 + $0x6cc] sm:$0xf]
    %v1031 = vld [vmem:[%s1 + $0x6d0] sm:$0xf]
    %v1032 = vld [vmem:[%s1 + $0x6d4] sm:$0xf]
    %v1033 = vld [vmem:[%s1 + $0x6d8] sm:$0xf]
    %v1034 = vld [vmem:[%s1 + $0x6dc] sm:$0xf]
    %v1035 = vld [vmem:[%s1 + $0x6e0] sm:$0xf]
    %v1036 = vld [vmem:[%s1 + $0x6e4] sm:$0xf]
    %v1037 = vld [vmem:[%s1 + $0x6e8] sm:$0xf]
    %v1038 = vld [vmem:[%s1 + $0x6ec] sm:$0xf]
    %v1039 = vld [vmem:[%s1 + $0x6f0] sm:$0xf]
    %v1040 = vld [vmem:[%s1 + $0x6f4] sm:$0xf]
    %v1041 = vld [vmem:[%s1 + $0x6f8] sm:$0xf]
    %v1042 = vld [vmem:[%s1 + $0x6fc] sm:$0xf]
    %v1043 = vld [vmem:[%s1 + $0x700] sm:$0xf]
    %v1044 = vld [vmem:[%s1 + $0x704] sm:$0xf]
    %v1045 = vld [vmem:[%s1 + $0x708] sm:$0xf]
    %v1046 = vld [vmem:[%s1 + $0x70c] sm:$0xf]
    %v1047 = vld [vmem:[%s1 + $0x710] sm:$0xf]
    %v1048 = vld [vmem:[%s1 + $0x714] sm:$0xf]
    %v1049 = vld [vmem:[%s1 + $0x718] sm:$0xf]
    %v1050 = vld [vmem:[%s1 + $0x71c] sm:$0xf]
    %v1051 = vld [vmem:[%s1 + $0x720] sm:$0xf]
    %v1052 = vld [vmem:[%s1 + $0x724] sm:$0xf]
    %v1053 = vld [vmem:[%s1 + $0x728] sm:$0xf]
    %v1054 = vld [vmem:[%s1 + $0x72c] sm:$0xf]
    %v1055 = vld [vmem:[%s1 + $0x730] sm:$0xf]
    %v1056 = vld [vmem:[%s1 + $0x734] sm:$0xf]
    %v1057 = vld [vmem:[%s1 + $0x738] sm:$0xf]
    %v1058 = vld [vmem:[%s1 + $0x73c] sm:$0xf]
    %v1059 = vld [vmem:[%s1 + $0x740] sm:$0xf]
    %v1060 = vld [vmem:[%s1 + $0x744] sm:$0xf]
    %v1061 = vld [vmem:[%s1 + $0x748] sm:$0xf]
    %v1062 = vld [vmem:[%s1 + $0x74c] sm:$0xf]
    %v1063 = vld [vmem:[%s1 + $0x750] sm:$0xf]
    %v1064 = vld [vmem:[%s1 + $0x754] sm:$0xf]
    %v1065 = vld [vmem:[%s1 + $0x758] sm:$0xf]
    %v1066 = vld [vmem:[%s1 + $0x75c] sm:$0xf]
    %v1067 = vld [vmem:[%s1 + $0x760] sm:$0xf]
    %v1068 = vld [vmem:[%s1 + $0x764] sm:$0xf]
    %v1069 = vld [vmem:[%s1 + $0x768] sm:$0xf]
    %v1070 = vld [vmem:[%s1 + $0x76c] sm:$0xf]
    %v1071 = vld [vmem:[%s1 + $0x770] sm:$0xf]
    %v1072 = vld [vmem:[%s1 + $0x774] sm:$0xf]
    %v1073 = vld [vmem:[%s1 + $0x778] sm:$0xf]
    %v1074 = vld [vmem:[%s1 + $0x77c] sm:$0xf]
    %v1075 = vld [vmem:[%s1 + $0x780] sm:$0xf]
    %v1076 = vld [vmem:[%s1 + $0x784] sm:$0xf]
    %v1077 = vld [vmem:[%s1 + $0x788] sm:$0xf]
    %v1078 = vld [vmem:[%s1 + $0x78c] sm:$0xf]
    %v1079 = vld [vmem:[%s1 + $0x790] sm:$0xf]
    %v1080 = vld [vmem:[%s1 + $0x794] sm:$0xf]
    %v1081 = vld [vmem:[%s1 + $0x798] sm:$0xf]
    %v1082 = vld [vmem:[%s1 + $0x79c] sm:$0xf]
    %v1083 = vld [vmem:[%s1 + $0x7a0] sm:$0xf]
    %v1084 = vld [vmem:[%s1 + $0x7a4] sm:$0xf]
    %v1085 = vld [vmem:[%s1 + $0x7a8] sm:$0xf]
    %v1086 = vld [vmem:[%s1 + $0x7ac] sm:$0xf]
    %v1087 = vld [vmem:[%s1 + $0x7b0] sm:$0xf]
    %v1088 = vld [vmem:[%s1 + $0x7b4] sm:$0xf]
    %v1089 = vld [vmem:[%s1 + $0x7b8] sm:$0xf]
    %v1090 = vld [vmem:[%s1 + $0x7bc] sm:$0xf]
    %v1091 = vld [vmem:[%s1 + $0x7c0] sm:$0xf]
    %v1092 = vld [vmem:[%s1 + $0x7c4] sm:$0xf]
    %v1093 = vld [vmem:[%s1 + $0x7c8] sm:$0xf]
    %v1094 = vld [vmem:[%s1 + $0x7cc] sm:$0xf]
    %v1095 = vld [vmem:[%s1 + $0x7d0] sm:$0xf]
    %v1096 = vld [vmem:[%s1 + $0x7d4] sm:$0xf]
    %v1097 = vld [vmem:[%s1 + $0x7d8] sm:$0xf]
    %v1098 = vld [vmem:[%s1 + $0x7dc] sm:$0xf]
    %v1099 = vld [vmem:[%s1 + $0x7e0] sm:$0xf]
    %v1100 = vld [vmem:[%s1 + $0x7e4] sm:$0xf]
    %v1101 = vld [vmem:[%s1 + $0x7e8] sm:$0xf]
    %v1102 = vld [vmem:[%s1 + $0x7ec] sm:$0xf]
    %v1103 = vld [vmem:[%s1 + $0x7f0] sm:$0xf]
    %v1104 = vld [vmem:[%s1 + $0x7f4] sm:$0xf]
    %v1105 = vld [vmem:[%s1 + $0x7f8] sm:$0xf]
    %v1106 = vld [vmem:[%s1 + $0x7fc] sm:$0xf]
    %v1107 = vld [vmem:[%s1 + $0x800] sm:$0xf]
    %v1108 = vld [vmem:[%s1 + $0x804] sm:$0xf]
    %v1109 = vld [vmem:[%s1 + $0x808] sm:$0xf]
    %v1110 = vld [vmem:[%s1 + $0x80c] sm:$0xf]
    %v1111 = vld [vmem:[%s1 + $0x810] sm:$0xf]
    %v1112 = vld [vmem:[%s1 + $0x814] sm:$0xf]
    %v1113 = vld [vmem:[%s1 + $0x818] sm:$0xf]
    %v1114 = vld [vmem:[%s1 + $0x81c] sm:$0xf]
    %v1115 = vld [vmem:[%s1 + $0x820] sm:$0xf]
    %v1116 = vld [vmem:[%s1 + $0x824] sm:$0xf]
    %v1117 = vld [vmem:[%s1 + $0x828] sm:$0xf]
    %v1118 = vld [vmem:[%s1 + $0x82c] sm:$0xf]
    %v1119 = vld [vmem:[%s1 + $0x830] sm:$0xf]
    %v1120 = vld [vmem:[%s1 + $0x834] sm:$0xf]
    %v1121 = vld [vmem:[%s1 + $0x838] sm:$0xf]
    %v1122 = vld [vmem:[%s1 + $0x83c] sm:$0xf]
    %v1123 = vld [vmem:[%s1 + $0x840] sm:$0xf]
    %v1124 = vld [vmem:[%s1 + $0x844] sm:$0xf]
    %v1125 = vld [vmem:[%s1 + $0x848] sm:$0xf]
    %v1126 = vld [vmem:[%s1 + $0x84c] sm:$0xf]
    %v1127 = vld [vmem:[%s1 + $0x850] sm:$0xf]
    %v1128 = vld [vmem:[%s1 + $0x854] sm:$0xf]
    %v1129 = vld [vmem:[%s1 + $0x858] sm:$0xf]
    %v1130 = vld [vmem:[%s1 + $0x85c] sm:$0xf]
    %v1131 = vld [vmem:[%s1 + $0x860] sm:$0xf]
    %v1132 = vld [vmem:[%s1 + $0x864] sm:$0xf]
    %v1133 = vld [vmem:[%s1 + $0x868] sm:$0xf]
    %v1134 = vld [vmem:[%s1 + $0x86c] sm:$0xf]
    %v1135 = vld [vmem:[%s1 + $0x870] sm:$0xf]
    %v1136 = vld [vmem:[%s1 + $0x874] sm:$0xf]
    %v1137 = vld [vmem:[%s1 + $0x878] sm:$0xf]
    %v1138 = vld [vmem:[%s1 + $0x87c] sm:$0xf]
    %v1139 = vld [vmem:[%s1 + $0x880] sm:$0xf]
    %v1140 = vld [vmem:[%s1 + $0x884] sm:$0xf]
    %v1141 = vld [vmem:[%s1 + $0x888] sm:$0xf]
    %v1142 = vld [vmem:[%s1 + $0x88c] sm:$0xf]
    %v1143 = vld [vmem:[%s1 + $0x890] sm:$0xf]
    %v1144 = vld [vmem:[%s1 + $0x894] sm:$0xf]
    %v1145 = vld [vmem:[%s1 + $0x898] sm:$0xf]
    %v1146 = vld [vmem:[%s1 + $0x89c] sm:$0xf]
    %v1147 = vld [vmem:[%s1 + $0x8a0] sm:$0xf]
    %v1148 = vld [vmem:[%s1 + $0x8a4] sm:$0xf]
    %v1149 = vld [vmem:[%s1 + $0x8a8] sm:$0xf]
    %v1150 = vld [vmem:[%s1 + $0x8ac] sm:$0xf]
    %v1151 = vld [vmem:[%s1 + $0x8b0] sm:$0xf]
    %v1152 = vld [vmem:[%s1 + $0x8b4] sm:$0xf]
    %v1153 = vld [vmem:[%s1 + $0x8b8] sm:$0xf]
    %v1154 = vld [vmem:[%s1 + $0x8bc] sm:$0xf]
    %v1155 = vld [vmem:[%s1 + $0x8c0] sm:$0xf]
    %v1156 = vld [vmem:[%s1 + $0x8c4] sm:$0xf]
    %v1157 = vld [vmem:[%s1 + $0x8c8] sm:$0xf]
    %v1158 = vld [vmem:[%s1 + $0x8cc] sm:$0xf]
    %v1159 = vld [vmem:[%s1 + $0x8d0] sm:$0xf]
    %v1160 = vld [vmem:[%s1 + $0x8d4] sm:$0xf]
    %v1161 = vld [vmem:[%s1 + $0x8d8] sm:$0xf]
    %v1162 = vld [vmem:[%s1 + $0x8dc] sm:$0xf]
    %v1163 = vld [vmem:[%s1 + $0x8e0] sm:$0xf]
    %v1164 = vld [vmem:[%s1 + $0x8e4] sm:$0xf]
    %v1165 = vld [vmem:[%s1 + $0x8e8] sm:$0xf]
    %v1166 = vld [vmem:[%s1 + $0x8ec] sm:$0xf]
    %v1167 = vld [vmem:[%s1 + $0x8f0] sm:$0xf]
    %v1168 = vld [vmem:[%s1 + $0x8f4] sm:$0xf]
    %v1169 = vld [vmem:[%s1 + $0x8f8] sm:$0xf]
    %v1170 = vld [vmem:[%s1 + $0x8fc] sm:$0xf]
    %v1171 = vld [vmem:[%s1 + $0x900] sm:$0xf]
    %v1172 = vld [vmem:[%s1 + $0x904] sm:$0xf]
    %v1173 = vld [vmem:[%s1 + $0x908] sm:$0xf]
    %v1174 = vld [vmem:[%s1 + $0x90c] sm:$0xf]
    %v1175 = vld [vmem:[%s1 + $0x910] sm:$0xf]
    %v1176 = vld [vmem:[%s1 + $0x914] sm:$0xf]
    %v1177 = vld [vmem:[%s1 + $0x918] sm:$0xf]
    %v1178 = vld [vmem:[%s1 + $0x91c] sm:$0xf]
    %v1179 = vld [vmem:[%s1 + $0x920] sm:$0xf]
    %v1180 = vld [vmem:[%s1 + $0x924] sm:$0xf]
    %v1181 = vld [vmem:[%s1 + $0x928] sm:$0xf]
    %v1182 = vld [vmem:[%s1 + $0x92c] sm:$0xf]
    %v1183 = vld [vmem:[%s1 + $0x930] sm:$0xf]
    %v1184 = vld [vmem:[%s1 + $0x934] sm:$0xf]
    %v1185 = vld [vmem:[%s1 + $0x938] sm:$0xf]
    %v1186 = vld [vmem:[%s1 + $0x93c] sm:$0xf]
    %v1187 = vld [vmem:[%s1 + $0x940] sm:$0xf]
    %v1188 = vld [vmem:[%s1 + $0x944] sm:$0xf]
    %v1189 = vld [vmem:[%s1 + $0x948] sm:$0xf]
    %v1190 = vld [vmem:[%s1 + $0x94c] sm:$0xf]
    %v1191 = vld [vmem:[%s1 + $0x950] sm:$0xf]
    %v1192 = vld [vmem:[%s1 + $0x954] sm:$0xf]
    %v1193 = vld [vmem:[%s1 + $0x958] sm:$0xf]
    %v1194 = vld [vmem:[%s1 + $0x95c] sm:$0xf]
    %v1195 = vld [vmem:[%s1 + $0x960] sm:$0xf]
    %v1196 = vld [vmem:[%s1 + $0x964] sm:$0xf]
    %v1197 = vld [vmem:[%s1 + $0x968] sm:$0xf]
    %v1198 = vld [vmem:[%s1 + $0x96c] sm:$0xf]
    %v1199 = vld [vmem:[%s1 + $0x970] sm:$0xf]
    %v1200 = vld [vmem:[%s1 + $0x974] sm:$0xf]
    %v1201 = vld [vmem:[%s1 + $0x978] sm:$0xf]
    %v1202 = vld [vmem:[%s1 + $0x97c] sm:$0xf]
    %v1203 = vld [vmem:[%s1 + $0x980] sm:$0xf]
    %v1204 = vld [vmem:[%s1 + $0x984] sm:$0xf]
    %v1205 = vld [vmem:[%s1 + $0x988] sm:$0xf]
    %v1206 = vld [vmem:[%s1 + $0x98c] sm:$0xf]
    %v1207 = vld [vmem:[%s1 + $0x990] sm:$0xf]
    %v1208 = vld [vmem:[%s1 + $0x994] sm:$0xf]
    %v1209 = vld [vmem:[%s1 + $0x998] sm:$0xf]
    %v1210 = vld [vmem:[%s1 + $0x99c] sm:$0xf]
    %v1211 = vld [vmem:[%s1 + $0x9a0] sm:$0xf]
    %v1212 = vld [vmem:[%s1 + $0x9a4] sm:$0xf]
    %v1213 = vld [vmem:[%s1 + $0x9a8] sm:$0xf]
    %v1214 = vld [vmem:[%s1 + $0x9ac] sm:$0xf]
    %v1215 = vld [vmem:[%s1 + $0x9b0] sm:$0xf]
    %v1216 = vld [vmem:[%s1 + $0x9b4] sm:$0xf]
    %v1217 = vld [vmem:[%s1 + $0x9b8] sm:$0xf]
    %v1218 = vld [vmem:[%s1 + $0x9bc] sm:$0xf]
    %v1219 = vld [vmem:[%s1 + $0x9c0] sm:$0xf]
    %v1220 = vld [vmem:[%s1 + $0x9c4] sm:$0xf]
    %v1221 = vld [vmem:[%s1 + $0x9c8] sm:$0xf]
    %v1222 = vld [vmem:[%s1 + $0x9cc] sm:$0xf]
    %v1223 = vld [vmem:[%s1 + $0x9d0] sm:$0xf]
    %v1224 = vld [vmem:[%s1 + $0x9d4] sm:$0xf]
    %v1225 = vld [vmem:[%s1 + $0x9d8] sm:$0xf]
    %v1226 = vld [vmem:[%s1 + $0x9dc] sm:$0xf]
    %v1227 = vld [vmem:[%s1 + $0x9e0] sm:$0xf]
    %v1228 = vld [vmem:[%s1 + $0x9e4] sm:$0xf]
    %v1229 = vld [vmem:[%s1 + $0x9e8] sm:$0xf]
    %v1230 = vld [vmem:[%s1 + $0x9ec] sm:$0xf]
    %v1231 = vld [vmem:[%s1 + $0x9f0] sm:$0xf]
    %v1232 = vld [vmem:[%s1 + $0x9f4] sm:$0xf]
    %v1233 = vld [vmem:[%s1 + $0x9f8] sm:$0xf]
    %v1234 = vld [vmem:[%s1 + $0x9fc] sm:$0xf]
    %v1235 = vld [vmem:[%s1 + $0xa00] sm:$0xf]
    %v1236 = vld [vmem:[%s1 + $0xa04] sm:$0xf]
    %v1237 = vld [vmem:[%s1 + $0xa08] sm:$0xf]
    %v1238 = vld [vmem:[%s1 + $0xa0c] sm:$0xf]
    %v1239 = vld [vmem:[%s1 + $0xa10] sm:$0xf]
    %v1240 = vld [vmem:[%s1 + $0xa14] sm:$0xf]
    %v1241 = vld [vmem:[%s1 + $0xa18] sm:$0xf]
    %v1242 = vld [vmem:[%s1 + $0xa1c] sm:$0xf]
    %v1243 = vld [vmem:[%s1 + $0xa20] sm:$0xf]
    %v1244 = vld [vmem:[%s1 + $0xa24] sm:$0xf]
    %v1245 = vld [vmem:[%s1 + $0xa28] sm:$0xf]
    %v1246 = vld [vmem:[%s1 + $0xa2c] sm:$0xf]
    %v1247 = vld [vmem:[%s1 + $0xa30] sm:$0xf]
    %v1248 = vld [vmem:[%s1 + $0xa34] sm:$0xf]
    %v1249 = vld [vmem:[%s1 + $0xa38] sm:$0xf]
    %v1250 = vld [vmem:[%s1 + $0xa3c] sm:$0xf]
    %v1251 = vld [vmem:[%s1 + $0xa40] sm:$0xf]
    %v1252 = vld [vmem:[%s1 + $0xa44] sm:$0xf]
    %v1253 = vld [vmem:[%s1 + $0xa48] sm:$0xf]
    %v1254 = vld [vmem:[%s1 + $0xa4c] sm:$0xf]
    %v1255 = vld [vmem:[%s1 + $0xa50] sm:$0xf]
    %v1256 = vld [vmem:[%s1 + $0xa54] sm:$0xf]
    %v1257 = vld [vmem:[%s1 + $0xa58] sm:$0xf]
    %v1258 = vld [vmem:[%s1 + $0xa5c] sm:$0xf]
    %v1259 = vld [vmem:[%s1 + $0xa60] sm:$0xf]
    %v1260 = vld [vmem:[%s1 + $0xa64] sm:$0xf]
    %v1261 = vld [vmem:[%s1 + $0xa68] sm:$0xf]
    %v1262 = vld [vmem:[%s1 + $0xa6c] sm:$0xf]
    %v1263 = vld [vmem:[%s1 + $0xa70] sm:$0xf]
    %v1264 = vld [vmem:[%s1 + $0xa74] sm:$0xf]
    %v1265 = vld [vmem:[%s1 + $0xa78] sm:$0xf]
    %v1266 = vld [vmem:[%s1 + $0xa7c] sm:$0xf]
    %v1267 = vld [vmem:[%s1 + $0xa80] sm:$0xf]
    %v1268 = vld [vmem:[%s1 + $0xa84] sm:$0xf]
    %v1269 = vld [vmem:[%s1 + $0xa88] sm:$0xf]
    %v1270 = vld [vmem:[%s1 + $0xa8c] sm:$0xf]
    %v1271 = vld [vmem:[%s1 + $0xa90] sm:$0xf]
    %v1272 = vld [vmem:[%s1 + $0xa94] sm:$0xf]
    %v1273 = vld [vmem:[%s1 + $0xa98] sm:$0xf]
    %v1274 = vld [vmem:[%s1 + $0xa9c] sm:$0xf]
    %v1275 = vld [vmem:[%s1 + $0xaa0] sm:$0xf]
    %v1276 = vld [vmem:[%s1 + $0xaa4] sm:$0xf]
    %v1277 = vld [vmem:[%s1 + $0xaa8] sm:$0xf]
    %v1278 = vld [vmem:[%s1 + $0xaac] sm:$0xf]
    %v1279 = vld [vmem:[%s1 + $0xab0] sm:$0xf]
    %v1280 = vld [vmem:[%s1 + $0xab4] sm:$0xf]
    %v1281 = vld [vmem:[%s1 + $0xab8] sm:$0xf]
    %v1282 = vld [vmem:[%s1 + $0xabc] sm:$0xf]
    %v1283 = vld [vmem:[%s1 + $0xac0] sm:$0xf]
    %v1284 = vld [vmem:[%s1 + $0xac4] sm:$0xf]
    %v1285 = vld [vmem:[%s1 + $0xac8] sm:$0xf]
    %v1286 = vld [vmem:[%s1 + $0xacc] sm:$0xf]
    %v1287 = vld [vmem:[%s1 + $0xad0] sm:$0xf]
    %v1288 = vld [vmem:[%s1 + $0xad4] sm:$0xf]
    %v1289 = vld [vmem:[%s1 + $0xad8] sm:$0xf]
    %v1290 = vld [vmem:[%s1 + $0xadc] sm:$0xf]
    %v1291 = vld [vmem:[%s1 + $0xae0] sm:$0xf]
    %v1292 = vld [vmem:[%s1 + $0xae4] sm:$0xf]
    %v1293 = vld [vmem:[%s1 + $0xae8] sm:$0xf]
    %v1294 = vld [vmem:[%s1 + $0xaec] sm:$0xf]
    %v1295 = vld [vmem:[%s1 + $0xaf0] sm:$0xf]
    %v1296 = vld [vmem:[%s1 + $0xaf4] sm:$0xf]
    %v1297 = vld [vmem:[%s1 + $0xaf8] sm:$0xf]
    %v1298 = vld [vmem:[%s1 + $0xafc] sm:$0xf]
    %v1299 = vld [vmem:[%s1 + $0xb00] sm:$0xf]
    %v1300 = vld [vmem:[%s1 + $0xb04] sm:$0xf]
    %v1301 = vld [vmem:[%s1 + $0xb08] sm:$0xf]
    %v1302 = vld [vmem:[%s1 + $0xb0c] sm:$0xf]
    %v1303 = vld [vmem:[%s1 + $0xb10] sm:$0xf]
    %v1304 = vld [vmem:[%s1 + $0xb14] sm:$0xf]
    %v1305 = vld [vmem:[%s1 + $0xb18] sm:$0xf]
    %v1306 = vld [vmem:[%s1 + $0xb1c] sm:$0xf]
    %v1307 = vld [vmem:[%s1 + $0xb20] sm:$0xf]
    %v1308 = vld [vmem:[%s1 + $0xb24] sm:$0xf]
    %v1309 = vld [vmem:[%s1 + $0xb28] sm:$0xf]
    %v1310 = vld [vmem:[%s1 + $0xb2c] sm:$0xf]
    %v1311 = vld [vmem:[%s1 + $0xb30] sm:$0xf]
    %v1312 = vld [vmem:[%s1 + $0xb34] sm:$0xf]
    %v1313 = vld [vmem:[%s1 + $0xb38] sm:$0xf]
    %v1314 = vld [vmem:[%s1 + $0xb3c] sm:$0xf]
    %v1315 = vld [vmem:[%s1 + $0xb40] sm:$0xf]
    %v1316 = vld [vmem:[%s1 + $0xb44] sm:$0xf]
    %v1317 = vld [vmem:[%s1 + $0xb48] sm:$0xf]
    %v1318 = vld [vmem:[%s1 + $0xb4c] sm:$0xf]
    %v1319 = vld [vmem:[%s1 + $0xb50] sm:$0xf]
    %v1320 = vld [vmem:[%s1 + $0xb54] sm:$0xf]
    %v1321 = vld [vmem:[%s1 + $0xb58] sm:$0xf]
    %v1322 = vld [vmem:[%s1 + $0xb5c] sm:$0xf]
    %v1323 = vld [vmem:[%s1 + $0xb60] sm:$0xf]
    %v1324 = vld [vmem:[%s1 + $0xb64] sm:$0xf]
    %v1325 = vld [vmem:[%s1 + $0xb68] sm:$0xf]
    %v1326 = vld [vmem:[%s1 + $0xb6c] sm:$0xf]
    %v1327 = vld [vmem:[%s1 + $0xb70] sm:$0xf]
    %v1328 = vld [vmem:[%s1 + $0xb74] sm:$0xf]
    %v1329 = vld [vmem:[%s1 + $0xb78] sm:$0xf]
    %v1330 = vld [vmem:[%s1 + $0xb7c] sm:$0xf]
    %v1331 = vld [vmem:[%s1 + $0xb80] sm:$0xf]
    %v1332 = vld [vmem:[%s1 + $0xb84] sm:$0xf]
    %v1333 = vld [vmem:[%s1 + $0xb88] sm:$0xf]
    %v1334 = vld [vmem:[%s1 + $0xb8c] sm:$0xf]
    %v1335 = vld [vmem:[%s1 + $0xb90] sm:$0xf]
    %v1336 = vld [vmem:[%s1 + $0xb94] sm:$0xf]
    %v1337 = vld [vmem:[%s1 + $0xb98] sm:$0xf]
    %v1338 = vld [vmem:[%s1 + $0xb9c] sm:$0xf]
    %v1339 = vld [vmem:[%s1 + $0xba0] sm:$0xf]
    %v1340 = vld [vmem:[%s1 + $0xba4] sm:$0xf]
    %v1341 = vld [vmem:[%s1 + $0xba8] sm:$0xf]
    %v1342 = vld [vmem:[%s1 + $0xbac] sm:$0xf]
    %v1343 = vld [vmem:[%s1 + $0xbb0] sm:$0xf]
    %v1344 = vld [vmem:[%s1 + $0xbb4] sm:$0xf]
    %v1345 = vld [vmem:[%s1 + $0xbb8] sm:$0xf]
    %v1346 = vld [vmem:[%s1 + $0xbbc] sm:$0xf]
    %v1347 = vld [vmem:[%s1 + $0xbc0] sm:$0xf]
    %v1348 = vld [vmem:[%s1 + $0xbc4] sm:$0xf]
    %v1349 = vld [vmem:[%s1 + $0xbc8] sm:$0xf]
    %v1350 = vld [vmem:[%s1 + $0xbcc] sm:$0xf]
    %v1351 = vld [vmem:[%s1 + $0xbd0] sm:$0xf]
    %v1352 = vld [vmem:[%s1 + $0xbd4] sm:$0xf]
    %v1353 = vld [vmem:[%s1 + $0xbd8] sm:$0xf]
    %v1354 = vld [vmem:[%s1 + $0xbdc] sm:$0xf]
    %v1355 = vld [vmem:[%s1 + $0xbe0] sm:$0xf]
    %v1356 = vld [vmem:[%s1 + $0xbe4] sm:$0xf]
    %v1357 = vld [vmem:[%s1 + $0xbe8] sm:$0xf]
    %v1358 = vld [vmem:[%s1 + $0xbec] sm:$0xf]
    %v1359 = vld [vmem:[%s1 + $0xbf0] sm:$0xf]
    %v1360 = vld [vmem:[%s1 + $0xbf4] sm:$0xf]
    %v1361 = vld [vmem:[%s1 + $0xbf8] sm:$0xf]
    %v1362 = vld [vmem:[%s1 + $0xbfc] sm:$0xf]
    %v1363 = vld [vmem:[%s1 + $0xc00] sm:$0xf]
    %v1364 = vld [vmem:[%s1 + $0xc04] sm:$0xf]
    %v1365 = vld [vmem:[%s1 + $0xc08] sm:$0xf]
    %v1366 = vld [vmem:[%s1 + $0xc0c] sm:$0xf]
    %v1367 = vld [vmem:[%s1 + $0xc10] sm:$0xf]
    %v1368 = vld [vmem:[%s1 + $0xc14] sm:$0xf]
    %v1369 = vld [vmem:[%s1 + $0xc18] sm:$0xf]
    %v1370 = vld [vmem:[%s1 + $0xc1c] sm:$0xf]
    %v1371 = vld [vmem:[%s1 + $0xc20] sm:$0xf]
    %v1372 = vld [vmem:[%s1 + $0xc24] sm:$0xf]
    %v1373 = vld [vmem:[%s1 + $0xc28] sm:$0xf]
    %v1374 = vld [vmem:[%s1 + $0xc2c] sm:$0xf]
    %v1375 = vld [vmem:[%s1 + $0xc30] sm:$0xf]
    %v1376 = vld [vmem:[%s1 + $0xc34] sm:$0xf]
    %v1377 = vld [vmem:[%s1 + $0xc38] sm:$0xf]
    %v1378 = vld [vmem:[%s1 + $0xc3c] sm:$0xf]
    %v1379 = vld [vmem:[%s1 + $0xc40] sm:$0xf]
    %v1380 = vld [vmem:[%s1 + $0xc44] sm:$0xf]
    %v1381 = vld [vmem:[%s1 + $0xc48] sm:$0xf]
    %v1382 = vld [vmem:[%s1 + $0xc4c] sm:$0xf]
    %v1383 = vld [vmem:[%s1 + $0xc50] sm:$0xf]
    %v1384 = vld [vmem:[%s1 + $0xc54] sm:$0xf]
    %v1385 = vld [vmem:[%s1 + $0xc58] sm:$0xf]
    %v1386 = vld [vmem:[%s1 + $0xc5c] sm:$0xf]
    %v1387 = vld [vmem:[%s1 + $0xc60] sm:$0xf]
    %v1388 = vld [vmem:[%s1 + $0xc64] sm:$0xf]
    %v1389 = vld [vmem:[%s1 + $0xc68] sm:$0xf]
    %v1390 = vld [vmem:[%s1 + $0xc6c] sm:$0xf]
    %v1391 = vld [vmem:[%s1 + $0xc70] sm:$0xf]
    %v1392 = vld [vmem:[%s1 + $0xc74] sm:$0xf]
    %v1393 = vld [vmem:[%s1 + $0xc78] sm:$0xf]
    %v1394 = vld [vmem:[%s1 + $0xc7c] sm:$0xf]
    %v1395 = vld [vmem:[%s1 + $0xc80] sm:$0xf]
    %v1396 = vld [vmem:[%s1 + $0xc84] sm:$0xf]
    %v1397 = vld [vmem:[%s1 + $0xc88] sm:$0xf]
    %v1398 = vld [vmem:[%s1 + $0xc8c] sm:$0xf]
    %v1399 = vld [vmem:[%s1 + $0xc90] sm:$0xf]
    %v1400 = vld [vmem:[%s1 + $0xc94] sm:$0xf]
    %v1401 = vld [vmem:[%s1 + $0xc98] sm:$0xf]
    %v1402 = vld [vmem:[%s1 + $0xc9c] sm:$0xf]
    %v1403 = vld [vmem:[%s1 + $0xca0] sm:$0xf]
    %v1404 = vld [vmem:[%s1 + $0xca4] sm:$0xf]
    %v1405 = vld [vmem:[%s1 + $0xca8] sm:$0xf]
    %v1406 = vld [vmem:[%s1 + $0xcac] sm:$0xf]
    %v1407 = vld [vmem:[%s1 + $0xcb0] sm:$0xf]
    %v1408 = vld [vmem:[%s1 + $0xcb4] sm:$0xf]
    %v1409 = vld [vmem:[%s1 + $0xcb8] sm:$0xf]
    %v1410 = vld [vmem:[%s1 + $0xcbc] sm:$0xf]
    %v1411 = vld [vmem:[%s1 + $0xcc0] sm:$0xf]
    %v1412 = vld [vmem:[%s1 + $0xcc4] sm:$0xf]
    %v1413 = vld [vmem:[%s1 + $0xcc8] sm:$0xf]
    %v1414 = vld [vmem:[%s1 + $0xccc] sm:$0xf]
    %v1415 = vld [vmem:[%s1 + $0xcd0] sm:$0xf]
    %v1416 = vld [vmem:[%s1 + $0xcd4] sm:$0xf]
    %v1417 = vld [vmem:[%s1 + $0xcd8] sm:$0xf]
    %v1418 = vld [vmem:[%s1 + $0xcdc] sm:$0xf]
    %v1419 = vld [vmem:[%s1 + $0xce0] sm:$0xf]
    %v1420 = vld [vmem:[%s1 + $0xce4] sm:$0xf]
    %v1421 = vld [vmem:[%s1 + $0xce8] sm:$0xf]
    %v1422 = vld [vmem:[%s1 + $0xcec] sm:$0xf]
    %v1423 = vld [vmem:[%s1 + $0xcf0] sm:$0xf]
    %v1424 = vld [vmem:[%s1 + $0xcf4] sm:$0xf]
    %v1425 = vld [vmem:[%s1 + $0xcf8] sm:$0xf]
    %v1426 = vld [vmem:[%s1 + $0xcfc] sm:$0xf]
    %v1427 = vld [vmem:[%s1 + $0xd00] sm:$0xf]
    %v1428 = vld [vmem:[%s1 + $0xd04] sm:$0xf]
    %v1429 = vld [vmem:[%s1 + $0xd08] sm:$0xf]
    %v1430 = vld [vmem:[%s1 + $0xd0c] sm:$0xf]
    %v1431 = vld [vmem:[%s1 + $0xd10] sm:$0xf]
    %v1432 = vld [vmem:[%s1 + $0xd14] sm:$0xf]
    %v1433 = vld [vmem:[%s1 + $0xd18] sm:$0xf]
    %v1434 = vld [vmem:[%s1 + $0xd1c] sm:$0xf]
    %v1435 = vld [vmem:[%s1 + $0xd20] sm:$0xf]
    %v1436 = vld [vmem:[%s1 + $0xd24] sm:$0xf]
    %v1437 = vld [vmem:[%s1 + $0xd28] sm:$0xf]
    %v1438 = vld [vmem:[%s1 + $0xd2c] sm:$0xf]
    %v1439 = vld [vmem:[%s1 + $0xd30] sm:$0xf]
    %v1440 = vld [vmem:[%s1 + $0xd34] sm:$0xf]
    %v1441 = vld [vmem:[%s1 + $0xd38] sm:$0xf]
    %v1442 = vld [vmem:[%s1 + $0xd3c] sm:$0xf]
    %v1443 = vld [vmem:[%s1 + $0xd40] sm:$0xf]
    %v1444 = vld [vmem:[%s1 + $0xd44] sm:$0xf]
    %v1445 = vld [vmem:[%s1 + $0xd48] sm:$0xf]
    %v1446 = vld [vmem:[%s1 + $0xd4c] sm:$0xf]
    %v1447 = vld [vmem:[%s1 + $0xd50] sm:$0xf]
    %v1448 = vld [vmem:[%s1 + $0xd54] sm:$0xf]
    %v1449 = vld [vmem:[%s1 + $0xd58] sm:$0xf]
    %v1450 = vld [vmem:[%s1 + $0xd5c] sm:$0xf]
    %v1451 = vld [vmem:[%s1 + $0xd60] sm:$0xf]
    %v1452 = vld [vmem:[%s1 + $0xd64] sm:$0xf]
    %v1453 = vld [vmem:[%s1 + $0xd68] sm:$0xf]
    %v1454 = vld [vmem:[%s1 + $0xd6c] sm:$0xf]
    %v1455 = vld [vmem:[%s1 + $0xd70] sm:$0xf]
    %v1456 = vld [vmem:[%s1 + $0xd74] sm:$0xf]
    %v1457 = vld [vmem:[%s1 + $0xd78] sm:$0xf]
    %v1458 = vld [vmem:[%s1 + $0xd7c] sm:$0xf]
    %v1459 = vld [vmem:[%s1 + $0xd80] sm:$0xf]
    %v1460 = vld [vmem:[%s1 + $0xd84] sm:$0xf]
    %v1461 = vld [vmem:[%s1 + $0xd88] sm:$0xf]
    %v1462 = vld [vmem:[%s1 + $0xd8c] sm:$0xf]
    %v1463 = vld [vmem:[%s1 + $0xd90] sm:$0xf]
    %v1464 = vld [vmem:[%s1 + $0xd94] sm:$0xf]
    %v1465 = vld [vmem:[%s1 + $0xd98] sm:$0xf]
    %v1466 = vld [vmem:[%s1 + $0xd9c] sm:$0xf]
    %v1467 = vld [vmem:[%s1 + $0xda0] sm:$0xf]
    %v1468 = vld [vmem:[%s1 + $0xda4] sm:$0xf]
    %v1469 = vld [vmem:[%s1 + $0xda8] sm:$0xf]
    %v1470 = vld [vmem:[%s1 + $0xdac] sm:$0xf]
    %v1471 = vld [vmem:[%s1 + $0xdb0] sm:$0xf]
    %v1472 = vld [vmem:[%s1 + $0xdb4] sm:$0xf]
    %v1473 = vld [vmem:[%s1 + $0xdb8] sm:$0xf]
    %v1474 = vld [vmem:[%s1 + $0xdbc] sm:$0xf]
    %v1475 = vld [vmem:[%s1 + $0xdc0] sm:$0xf]
    %v1476 = vld [vmem:[%s1 + $0xdc4] sm:$0xf]
    %v1477 = vld [vmem:[%s1 + $0xdc8] sm:$0xf]
    %v1478 = vld [vmem:[%s1 + $0xdcc] sm:$0xf]
    %v1479 = vld [vmem:[%s1 + $0xdd0] sm:$0xf]
    %v1480 = vld [vmem:[%s1 + $0xdd4] sm:$0xf]
    %v1481 = vld [vmem:[%s1 + $0xdd8] sm:$0xf]
    %v1482 = vld [vmem:[%s1 + $0xddc] sm:$0xf]
    %v1483 = vld [vmem:[%s1 + $0xde0] sm:$0xf]
    %v1484 = vld [vmem:[%s1 + $0xde4] sm:$0xf]
    %v1485 = vld [vmem:[%s1 + $0xde8] sm:$0xf]
    %v1486 = vld [vmem:[%s1 + $0xdec] sm:$0xf]
    %v1487 = vld [vmem:[%s1 + $0xdf0] sm:$0xf]
    %v1488 = vld [vmem:[%s1 + $0xdf4] sm:$0xf]
    %v1489 = vld [vmem:[%s1 + $0xdf8] sm:$0xf]
    %v1490 = vld [vmem:[%s1 + $0xdfc] sm:$0xf]
    %v1491 = vld [vmem:[%s1 + $0xe00] sm:$0xf]
    %v1492 = vld [vmem:[%s1 + $0xe04] sm:$0xf]
    %v1493 = vld [vmem:[%s1 + $0xe08] sm:$0xf]
    %v1494 = vld [vmem:[%s1 + $0xe0c] sm:$0xf]
    %v1495 = vld [vmem:[%s1 + $0xe10] sm:$0xf]
    %v1496 = vld [vmem:[%s1 + $0xe14] sm:$0xf]
    %v1497 = vld [vmem:[%s1 + $0xe18] sm:$0xf]
    %v1498 = vld [vmem:[%s1 + $0xe1c] sm:$0xf]
    %v1499 = vld [vmem:[%s1 + $0xe20] sm:$0xf]
    %v1500 = vld [vmem:[%s1 + $0xe24] sm:$0xf]
    %v1501 = vld [vmem:[%s1 + $0xe28] sm:$0xf]
    %v1502 = vld [vmem:[%s1 + $0xe2c] sm:$0xf]
    %v1503 = vld [vmem:[%s1 + $0xe30] sm:$0xf]
    %v1504 = vld [vmem:[%s1 + $0xe34] sm:$0xf]
    %v1505 = vld [vmem:[%s1 + $0xe38] sm:$0xf]
    %v1506 = vld [vmem:[%s1 + $0xe3c] sm:$0xf]
    %v1507 = vld [vmem:[%s1 + $0xe40] sm:$0xf]
    %v1508 = vld [vmem:[%s1 + $0xe44] sm:$0xf]
    %v1509 = vld [vmem:[%s1 + $0xe48] sm:$0xf]
    %v1510 = vld [vmem:[%s1 + $0xe4c] sm:$0xf]
    %v1511 = vld [vmem:[%s1 + $0xe50] sm:$0xf]
    %v1512 = vld [vmem:[%s1 + $0xe54] sm:$0xf]
    %v1513 = vld [vmem:[%s1 + $0xe58] sm:$0xf]
    %v1514 = vld [vmem:[%s1 + $0xe5c] sm:$0xf]
    %v1515 = vld [vmem:[%s1 + $0xe60] sm:$0xf]
    %v1516 = vld [vmem:[%s1 + $0xe64] sm:$0xf]
    %v1517 = vld [vmem:[%s1 + $0xe68] sm:$0xf]
    %v1518 = vld [vmem:[%s1 + $0xe6c] sm:$0xf]
    %v1519 = vld [vmem:[%s1 + $0xe70] sm:$0xf]
    %v1520 = vld [vmem:[%s1 + $0xe74] sm:$0xf]
    %v1521 = vld [vmem:[%s1 + $0xe78] sm:$0xf]
    %v1522 = vld [vmem:[%s1 + $0xe7c] sm:$0xf]
    %v1523 = vld [vmem:[%s1 + $0xe80] sm:$0xf]
    %v1524 = vld [vmem:[%s1 + $0xe84] sm:$0xf]
    %v1525 = vld [vmem:[%s1 + $0xe88] sm:$0xf]
    %v1526 = vld [vmem:[%s1 + $0xe8c] sm:$0xf]
    %v1527 = vld [vmem:[%s1 + $0xe90] sm:$0xf]
    %v1528 = vld [vmem:[%s1 + $0xe94] sm:$0xf]
    %v1529 = vld [vmem:[%s1 + $0xe98] sm:$0xf]
    %v1530 = vld [vmem:[%s1 + $0xe9c] sm:$0xf]
    %v1531 = vld [vmem:[%s1 + $0xea0] sm:$0xf]
    %v1532 = vld [vmem:[%s1 + $0xea4] sm:$0xf]
    %v1533 = vld [vmem:[%s1 + $0xea8] sm:$0xf]
    %v1534 = vld [vmem:[%s1 + $0xeac] sm:$0xf]
    %v1535 = vld [vmem:[%s1 + $0xeb0] sm:$0xf]
    %v1536 = vld [vmem:[%s1 + $0xeb4] sm:$0xf]
    %v1537 = vld [vmem:[%s1 + $0xeb8] sm:$0xf]
    %v1538 = vld [vmem:[%s1 + $0xebc] sm:$0xf]
    %v1539 = vld [vmem:[%s1 + $0xec0] sm:$0xf]
    %v1540 = vld [vmem:[%s1 + $0xec4] sm:$0xf]
    %v1541 = vld [vmem:[%s1 + $0xec8] sm:$0xf]
    %v1542 = vld [vmem:[%s1 + $0xecc] sm:$0xf]
    %v1543 = vld [vmem:[%s1 + $0xed0] sm:$0xf]
    %v1544 = vld [vmem:[%s1 + $0xed4] sm:$0xf]
    %v1545 = vld [vmem:[%s1 + $0xed8] sm:$0xf]
    %v1546 = vld [vmem:[%s1 + $0xedc] sm:$0xf]
    %v1547 = vld [vmem:[%s1 + $0xee0] sm:$0xf]
    %v1548 = vld [vmem:[%s1 + $0xee4] sm:$0xf]
    %v1549 = vld [vmem:[%s1 + $0xee8] sm:$0xf]
    %v1550 = vld [vmem:[%s1 + $0xeec] sm:$0xf]
    %v1551 = vld [vmem:[%s1 + $0xef0] sm:$0xf]
    %v1552 = vld [vmem:[%s1 + $0xef4] sm:$0xf]
    %v1553 = vld [vmem:[%s1 + $0xef8] sm:$0xf]
    %v1554 = vld [vmem:[%s1 + $0xefc] sm:$0xf]
    %v1555 = vld [vmem:[%s1 + $0xf00] sm:$0xf]
    %v1556 = vld [vmem:[%s1 + $0xf04] sm:$0xf]
    %v1557 = vld [vmem:[%s1 + $0xf08] sm:$0xf]
    %v1558 = vld [vmem:[%s1 + $0xf0c] sm:$0xf]
    %v1559 = vld [vmem:[%s1 + $0xf10] sm:$0xf]
    %v1560 = vld [vmem:[%s1 + $0xf14] sm:$0xf]
    %v1561 = vld [vmem:[%s1 + $0xf18] sm:$0xf]
    %v1562 = vld [vmem:[%s1 + $0xf1c] sm:$0xf]
    %v1563 = vld [vmem:[%s1 + $0xf20] sm:$0xf]
    %v1564 = vld [vmem:[%s1 + $0xf24] sm:$0xf]
    %v1565 = vld [vmem:[%s1 + $0xf28] sm:$0xf]
    %v1566 = vld [vmem:[%s1 + $0xf2c] sm:$0xf]
    %v1567 = vld [vmem:[%s1 + $0xf30] sm:$0xf]
    %v1568 = vld [vmem:[%s1 + $0xf34] sm:$0xf]
    %v1569 = vld [vmem:[%s1 + $0xf38] sm:$0xf]
    %v1570 = vld [vmem:[%s1 + $0xf3c] sm:$0xf]
    %v1571 = vld [vmem:[%s1 + $0xf40] sm:$0xf]
    %v1572 = vld [vmem:[%s1 + $0xf44] sm:$0xf]
    %v1573 = vld [vmem:[%s1 + $0xf48] sm:$0xf]
    %v1574 = vld [vmem:[%s1 + $0xf4c] sm:$0xf]
    %v1575 = vld [vmem:[%s1 + $0xf50] sm:$0xf]
    %v1576 = vld [vmem:[%s1 + $0xf54] sm:$0xf]
    %v1577 = vld [vmem:[%s1 + $0xf58] sm:$0xf]
    %v1578 = vld [vmem:[%s1 + $0xf5c] sm:$0xf]
    %v1579 = vld [vmem:[%s1 + $0xf60] sm:$0xf]
    %v1580 = vld [vmem:[%s1 + $0xf64] sm:$0xf]
    %v1581 = vld [vmem:[%s1 + $0xf68] sm:$0xf]
    %v1582 = vld [vmem:[%s1 + $0xf6c] sm:$0xf]
    %v1583 = vld [vmem:[%s1 + $0xf70] sm:$0xf]
    %v1584 = vld [vmem:[%s1 + $0xf74] sm:$0xf]
    %v1585 = vld [vmem:[%s1 + $0xf78] sm:$0xf]
    %v1586 = vld [vmem:[%s1 + $0xf7c] sm:$0xf]
    %v1587 = vld [vmem:[%s1 + $0xf80] sm:$0xf]
    %v1588 = vld [vmem:[%s1 + $0xf84] sm:$0xf]
    %v1589 = vld [vmem:[%s1 + $0xf88] sm:$0xf]
    %v1590 = vld [vmem:[%s1 + $0xf8c] sm:$0xf]
    %v1591 = vld [vmem:[%s1 + $0xf90] sm:$0xf]
    %v1592 = vld [vmem:[%s1 + $0xf94] sm:$0xf]
    %v1593 = vld [vmem:[%s1 + $0xf98] sm:$0xf]
    %v1594 = vld [vmem:[%s1 + $0xf9c] sm:$0xf]
    %v1595 = vld [vmem:[%s1 + $0xfa0] sm:$0xf]
    %v1596 = vld [vmem:[%s1 + $0xfa4] sm:$0xf]
    %v1597 = vld [vmem:[%s1 + $0xfa8] sm:$0xf]
    %v1598 = vld [vmem:[%s1 + $0xfac] sm:$0xf]
    %v1599 = vld [vmem:[%s1 + $0xfb0] sm:$0xf]
    %v1600 = vld [vmem:[%s1 + $0xfb4] sm:$0xf]
    %v1601 = vld [vmem:[%s1 + $0xfb8] sm:$0xf]
    %v1602 = vld [vmem:[%s1 + $0xfbc] sm:$0xf]
    %v1603 = vld [vmem:[%s1 + $0xfc0] sm:$0xf]
    %v1604 = vld [vmem:[%s1 + $0xfc4] sm:$0xf]
    %v1605 = vld [vmem:[%s1 + $0xfc8] sm:$0xf]
    %v1606 = vld [vmem:[%s1 + $0xfcc] sm:$0xf]
    %v1607 = vld [vmem:[%s1 + $0xfd0] sm:$0xf]
    %v1608 = vld [vmem:[%s1 + $0xfd4] sm:$0xf]
    %v1609 = vld [vmem:[%s1 + $0xfd8] sm:$0xf]
    %v1610 = vld [vmem:[%s1 + $0xfdc] sm:$0xf]
    %v1611 = vld [vmem:[%s1 + $0xfe0] sm:$0xf]
    %v1612 = vld [vmem:[%s1 + $0xfe4] sm:$0xf]
    %v1613 = vld [vmem:[%s1 + $0xfe8] sm:$0xf]
    %v1614 = vld [vmem:[%s1 + $0xfec] sm:$0xf]
    %v1615 = vld [vmem:[%s1 + $0xff0] sm:$0xf]
    %v1616 = vld [vmem:[%s1 + $0xff4] sm:$0xf]
    %v1617 = vld [vmem:[%s1 + $0xff8] sm:$0xf]
    %v1618 = vld [vmem:[%s1 + $0xffc] sm:$0xf]
    %v1619 = vld [vmem:[%s1 + $0x1000] sm:$0xf]
    %v1620 = vld [vmem:[%s1 + $0x1004] sm:$0xf]
    %v1621 = vld [vmem:[%s1 + $0x1008] sm:$0xf]
    %v1622 = vld [vmem:[%s1 + $0x100c] sm:$0xf]
    %v1623 = vld [vmem:[%s1 + $0x1010] sm:$0xf]
    %v1624 = vld [vmem:[%s1 + $0x1014] sm:$0xf]
    %v1625 = vld [vmem:[%s1 + $0x1018] sm:$0xf]
    %v1626 = vld [vmem:[%s1 + $0x101c] sm:$0xf]
    %v1627 = vld [vmem:[%s1 + $0x1020] sm:$0xf]
    %v1628 = vld [vmem:[%s1 + $0x1024] sm:$0xf]
    %v1629 = vld [vmem:[%s1 + $0x1028] sm:$0xf]
    %v1630 = vld [vmem:[%s1 + $0x102c] sm:$0xf]
    %v1631 = vld [vmem:[%s1 + $0x1030] sm:$0xf]
    %v1632 = vld [vmem:[%s1 + $0x1034] sm:$0xf]
    %v1633 = vld [vmem:[%s1 + $0x1038] sm:$0xf]
    %v1634 = vld [vmem:[%s1 + $0x103c] sm:$0xf]
    %v1635 = vld [vmem:[%s1 + $0x1040] sm:$0xf]
    %v1636 = vld [vmem:[%s1 + $0x1044] sm:$0xf]
    %v1637 = vld [vmem:[%s1 + $0x1048] sm:$0xf]
    %v1638 = vld [vmem:[%s1 + $0x104c] sm:$0xf]
    %v1639 = vld [vmem:[%s1 + $0x1050] sm:$0xf]
    %v1640 = vld [vmem:[%s1 + $0x1054] sm:$0xf]
    %v1641 = vld [vmem:[%s1 + $0x1058] sm:$0xf]
    %v1642 = vld [vmem:[%s1 + $0x105c] sm:$0xf]
    %v1643 = vld [vmem:[%s1 + $0x1060] sm:$0xf]
    %v1644 = vld [vmem:[%s1 + $0x1064] sm:$0xf]
    %v1645 = vld [vmem:[%s1 + $0x1068] sm:$0xf]
    %v1646 = vld [vmem:[%s1 + $0x106c] sm:$0xf]
    %v1647 = vld [vmem:[%s1 + $0x1070] sm:$0xf]
    %v1648 = vld [vmem:[%s1 + $0x1074] sm:$0xf]
    %v1649 = vld [vmem:[%s1 + $0x1078] sm:$0xf]
    %v1650 = vld [vmem:[%s1 + $0x107c] sm:$0xf]
    %v1651 = vld [vmem:[%s1 + $0x1080] sm:$0xf]
    %v1652 = vld [vmem:[%s1 + $0x1084] sm:$0xf]
    %v1653 = vld [vmem:[%s1 + $0x1088] sm:$0xf]
    %v1654 = vld [vmem:[%s1 + $0x108c] sm:$0xf]
    %v1655 = vld [vmem:[%s1 + $0x1090] sm:$0xf]
    %v1656 = vld [vmem:[%s1 + $0x1094] sm:$0xf]
    %v1657 = vld [vmem:[%s1 + $0x1098] sm:$0xf]
    %v1658 = vld [vmem:[%s1 + $0x109c] sm:$0xf]
    %v1659 = vld [vmem:[%s1 + $0x10a0] sm:$0xf]
    %v1660 = vld [vmem:[%s1 + $0x10a4] sm:$0xf]
    %v1661 = vld [vmem:[%s1 + $0x10a8] sm:$0xf]
    %v1662 = vld [vmem:[%s1 + $0x10ac] sm:$0xf]
    %v1663 = vld [vmem:[%s1 + $0x10b0] sm:$0xf]
    %v1664 = vld [vmem:[%s1 + $0x10b4] sm:$0xf]
    %v1665 = vld [vmem:[%s1 + $0x10b8] sm:$0xf]
    %v1666 = vld [vmem:[%s1 + $0x10bc] sm:$0xf]
    %v1667 = vld [vmem:[%s1 + $0x10c0] sm:$0xf]
    %v1668 = vld [vmem:[%s1 + $0x10c4] sm:$0xf]
    %v1669 = vld [vmem:[%s1 + $0x10c8] sm:$0xf]
    %v1670 = vld [vmem:[%s1 + $0x10cc] sm:$0xf]
    %v1671 = vld [vmem:[%s1 + $0x10d0] sm:$0xf]
    %v1672 = vld [vmem:[%s1 + $0x10d4] sm:$0xf]
    %v1673 = vld [vmem:[%s1 + $0x10d8] sm:$0xf]
    %v1674 = vld [vmem:[%s1 + $0x10dc] sm:$0xf]
    %v1675 = vld [vmem:[%s1 + $0x10e0] sm:$0xf]
    %v1676 = vld [vmem:[%s1 + $0x10e4] sm:$0xf]
    %v1677 = vld [vmem:[%s1 + $0x10e8] sm:$0xf]
    %v1678 = vld [vmem:[%s1 + $0x10ec] sm:$0xf]
    %v1679 = vld [vmem:[%s1 + $0x10f0] sm:$0xf]
    %v1680 = vld [vmem:[%s1 + $0x10f4] sm:$0xf]
    %v1681 = vld [vmem:[%s1 + $0x10f8] sm:$0xf]
    %v1682 = vld [vmem:[%s1 + $0x10fc] sm:$0xf]
    %v1683 = vld [vmem:[%s1 + $0x1100] sm:$0xf]
    %v1684 = vld [vmem:[%s1 + $0x1104] sm:$0xf]
    %v1685 = vld [vmem:[%s1 + $0x1108] sm:$0xf]
    %v1686 = vld [vmem:[%s1 + $0x110c] sm:$0xf]
    %v1687 = vld [vmem:[%s1 + $0x1110] sm:$0xf]
    %v1688 = vld [vmem:[%s1 + $0x1114] sm:$0xf]
    %v1689 = vld [vmem:[%s1 + $0x1118] sm:$0xf]
    %v1690 = vld [vmem:[%s1 + $0x111c] sm:$0xf]
    %v1691 = vld [vmem:[%s1 + $0x1120] sm:$0xf]
    %v1692 = vld [vmem:[%s1 + $0x1124] sm:$0xf]
    %v1693 = vld [vmem:[%s1 + $0x1128] sm:$0xf]
    %v1694 = vld [vmem:[%s1 + $0x112c] sm:$0xf]
    %v1695 = vld [vmem:[%s1 + $0x1130] sm:$0xf]
    %v1696 = vld [vmem:[%s1 + $0x1134] sm:$0xf]
    %v1697 = vld [vmem:[%s1 + $0x1138] sm:$0xf]
    %v1698 = vld [vmem:[%s1 + $0x113c] sm:$0xf]
    %v1699 = vld [vmem:[%s1 + $0x1140] sm:$0xf]
    %v1700 = vld [vmem:[%s1 + $0x1144] sm:$0xf]
    %v1701 = vld [vmem:[%s1 + $0x1148] sm:$0xf]
    %v1702 = vld [vmem:[%s1 + $0x114c] sm:$0xf]
    %v1703 = vld [vmem:[%s1 + $0x1150] sm:$0xf]
    %v1704 = vld [vmem:[%s1 + $0x1154] sm:$0xf]
    %v1705 = vld [vmem:[%s1 + $0x1158] sm:$0xf]
    %v1706 = vld [vmem:[%s1 + $0x115c] sm:$0xf]
    %v1707 = vld [vmem:[%s1 + $0x1160] sm:$0xf]
    %v1708 = vld [vmem:[%s1 + $0x1164] sm:$0xf]
    %v1709 = vld [vmem:[%s1 + $0x1168] sm:$0xf]
    %v1710 = vld [vmem:[%s1 + $0x116c] sm:$0xf]
    %v1711 = vld [vmem:[%s1 + $0x1170] sm:$0xf]
    %v1712 = vld [vmem:[%s1 + $0x1174] sm:$0xf]
    %v1713 = vld [vmem:[%s1 + $0x1178] sm:$0xf]
    %v1714 = vld [vmem:[%s1 + $0x117c] sm:$0xf]
    %v1715 = vld [vmem:[%s1 + $0x1180] sm:$0xf]
    %v1716 = vld [vmem:[%s1 + $0x1184] sm:$0xf]
    %v1717 = vld [vmem:[%s1 + $0x1188] sm:$0xf]
    %v1718 = vld [vmem:[%s1 + $0x118c] sm:$0xf]
    %v1719 = vld [vmem:[%s1 + $0x1190] sm:$0xf]
    %v1720 = vld [vmem:[%s1 + $0x1194] sm:$0xf]
    %v1721 = vld [vmem:[%s1 + $0x1198] sm:$0xf]
    %v1722 = vld [vmem:[%s1 + $0x119c] sm:$0xf]
    %v1723 = vld [vmem:[%s1 + $0x11a0] sm:$0xf]
    %v1724 = vld [vmem:[%s1 + $0x11a4] sm:$0xf]
    %v1725 = vld [vmem:[%s1 + $0x11a8] sm:$0xf]
    %v1726 = vld [vmem:[%s1 + $0x11ac] sm:$0xf]
    %v1727 = vld [vmem:[%s1 + $0x11b0] sm:$0xf]
    %v1728 = vld [vmem:[%s1 + $0x11b4] sm:$0xf]
    %v1729 = vld [vmem:[%s1 + $0x11b8] sm:$0xf]
    %v1730 = vld [vmem:[%s1 + $0x11bc] sm:$0xf]
    %v1731 = vld [vmem:[%s1 + $0x11c0] sm:$0xf]
    %v1732 = vld [vmem:[%s1 + $0x11c4] sm:$0xf]
    %v1733 = vld [vmem:[%s1 + $0x11c8] sm:$0xf]
    %v1734 = vld [vmem:[%s1 + $0x11cc] sm:$0xf]
    %v1735 = vld [vmem:[%s1 + $0x11d0] sm:$0xf]
    %v1736 = vld [vmem:[%s1 + $0x11d4] sm:$0xf]
    %v1737 = vld [vmem:[%s1 + $0x11d8] sm:$0xf]
    %v1738 = vld [vmem:[%s1 + $0x11dc] sm:$0xf]
    %v1739 = vld [vmem:[%s1 + $0x11e0] sm:$0xf]
    %v1740 = vld [vmem:[%s1 + $0x11e4] sm:$0xf]
    %v1741 = vld [vmem:[%s1 + $0x11e8] sm:$0xf]
    %v1742 = vld [vmem:[%s1 + $0x11ec] sm:$0xf]
    %v1743 = vld [vmem:[%s1 + $0x11f0] sm:$0xf]
    %v1744 = vld [vmem:[%s1 + $0x11f4] sm:$0xf]
    %v1745 = vld [vmem:[%s1 + $0x11f8] sm:$0xf]
    %v1746 = vld [vmem:[%s1 + $0x11fc] sm:$0xf]
    %v1747 = vld [vmem:[%s1 + $0x1200] sm:$0xf]
    %v1748 = vld [vmem:[%s1 + $0x1204] sm:$0xf]
    %v1749 = vld [vmem:[%s1 + $0x1208] sm:$0xf]
    %v1750 = vld [vmem:[%s1 + $0x120c] sm:$0xf]
    %v1751 = vld [vmem:[%s1 + $0x1210] sm:$0xf]
    %v1752 = vld [vmem:[%s1 + $0x1214] sm:$0xf]
    %v1753 = vld [vmem:[%s1 + $0x1218] sm:$0xf]
    %v1754 = vld [vmem:[%s1 + $0x121c] sm:$0xf]
    %v1755 = vld [vmem:[%s1 + $0x1220] sm:$0xf]
    %v1756 = vld [vmem:[%s1 + $0x1224] sm:$0xf]
    %v1757 = vld [vmem:[%s1 + $0x1228] sm:$0xf]
    %v1758 = vld [vmem:[%s1 + $0x122c] sm:$0xf]
    %v1759 = vld [vmem:[%s1 + $0x1230] sm:$0xf]
    %v1760 = vld [vmem:[%s1 + $0x1234] sm:$0xf]
    %v1761 = vld [vmem:[%s1 + $0x1238] sm:$0xf]
    %v1762 = vld [vmem:[%s1 + $0x123c] sm:$0xf]
    %v1763 = vld [vmem:[%s1 + $0x1240] sm:$0xf]
    %v1764 = vld [vmem:[%s1 + $0x1244] sm:$0xf]
    %v1765 = vld [vmem:[%s1 + $0x1248] sm:$0xf]
    %v1766 = vld [vmem:[%s1 + $0x124c] sm:$0xf]
    %v1767 = vld [vmem:[%s1 + $0x1250] sm:$0xf]
    %v1768 = vld [vmem:[%s1 + $0x1254] sm:$0xf]
    %v1769 = vld [vmem:[%s1 + $0x1258] sm:$0xf]
    %v1770 = vld [vmem:[%s1 + $0x125c] sm:$0xf]
    %v1771 = vld [vmem:[%s1 + $0x1260] sm:$0xf]
    %v1772 = vld [vmem:[%s1 + $0x1264] sm:$0xf]
    %v1773 = vld [vmem:[%s1 + $0x1268] sm:$0xf]
    %v1774 = vld [vmem:[%s1 + $0x126c] sm:$0xf]
    %v1775 = vld [vmem:[%s1 + $0x1270] sm:$0xf]
    %v1776 = vld [vmem:[%s1 + $0x1274] sm:$0xf]
    %v1777 = vld [vmem:[%s1 + $0x1278] sm:$0xf]
    %v1778 = vld [vmem:[%s1 + $0x127c] sm:$0xf]
    %v1779 = vld [vmem:[%s1 + $0x1280] sm:$0xf]
    %v1780 = vld [vmem:[%s1 + $0x1284] sm:$0xf]
    %v1781 = vld [vmem:[%s1 + $0x1288] sm:$0xf]
    %v1782 = vld [vmem:[%s1 + $0x128c] sm:$0xf]
    %v1783 = vld [vmem:[%s1 + $0x1290] sm:$0xf]
    %v1784 = vld [vmem:[%s1 + $0x1294] sm:$0xf]
    %v1785 = vld [vmem:[%s1 + $0x1298] sm:$0xf]
    %v1786 = vld [vmem:[%s1 + $0x129c] sm:$0xf]
    %v1787 = vld [vmem:[%s1 + $0x12a0] sm:$0xf]
    %v1788 = vld [vmem:[%s1 + $0x12a4] sm:$0xf]
    %v1789 = vld [vmem:[%s1 + $0x12a8] sm:$0xf]
    %v1790 = vld [vmem:[%s1 + $0x12ac] sm:$0xf]
    %v1791 = vld [vmem:[%s1 + $0x12b0] sm:$0xf]
    %v1792 = vld [vmem:[%s1 + $0x12b4] sm:$0xf]
    %v1793 = vld [vmem:[%s1 + $0x12b8] sm:$0xf]
    %v1794 = vld [vmem:[%s1 + $0x12bc] sm:$0xf]
    %v1795 = vld [vmem:[%s1 + $0x12c0] sm:$0xf]
    %v1796 = vld [vmem:[%s1 + $0x12c4] sm:$0xf]
    %v1797 = vld [vmem:[%s1 + $0x12c8] sm:$0xf]
    %v1798 = vld [vmem:[%s1 + $0x12cc] sm:$0xf]
    %v1799 = vld [vmem:[%s1 + $0x12d0] sm:$0xf]
    %v1800 = vld [vmem:[%s1 + $0x12d4] sm:$0xf]
    %v1801 = vld [vmem:[%s1 + $0x12d8] sm:$0xf]
    %v1802 = vld [vmem:[%s1 + $0x12dc] sm:$0xf]
    %v1803 = vld [vmem:[%s1 + $0x12e0] sm:$0xf]
    %v1804 = vld [vmem:[%s1 + $0x12e4] sm:$0xf]
    %v1805 = vld [vmem:[%s1 + $0x12e8] sm:$0xf]
    %v1806 = vld [vmem:[%s1 + $0x12ec] sm:$0xf]
    %v1807 = vld [vmem:[%s1 + $0x12f0] sm:$0xf]
    %v1808 = vld [vmem:[%s1 + $0x12f4] sm:$0xf]
    %v1809 = vld [vmem:[%s1 + $0x12f8] sm:$0xf]
    %v1810 = vld [vmem:[%s1 + $0x12fc] sm:$0xf]
    %v1811 = vld [vmem:[%s1 + $0x1300] sm:$0xf]
    %v1812 = vld [vmem:[%s1 + $0x1304] sm:$0xf]
    %v1813 = vld [vmem:[%s1 + $0x1308] sm:$0xf]
    %v1814 = vld [vmem:[%s1 + $0x130c] sm:$0xf]
    %v1815 = vld [vmem:[%s1 + $0x1310] sm:$0xf]
    %v1816 = vld [vmem:[%s1 + $0x1314] sm:$0xf]
    %v1817 = vld [vmem:[%s1 + $0x1318] sm:$0xf]
    %v1818 = vld [vmem:[%s1 + $0x131c] sm:$0xf]
    %v1819 = vld [vmem:[%s1 + $0x1320] sm:$0xf]
    %v1820 = vld [vmem:[%s1 + $0x1324] sm:$0xf]
    %v1821 = vld [vmem:[%s1 + $0x1328] sm:$0xf]
    %v1822 = vld [vmem:[%s1 + $0x132c] sm:$0xf]
    %v1823 = vld [vmem:[%s1 + $0x1330] sm:$0xf]
    %v1824 = vld [vmem:[%s1 + $0x1334] sm:$0xf]
    %v1825 = vld [vmem:[%s1 + $0x1338] sm:$0xf]
    %v1826 = vld [vmem:[%s1 + $0x133c] sm:$0xf]
    %v1827 = vld [vmem:[%s1 + $0x1340] sm:$0xf]
    %v1828 = vld [vmem:[%s1 + $0x1344] sm:$0xf]
    %v1829 = vld [vmem:[%s1 + $0x1348] sm:$0xf]
    %v1830 = vld [vmem:[%s1 + $0x134c] sm:$0xf]
    %v1831 = vld [vmem:[%s1 + $0x1350] sm:$0xf]
    %v1832 = vld [vmem:[%s1 + $0x1354] sm:$0xf]
    %v1833 = vld [vmem:[%s1 + $0x1358] sm:$0xf]
    %v1834 = vld [vmem:[%s1 + $0x135c] sm:$0xf]
    %v1835 = vld [vmem:[%s1 + $0x1360] sm:$0xf]
    %v1836 = vld [vmem:[%s1 + $0x1364] sm:$0xf]
    %v1837 = vld [vmem:[%s1 + $0x1368] sm:$0xf]
    %v1838 = vld [vmem:[%s1 + $0x136c] sm:$0xf]
    %v1839 = vld [vmem:[%s1 + $0x1370] sm:$0xf]
    %v1840 = vld [vmem:[%s1 + $0x1374] sm:$0xf]
    %v1841 = vld [vmem:[%s1 + $0x1378] sm:$0xf]
    %v1842 = vld [vmem:[%s1 + $0x137c] sm:$0xf]
    %v1843 = vld [vmem:[%s1 + $0x1380] sm:$0xf]
    %v1844 = vld [vmem:[%s1 + $0x1384] sm:$0xf]
    %v1845 = vld [vmem:[%s1 + $0x1388] sm:$0xf]
    %v1846 = vld [vmem:[%s1 + $0x138c] sm:$0xf]
    %v1847 = vld [vmem:[%s1 + $0x1390] sm:$0xf]
    %v1848 = vld [vmem:[%s1 + $0x1394] sm:$0xf]
    %v1849 = vld [vmem:[%s1 + $0x1398] sm:$0xf]
    %v1850 = vld [vmem:[%s1 + $0x139c] sm:$0xf]
    %v1851 = vld [vmem:[%s1 + $0x13a0] sm:$0xf]
    %v1852 = vld [vmem:[%s1 + $0x13a4] sm:$0xf]
    %v1853 = vld [vmem:[%s1 + $0x13a8] sm:$0xf]
    %v1854 = vld [vmem:[%s1 + $0x13ac] sm:$0xf]
    %v1855 = vld [vmem:[%s1 + $0x13b0] sm:$0xf]
    %v1856 = vld [vmem:[%s1 + $0x13b4] sm:$0xf]
    %v1857 = vld [vmem:[%s1 + $0x13b8] sm:$0xf]
    %v1858 = vld [vmem:[%s1 + $0x13bc] sm:$0xf]
    %v1859 = vld [vmem:[%s1 + $0x13c0] sm:$0xf]
    %v1860 = vld [vmem:[%s1 + $0x13c4] sm:$0xf]
    %v1861 = vld [vmem:[%s1 + $0x13c8] sm:$0xf]
    %v1862 = vld [vmem:[%s1 + $0x13cc] sm:$0xf]
    %v1863 = vld [vmem:[%s1 + $0x13d0] sm:$0xf]
    %v1864 = vld [vmem:[%s1 + $0x13d4] sm:$0xf]
    %v1865 = vld [vmem:[%s1 + $0x13d8] sm:$0xf]
    %v1866 = vld [vmem:[%s1 + $0x13dc] sm:$0xf]
    %v1867 = vld [vmem:[%s1 + $0x13e0] sm:$0xf]
    %v1868 = vld [vmem:[%s1 + $0x13e4] sm:$0xf]
    %v1869 = vld [vmem:[%s1 + $0x13e8] sm:$0xf]
    %v1870 = vld [vmem:[%s1 + $0x13ec] sm:$0xf]
    %v1871 = vld [vmem:[%s1 + $0x13f0] sm:$0xf]
    %v1872 = vld [vmem:[%s1 + $0x13f4] sm:$0xf]
    %v1873 = vld [vmem:[%s1 + $0x13f8] sm:$0xf]
    %v1874 = vld [vmem:[%s1 + $0x13fc] sm:$0xf]
    %v1875 = vld [vmem:[%s1 + $0x1400] sm:$0xf]
    %v1876 = vld [vmem:[%s1 + $0x1404] sm:$0xf]
    %v1877 = vld [vmem:[%s1 + $0x1408] sm:$0xf]
    %v1878 = vld [vmem:[%s1 + $0x140c] sm:$0xf]
    %v1879 = vld [vmem:[%s1 + $0x1410] sm:$0xf]
    %v1880 = vld [vmem:[%s1 + $0x1414] sm:$0xf]
    %v1881 = vld [vmem:[%s1 + $0x1418] sm:$0xf]
    %v1882 = vld [vmem:[%s1 + $0x141c] sm:$0xf]
    %v1883 = vld [vmem:[%s1 + $0x1420] sm:$0xf]
    %v1884 = vld [vmem:[%s1 + $0x1424] sm:$0xf]
    %v1885 = vld [vmem:[%s1 + $0x1428] sm:$0xf]
    %v1886 = vld [vmem:[%s1 + $0x142c] sm:$0xf]
    %v1887 = vld [vmem:[%s1 + $0x1430] sm:$0xf]
    %v1888 = vld [vmem:[%s1 + $0x1434] sm:$0xf]
    %v1889 = vld [vmem:[%s1 + $0x1438] sm:$0xf]
    %v1890 = vld [vmem:[%s1 + $0x143c] sm:$0xf]
    %v1891 = vld [vmem:[%s1 + $0x1440] sm:$0xf]
    %v1892 = vld [vmem:[%s1 + $0x1444] sm:$0xf]
    %v1893 = vld [vmem:[%s1 + $0x1448] sm:$0xf]
    %v1894 = vld [vmem:[%s1 + $0x144c] sm:$0xf]
    %v1895 = vld [vmem:[%s1 + $0x1450] sm:$0xf]
    %v1896 = vld [vmem:[%s1 + $0x1454] sm:$0xf]
    %v1897 = vld [vmem:[%s1 + $0x1458] sm:$0xf]
    %v1898 = vld [vmem:[%s1 + $0x145c] sm:$0xf]
    %v1899 = vld [vmem:[%s1 + $0x1460] sm:$0xf]
    %v1900 = vld [vmem:[%s1 + $0x1464] sm:$0xf]
    %v1901 = vld [vmem:[%s1 + $0x1468] sm:$0xf]
    %v1902 = vld [vmem:[%s1 + $0x146c] sm:$0xf]
    %v1903 = vld [vmem:[%s1 + $0x1470] sm:$0xf]
    %v1904 = vld [vmem:[%s1 + $0x1474] sm:$0xf]
    %v1905 = vld [vmem:[%s1 + $0x1478] sm:$0xf]
    %v1906 = vld [vmem:[%s1 + $0x147c] sm:$0xf]
    %v1907 = vld [vmem:[%s1 + $0x1480] sm:$0xf]
    %v1908 = vld [vmem:[%s1 + $0x1484] sm:$0xf]
    %v1909 = vld [vmem:[%s1 + $0x1488] sm:$0xf]
    %v1910 = vld [vmem:[%s1 + $0x148c] sm:$0xf]
    %v1911 = vld [vmem:[%s1 + $0x1490] sm:$0xf]
    %v1912 = vld [vmem:[%s1 + $0x1494] sm:$0xf]
    %v1913 = vld [vmem:[%s1 + $0x1498] sm:$0xf]
    %v1914 = vld [vmem:[%s1 + $0x149c] sm:$0xf]
    %v1915 = vld [vmem:[%s1 + $0x14a0] sm:$0xf]
    %v1916 = vld [vmem:[%s1 + $0x14a4] sm:$0xf]
    %v1917 = vld [vmem:[%s1 + $0x14a8] sm:$0xf]
    %v1918 = vld [vmem:[%s1 + $0x14ac] sm:$0xf]
    %v1919 = vld [vmem:[%s1 + $0x14b0] sm:$0xf]
    %v1920 = vld [vmem:[%s1 + $0x14b4] sm:$0xf]
    %v1921 = vld [vmem:[%s1 + $0x14b8] sm:$0xf]
    %v1922 = vld [vmem:[%s1 + $0x14bc] sm:$0xf]
    %v1923 = vld [vmem:[%s1 + $0x14c0] sm:$0xf]
    %v1924 = vld [vmem:[%s1 + $0x14c4] sm:$0xf]
    %v1925 = vld [vmem:[%s1 + $0x14c8] sm:$0xf]
    %v1926 = vld [vmem:[%s1 + $0x14cc] sm:$0xf]
    %v1927 = vld [vmem:[%s1 + $0x14d0] sm:$0xf]
    %v1928 = vld [vmem:[%s1 + $0x14d4] sm:$0xf]
    %v1929 = vld [vmem:[%s1 + $0x14d8] sm:$0xf]
    %v1930 = vld [vmem:[%s1 + $0x14dc] sm:$0xf]
    %v1931 = vld [vmem:[%s1 + $0x14e0] sm:$0xf]
    %v1932 = vld [vmem:[%s1 + $0x14e4] sm:$0xf]
    %v1933 = vld [vmem:[%s1 + $0x14e8] sm:$0xf]
    %v1934 = vld [vmem:[%s1 + $0x14ec] sm:$0xf]
    %v1935 = vld [vmem:[%s1 + $0x14f0] sm:$0xf]
    %v1936 = vld [vmem:[%s1 + $0x14f4] sm:$0xf]
    %v1937 = vld [vmem:[%s1 + $0x14f8] sm:$0xf]
    %v1938 = vld [vmem:[%s1 + $0x14fc] sm:$0xf]
    %v1939 = vld [vmem:[%s1 + $0x1500] sm:$0xf]
    %v1940 = vld [vmem:[%s1 + $0x1504] sm:$0xf]
    %v1941 = vld [vmem:[%s1 + $0x1508] sm:$0xf]
    %v1942 = vld [vmem:[%s1 + $0x150c] sm:$0xf]
    %v1943 = vld [vmem:[%s1 + $0x1510] sm:$0xf]
    %v1944 = vld [vmem:[%s1 + $0x1514] sm:$0xf]
    %v1945 = vld [vmem:[%s1 + $0x1518] sm:$0xf]
    %v1946 = vld [vmem:[%s1 + $0x151c] sm:$0xf]
    %v1947 = vld [vmem:[%s1 + $0x1520] sm:$0xf]
    %v1948 = vld [vmem:[%s1 + $0x1524] sm:$0xf]
    %v1949 = vld [vmem:[%s1 + $0x1528] sm:$0xf]
    %v1950 = vld [vmem:[%s1 + $0x152c] sm:$0xf]
    %v1951 = vld [vmem:[%s1 + $0x1530] sm:$0xf]
    %v1952 = vld [vmem:[%s1 + $0x1534] sm:$0xf]
    %v1953 = vld [vmem:[%s1 + $0x1538] sm:$0xf]
    %v1954 = vld [vmem:[%s1 + $0x153c] sm:$0xf]
    %v1955 = vld [vmem:[%s1 + $0x1540] sm:$0xf]
    %v1956 = vld [vmem:[%s1 + $0x1544] sm:$0xf]
    %v1957 = vld [vmem:[%s1 + $0x1548] sm:$0xf]
    %v1958 = vld [vmem:[%s1 + $0x154c] sm:$0xf]
    %v1959 = vld [vmem:[%s1 + $0x1550] sm:$0xf]
    %v1960 = vld [vmem:[%s1 + $0x1554] sm:$0xf]
    %v1961 = vld [vmem:[%s1 + $0x1558] sm:$0xf]
    %v1962 = vld [vmem:[%s1 + $0x155c] sm:$0xf]
    %v1963 = vld [vmem:[%s1 + $0x1560] sm:$0xf]
    %v1964 = vld [vmem:[%s1 + $0x1564] sm:$0xf]
    %v1965 = vld [vmem:[%s1 + $0x1568] sm:$0xf]
    %v1966 = vld [vmem:[%s1 + $0x156c] sm:$0xf]
    %v1967 = vld [vmem:[%s1 + $0x1570] sm:$0xf]
    %v1968 = vld [vmem:[%s1 + $0x1574] sm:$0xf]
    %v1969 = vld [vmem:[%s1 + $0x1578] sm:$0xf]
    %v1970 = vld [vmem:[%s1 + $0x157c] sm:$0xf]
    %v1971 = vld [vmem:[%s1 + $0x1580] sm:$0xf]
    %v1972 = vld [vmem:[%s1 + $0x1584] sm:$0xf]
    %v1973 = vld [vmem:[%s1 + $0x1588] sm:$0xf]
    %v1974 = vld [vmem:[%s1 + $0x158c] sm:$0xf]
    %v1975 = vld [vmem:[%s1 + $0x1590] sm:$0xf]
    %v1976 = vld [vmem:[%s1 + $0x1594] sm:$0xf]
    %v1977 = vld [vmem:[%s1 + $0x1598] sm:$0xf]
    %v1978 = vld [vmem:[%s1 + $0x159c] sm:$0xf]
    %v1979 = vld [vmem:[%s1 + $0x15a0] sm:$0xf]
    %v1980 = vld [vmem:[%s1 + $0x15a4] sm:$0xf]
    %v1981 = vld [vmem:[%s1 + $0x15a8] sm:$0xf]
    %v1982 = vld [vmem:[%s1 + $0x15ac] sm:$0xf]
    %v1983 = vld [vmem:[%s1 + $0x15b0] sm:$0xf]
    %v1984 = vld [vmem:[%s1 + $0x15b4] sm:$0xf]
    %v1985 = vld [vmem:[%s1 + $0x15b8] sm:$0xf]
    %v1986 = vld [vmem:[%s1 + $0x15bc] sm:$0xf]
    %v1987 = vld [vmem:[%s1 + $0x15c0] sm:$0xf]
    %v1988 = vld [vmem:[%s1 + $0x15c4] sm:$0xf]
    %v1989 = vld [vmem:[%s1 + $0x15c8] sm:$0xf]
    %v1990 = vld [vmem:[%s1 + $0x15cc] sm:$0xf]
    %v1991 = vld [vmem:[%s1 + $0x15d0] sm:$0xf]
    %v1992 = vld [vmem:[%s1 + $0x15d4] sm:$0xf]
    %v1993 = vld [vmem:[%s1 + $0x15d8] sm:$0xf]
    %v1994 = vld [vmem:[%s1 + $0x15dc] sm:$0xf]
    %v1995 = vld [vmem:[%s1 + $0x15e0] sm:$0xf]
    %v1996 = vld [vmem:[%s1 + $0x15e4] sm:$0xf]
    %v1997 = vld [vmem:[%s1 + $0x15e8] sm:$0xf]
    %v1998 = vld [vmem:[%s1 + $0x15ec] sm:$0xf]
    %v1999 = vld [vmem:[%s1 + $0x15f0] sm:$0xf]
    %v2000 = vld [vmem:[%s1 + $0x15f4] sm:$0xf]
    %v2001 = vld [vmem:[%s1 + $0x15f8] sm:$0xf]
    %v2002 = vld [vmem:[%s1 + $0x15fc] sm:$0xf]
    %v2003 = vld [vmem:[%s1 + $0x1600] sm:$0xf]
    %v2004 = vld [vmem:[%s1 + $0x1604] sm:$0xf]
    %v2005 = vld [vmem:[%s1 + $0x1608] sm:$0xf]
    %v2006 = vld [vmem:[%s1 + $0x160c] sm:$0xf]
    %v2007 = vld [vmem:[%s1 + $0x1610] sm:$0xf]
    %v2008 = vld [vmem:[%s1 + $0x1614] sm:$0xf]
    %v2009 = vld [vmem:[%s1 + $0x1618] sm:$0xf]
    %v2010 = vld [vmem:[%s1 + $0x161c] sm:$0xf]
    %v2011 = vld [vmem:[%s1 + $0x1620] sm:$0xf]
    %v2012 = vld [vmem:[%s1 + $0x1624] sm:$0xf]
    %v2013 = vld [vmem:[%s1 + $0x1628] sm:$0xf]
    %v2014 = vld [vmem:[%s1 + $0x162c] sm:$0xf]
    %v2015 = vld [vmem:[%s1 + $0x1630] sm:$0xf]
    %v2016 = vld [vmem:[%s1 + $0x1634] sm:$0xf]
    %v2017 = vld [vmem:[%s1 + $0x1638] sm:$0xf]
    %v2018 = vld [vmem:[%s1 + $0x163c] sm:$0xf]
    %v2019 = vld [vmem:[%s1 + $0x1640] sm:$0xf]
    %v2020 = vld [vmem:[%s1 + $0x1644] sm:$0xf]
    %v2021 = vld [vmem:[%s1 + $0x1648] sm:$0xf]
    %v2022 = vld [vmem:[%s1 + $0x164c] sm:$0xf]
    %v2023 = vld [vmem:[%s1 + $0x1650] sm:$0xf]
    %v2024 = vld [vmem:[%s1 + $0x1654] sm:$0xf]
    %v2025 = vld [vmem:[%s1 + $0x1658] sm:$0xf]
    %v2026 = vld [vmem:[%s1 + $0x165c] sm:$0xf]
    %v2027 = vld [vmem:[%s1 + $0x1660] sm:$0xf]
    %v2028 = vld [vmem:[%s1 + $0x1664] sm:$0xf]
    %v2029 = vld [vmem:[%s1 + $0x1668] sm:$0xf]
    %v2030 = vld [vmem:[%s1 + $0x166c] sm:$0xf]
    %v2031 = vld [vmem:[%s1 + $0x1670] sm:$0xf]
    %v2032 = vld [vmem:[%s1 + $0x1674] sm:$0xf]
    %v2033 = vld [vmem:[%s1 + $0x1678] sm:$0xf]
    %v2034 = vld [vmem:[%s1 + $0x167c] sm:$0xf]
    %v2035 = vld [vmem:[%s1 + $0x1680] sm:$0xf]
    %v2036 = vld [vmem:[%s1 + $0x1684] sm:$0xf]
    %v2037 = vld [vmem:[%s1 + $0x1688] sm:$0xf]
    %v2038 = vld [vmem:[%s1 + $0x168c] sm:$0xf]
    %v2039 = vld [vmem:[%s1 + $0x1690] sm:$0xf]
    %v2040 = vld [vmem:[%s1 + $0x1694] sm:$0xf]
    %v2041 = vld [vmem:[%s1 + $0x1698] sm:$0xf]
    %v2042 = vld [vmem:[%s1 + $0x169c] sm:$0xf]
    %v2043 = vld [vmem:[%s1 + $0x16a0] sm:$0xf]
    %v2044 = vld [vmem:[%s1 + $0x16a4] sm:$0xf]
    %v2045 = vld [vmem:[%s1 + $0x16a8] sm:$0xf]
    %v2046 = vld [vmem:[%s1 + $0x16ac] sm:$0xf]
    %v2047 = vld [vmem:[%s1 + $0x16b0] sm:$0xf]
    %v2048 = vld [vmem:[%s1 + $0x16b4] sm:$0xf]
    %v2049 = vld [vmem:[%s1 + $0x16b8] sm:$0xf]
    %v2050 = vld [vmem:[%s1 + $0x16bc] sm:$0xf]
    %v2051 = vld [vmem:[%s1 + $0x16c0] sm:$0xf]
    %v2052 = vld [vmem:[%s1 + $0x16c4] sm:$0xf]
    %v2053 = vld [vmem:[%s1 + $0x16c8] sm:$0xf]
    %v2054 = vld [vmem:[%s1 + $0x16cc] sm:$0xf]
    %v2055 = vld [vmem:[%s1 + $0x16d0] sm:$0xf]
    %v2056 = vld [vmem:[%s1 + $0x16d4] sm:$0xf]
    %v2057 = vld [vmem:[%s1 + $0x16d8] sm:$0xf]
    %v2058 = vld [vmem:[%s1 + $0x16dc] sm:$0xf]
    %v2059 = vld [vmem:[%s1 + $0x16e0] sm:$0xf]
    %v2060 = vld [vmem:[%s1 + $0x16e4] sm:$0xf]
    %v2061 = vld [vmem:[%s1 + $0x16e8] sm:$0xf]
    %v2062 = vld [vmem:[%s1 + $0x16ec] sm:$0xf]
    %v2063 = vld [vmem:[%s1 + $0x16f0] sm:$0xf]
    %v2064 = vld [vmem:[%s1 + $0x16f4] sm:$0xf]
    %v2065 = vld [vmem:[%s1 + $0x16f8] sm:$0xf]
    %v2066 = vld [vmem:[%s1 + $0x16fc] sm:$0xf]
    %v2067 = vld [vmem:[%s1 + $0x1700] sm:$0xf]
    %v2068 = vld [vmem:[%s1 + $0x1704] sm:$0xf]
    %v2069 = vld [vmem:[%s1 + $0x1708] sm:$0xf]
    %v2070 = vld [vmem:[%s1 + $0x170c] sm:$0xf]
    %v2071 = vld [vmem:[%s1 + $0x1710] sm:$0xf]
    %v2072 = vld [vmem:[%s1 + $0x1714] sm:$0xf]
    %v2073 = vld [vmem:[%s1 + $0x1718] sm:$0xf]
    %v2074 = vld [vmem:[%s1 + $0x171c] sm:$0xf]
    %v2075 = vld [vmem:[%s1 + $0x1720] sm:$0xf]
    %v2076 = vld [vmem:[%s1 + $0x1724] sm:$0xf]
    %v2077 = vld [vmem:[%s1 + $0x1728] sm:$0xf]
    %v2078 = vld [vmem:[%s1 + $0x172c] sm:$0xf]
    %v2079 = vld [vmem:[%s1 + $0x1730] sm:$0xf]
    %v2080 = vld [vmem:[%s1 + $0x1734] sm:$0xf]
    %v2081 = vld [vmem:[%s1 + $0x1738] sm:$0xf]
    %v2082 = vld [vmem:[%s1 + $0x173c] sm:$0xf]
    %v2083 = vld [vmem:[%s1 + $0x1740] sm:$0xf]
    %v2084 = vld [vmem:[%s1 + $0x1744] sm:$0xf]
    %v2085 = vld [vmem:[%s1 + $0x1748] sm:$0xf]
    %v2086 = vld [vmem:[%s1 + $0x174c] sm:$0xf]
    %v2087 = vld [vmem:[%s1 + $0x1750] sm:$0xf]
    %v2088 = vld [vmem:[%s1 + $0x1754] sm:$0xf]
    %v2089 = vld [vmem:[%s1 + $0x1758] sm:$0xf]
    %v2090 = vld [vmem:[%s1 + $0x175c] sm:$0xf]
    %v2091 = vld [vmem:[%s1 + $0x1760] sm:$0xf]
    %v2092 = vld [vmem:[%s1 + $0x1764] sm:$0xf]
    %v2093 = vld [vmem:[%s1 + $0x1768] sm:$0xf]
    %v2094 = vld [vmem:[%s1 + $0x176c] sm:$0xf]
    %v2095 = vld [vmem:[%s1 + $0x1770] sm:$0xf]
    %v2096 = vld [vmem:[%s1 + $0x1774] sm:$0xf]
    %v2097 = vld [vmem:[%s1 + $0x1778] sm:$0xf]
    %v2098 = vld [vmem:[%s1 + $0x177c] sm:$0xf]
    %v2099 = vld [vmem:[%s1 + $0x1780] sm:$0xf]
    %v2100 = vld [vmem:[%s1 + $0x1784] sm:$0xf]
    %v2101 = vld [vmem:[%s1 + $0x1788] sm:$0xf]
    %v2102 = vld [vmem:[%s1 + $0x178c] sm:$0xf]
    %v2103 = vld [vmem:[%s1 + $0x1790] sm:$0xf]
    %v2104 = vld [vmem:[%s1 + $0x1794] sm:$0xf]
    %v2105 = vld [vmem:[%s1 + $0x1798] sm:$0xf]
    %v2106 = vld [vmem:[%s1 + $0x179c] sm:$0xf]
    %v2107 = vld [vmem:[%s1 + $0x17a0] sm:$0xf]
    %v2108 = vld [vmem:[%s1 + $0x17a4] sm:$0xf]
    %v2109 = vld [vmem:[%s1 + $0x17a8] sm:$0xf]
    %v2110 = vld [vmem:[%s1 + $0x17ac] sm:$0xf]
    %v2111 = vld [vmem:[%s1 + $0x17b0] sm:$0xf]
    %v2112 = vld [vmem:[%s1 + $0x17b4] sm:$0xf]
    %v2113 = vld [vmem:[%s1 + $0x17b8] sm:$0xf]
    %v2114 = vld [vmem:[%s1 + $0x17bc] sm:$0xf]
    %v2115 = vld [vmem:[%s1 + $0x17c0] sm:$0xf]
    %v2116 = vld [vmem:[%s1 + $0x17c4] sm:$0xf]
    %v2117 = vld [vmem:[%s1 + $0x17c8] sm:$0xf]
    %v2118 = vld [vmem:[%s1 + $0x17cc] sm:$0xf]
    %v2119 = vld [vmem:[%s1 + $0x17d0] sm:$0xf]
    %v2120 = vld [vmem:[%s1 + $0x17d4] sm:$0xf]
    %v2121 = vld [vmem:[%s1 + $0x17d8] sm:$0xf]
    %v2122 = vld [vmem:[%s1 + $0x17dc] sm:$0xf]
    %v2123 = vld [vmem:[%s1 + $0x17e0] sm:$0xf]
    %v2124 = vld [vmem:[%s1 + $0x17e4] sm:$0xf]
    %v2125 = vld [vmem:[%s1 + $0x17e8] sm:$0xf]
    %v2126 = vld [vmem:[%s1 + $0x17ec] sm:$0xf]
    %v2127 = vld [vmem:[%s1 + $0x17f0] sm:$0xf]
    %v2128 = vld [vmem:[%s1 + $0x17f4] sm:$0xf]
    %v2129 = vld [vmem:[%s1 + $0x17f8] sm:$0xf]
    %v2130 = vld [vmem:[%s1 + $0x17fc] sm:$0xf]
    %v2131 = vld [vmem:[%s1 + $0x1800] sm:$0xf]
    %v2132 = vld [vmem:[%s1 + $0x1804] sm:$0xf]
    %v2133 = vld [vmem:[%s1 + $0x1808] sm:$0xf]
    %v2134 = vld [vmem:[%s1 + $0x180c] sm:$0xf]
    %v2135 = vld [vmem:[%s1 + $0x1810] sm:$0xf]
    %v2136 = vld [vmem:[%s1 + $0x1814] sm:$0xf]
    %v2137 = vld [vmem:[%s1 + $0x1818] sm:$0xf]
    %v2138 = vld [vmem:[%s1 + $0x181c] sm:$0xf]
    %v2139 = vld [vmem:[%s1 + $0x1820] sm:$0xf]
    %v2140 = vld [vmem:[%s1 + $0x1824] sm:$0xf]
    %v2141 = vld [vmem:[%s1 + $0x1828] sm:$0xf]
    %v2142 = vld [vmem:[%s1 + $0x182c] sm:$0xf]
    %v2143 = vld [vmem:[%s1 + $0x1830] sm:$0xf]
    %v2144 = vld [vmem:[%s1 + $0x1834] sm:$0xf]
    %v2145 = vld [vmem:[%s1 + $0x1838] sm:$0xf]
    %v2146 = vld [vmem:[%s1 + $0x183c] sm:$0xf]
    %v2147 = vld [vmem:[%s1 + $0x1840] sm:$0xf]
    %v2148 = vld [vmem:[%s1 + $0x1844] sm:$0xf]
    %v2149 = vld [vmem:[%s1 + $0x1848] sm:$0xf]
    %v2150 = vld [vmem:[%s1 + $0x184c] sm:$0xf]
    %v2151 = vld [vmem:[%s1 + $0x1850] sm:$0xf]
    %v2152 = vld [vmem:[%s1 + $0x1854] sm:$0xf]
    %v2153 = vld [vmem:[%s1 + $0x1858] sm:$0xf]
    %v2154 = vld [vmem:[%s1 + $0x185c] sm:$0xf]
    %v2155 = vld [vmem:[%s1 + $0x1860] sm:$0xf]
    %v2156 = vld [vmem:[%s1 + $0x1864] sm:$0xf]
    %v2157 = vld [vmem:[%s1 + $0x1868] sm:$0xf]
    %v2158 = vld [vmem:[%s1 + $0x186c] sm:$0xf]
    %v2159 = vld [vmem:[%s1 + $0x1870] sm:$0xf]
    %v2160 = vld [vmem:[%s1 + $0x1874] sm:$0xf]
    %v2161 = vld [vmem:[%s1 + $0x1878] sm:$0xf]
    %v2162 = vld [vmem:[%s1 + $0x187c] sm:$0xf]
    %v2163 = vld [vmem:[%s1 + $0x1880] sm:$0xf]
    %v2164 = vld [vmem:[%s1 + $0x1884] sm:$0xf]
    %v2165 = vld [vmem:[%s1 + $0x1888] sm:$0xf]
    %v2166 = vld [vmem:[%s1 + $0x188c] sm:$0xf]
    %v2167 = vld [vmem:[%s1 + $0x1890] sm:$0xf]
    %v2168 = vld [vmem:[%s1 + $0x1894] sm:$0xf]
    %v2169 = vld [vmem:[%s1 + $0x1898] sm:$0xf]
    %v2170 = vld [vmem:[%s1 + $0x189c] sm:$0xf]
    %v2171 = vld [vmem:[%s1 + $0x18a0] sm:$0xf]
    %v2172 = vld [vmem:[%s1 + $0x18a4] sm:$0xf]
    %v2173 = vld [vmem:[%s1 + $0x18a8] sm:$0xf]
    %v2174 = vld [vmem:[%s1 + $0x18ac] sm:$0xf]
    %v2175 = vld [vmem:[%s1 + $0x18b0] sm:$0xf]
    %v2176 = vld [vmem:[%s1 + $0x18b4] sm:$0xf]
    %v2177 = vld [vmem:[%s1 + $0x18b8] sm:$0xf]
    %v2178 = vld [vmem:[%s1 + $0x18bc] sm:$0xf]
    %v2179 = vld [vmem:[%s1 + $0x18c0] sm:$0xf]
    %v2180 = vld [vmem:[%s1 + $0x18c4] sm:$0xf]
    %v2181 = vld [vmem:[%s1 + $0x18c8] sm:$0xf]
    %v2182 = vld [vmem:[%s1 + $0x18cc] sm:$0xf]
    %v2183 = vld [vmem:[%s1 + $0x18d0] sm:$0xf]
    %v2184 = vld [vmem:[%s1 + $0x18d4] sm:$0xf]
    %v2185 = vld [vmem:[%s1 + $0x18d8] sm:$0xf]
    %v2186 = vld [vmem:[%s1 + $0x18dc] sm:$0xf]
    %v2187 = vld [vmem:[%s1 + $0x18e0] sm:$0xf]
    %v2188 = vld [vmem:[%s1 + $0x18e4] sm:$0xf]
    %v2189 = vld [vmem:[%s1 + $0x18e8] sm:$0xf]
    %v2190 = vld [vmem:[%s1 + $0x18ec] sm:$0xf]
    %v2191 = vld [vmem:[%s1 + $0x18f0] sm:$0xf]
    %v2192 = vld [vmem:[%s1 + $0x18f4] sm:$0xf]
    %v2193 = vld [vmem:[%s1 + $0x18f8] sm:$0xf]
    %v2194 = vld [vmem:[%s1 + $0x18fc] sm:$0xf]
    %v2195 = vld [vmem:[%s1 + $0x1900] sm:$0xf]
    %v2196 = vld [vmem:[%s1 + $0x1904] sm:$0xf]
    %v2197 = vld [vmem:[%s1 + $0x1908] sm:$0xf]
    %v2198 = vld [vmem:[%s1 + $0x190c] sm:$0xf]
    %v2199 = vld [vmem:[%s1 + $0x1910] sm:$0xf]
    %v2200 = vld [vmem:[%s1 + $0x1914] sm:$0xf]
    %v2201 = vld [vmem:[%s1 + $0x1918] sm:$0xf]
    %v2202 = vld [vmem:[%s1 + $0x191c] sm:$0xf]
    %v2203 = vld [vmem:[%s1 + $0x1920] sm:$0xf]
    %v2204 = vld [vmem:[%s1 + $0x1924] sm:$0xf]
    %v2205 = vld [vmem:[%s1 + $0x1928] sm:$0xf]
    %v2206 = vld [vmem:[%s1 + $0x192c] sm:$0xf]
    %v2207 = vld [vmem:[%s1 + $0x1930] sm:$0xf]
    %v2208 = vld [vmem:[%s1 + $0x1934] sm:$0xf]
    %v2209 = vld [vmem:[%s1 + $0x1938] sm:$0xf]
    %v2210 = vld [vmem:[%s1 + $0x193c] sm:$0xf]
    %v2211 = vld [vmem:[%s1 + $0x1940] sm:$0xf]
    %v2212 = vld [vmem:[%s1 + $0x1944] sm:$0xf]
    %v2213 = vld [vmem:[%s1 + $0x1948] sm:$0xf]
    %v2214 = vld [vmem:[%s1 + $0x194c] sm:$0xf]
    %v2215 = vld [vmem:[%s1 + $0x1950] sm:$0xf]
    %v2216 = vld [vmem:[%s1 + $0x1954] sm:$0xf]
    %v2217 = vld [vmem:[%s1 + $0x1958] sm:$0xf]
    %v2218 = vld [vmem:[%s1 + $0x195c] sm:$0xf]
    %v2219 = vld [vmem:[%s1 + $0x1960] sm:$0xf]
    %v2220 = vld [vmem:[%s1 + $0x1964] sm:$0xf]
    %v2221 = vld [vmem:[%s1 + $0x1968] sm:$0xf]
    %v2222 = vld [vmem:[%s1 + $0x196c] sm:$0xf]
    %v2223 = vld [vmem:[%s1 + $0x1970] sm:$0xf]
    %v2224 = vld [vmem:[%s1 + $0x1974] sm:$0xf]
    %v2225 = vld [vmem:[%s1 + $0x1978] sm:$0xf]
    %v2226 = vld [vmem:[%s1 + $0x197c] sm:$0xf]
    %v2227 = vld [vmem:[%s1 + $0x1980] sm:$0xf]
    %v2228 = vld [vmem:[%s1 + $0x1984] sm:$0xf]
    %v2229 = vld [vmem:[%s1 + $0x1988] sm:$0xf]
    %v2230 = vld [vmem:[%s1 + $0x198c] sm:$0xf]
    %v2231 = vld [vmem:[%s1 + $0x1990] sm:$0xf]
    %v2232 = vld [vmem:[%s1 + $0x1994] sm:$0xf]
    %v2233 = vld [vmem:[%s1 + $0x1998] sm:$0xf]
    %v2234 = vld [vmem:[%s1 + $0x199c] sm:$0xf]
    %v2235 = vld [vmem:[%s1 + $0x19a0] sm:$0xf]
    %v2236 = vld [vmem:[%s1 + $0x19a4] sm:$0xf]
    %v2237 = vld [vmem:[%s1 + $0x19a8] sm:$0xf]
    %v2238 = vld [vmem:[%s1 + $0x19ac] sm:$0xf]
    %v2239 = vld [vmem:[%s1 + $0x19b0] sm:$0xf]
    %v2240 = vld [vmem:[%s1 + $0x19b4] sm:$0xf]
    %v2241 = vld [vmem:[%s1 + $0x19b8] sm:$0xf]
    %v2242 = vld [vmem:[%s1 + $0x19bc] sm:$0xf]
    %v2243 = vld [vmem:[%s1 + $0x19c0] sm:$0xf]
    %v2244 = vld [vmem:[%s1 + $0x19c4] sm:$0xf]
    %v2245 = vld [vmem:[%s1 + $0x19c8] sm:$0xf]
    %v2246 = vld [vmem:[%s1 + $0x19cc] sm:$0xf]
    %v2247 = vld [vmem:[%s1 + $0x19d0] sm:$0xf]
    %v2248 = vld [vmem:[%s1 + $0x19d4] sm:$0xf]
    %v2249 = vld [vmem:[%s1 + $0x19d8] sm:$0xf]
    %v2250 = vld [vmem:[%s1 + $0x19dc] sm:$0xf]
    %v2251 = vld [vmem:[%s1 + $0x19e0] sm:$0xf]
    %v2252 = vld [vmem:[%s1 + $0x19e4] sm:$0xf]
    %v2253 = vld [vmem:[%s1 + $0x19e8] sm:$0xf]
    %v2254 = vld [vmem:[%s1 + $0x19ec] sm:$0xf]
    %v2255 = vld [vmem:[%s1 + $0x19f0] sm:$0xf]
    %v2256 = vld [vmem:[%s1 + $0x19f4] sm:$0xf]
    %v2257 = vld [vmem:[%s1 + $0x19f8] sm:$0xf]
    %v2258 = vld [vmem:[%s1 + $0x19fc] sm:$0xf]
    %v2259 = vld [vmem:[%s1 + $0x1a00] sm:$0xf]
    %v2260 = vld [vmem:[%s1 + $0x1a04] sm:$0xf]
    %v2261 = vld [vmem:[%s1 + $0x1a08] sm:$0xf]
    %v2262 = vld [vmem:[%s1 + $0x1a0c] sm:$0xf]
    %v2263 = vld [vmem:[%s1 + $0x1a10] sm:$0xf]
    %v2264 = vld [vmem:[%s1 + $0x1a14] sm:$0xf]
    %v2265 = vld [vmem:[%s1 + $0x1a18] sm:$0xf]
    %v2266 = vld [vmem:[%s1 + $0x1a1c] sm:$0xf]
    %v2267 = vld [vmem:[%s1 + $0x1a20] sm:$0xf]
    %v2268 = vld [vmem:[%s1 + $0x1a24] sm:$0xf]
    %v2269 = vld [vmem:[%s1 + $0x1a28] sm:$0xf]
    %v2270 = vld [vmem:[%s1 + $0x1a2c] sm:$0xf]
    %v2271 = vld [vmem:[%s1 + $0x1a30] sm:$0xf]
    %v2272 = vld [vmem:[%s1 + $0x1a34] sm:$0xf]
    %v2273 = vld [vmem:[%s1 + $0x1a38] sm:$0xf]
    %v2274 = vld [vmem:[%s1 + $0x1a3c] sm:$0xf]
    %v2275 = vld [vmem:[%s1 + $0x1a40] sm:$0xf]
    %v2276 = vld [vmem:[%s1 + $0x1a44] sm:$0xf]
    %v2277 = vld [vmem:[%s1 + $0x1a48] sm:$0xf]
    %v2278 = vld [vmem:[%s1 + $0x1a4c] sm:$0xf]
    %v2279 = vld [vmem:[%s1 + $0x1a50] sm:$0xf]
    %v2280 = vld [vmem:[%s1 + $0x1a54] sm:$0xf]
    %v2281 = vld [vmem:[%s1 + $0x1a58] sm:$0xf]
    %v2282 = vld [vmem:[%s1 + $0x1a5c] sm:$0xf]
    %v2283 = vld [vmem:[%s1 + $0x1a60] sm:$0xf]
    %v2284 = vld [vmem:[%s1 + $0x1a64] sm:$0xf]
    %v2285 = vld [vmem:[%s1 + $0x1a68] sm:$0xf]
    %v2286 = vld [vmem:[%s1 + $0x1a6c] sm:$0xf]
    %v2287 = vld [vmem:[%s1 + $0x1a70] sm:$0xf]
    %v2288 = vld [vmem:[%s1 + $0x1a74] sm:$0xf]
    %v2289 = vld [vmem:[%s1 + $0x1a78] sm:$0xf]
    %v2290 = vld [vmem:[%s1 + $0x1a7c] sm:$0xf]
    %v2291 = vld [vmem:[%s1 + $0x1a80] sm:$0xf]
    %v2292 = vld [vmem:[%s1 + $0x1a84] sm:$0xf]
    %v2293 = vld [vmem:[%s1 + $0x1a88] sm:$0xf]
    %v2294 = vld [vmem:[%s1 + $0x1a8c] sm:$0xf]
    %v2295 = vld [vmem:[%s1 + $0x1a90] sm:$0xf]
    %v2296 = vld [vmem:[%s1 + $0x1a94] sm:$0xf]
    %v2297 = vld [vmem:[%s1 + $0x1a98] sm:$0xf]
    %v2298 = vld [vmem:[%s1 + $0x1a9c] sm:$0xf]
    %v2299 = vld [vmem:[%s1 + $0x1aa0] sm:$0xf]
    %v2300 = vld [vmem:[%s1 + $0x1aa4] sm:$0xf]
    %v2301 = vld [vmem:[%s1 + $0x1aa8] sm:$0xf]
    %v2302 = vld [vmem:[%s1 + $0x1aac] sm:$0xf]
    %v2303 = vld [vmem:[%s1 + $0x1ab0] sm:$0xf]
    %v2304 = vld [vmem:[%s1 + $0x1ab4] sm:$0xf]
    %v2305 = vld [vmem:[%s1 + $0x1ab8] sm:$0xf]
    %v2306 = vld [vmem:[%s1 + $0x1abc] sm:$0xf]
    %v2307 = vld [vmem:[%s1 + $0x1ac0] sm:$0xf]
    %v2308 = vld [vmem:[%s1 + $0x1ac4] sm:$0xf]
    %v2309 = vld [vmem:[%s1 + $0x1ac8] sm:$0xf]
    %v2310 = vld [vmem:[%s1 + $0x1acc] sm:$0xf]
    %v2311 = vld [vmem:[%s1 + $0x1ad0] sm:$0xf]
    %v2312 = vld [vmem:[%s1 + $0x1ad4] sm:$0xf]
    %v2313 = vld [vmem:[%s1 + $0x1ad8] sm:$0xf]
    %v2314 = vld [vmem:[%s1 + $0x1adc] sm:$0xf]
    %v2315 = vld [vmem:[%s1 + $0x1ae0] sm:$0xf]
    %v2316 = vld [vmem:[%s1 + $0x1ae4] sm:$0xf]
    %v2317 = vld [vmem:[%s1 + $0x1ae8] sm:$0xf]
    %v2318 = vld [vmem:[%s1 + $0x1aec] sm:$0xf]
    %v2319 = vld [vmem:[%s1 + $0x1af0] sm:$0xf]
    %v2320 = vld [vmem:[%s1 + $0x1af4] sm:$0xf]
    %v2321 = vld [vmem:[%s1 + $0x1af8] sm:$0xf]
    %v2322 = vld [vmem:[%s1 + $0x1afc] sm:$0xf]
    %v2323 = vld [vmem:[%s1 + $0x1b00] sm:$0xf]
    %v2324 = vld [vmem:[%s1 + $0x1b04] sm:$0xf]
    %v2325 = vld [vmem:[%s1 + $0x1b08] sm:$0xf]
    %v2326 = vld [vmem:[%s1 + $0x1b0c] sm:$0xf]
    %v2327 = vld [vmem:[%s1 + $0x1b10] sm:$0xf]
    %v2328 = vld [vmem:[%s1 + $0x1b14] sm:$0xf]
    %v2329 = vld [vmem:[%s1 + $0x1b18] sm:$0xf]
    %v2330 = vld [vmem:[%s1 + $0x1b1c] sm:$0xf]
    %v2331 = vld [vmem:[%s1 + $0x1b20] sm:$0xf]
    %v2332 = vld [vmem:[%s1 + $0x1b24] sm:$0xf]
    %v2333 = vld [vmem:[%s1 + $0x1b28] sm:$0xf]
    %v2334 = vld [vmem:[%s1 + $0x1b2c] sm:$0xf]
    %v2335 = vld [vmem:[%s1 + $0x1b30] sm:$0xf]
    %v2336 = vld [vmem:[%s1 + $0x1b34] sm:$0xf]
    %v2337 = vld [vmem:[%s1 + $0x1b38] sm:$0xf]
    %v2338 = vld [vmem:[%s1 + $0x1b3c] sm:$0xf]
    %v2339 = vld [vmem:[%s1 + $0x1b40] sm:$0xf]
    %v2340 = vld [vmem:[%s1 + $0x1b44] sm:$0xf]
    %v2341 = vld [vmem:[%s1 + $0x1b48] sm:$0xf]
    %v2342 = vld [vmem:[%s1 + $0x1b4c] sm:$0xf]
    %v2343 = vld [vmem:[%s1 + $0x1b50] sm:$0xf]
    %v2344 = vld [vmem:[%s1 + $0x1b54] sm:$0xf]
    %v2345 = vld [vmem:[%s1 + $0x1b58] sm:$0xf]
    %v2346 = vld [vmem:[%s1 + $0x1b5c] sm:$0xf]
    %v2347 = vld [vmem:[%s1 + $0x1b60] sm:$0xf]
    %v2348 = vld [vmem:[%s1 + $0x1b64] sm:$0xf]
    %v2349 = vld [vmem:[%s1 + $0x1b68] sm:$0xf]
    %v2350 = vld [vmem:[%s1 + $0x1b6c] sm:$0xf]
    %v2351 = vld [vmem:[%s1 + $0x1b70] sm:$0xf]
    %v2352 = vld [vmem:[%s1 + $0x1b74] sm:$0xf]
    %v2353 = vld [vmem:[%s1 + $0x1b78] sm:$0xf]
    %v2354 = vld [vmem:[%s1 + $0x1b7c] sm:$0xf]
    %v2355 = vld [vmem:[%s1 + $0x1b80] sm:$0xf]
    %v2356 = vld [vmem:[%s1 + $0x1b84] sm:$0xf]
    %v2357 = vld [vmem:[%s1 + $0x1b88] sm:$0xf]
    %v2358 = vld [vmem:[%s1 + $0x1b8c] sm:$0xf]
    %v2359 = vld [vmem:[%s1 + $0x1b90] sm:$0xf]
    %v2360 = vld [vmem:[%s1 + $0x1b94] sm:$0xf]
    %v2361 = vld [vmem:[%s1 + $0x1b98] sm:$0xf]
    %v2362 = vld [vmem:[%s1 + $0x1b9c] sm:$0xf]
    %v2363 = vld [vmem:[%s1 + $0x1ba0] sm:$0xf]
    %v2364 = vld [vmem:[%s1 + $0x1ba4] sm:$0xf]
    %v2365 = vld [vmem:[%s1 + $0x1ba8] sm:$0xf]
    %v2366 = vld [vmem:[%s1 + $0x1bac] sm:$0xf]
    %v2367 = vld [vmem:[%s1 + $0x1bb0] sm:$0xf]
    %v2368 = vld [vmem:[%s1 + $0x1bb4] sm:$0xf]
    %v2369 = vld [vmem:[%s1 + $0x1bb8] sm:$0xf]
    %v2370 = vld [vmem:[%s1 + $0x1bbc] sm:$0xf]
    %v2371 = vld [vmem:[%s1 + $0x1bc0] sm:$0xf]
    %v2372 = vld [vmem:[%s1 + $0x1bc4] sm:$0xf]
    %v2373 = vld [vmem:[%s1 + $0x1bc8] sm:$0xf]
    %v2374 = vld [vmem:[%s1 + $0x1bcc] sm:$0xf]
    %v2375 = vld [vmem:[%s1 + $0x1bd0] sm:$0xf]
    %v2376 = vld [vmem:[%s1 + $0x1bd4] sm:$0xf]
    %v2377 = vld [vmem:[%s1 + $0x1bd8] sm:$0xf]
    %v2378 = vld [vmem:[%s1 + $0x1bdc] sm:$0xf]
    %v2379 = vld [vmem:[%s1 + $0x1be0] sm:$0xf]
    %v2380 = vld [vmem:[%s1 + $0x1be4] sm:$0xf]
    %v2381 = vld [vmem:[%s1 + $0x1be8] sm:$0xf]
    %v2382 = vld [vmem:[%s1 + $0x1bec] sm:$0xf]
    %v2383 = vld [vmem:[%s1 + $0x1bf0] sm:$0xf]
    %v2384 = vld [vmem:[%s1 + $0x1bf4] sm:$0xf]
    %v2385 = vld [vmem:[%s1 + $0x1bf8] sm:$0xf]
    %v2386 = vld [vmem:[%s1 + $0x1bfc] sm:$0xf]
    %v2387 = vld [vmem:[%s1 + $0x1c00] sm:$0xf]
    %v2388 = vld [vmem:[%s1 + $0x1c04] sm:$0xf]
    %v2389 = vld [vmem:[%s1 + $0x1c08] sm:$0xf]
    %v2390 = vld [vmem:[%s1 + $0x1c0c] sm:$0xf]
    %v2391 = vld [vmem:[%s1 + $0x1c10] sm:$0xf]
    %v2392 = vld [vmem:[%s1 + $0x1c14] sm:$0xf]
    %v2393 = vld [vmem:[%s1 + $0x1c18] sm:$0xf]
    %v2394 = vld [vmem:[%s1 + $0x1c1c] sm:$0xf]
    %v2395 = vld [vmem:[%s1 + $0x1c20] sm:$0xf]
    %v2396 = vld [vmem:[%s1 + $0x1c24] sm:$0xf]
    %v2397 = vld [vmem:[%s1 + $0x1c28] sm:$0xf]
    %v2398 = vld [vmem:[%s1 + $0x1c2c] sm:$0xf]
    %v2399 = vld [vmem:[%s1 + $0x1c30] sm:$0xf]
    %v2400 = vld [vmem:[%s1 + $0x1c34] sm:$0xf]
    %v2401 = vld [vmem:[%s1 + $0x1c38] sm:$0xf]
    %v2402 = vld [vmem:[%s1 + $0x1c3c] sm:$0xf]
    %v2403 = vld [vmem:[%s1 + $0x1c40] sm:$0xf]
    %v2404 = vld [vmem:[%s1 + $0x1c44] sm:$0xf]
    %v2405 = vld [vmem:[%s1 + $0x1c48] sm:$0xf]
    %v2406 = vld [vmem:[%s1 + $0x1c4c] sm:$0xf]
    %v2407 = vld [vmem:[%s1 + $0x1c50] sm:$0xf]
    %v2408 = vld [vmem:[%s1 + $0x1c54] sm:$0xf]
    %v2409 = vld [vmem:[%s1 + $0x1c58] sm:$0xf]
    %v2410 = vld [vmem:[%s1 + $0x1c5c] sm:$0xf]
    %v2411 = vld [vmem:[%s1 + $0x1c60] sm:$0xf]
    %v2412 = vld [vmem:[%s1 + $0x1c64] sm:$0xf]
    %v2413 = vld [vmem:[%s1 + $0x1c68] sm:$0xf]
    %v2414 = vld [vmem:[%s1 + $0x1c6c] sm:$0xf]
    %v2415 = vld [vmem:[%s1 + $0x1c70] sm:$0xf]
    %v2416 = vld [vmem:[%s1 + $0x1c74] sm:$0xf]
    %v2417 = vld [vmem:[%s1 + $0x1c78] sm:$0xf]
    %v2418 = vld [vmem:[%s1 + $0x1c7c] sm:$0xf]
    %v2419 = vld [vmem:[%s1 + $0x1c80] sm:$0xf]
    %v2420 = vld [vmem:[%s1 + $0x1c84] sm:$0xf]
    %v2421 = vld [vmem:[%s1 + $0x1c88] sm:$0xf]
    %v2422 = vld [vmem:[%s1 + $0x1c8c] sm:$0xf]
    %v2423 = vld [vmem:[%s1 + $0x1c90] sm:$0xf]
    %v2424 = vld [vmem:[%s1 + $0x1c94] sm:$0xf]
    %v2425 = vld [vmem:[%s1 + $0x1c98] sm:$0xf]
    %v2426 = vld [vmem:[%s1 + $0x1c9c] sm:$0xf]
    %v2427 = vld [vmem:[%s1 + $0x1ca0] sm:$0xf]
    %v2428 = vld [vmem:[%s1 + $0x1ca4] sm:$0xf]
    %v2429 = vld [vmem:[%s1 + $0x1ca8] sm:$0xf]
    %v2430 = vld [vmem:[%s1 + $0x1cac] sm:$0xf]
    %v2431 = vld [vmem:[%s1 + $0x1cb0] sm:$0xf]
    %v2432 = vld [vmem:[%s1 + $0x1cb4] sm:$0xf]
    %v2433 = vld [vmem:[%s1 + $0x1cb8] sm:$0xf]
    %v2434 = vld [vmem:[%s1 + $0x1cbc] sm:$0xf]
    %v2435 = vld [vmem:[%s1 + $0x1cc0] sm:$0xf]
    %v2436 = vld [vmem:[%s1 + $0x1cc4] sm:$0xf]
    %v2437 = vld [vmem:[%s1 + $0x1cc8] sm:$0xf]
    %v2438 = vld [vmem:[%s1 + $0x1ccc] sm:$0xf]
    %v2439 = vld [vmem:[%s1 + $0x1cd0] sm:$0xf]
    %v2440 = vld [vmem:[%s1 + $0x1cd4] sm:$0xf]
    %v2441 = vld [vmem:[%s1 + $0x1cd8] sm:$0xf]
    %v2442 = vld [vmem:[%s1 + $0x1cdc] sm:$0xf]
    %v2443 = vld [vmem:[%s1 + $0x1ce0] sm:$0xf]
    %v2444 = vld [vmem:[%s1 + $0x1ce4] sm:$0xf]
    %v2445 = vld [vmem:[%s1 + $0x1ce8] sm:$0xf]
    %v2446 = vld [vmem:[%s1 + $0x1cec] sm:$0xf]
    %v2447 = vld [vmem:[%s1 + $0x1cf0] sm:$0xf]
    %v2448 = vld [vmem:[%s1 + $0x1cf4] sm:$0xf]
    %v2449 = vld [vmem:[%s1 + $0x1cf8] sm:$0xf]
    %v2450 = vld [vmem:[%s1 + $0x1cfc] sm:$0xf]
    %v2451 = vld [vmem:[%s1 + $0x1d00] sm:$0xf]
    %v2452 = vld [vmem:[%s1 + $0x1d04] sm:$0xf]
    %v2453 = vld [vmem:[%s1 + $0x1d08] sm:$0xf]
    %v2454 = vld [vmem:[%s1 + $0x1d0c] sm:$0xf]
    %v2455 = vld [vmem:[%s1 + $0x1d10] sm:$0xf]
    %v2456 = vld [vmem:[%s1 + $0x1d14] sm:$0xf]
    %v2457 = vld [vmem:[%s1 + $0x1d18] sm:$0xf]
    %v2458 = vld [vmem:[%s1 + $0x1d1c] sm:$0xf]
    %v2459 = vld [vmem:[%s1 + $0x1d20] sm:$0xf]
    %v2460 = vld [vmem:[%s1 + $0x1d24] sm:$0xf]
    %v2461 = vld [vmem:[%s1 + $0x1d28] sm:$0xf]
    %v2462 = vld [vmem:[%s1 + $0x1d2c] sm:$0xf]
    %v2463 = vld [vmem:[%s1 + $0x1d30] sm:$0xf]
    %v2464 = vld [vmem:[%s1 + $0x1d34] sm:$0xf]
    %v2465 = vld [vmem:[%s1 + $0x1d38] sm:$0xf]
    %v2466 = vld [vmem:[%s1 + $0x1d3c] sm:$0xf]
    %v2467 = vld [vmem:[%s1 + $0x1d40] sm:$0xf]
    %v2468 = vld [vmem:[%s1 + $0x1d44] sm:$0xf]
    %v2469 = vld [vmem:[%s1 + $0x1d48] sm:$0xf]
    %v2470 = vld [vmem:[%s1 + $0x1d4c] sm:$0xf]
    %v2471 = vld [vmem:[%s1 + $0x1d50] sm:$0xf]
    %v2472 = vld [vmem:[%s1 + $0x1d54] sm:$0xf]
    %v2473 = vld [vmem:[%s1 + $0x1d58] sm:$0xf]
    %v2474 = vld [vmem:[%s1 + $0x1d5c] sm:$0xf]
    %v2475 = vld [vmem:[%s1 + $0x1d60] sm:$0xf]
    %v2476 = vld [vmem:[%s1 + $0x1d64] sm:$0xf]
    %v2477 = vld [vmem:[%s1 + $0x1d68] sm:$0xf]
    %v2478 = vld [vmem:[%s1 + $0x1d6c] sm:$0xf]
    %v2479 = vld [vmem:[%s1 + $0x1d70] sm:$0xf]
    %v2480 = vld [vmem:[%s1 + $0x1d74] sm:$0xf]
    %v2481 = vld [vmem:[%s1 + $0x1d78] sm:$0xf]
    %v2482 = vld [vmem:[%s1 + $0x1d7c] sm:$0xf]
    %v2483 = vld [vmem:[%s1 + $0x1d80] sm:$0xf]
    %v2484 = vld [vmem:[%s1 + $0x1d84] sm:$0xf]
    %v2485 = vld [vmem:[%s1 + $0x1d88] sm:$0xf]
    %v2486 = vld [vmem:[%s1 + $0x1d8c] sm:$0xf]
    %v2487 = vld [vmem:[%s1 + $0x1d90] sm:$0xf]
    %v2488 = vld [vmem:[%s1 + $0x1d94] sm:$0xf]
    %v2489 = vld [vmem:[%s1 + $0x1d98] sm:$0xf]
    %v2490 = vld [vmem:[%s1 + $0x1d9c] sm:$0xf]
    %v2491 = vld [vmem:[%s1 + $0x1da0] sm:$0xf]
    %v2492 = vld [vmem:[%s1 + $0x1da4] sm:$0xf]
    %v2493 = vld [vmem:[%s1 + $0x1da8] sm:$0xf]
    %v2494 = vld [vmem:[%s1 + $0x1dac] sm:$0xf]
    %v2495 = vld [vmem:[%s1 + $0x1db0] sm:$0xf]
    %v2496 = vld [vmem:[%s1 + $0x1db4] sm:$0xf]
    %v2497 = vld [vmem:[%s1 + $0x1db8] sm:$0xf]
    %v2498 = vld [vmem:[%s1 + $0x1dbc] sm:$0xf]
    %v2499 = vld [vmem:[%s1 + $0x1dc0] sm:$0xf]
    %v2500 = vld [vmem:[%s1 + $0x1dc4] sm:$0xf]
    %v2501 = vld [vmem:[%s1 + $0x1dc8] sm:$0xf]
    %v2502 = vld [vmem:[%s1 + $0x1dcc] sm:$0xf]
    %v2503 = vld [vmem:[%s1 + $0x1dd0] sm:$0xf]
    %v2504 = vld [vmem:[%s1 + $0x1dd4] sm:$0xf]
    %v2505 = vld [vmem:[%s1 + $0x1dd8] sm:$0xf]
    %v2506 = vld [vmem:[%s1 + $0x1ddc] sm:$0xf]
    %v2507 = vld [vmem:[%s1 + $0x1de0] sm:$0xf]
    %v2508 = vld [vmem:[%s1 + $0x1de4] sm:$0xf]
    %v2509 = vld [vmem:[%s1 + $0x1de8] sm:$0xf]
    %v2510 = vld [vmem:[%s1 + $0x1dec] sm:$0xf]
    %v2511 = vld [vmem:[%s1 + $0x1df0] sm:$0xf]
    %v2512 = vld [vmem:[%s1 + $0x1df4] sm:$0xf]
    %v2513 = vld [vmem:[%s1 + $0x1df8] sm:$0xf]
    %v2514 = vld [vmem:[%s1 + $0x1dfc] sm:$0xf]
    %v2515 = vld [vmem:[%s1 + $0x1e00] sm:$0xf]
    %v2516 = vld [vmem:[%s1 + $0x1e04] sm:$0xf]
    %v2517 = vld [vmem:[%s1 + $0x1e08] sm:$0xf]
    %v2518 = vld [vmem:[%s1 + $0x1e0c] sm:$0xf]
    %v2519 = vld [vmem:[%s1 + $0x1e10] sm:$0xf]
    %v2520 = vld [vmem:[%s1 + $0x1e14] sm:$0xf]
    %v2521 = vld [vmem:[%s1 + $0x1e18] sm:$0xf]
    %v2522 = vld [vmem:[%s1 + $0x1e1c] sm:$0xf]
    %v2523 = vld [vmem:[%s1 + $0x1e20] sm:$0xf]
    %v2524 = vld [vmem:[%s1 + $0x1e24] sm:$0xf]
    %v2525 = vld [vmem:[%s1 + $0x1e28] sm:$0xf]
    %v2526 = vld [vmem:[%s1 + $0x1e2c] sm:$0xf]
    %v2527 = vld [vmem:[%s1 + $0x1e30] sm:$0xf]
    %v2528 = vld [vmem:[%s1 + $0x1e34] sm:$0xf]
    %v2529 = vld [vmem:[%s1 + $0x1e38] sm:$0xf]
    %v2530 = vld [vmem:[%s1 + $0x1e3c] sm:$0xf]
    %v2531 = vld [vmem:[%s1 + $0x1e40] sm:$0xf]
    %v2532 = vld [vmem:[%s1 + $0x1e44] sm:$0xf]
    %v2533 = vld [vmem:[%s1 + $0x1e48] sm:$0xf]
    %v2534 = vld [vmem:[%s1 + $0x1e4c] sm:$0xf]
    %v2535 = vld [vmem:[%s1 + $0x1e50] sm:$0xf]
    %v2536 = vld [vmem:[%s1 + $0x1e54] sm:$0xf]
    %v2537 = vld [vmem:[%s1 + $0x1e58] sm:$0xf]
    %v2538 = vld [vmem:[%s1 + $0x1e5c] sm:$0xf]
    %v2539 = vld [vmem:[%s1 + $0x1e60] sm:$0xf]
    %v2540 = vld [vmem:[%s1 + $0x1e64] sm:$0xf]
    %v2541 = vld [vmem:[%s1 + $0x1e68] sm:$0xf]
    %v2542 = vld [vmem:[%s1 + $0x1e6c] sm:$0xf]
    %v2543 = vld [vmem:[%s1 + $0x1e70] sm:$0xf]
    %v2544 = vld [vmem:[%s1 + $0x1e74] sm:$0xf]
    %v2545 = vld [vmem:[%s1 + $0x1e78] sm:$0xf]
    %v2546 = vld [vmem:[%s1 + $0x1e7c] sm:$0xf]
    %v2547 = vld [vmem:[%s1 + $0x1e80] sm:$0xf]
    %v2548 = vld [vmem:[%s1 + $0x1e84] sm:$0xf]
    %v2549 = vld [vmem:[%s1 + $0x1e88] sm:$0xf]
    %v2550 = vld [vmem:[%s1 + $0x1e8c] sm:$0xf]
    %v2551 = vld [vmem:[%s1 + $0x1e90] sm:$0xf]
    %v2552 = vld [vmem:[%s1 + $0x1e94] sm:$0xf]
    %v2553 = vld [vmem:[%s1 + $0x1e98] sm:$0xf]
    %v2554 = vld [vmem:[%s1 + $0x1e9c] sm:$0xf]
    %v2555 = vld [vmem:[%s1 + $0x1ea0] sm:$0xf]
    %v2556 = vld [vmem:[%s1 + $0x1ea4] sm:$0xf]
    %v2557 = vld [vmem:[%s1 + $0x1ea8] sm:$0xf]
    %v2558 = vld [vmem:[%s1 + $0x1eac] sm:$0xf]
    %v2559 = vld [vmem:[%s1 + $0x1eb0] sm:$0xf]
    %v2560 = vld [vmem:[%s1 + $0x1eb4] sm:$0xf]
    %v2561 = vld [vmem:[%s1 + $0x1eb8] sm:$0xf]
    %v2562 = vld [vmem:[%s1 + $0x1ebc] sm:$0xf]
    %v2563 = vld [vmem:[%s1 + $0x1ec0] sm:$0xf]
    %v2564 = vld [vmem:[%s1 + $0x1ec4] sm:$0xf]
    %v2565 = vld [vmem:[%s1 + $0x1ec8] sm:$0xf]
    %v2566 = vld [vmem:[%s1 + $0x1ecc] sm:$0xf]
    %v2567 = vld [vmem:[%s1 + $0x1ed0] sm:$0xf]
    %v2568 = vld [vmem:[%s1 + $0x1ed4] sm:$0xf]
    %v2569 = vld [vmem:[%s1 + $0x1ed8] sm:$0xf]
    %v2570 = vld [vmem:[%s1 + $0x1edc] sm:$0xf]
    %v2571 = vld [vmem:[%s1 + $0x1ee0] sm:$0xf]
    %v2572 = vld [vmem:[%s1 + $0x1ee4] sm:$0xf]
    %v2573 = vld [vmem:[%s1 + $0x1ee8] sm:$0xf]
    %v2574 = vld [vmem:[%s1 + $0x1eec] sm:$0xf]
    %v2575 = vld [vmem:[%s1 + $0x1ef0] sm:$0xf]
    %v2576 = vld [vmem:[%s1 + $0x1ef4] sm:$0xf]
    %v2577 = vld [vmem:[%s1 + $0x1ef8] sm:$0xf]
    %v2578 = vld [vmem:[%s1 + $0x1efc] sm:$0xf]
    %v2579 = vld [vmem:[%s1 + $0x1f00] sm:$0xf]
    %v2580 = vld [vmem:[%s1 + $0x1f04] sm:$0xf]
    %v2581 = vld [vmem:[%s1 + $0x1f08] sm:$0xf]
    %v2582 = vld [vmem:[%s1 + $0x1f0c] sm:$0xf]
    %v2583 = vld [vmem:[%s1 + $0x1f10] sm:$0xf]
    %v2584 = vld [vmem:[%s1 + $0x1f14] sm:$0xf]
    %v2585 = vld [vmem:[%s1 + $0x1f18] sm:$0xf]
    %v2586 = vld [vmem:[%s1 + $0x1f1c] sm:$0xf]
    %v2587 = vld [vmem:[%s1 + $0x1f20] sm:$0xf]
    %v2588 = vld [vmem:[%s1 + $0x1f24] sm:$0xf]
    %v2589 = vld [vmem:[%s1 + $0x1f28] sm:$0xf]
    %v2590 = vld [vmem:[%s1 + $0x1f2c] sm:$0xf]
    %v2591 = vld [vmem:[%s1 + $0x1f30] sm:$0xf]
    %v2592 = vld [vmem:[%s1 + $0x1f34] sm:$0xf]
    %v2593 = vld [vmem:[%s1 + $0x1f38] sm:$0xf]
    %v2594 = vld [vmem:[%s1 + $0x1f3c] sm:$0xf]
    %v2595 = vld [vmem:[%s1 + $0x1f40] sm:$0xf]
    %v2596 = vld [vmem:[%s1 + $0x1f44] sm:$0xf]
    %v2597 = vld [vmem:[%s1 + $0x1f48] sm:$0xf]
    %v2598 = vld [vmem:[%s1 + $0x1f4c] sm:$0xf]
    %v2599 = vld [vmem:[%s1 + $0x1f50] sm:$0xf]
    %v2600 = vld [vmem:[%s1 + $0x1f54] sm:$0xf]
    %v2601 = vld [vmem:[%s1 + $0x1f58] sm:$0xf]
    %v2602 = vld [vmem:[%s1 + $0x1f5c] sm:$0xf]
    %v2603 = vld [vmem:[%s1 + $0x1f60] sm:$0xf]
    %v2604 = vld [vmem:[%s1 + $0x1f64] sm:$0xf]
    %v2605 = vld [vmem:[%s1 + $0x1f68] sm:$0xf]
    %v2606 = vld [vmem:[%s1 + $0x1f6c] sm:$0xf]
    %v2607 = vld [vmem:[%s1 + $0x1f70] sm:$0xf]
    %v2608 = vld [vmem:[%s1 + $0x1f74] sm:$0xf]
    %v2609 = vld [vmem:[%s1 + $0x1f78] sm:$0xf]
    %v2610 = vld [vmem:[%s1 + $0x1f7c] sm:$0xf]
    %v2611 = vld [vmem:[%s1 + $0x1f80] sm:$0xf]
    %v2612 = vld [vmem:[%s1 + $0x1f84] sm:$0xf]
    %v2613 = vld [vmem:[%s1 + $0x1f88] sm:$0xf]
    %v2614 = vld [vmem:[%s1 + $0x1f8c] sm:$0xf]
    %v2615 = vld [vmem:[%s1 + $0x1f90] sm:$0xf]
    %v2616 = vld [vmem:[%s1 + $0x1f94] sm:$0xf]
    %v2617 = vld [vmem:[%s1 + $0x1f98] sm:$0xf]
    %v2618 = vld [vmem:[%s1 + $0x1f9c] sm:$0xf]
    %v2619 = vld [vmem:[%s1 + $0x1fa0] sm:$0xf]
    %v2620 = vld [vmem:[%s1 + $0x1fa4] sm:$0xf]
    %v2621 = vld [vmem:[%s1 + $0x1fa8] sm:$0xf]
    %v2622 = vld [vmem:[%s1 + $0x1fac] sm:$0xf]
    %v2623 = vld [vmem:[%s1 + $0x1fb0] sm:$0xf]
    %v2624 = vld [vmem:[%s1 + $0x1fb4] sm:$0xf]
    %v2625 = vld [vmem:[%s1 + $0x1fb8] sm:$0xf]
    %v2626 = vld [vmem:[%s1 + $0x1fbc] sm:$0xf]
    %v2627 = vld [vmem:[%s1 + $0x1fc0] sm:$0xf]
    %v2628 = vld [vmem:[%s1 + $0x1fc4] sm:$0xf]
    %v2629 = vld [vmem:[%s1 + $0x1fc8] sm:$0xf]
    %v2630 = vld [vmem:[%s1 + $0x1fcc] sm:$0xf]
    %v2631 = vld [vmem:[%s1 + $0x1fd0] sm:$0xf]
    %v2632 = vld [vmem:[%s1 + $0x1fd4] sm:$0xf]
    %v2633 = vld [vmem:[%s1 + $0x1fd8] sm:$0xf]
    %v2634 = vld [vmem:[%s1 + $0x1fdc] sm:$0xf]
    %v2635 = vld [vmem:[%s1 + $0x1fe0] sm:$0xf]
    %v2636 = vld [vmem:[%s1 + $0x1fe4] sm:$0xf]
    %v2637 = vld [vmem:[%s1 + $0x1fe8] sm:$0xf]
    %v2638 = vld [vmem:[%s1 + $0x1fec] sm:$0xf]
    %v2639 = vld [vmem:[%s1 + $0x1ff0] sm:$0xf]
    %v2640 = vld [vmem:[%s1 + $0x1ff4] sm:$0xf]
    %v2641 = vld [vmem:[%s1 + $0x1ff8] sm:$0xf]
    %v2642 = vld [vmem:[%s1 + $0x1ffc] sm:$0xf]
    %v2643 = vld [vmem:[%s1 + $0x2000] sm:$0xf]
    %v2644 = vld [vmem:[%s1 + $0x2004] sm:$0xf]
    %v2645 = vld [vmem:[%s1 + $0x2008] sm:$0xf]
    %v2646 = vld [vmem:[%s1 + $0x200c] sm:$0xf]
    %v2647 = vld [vmem:[%s1 + $0x2010] sm:$0xf]
    %v2648 = vld [vmem:[%s1 + $0x2014] sm:$0xf]
    %v2649 = vld [vmem:[%s1 + $0x2018] sm:$0xf]
    %v2650 = vld [vmem:[%s1 + $0x201c] sm:$0xf]
    %v2651 = vld [vmem:[%s1 + $0x2020] sm:$0xf]
    %v2652 = vld [vmem:[%s1 + $0x2024] sm:$0xf]
    %v2653 = vld [vmem:[%s1 + $0x2028] sm:$0xf]
    %v2654 = vld [vmem:[%s1 + $0x202c] sm:$0xf]
    %v2655 = vld [vmem:[%s1 + $0x2030] sm:$0xf]
    %v2656 = vld [vmem:[%s1 + $0x2034] sm:$0xf]
    %v2657 = vld [vmem:[%s1 + $0x2038] sm:$0xf]
    %v2658 = vld [vmem:[%s1 + $0x203c] sm:$0xf]
    %v2659 = vld [vmem:[%s1 + $0x2040] sm:$0xf]
    %v2660 = vld [vmem:[%s1 + $0x2044] sm:$0xf]
    %v2661 = vld [vmem:[%s1 + $0x2048] sm:$0xf]
    %v2662 = vld [vmem:[%s1 + $0x204c] sm:$0xf]
    %v2663 = vld [vmem:[%s1 + $0x2050] sm:$0xf]
    %v2664 = vld [vmem:[%s1 + $0x2054] sm:$0xf]
    %v2665 = vld [vmem:[%s1 + $0x2058] sm:$0xf]
    %v2666 = vld [vmem:[%s1 + $0x205c] sm:$0xf]
    %v2667 = vld [vmem:[%s1 + $0x2060] sm:$0xf]
    %v2668 = vld [vmem:[%s1 + $0x2064] sm:$0xf]
    %v2669 = vld [vmem:[%s1 + $0x2068] sm:$0xf]
    %v2670 = vld [vmem:[%s1 + $0x206c] sm:$0xf]
    %v2671 = vld [vmem:[%s1 + $0x2070] sm:$0xf]
    %v2672 = vld [vmem:[%s1 + $0x2074] sm:$0xf]
    %v2673 = vld [vmem:[%s1 + $0x2078] sm:$0xf]
    %v2674 = vld [vmem:[%s1 + $0x207c] sm:$0xf]
    %v2675 = vld [vmem:[%s1 + $0x2080] sm:$0xf]
    %v2676 = vld [vmem:[%s1 + $0x2084] sm:$0xf]
    %v2677 = vld [vmem:[%s1 + $0x2088] sm:$0xf]
    %v2678 = vld [vmem:[%s1 + $0x208c] sm:$0xf]
    %v2679 = vld [vmem:[%s1 + $0x2090] sm:$0xf]
    %v2680 = vld [vmem:[%s1 + $0x2094] sm:$0xf]
    %v2681 = vld [vmem:[%s1 + $0x2098] sm:$0xf]
    %v2682 = vld [vmem:[%s1 + $0x209c] sm:$0xf]
    %v2683 = vld [vmem:[%s1 + $0x20a0] sm:$0xf]
    %v2684 = vld [vmem:[%s1 + $0x20a4] sm:$0xf]
    %v2685 = vld [vmem:[%s1 + $0x20a8] sm:$0xf]
    %v2686 = vld [vmem:[%s1 + $0x20ac] sm:$0xf]
    %v2687 = vld [vmem:[%s1 + $0x20b0] sm:$0xf]
    %v2688 = vld [vmem:[%s1 + $0x20b4] sm:$0xf]
    %v2689 = vld [vmem:[%s1 + $0x20b8] sm:$0xf]
    %v2690 = vld [vmem:[%s1 + $0x20bc] sm:$0xf]
    %v2691 = vld [vmem:[%s1 + $0x20c0] sm:$0xf]
    %v2692 = vld [vmem:[%s1 + $0x20c4] sm:$0xf]
    %v2693 = vld [vmem:[%s1 + $0x20c8] sm:$0xf]
    %v2694 = vld [vmem:[%s1 + $0x20cc] sm:$0xf]
    %v2695 = vld [vmem:[%s1 + $0x20d0] sm:$0xf]
    %v2696 = vld [vmem:[%s1 + $0x20d4] sm:$0xf]
    %v2697 = vld [vmem:[%s1 + $0x20d8] sm:$0xf]
    %v2698 = vld [vmem:[%s1 + $0x20dc] sm:$0xf]
    %v2699 = vld [vmem:[%s1 + $0x20e0] sm:$0xf]
    %v2700 = vld [vmem:[%s1 + $0x20e4] sm:$0xf]
    %v2701 = vld [vmem:[%s1 + $0x20e8] sm:$0xf]
    %v2702 = vld [vmem:[%s1 + $0x20ec] sm:$0xf]
    %v2703 = vld [vmem:[%s1 + $0x20f0] sm:$0xf]
    %v2704 = vld [vmem:[%s1 + $0x20f4] sm:$0xf]
    %v2705 = vld [vmem:[%s1 + $0x20f8] sm:$0xf]
    %v2706 = vld [vmem:[%s1 + $0x20fc] sm:$0xf]
    %v2707 = vld [vmem:[%s1 + $0x2100] sm:$0xf]
    %v2708 = vld [vmem:[%s1 + $0x2104] sm:$0xf]
    %v2709 = vld [vmem:[%s1 + $0x2108] sm:$0xf]
    %v2710 = vld [vmem:[%s1 + $0x210c] sm:$0xf]
    %v2711 = vld [vmem:[%s1 + $0x2110] sm:$0xf]
    %v2712 = vld [vmem:[%s1 + $0x2114] sm:$0xf]
    %v2713 = vld [vmem:[%s1 + $0x2118] sm:$0xf]
    %v2714 = vld [vmem:[%s1 + $0x211c] sm:$0xf]
    %v2715 = vld [vmem:[%s1 + $0x2120] sm:$0xf]
    %v2716 = vld [vmem:[%s1 + $0x2124] sm:$0xf]
    %v2717 = vld [vmem:[%s1 + $0x2128] sm:$0xf]
    %v2718 = vld [vmem:[%s1 + $0x212c] sm:$0xf]
    %v2719 = vld [vmem:[%s1 + $0x2130] sm:$0xf]
    %v2720 = vld [vmem:[%s1 + $0x2134] sm:$0xf]
    %v2721 = vld [vmem:[%s1 + $0x2138] sm:$0xf]
    %v2722 = vld [vmem:[%s1 + $0x213c] sm:$0xf]
    %v2723 = vld [vmem:[%s1 + $0x2140] sm:$0xf]
    %v2724 = vld [vmem:[%s1 + $0x2144] sm:$0xf]
    %v2725 = vld [vmem:[%s1 + $0x2148] sm:$0xf]
    %v2726 = vld [vmem:[%s1 + $0x214c] sm:$0xf]
    %v2727 = vld [vmem:[%s1 + $0x2150] sm:$0xf]
    %v2728 = vld [vmem:[%s1 + $0x2154] sm:$0xf]
    %v2729 = vld [vmem:[%s1 + $0x2158] sm:$0xf]
    %v2730 = vld [vmem:[%s1 + $0x215c] sm:$0xf]
    %v2731 = vld [vmem:[%s1 + $0x2160] sm:$0xf]
    %v2732 = vld [vmem:[%s1 + $0x2164] sm:$0xf]
    %v2733 = vld [vmem:[%s1 + $0x2168] sm:$0xf]
    %v2734 = vld [vmem:[%s1 + $0x216c] sm:$0xf]
    %v2735 = vld [vmem:[%s1 + $0x2170] sm:$0xf]
    %v2736 = vld [vmem:[%s1 + $0x2174] sm:$0xf]
    %v2737 = vld [vmem:[%s1 + $0x2178] sm:$0xf]
    %v2738 = vld [vmem:[%s1 + $0x217c] sm:$0xf]
    %v2739 = vld [vmem:[%s1 + $0x2180] sm:$0xf]
    %v2740 = vld [vmem:[%s1 + $0x2184] sm:$0xf]
    %v2741 = vld [vmem:[%s1 + $0x2188] sm:$0xf]
    %v2742 = vld [vmem:[%s1 + $0x218c] sm:$0xf]
    %v2743 = vld [vmem:[%s1 + $0x2190] sm:$0xf]
    %v2744 = vld [vmem:[%s1 + $0x2194] sm:$0xf]
    %v2745 = vld [vmem:[%s1 + $0x2198] sm:$0xf]
    %v2746 = vld [vmem:[%s1 + $0x219c] sm:$0xf]
    %v2747 = vld [vmem:[%s1 + $0x21a0] sm:$0xf]
    %v2748 = vld [vmem:[%s1 + $0x21a4] sm:$0xf]
    %v2749 = vld [vmem:[%s1 + $0x21a8] sm:$0xf]
    %v2750 = vld [vmem:[%s1 + $0x21ac] sm:$0xf]
    %v2751 = vld [vmem:[%s1 + $0x21b0] sm:$0xf]
    %v2752 = vld [vmem:[%s1 + $0x21b4] sm:$0xf]
    %v2753 = vld [vmem:[%s1 + $0x21b8] sm:$0xf]
    %v2754 = vld [vmem:[%s1 + $0x21bc] sm:$0xf]
    %v2755 = vld [vmem:[%s1 + $0x21c0] sm:$0xf]
    %v2756 = vld [vmem:[%s1 + $0x21c4] sm:$0xf]
    %v2757 = vld [vmem:[%s1 + $0x21c8] sm:$0xf]
    %v2758 = vld [vmem:[%s1 + $0x21cc] sm:$0xf]
    %v2759 = vld [vmem:[%s1 + $0x21d0] sm:$0xf]
    %v2760 = vld [vmem:[%s1 + $0x21d4] sm:$0xf]
    %v2761 = vld [vmem:[%s1 + $0x21d8] sm:$0xf]
    %v2762 = vld [vmem:[%s1 + $0x21dc] sm:$0xf]
    %v2763 = vld [vmem:[%s1 + $0x21e0] sm:$0xf]
    %v2764 = vld [vmem:[%s1 + $0x21e4] sm:$0xf]
    %v2765 = vld [vmem:[%s1 + $0x21e8] sm:$0xf]
    %v2766 = vld [vmem:[%s1 + $0x21ec] sm:$0xf]
    %v2767 = vld [vmem:[%s1 + $0x21f0] sm:$0xf]
    %v2768 = vld [vmem:[%s1 + $0x21f4] sm:$0xf]
    %v2769 = vld [vmem:[%s1 + $0x21f8] sm:$0xf]
    %v2770 = vld [vmem:[%s1 + $0x21fc] sm:$0xf]
    %v2771 = vld [vmem:[%s1 + $0x2200] sm:$0xf]
    %v2772 = vld [vmem:[%s1 + $0x2204] sm:$0xf]
    %v2773 = vld [vmem:[%s1 + $0x2208] sm:$0xf]
    %v2774 = vld [vmem:[%s1 + $0x220c] sm:$0xf]
    %v2775 = vld [vmem:[%s1 + $0x2210] sm:$0xf]
    %v2776 = vld [vmem:[%s1 + $0x2214] sm:$0xf]
    %v2777 = vld [vmem:[%s1 + $0x2218] sm:$0xf]
    %v2778 = vld [vmem:[%s1 + $0x221c] sm:$0xf]
    %v2779 = vld [vmem:[%s1 + $0x2220] sm:$0xf]
    %v2780 = vld [vmem:[%s1 + $0x2224] sm:$0xf]
    %v2781 = vld [vmem:[%s1 + $0x2228] sm:$0xf]
    %v2782 = vld [vmem:[%s1 + $0x222c] sm:$0xf]
    %v2783 = vld [vmem:[%s1 + $0x2230] sm:$0xf]
    %v2784 = vld [vmem:[%s1 + $0x2234] sm:$0xf]
    %v2785 = vld [vmem:[%s1 + $0x2238] sm:$0xf]
    %v2786 = vld [vmem:[%s1 + $0x223c] sm:$0xf]
    %v2787 = vld [vmem:[%s1 + $0x2240] sm:$0xf]
    %v2788 = vld [vmem:[%s1 + $0x2244] sm:$0xf]
    %v2789 = vld [vmem:[%s1 + $0x2248] sm:$0xf]
    %v2790 = vld [vmem:[%s1 + $0x224c] sm:$0xf]
    %v2791 = vld [vmem:[%s1 + $0x2250] sm:$0xf]
    %v2792 = vld [vmem:[%s1 + $0x2254] sm:$0xf]
    %v2793 = vld [vmem:[%s1 + $0x2258] sm:$0xf]
    %v2794 = vld [vmem:[%s1 + $0x225c] sm:$0xf]
    %v2795 = vld [vmem:[%s1 + $0x2260] sm:$0xf]
    %v2796 = vld [vmem:[%s1 + $0x2264] sm:$0xf]
    %v2797 = vld [vmem:[%s1 + $0x2268] sm:$0xf]
    %v2798 = vld [vmem:[%s1 + $0x226c] sm:$0xf]
    %v2799 = vld [vmem:[%s1 + $0x2270] sm:$0xf]
    %v2800 = vld [vmem:[%s1 + $0x2274] sm:$0xf]
    %v2801 = vld [vmem:[%s1 + $0x2278] sm:$0xf]
    %v2802 = vld [vmem:[%s1 + $0x227c] sm:$0xf]
    %v2803 = vld [vmem:[%s1 + $0x2280] sm:$0xf]
    %v2804 = vld [vmem:[%s1 + $0x2284] sm:$0xf]
    %v2805 = vld [vmem:[%s1 + $0x2288] sm:$0xf]
    %v2806 = vld [vmem:[%s1 + $0x228c] sm:$0xf]
    %v2807 = vld [vmem:[%s1 + $0x2290] sm:$0xf]
    %v2808 = vld [vmem:[%s1 + $0x2294] sm:$0xf]
    %v2809 = vld [vmem:[%s1 + $0x2298] sm:$0xf]
    %v2810 = vld [vmem:[%s1 + $0x229c] sm:$0xf]
    %v2811 = vld [vmem:[%s1 + $0x22a0] sm:$0xf]
    %v2812 = vld [vmem:[%s1 + $0x22a4] sm:$0xf]
    %v2813 = vld [vmem:[%s1 + $0x22a8] sm:$0xf]
    %v2814 = vld [vmem:[%s1 + $0x22ac] sm:$0xf]
    %v2815 = vld [vmem:[%s1 + $0x22b0] sm:$0xf]
    %v2816 = vld [vmem:[%s1 + $0x22b4] sm:$0xf]
    %v2817 = vld [vmem:[%s1 + $0x22b8] sm:$0xf]
    %v2818 = vld [vmem:[%s1 + $0x22bc] sm:$0xf]
    %v2819 = vld [vmem:[%s1 + $0x22c0] sm:$0xf]
    %v2820 = vld [vmem:[%s1 + $0x22c4] sm:$0xf]
    %v2821 = vld [vmem:[%s1 + $0x22c8] sm:$0xf]
    %v2822 = vld [vmem:[%s1 + $0x22cc] sm:$0xf]
    %v2823 = vld [vmem:[%s1 + $0x22d0] sm:$0xf]
    %v2824 = vld [vmem:[%s1 + $0x22d4] sm:$0xf]
    %v2825 = vld [vmem:[%s1 + $0x22d8] sm:$0xf]
    %v2826 = vld [vmem:[%s1 + $0x22dc] sm:$0xf]
    %v2827 = vld [vmem:[%s1 + $0x22e0] sm:$0xf]
    %v2828 = vld [vmem:[%s1 + $0x22e4] sm:$0xf]
    %v2829 = vld [vmem:[%s1 + $0x22e8] sm:$0xf]
    %v2830 = vld [vmem:[%s1 + $0x22ec] sm:$0xf]
    %v2831 = vld [vmem:[%s1 + $0x22f0] sm:$0xf]
    %v2832 = vld [vmem:[%s1 + $0x22f4] sm:$0xf]
    %v2833 = vld [vmem:[%s1 + $0x22f8] sm:$0xf]
    %v2834 = vld [vmem:[%s1 + $0x22fc] sm:$0xf]
    %v2835 = vld [vmem:[%s1 + $0x2300] sm:$0xf]
    %v2836 = vld [vmem:[%s1 + $0x2304] sm:$0xf]
    %v2837 = vld [vmem:[%s1 + $0x2308] sm:$0xf]
    %v2838 = vld [vmem:[%s1 + $0x230c] sm:$0xf]
    %v2839 = vld [vmem:[%s1 + $0x2310] sm:$0xf]
    %v2840 = vld [vmem:[%s1 + $0x2314] sm:$0xf]
    %v2841 = vld [vmem:[%s1 + $0x2318] sm:$0xf]
    %v2842 = vld [vmem:[%s1 + $0x231c] sm:$0xf]
    %v2843 = vld [vmem:[%s1 + $0x2320] sm:$0xf]
    %v2844 = vld [vmem:[%s1 + $0x2324] sm:$0xf]
    %v2845 = vld [vmem:[%s1 + $0x2328] sm:$0xf]
    %v2846 = vld [vmem:[%s1 + $0x232c] sm:$0xf]
    %v2847 = vld [vmem:[%s1 + $0x2330] sm:$0xf]
    %v2848 = vld [vmem:[%s1 + $0x2334] sm:$0xf]
    %v2849 = vld [vmem:[%s1 + $0x2338] sm:$0xf]
    %v2850 = vld [vmem:[%s1 + $0x233c] sm:$0xf]
    %v2851 = vld [vmem:[%s1 + $0x2340] sm:$0xf]
    %v2852 = vld [vmem:[%s1 + $0x2344] sm:$0xf]
    %v2853 = vld [vmem:[%s1 + $0x2348] sm:$0xf]
    %v2854 = vld [vmem:[%s1 + $0x234c] sm:$0xf]
    %v2855 = vld [vmem:[%s1 + $0x2350] sm:$0xf]
    %v2856 = vld [vmem:[%s1 + $0x2354] sm:$0xf]
    %v2857 = vld [vmem:[%s1 + $0x2358] sm:$0xf]
    %v2858 = vld [vmem:[%s1 + $0x235c] sm:$0xf]
    %v2859 = vld [vmem:[%s1 + $0x2360] sm:$0xf]
    %v2860 = vld [vmem:[%s1 + $0x2364] sm:$0xf]
    %v2861 = vld [vmem:[%s1 + $0x2368] sm:$0xf]
    %v2862 = vld [vmem:[%s1 + $0x236c] sm:$0xf]
    %v2863 = vld [vmem:[%s1 + $0x2370] sm:$0xf]
    %v2864 = vld [vmem:[%s1 + $0x2374] sm:$0xf]
    %v2865 = vld [vmem:[%s1 + $0x2378] sm:$0xf]
    %v2866 = vld [vmem:[%s1 + $0x237c] sm:$0xf]
    %v2867 = vld [vmem:[%s1 + $0x2380] sm:$0xf]
    %v2868 = vld [vmem:[%s1 + $0x2384] sm:$0xf]
    %v2869 = vld [vmem:[%s1 + $0x2388] sm:$0xf]
    %v2870 = vld [vmem:[%s1 + $0x238c] sm:$0xf]
    %v2871 = vld [vmem:[%s1 + $0x2390] sm:$0xf]
    %v2872 = vld [vmem:[%s1 + $0x2394] sm:$0xf]
    %v2873 = vld [vmem:[%s1 + $0x2398] sm:$0xf]
    %v2874 = vld [vmem:[%s1 + $0x239c] sm:$0xf]
    %v2875 = vld [vmem:[%s1 + $0x23a0] sm:$0xf]
    %v2876 = vld [vmem:[%s1 + $0x23a4] sm:$0xf]
    %v2877 = vld [vmem:[%s1 + $0x23a8] sm:$0xf]
    %v2878 = vld [vmem:[%s1 + $0x23ac] sm:$0xf]
    %v2879 = vld [vmem:[%s1 + $0x23b0] sm:$0xf]
    %v2880 = vld [vmem:[%s1 + $0x23b4] sm:$0xf]
    %v2881 = vld [vmem:[%s1 + $0x23b8] sm:$0xf]
    %v2882 = vld [vmem:[%s1 + $0x23bc] sm:$0xf]
    %v2883 = vld [vmem:[%s1 + $0x23c0] sm:$0xf]
    %v2884 = vld [vmem:[%s1 + $0x23c4] sm:$0xf]
    %v2885 = vld [vmem:[%s1 + $0x23c8] sm:$0xf]
    %v2886 = vld [vmem:[%s1 + $0x23cc] sm:$0xf]
    %v2887 = vld [vmem:[%s1 + $0x23d0] sm:$0xf]
    %v2888 = vld [vmem:[%s1 + $0x23d4] sm:$0xf]
    %v2889 = vld [vmem:[%s1 + $0x23d8] sm:$0xf]
    %v2890 = vld [vmem:[%s1 + $0x23dc] sm:$0xf]
    %v2891 = vld [vmem:[%s1 + $0x23e0] sm:$0xf]
    %v2892 = vld [vmem:[%s1 + $0x23e4] sm:$0xf]
    %v2893 = vld [vmem:[%s1 + $0x23e8] sm:$0xf]
    %v2894 = vld [vmem:[%s1 + $0x23ec] sm:$0xf]
    %v2895 = vld [vmem:[%s1 + $0x23f0] sm:$0xf]
    %v2896 = vld [vmem:[%s1 + $0x23f4] sm:$0xf]
    %v2897 = vld [vmem:[%s1 + $0x23f8] sm:$0xf]
    %v2898 = vld [vmem:[%s1 + $0x23fc] sm:$0xf]
    %v2899 = vld [vmem:[%s1 + $0x2400] sm:$0xf]
    %v2900 = vld [vmem:[%s1 + $0x2404] sm:$0xf]
    %v2901 = vld [vmem:[%s1 + $0x2408] sm:$0xf]
    %v2902 = vld [vmem:[%s1 + $0x240c] sm:$0xf]
    %v2903 = vld [vmem:[%s1 + $0x2410] sm:$0xf]
    %v2904 = vld [vmem:[%s1 + $0x2414] sm:$0xf]
    %v2905 = vld [vmem:[%s1 + $0x2418] sm:$0xf]
    %v2906 = vld [vmem:[%s1 + $0x241c] sm:$0xf]
    %v2907 = vld [vmem:[%s1 + $0x2420] sm:$0xf]
    %v2908 = vld [vmem:[%s1 + $0x2424] sm:$0xf]
    %v2909 = vld [vmem:[%s1 + $0x2428] sm:$0xf]
    %v2910 = vld [vmem:[%s1 + $0x242c] sm:$0xf]
    %v2911 = vld [vmem:[%s1 + $0x2430] sm:$0xf]
    %v2912 = vld [vmem:[%s1 + $0x2434] sm:$0xf]
    %v2913 = vld [vmem:[%s1 + $0x2438] sm:$0xf]
    %v2914 = vld [vmem:[%s1 + $0x243c] sm:$0xf]
    %v2915 = vld [vmem:[%s1 + $0x2440] sm:$0xf]
    %v2916 = vld [vmem:[%s1 + $0x2444] sm:$0xf]
    %v2917 = vld [vmem:[%s1 + $0x2448] sm:$0xf]
    %v2918 = vld [vmem:[%s1 + $0x244c] sm:$0xf]
    %v2919 = vld [vmem:[%s1 + $0x2450] sm:$0xf]
    %v2920 = vld [vmem:[%s1 + $0x2454] sm:$0xf]
    %v2921 = vld [vmem:[%s1 + $0x2458] sm:$0xf]
    %v2922 = vld [vmem:[%s1 + $0x245c] sm:$0xf]
    %v2923 = vld [vmem:[%s1 + $0x2460] sm:$0xf]
    %v2924 = vld [vmem:[%s1 + $0x2464] sm:$0xf]
    %v2925 = vld [vmem:[%s1 + $0x2468] sm:$0xf]
    %v2926 = vld [vmem:[%s1 + $0x246c] sm:$0xf]
    %v2927 = vld [vmem:[%s1 + $0x2470] sm:$0xf]
    %v2928 = vld [vmem:[%s1 + $0x2474] sm:$0xf]
    %v2929 = vld [vmem:[%s1 + $0x2478] sm:$0xf]
    %v2930 = vld [vmem:[%s1 + $0x247c] sm:$0xf]
    %v2931 = vld [vmem:[%s1 + $0x2480] sm:$0xf]
    %v2932 = vld [vmem:[%s1 + $0x2484] sm:$0xf]
    %v2933 = vld [vmem:[%s1 + $0x2488] sm:$0xf]
    %v2934 = vld [vmem:[%s1 + $0x248c] sm:$0xf]
    %v2935 = vld [vmem:[%s1 + $0x2490] sm:$0xf]
    %v2936 = vld [vmem:[%s1 + $0x2494] sm:$0xf]
    %v2937 = vld [vmem:[%s1 + $0x2498] sm:$0xf]
    %v2938 = vld [vmem:[%s1 + $0x249c] sm:$0xf]
    %v2939 = vld [vmem:[%s1 + $0x24a0] sm:$0xf]
    %v2940 = vld [vmem:[%s1 + $0x24a4] sm:$0xf]
    %v2941 = vld [vmem:[%s1 + $0x24a8] sm:$0xf]
    %v2942 = vld [vmem:[%s1 + $0x24ac] sm:$0xf]
    %v2943 = vld [vmem:[%s1 + $0x24b0] sm:$0xf]
    %v2944 = vld [vmem:[%s1 + $0x24b4] sm:$0xf]
    %v2945 = vld [vmem:[%s1 + $0x24b8] sm:$0xf]
    %v2946 = vld [vmem:[%s1 + $0x24bc] sm:$0xf]
    %v2947 = vld [vmem:[%s1 + $0x24c0] sm:$0xf]
    %v2948 = vld [vmem:[%s1 + $0x24c4] sm:$0xf]
    %v2949 = vld [vmem:[%s1 + $0x24c8] sm:$0xf]
    %v2950 = vld [vmem:[%s1 + $0x24cc] sm:$0xf]
    %v2951 = vld [vmem:[%s1 + $0x24d0] sm:$0xf]
    %v2952 = vld [vmem:[%s1 + $0x24d4] sm:$0xf]
    %v2953 = vld [vmem:[%s1 + $0x24d8] sm:$0xf]
    %v2954 = vld [vmem:[%s1 + $0x24dc] sm:$0xf]
    %v2955 = vld [vmem:[%s1 + $0x24e0] sm:$0xf]
    %v2956 = vld [vmem:[%s1 + $0x24e4] sm:$0xf]
    %v2957 = vld [vmem:[%s1 + $0x24e8] sm:$0xf]
    %v2958 = vld [vmem:[%s1 + $0x24ec] sm:$0xf]
    %v2959 = vld [vmem:[%s1 + $0x24f0] sm:$0xf]
    %v2960 = vld [vmem:[%s1 + $0x24f4] sm:$0xf]
    %v2961 = vld [vmem:[%s1 + $0x24f8] sm:$0xf]
    %v2962 = vld [vmem:[%s1 + $0x24fc] sm:$0xf]
    %v2963 = vld [vmem:[%s1 + $0x2500] sm:$0xf]
    %v2964 = vld [vmem:[%s1 + $0x2504] sm:$0xf]
    %v2965 = vld [vmem:[%s1 + $0x2508] sm:$0xf]
    %v2966 = vld [vmem:[%s1 + $0x250c] sm:$0xf]
    %v2967 = vld [vmem:[%s1 + $0x2510] sm:$0xf]
    %v2968 = vld [vmem:[%s1 + $0x2514] sm:$0xf]
    %v2969 = vld [vmem:[%s1 + $0x2518] sm:$0xf]
    %v2970 = vld [vmem:[%s1 + $0x251c] sm:$0xf]
    %v2971 = vld [vmem:[%s1 + $0x2520] sm:$0xf]
    %v2972 = vld [vmem:[%s1 + $0x2524] sm:$0xf]
    %v2973 = vld [vmem:[%s1 + $0x2528] sm:$0xf]
    %v2974 = vld [vmem:[%s1 + $0x252c] sm:$0xf]
    %v2975 = vld [vmem:[%s1 + $0x2530] sm:$0xf]
    %v2976 = vld [vmem:[%s1 + $0x2534] sm:$0xf]
    %v2977 = vld [vmem:[%s1 + $0x2538] sm:$0xf]
    %v2978 = vld [vmem:[%s1 + $0x253c] sm:$0xf]
    %v2979 = vld [vmem:[%s1 + $0x2540] sm:$0xf]
    %v2980 = vld [vmem:[%s1 + $0x2544] sm:$0xf]
    %v2981 = vld [vmem:[%s1 + $0x2548] sm:$0xf]
    %v2982 = vld [vmem:[%s1 + $0x254c] sm:$0xf]
    %v2983 = vld [vmem:[%s1 + $0x2550] sm:$0xf]
    %v2984 = vld [vmem:[%s1 + $0x2554] sm:$0xf]
    %v2985 = vld [vmem:[%s1 + $0x2558] sm:$0xf]
    %v2986 = vld [vmem:[%s1 + $0x255c] sm:$0xf]
    %v2987 = vld [vmem:[%s1 + $0x2560] sm:$0xf]
    %v2988 = vld [vmem:[%s1 + $0x2564] sm:$0xf]
    %v2989 = vld [vmem:[%s1 + $0x2568] sm:$0xf]
    %v2990 = vld [vmem:[%s1 + $0x256c] sm:$0xf]
    %v2991 = vld [vmem:[%s1 + $0x2570] sm:$0xf]
    %v2992 = vld [vmem:[%s1 + $0x2574] sm:$0xf]
    %v2993 = vld [vmem:[%s1 + $0x2578] sm:$0xf]
    %v2994 = vld [vmem:[%s1 + $0x257c] sm:$0xf]
    %v2995 = vld [vmem:[%s1 + $0x2580] sm:$0xf]
    %v2996 = vld [vmem:[%s1 + $0x2584] sm:$0xf]
    %v2997 = vld [vmem:[%s1 + $0x2588] sm:$0xf]
    %v2998 = vld [vmem:[%s1 + $0x258c] sm:$0xf]
    %v2999 = vld [vmem:[%s1 + $0x2590] sm:$0xf]
    %v3000 = vld [vmem:[%s1 + $0x2594] sm:$0xf]
    %v3001 = vld [vmem:[%s1 + $0x2598] sm:$0xf]
    %v3002 = vld [vmem:[%s1 + $0x259c] sm:$0xf]
    %v3003 = vld [vmem:[%s1 + $0x25a0] sm:$0xf]
    %v3004 = vld [vmem:[%s1 + $0x25a4] sm:$0xf]
    %v3005 = vld [vmem:[%s1 + $0x25a8] sm:$0xf]
    %v3006 = vld [vmem:[%s1 + $0x25ac] sm:$0xf]
    %v3007 = vld [vmem:[%s1 + $0x25b0] sm:$0xf]
    %v3008 = vld [vmem:[%s1 + $0x25b4] sm:$0xf]
    %v3009 = vld [vmem:[%s1 + $0x25b8] sm:$0xf]
    %v3010 = vld [vmem:[%s1 + $0x25bc] sm:$0xf]
    %v3011 = vld [vmem:[%s1 + $0x25c0] sm:$0xf]
    %v3012 = vld [vmem:[%s1 + $0x25c4] sm:$0xf]
    %v3013 = vld [vmem:[%s1 + $0x25c8] sm:$0xf]
    %v3014 = vld [vmem:[%s1 + $0x25cc] sm:$0xf]
    %v3015 = vld [vmem:[%s1 + $0x25d0] sm:$0xf]
    %v3016 = vld [vmem:[%s1 + $0x25d4] sm:$0xf]
    %v3017 = vld [vmem:[%s1 + $0x25d8] sm:$0xf]
    %v3018 = vld [vmem:[%s1 + $0x25dc] sm:$0xf]
    %v3019 = vld [vmem:[%s1 + $0x25e0] sm:$0xf]
    %v3020 = vld [vmem:[%s1 + $0x25e4] sm:$0xf]
    %v3021 = vld [vmem:[%s1 + $0x25e8] sm:$0xf]
    %v3022 = vld [vmem:[%s1 + $0x25ec] sm:$0xf]
    %v3023 = vld [vmem:[%s1 + $0x25f0] sm:$0xf]
    %v3024 = vld [vmem:[%s1 + $0x25f4] sm:$0xf]
    %v3025 = vld [vmem:[%s1 + $0x25f8] sm:$0xf]
    %v3026 = vld [vmem:[%s1 + $0x25fc] sm:$0xf]
    %v3027 = vld [vmem:[%s1 + $0x2600] sm:$0xf]
    %v3028 = vld [vmem:[%s1 + $0x2604] sm:$0xf]
    %v3029 = vld [vmem:[%s1 + $0x2608] sm:$0xf]
    %v3030 = vld [vmem:[%s1 + $0x260c] sm:$0xf]
    %v3031 = vld [vmem:[%s1 + $0x2610] sm:$0xf]
    %v3032 = vld [vmem:[%s1 + $0x2614] sm:$0xf]
    %v3033 = vld [vmem:[%s1 + $0x2618] sm:$0xf]
    %v3034 = vld [vmem:[%s1 + $0x261c] sm:$0xf]
    %v3035 = vld [vmem:[%s1 + $0x2620] sm:$0xf]
    %v3036 = vld [vmem:[%s1 + $0x2624] sm:$0xf]
    %v3037 = vld [vmem:[%s1 + $0x2628] sm:$0xf]
    %v3038 = vld [vmem:[%s1 + $0x262c] sm:$0xf]
    %v3039 = vld [vmem:[%s1 + $0x2630] sm:$0xf]
    %v3040 = vld [vmem:[%s1 + $0x2634] sm:$0xf]
    %v3041 = vld [vmem:[%s1 + $0x2638] sm:$0xf]
    %v3042 = vld [vmem:[%s1 + $0x263c] sm:$0xf]
    %v3043 = vld [vmem:[%s1 + $0x2640] sm:$0xf]
    %v3044 = vld [vmem:[%s1 + $0x2644] sm:$0xf]
    %v3045 = vld [vmem:[%s1 + $0x2648] sm:$0xf]
    %v3046 = vld [vmem:[%s1 + $0x264c] sm:$0xf]
    %v3047 = vld [vmem:[%s1 + $0x2650] sm:$0xf]
    %v3048 = vld [vmem:[%s1 + $0x2654] sm:$0xf]
    %v3049 = vld [vmem:[%s1 + $0x2658] sm:$0xf]
    %v3050 = vld [vmem:[%s1 + $0x265c] sm:$0xf]
    %v3051 = vld [vmem:[%s1 + $0x2660] sm:$0xf]
    %v3052 = vld [vmem:[%s1 + $0x2664] sm:$0xf]
    %v3053 = vld [vmem:[%s1 + $0x2668] sm:$0xf]
    %v3054 = vld [vmem:[%s1 + $0x266c] sm:$0xf]
    %v3055 = vld [vmem:[%s1 + $0x2670] sm:$0xf]
    %v3056 = vld [vmem:[%s1 + $0x2674] sm:$0xf]
    %v3057 = vld [vmem:[%s1 + $0x2678] sm:$0xf]
    %v3058 = vld [vmem:[%s1 + $0x267c] sm:$0xf]
    %v3059 = vld [vmem:[%s2] sm:$0x1]
    %v3061 = vperm.slane %v3059, 0
    %v5527 = vunpack.c.l.b16 %v595
    %v5528 = vunpack.c.l.b16 %v596
    %v5529 = vunpack.c.l.b16 %v597
    %v5530 = vunpack.c.l.b16 %v598
    %v5531 = vunpack.c.l.b16 %v599
    %v5532 = vunpack.c.l.b16 %v600
    %v5533 = vunpack.c.l.b16 %v601
    %v5534 = vunpack.c.l.b16 %v602
    %v5535 = vunpack.c.l.b16 %v603
    %v5536 = vunpack.c.l.b16 %v604
    %v5537 = vunpack.c.l.b16 %v605
    %v5538 = vunpack.c.l.b16 %v606
    %v5539 = vunpack.c.l.b16 %v607
    %v5540 = vunpack.c.l.b16 %v608
    %v5541 = vunpack.c.l.b16 %v609
    %v5542 = vunpack.c.l.b16 %v610
    %v5543 = vunpack.c.l.b16 %v611
    %v5544 = vunpack.c.l.b16 %v612
    %v5545 = vunpack.c.l.b16 %v613
    %v5546 = vunpack.c.l.b16 %v614
    %v5547 = vunpack.c.l.b16 %v615
    %v5548 = vunpack.c.l.b16 %v616
    %v5549 = vunpack.c.l.b16 %v617
    %v5550 = vunpack.c.l.b16 %v618
    %v5551 = vunpack.c.l.b16 %v619
    %v5552 = vunpack.c.l.b16 %v620
    %v5553 = vunpack.c.l.b16 %v621
    %v5554 = vunpack.c.l.b16 %v622
    %v5555 = vunpack.c.l.b16 %v623
    %v5556 = vunpack.c.l.b16 %v624
    %v5557 = vunpack.c.l.b16 %v625
    %v5558 = vunpack.c.l.b16 %v626
    %v5559 = vunpack.c.l.b16 %v627
    %v5560 = vunpack.c.l.b16 %v628
    %v5561 = vunpack.c.l.b16 %v629
    %v5562 = vunpack.c.l.b16 %v630
    %v5563 = vunpack.c.l.b16 %v631
    %v5564 = vunpack.c.l.b16 %v632
    %v5565 = vunpack.c.l.b16 %v633
    %v5566 = vunpack.c.l.b16 %v634
    %v5567 = vunpack.c.l.b16 %v635
    %v5568 = vunpack.c.l.b16 %v636
    %v5569 = vunpack.c.l.b16 %v637
    %v5570 = vunpack.c.l.b16 %v638
    %v5571 = vunpack.c.l.b16 %v639
    %v5572 = vunpack.c.l.b16 %v640
    %v5573 = vunpack.c.l.b16 %v641
    %v5574 = vunpack.c.l.b16 %v642
    %v5575 = vunpack.c.l.b16 %v643
    %v5576 = vunpack.c.l.b16 %v644
    %v5577 = vunpack.c.l.b16 %v645
    %v5578 = vunpack.c.l.b16 %v646
    %v5579 = vunpack.c.l.b16 %v647
    %v5580 = vunpack.c.l.b16 %v648
    %v5581 = vunpack.c.l.b16 %v649
    %v5582 = vunpack.c.l.b16 %v650
    %v5583 = vunpack.c.l.b16 %v651
    %v5584 = vunpack.c.l.b16 %v652
    %v5585 = vunpack.c.l.b16 %v653
    %v5586 = vunpack.c.l.b16 %v654
    %v5587 = vunpack.c.l.b16 %v655
    %v5588 = vunpack.c.l.b16 %v656
    %v5589 = vunpack.c.l.b16 %v657
    %v5590 = vunpack.c.l.b16 %v658
    %v5591 = vunpack.c.l.b16 %v659
    %v5592 = vunpack.c.l.b16 %v660
    %v5593 = vunpack.c.l.b16 %v661
    %v5594 = vunpack.c.l.b16 %v662
    %v5595 = vunpack.c.l.b16 %v663
    %v5596 = vunpack.c.l.b16 %v664
    %v5597 = vunpack.c.l.b16 %v665
    %v5598 = vunpack.c.l.b16 %v666
    %v5599 = vunpack.c.l.b16 %v667
    %v5600 = vunpack.c.l.b16 %v668
    %v5601 = vunpack.c.l.b16 %v669
    %v5602 = vunpack.c.l.b16 %v670
    %v5603 = vunpack.c.l.b16 %v671
    %v5604 = vunpack.c.l.b16 %v672
    %v5605 = vunpack.c.l.b16 %v673
    %v5606 = vunpack.c.l.b16 %v674
    %v5607 = vunpack.c.l.b16 %v675
    %v5608 = vunpack.c.l.b16 %v676
    %v5609 = vunpack.c.l.b16 %v677
    %v5610 = vunpack.c.l.b16 %v678
    %v5611 = vunpack.c.l.b16 %v679
    %v5612 = vunpack.c.l.b16 %v680
    %v5613 = vunpack.c.l.b16 %v681
    %v5614 = vunpack.c.l.b16 %v682
    %v5615 = vunpack.c.l.b16 %v683
    %v5616 = vunpack.c.l.b16 %v684
    %v5617 = vunpack.c.l.b16 %v685
    %v5618 = vunpack.c.l.b16 %v686
    %v5619 = vunpack.c.l.b16 %v687
    %v5620 = vunpack.c.l.b16 %v688
    %v5621 = vunpack.c.l.b16 %v689
    %v5622 = vunpack.c.l.b16 %v690
    %v5623 = vunpack.c.l.b16 %v691
    %v5624 = vunpack.c.l.b16 %v692
    %v5625 = vunpack.c.l.b16 %v693
    %v5626 = vunpack.c.l.b16 %v694
    %v5627 = vunpack.c.l.b16 %v695
    %v5628 = vunpack.c.l.b16 %v696
    %v5629 = vunpack.c.l.b16 %v697
    %v5630 = vunpack.c.l.b16 %v698
    %v5631 = vunpack.c.l.b16 %v699
    %v5632 = vunpack.c.l.b16 %v700
    %v5633 = vunpack.c.l.b16 %v701
    %v5634 = vunpack.c.l.b16 %v702
    %v5635 = vunpack.c.l.b16 %v703
    %v5636 = vunpack.c.l.b16 %v704
    %v5637 = vunpack.c.l.b16 %v705
    %v5638 = vunpack.c.l.b16 %v706
    %v5639 = vunpack.c.l.b16 %v707
    %v5640 = vunpack.c.l.b16 %v708
    %v5641 = vunpack.c.l.b16 %v709
    %v5642 = vunpack.c.l.b16 %v710
    %v5643 = vunpack.c.l.b16 %v711
    %v5644 = vunpack.c.l.b16 %v712
    %v5645 = vunpack.c.l.b16 %v713
    %v5646 = vunpack.c.l.b16 %v714
    %v5647 = vunpack.c.l.b16 %v715
    %v5648 = vunpack.c.l.b16 %v716
    %v5649 = vunpack.c.l.b16 %v717
    %v5650 = vunpack.c.l.b16 %v718
    %v5651 = vunpack.c.l.b16 %v719
    %v5652 = vunpack.c.l.b16 %v720
    %v5653 = vunpack.c.l.b16 %v721
    %v5654 = vunpack.c.l.b16 %v722
    %v5655 = vunpack.c.l.b16 %v723
    %v5656 = vunpack.c.l.b16 %v724
    %v5657 = vunpack.c.l.b16 %v725
    %v5658 = vunpack.c.l.b16 %v726
    %v5659 = vunpack.c.l.b16 %v727
    %v5660 = vunpack.c.l.b16 %v728
    %v5661 = vunpack.c.l.b16 %v729
    %v5662 = vunpack.c.l.b16 %v730
    %v5663 = vunpack.c.l.b16 %v731
    %v5664 = vunpack.c.l.b16 %v732
    %v5665 = vunpack.c.l.b16 %v733
    %v5666 = vunpack.c.l.b16 %v734
    %v5667 = vunpack.c.l.b16 %v735
    %v5668 = vunpack.c.l.b16 %v736
    %v5669 = vunpack.c.l.b16 %v737
    %v5670 = vunpack.c.l.b16 %v738
    %v5671 = vunpack.c.l.b16 %v739
    %v5672 = vunpack.c.l.b16 %v740
    %v5673 = vunpack.c.l.b16 %v741
    %v5674 = vunpack.c.l.b16 %v742
    %v5675 = vunpack.c.l.b16 %v743
    %v5676 = vunpack.c.l.b16 %v744
    %v5677 = vunpack.c.l.b16 %v745
    %v5678 = vunpack.c.l.b16 %v746
    %v5679 = vunpack.c.l.b16 %v747
    %v5680 = vunpack.c.l.b16 %v748
    %v5681 = vunpack.c.l.b16 %v749
    %v5682 = vunpack.c.l.b16 %v750
    %v5683 = vunpack.c.l.b16 %v751
    %v5684 = vunpack.c.l.b16 %v752
    %v5685 = vunpack.c.l.b16 %v753
    %v5686 = vunpack.c.l.b16 %v754
    %v5687 = vunpack.c.l.b16 %v755
    %v5688 = vunpack.c.l.b16 %v756
    %v5689 = vunpack.c.l.b16 %v757
    %v5690 = vunpack.c.l.b16 %v758
    %v5691 = vunpack.c.l.b16 %v759
    %v5692 = vunpack.c.l.b16 %v760
    %v5693 = vunpack.c.l.b16 %v761
    %v5694 = vunpack.c.l.b16 %v762
    %v5695 = vunpack.c.l.b16 %v763
    %v5696 = vunpack.c.l.b16 %v764
    %v5697 = vunpack.c.l.b16 %v765
    %v5698 = vunpack.c.l.b16 %v766
    %v5699 = vunpack.c.l.b16 %v767
    %v5700 = vunpack.c.l.b16 %v768
    %v5701 = vunpack.c.l.b16 %v769
    %v5702 = vunpack.c.l.b16 %v770
    %v5703 = vunpack.c.l.b16 %v771
    %v5704 = vunpack.c.l.b16 %v772
    %v5705 = vunpack.c.l.b16 %v773
    %v5706 = vunpack.c.l.b16 %v774
    %v5707 = vunpack.c.l.b16 %v775
    %v5708 = vunpack.c.l.b16 %v776
    %v5709 = vunpack.c.l.b16 %v777
    %v5710 = vunpack.c.l.b16 %v778
    %v5711 = vunpack.c.l.b16 %v779
    %v5712 = vunpack.c.l.b16 %v780
    %v5713 = vunpack.c.l.b16 %v781
    %v5714 = vunpack.c.l.b16 %v782
    %v5715 = vunpack.c.l.b16 %v783
    %v5716 = vunpack.c.l.b16 %v784
    %v5717 = vunpack.c.l.b16 %v785
    %v5718 = vunpack.c.l.b16 %v786
    %v5719 = vunpack.c.l.b16 %v787
    %v5720 = vunpack.c.l.b16 %v788
    %v5721 = vunpack.c.l.b16 %v789
    %v5722 = vunpack.c.l.b16 %v790
    %v5723 = vunpack.c.l.b16 %v791
    %v5724 = vunpack.c.l.b16 %v792
    %v5725 = vunpack.c.l.b16 %v793
    %v5726 = vunpack.c.l.b16 %v794
    %v5727 = vunpack.c.l.b16 %v795
    %v5728 = vunpack.c.l.b16 %v796
    %v5729 = vunpack.c.l.b16 %v797
    %v5730 = vunpack.c.l.b16 %v798
    %v5731 = vunpack.c.l.b16 %v799
    %v5732 = vunpack.c.l.b16 %v800
    %v5733 = vunpack.c.l.b16 %v801
    %v5734 = vunpack.c.l.b16 %v802
    %v5735 = vunpack.c.l.b16 %v803
    %v5736 = vunpack.c.l.b16 %v804
    %v5737 = vunpack.c.l.b16 %v805
    %v5738 = vunpack.c.l.b16 %v806
    %v5739 = vunpack.c.l.b16 %v807
    %v5740 = vunpack.c.l.b16 %v808
    %v5741 = vunpack.c.l.b16 %v809
    %v5742 = vunpack.c.l.b16 %v810
    %v5743 = vunpack.c.l.b16 %v811
    %v5744 = vunpack.c.l.b16 %v812
    %v5745 = vunpack.c.l.b16 %v813
    %v5746 = vunpack.c.l.b16 %v814
    %v5747 = vunpack.c.l.b16 %v815
    %v5748 = vunpack.c.l.b16 %v816
    %v5749 = vunpack.c.l.b16 %v817
    %v5750 = vunpack.c.l.b16 %v818
    %v5751 = vunpack.c.l.b16 %v819
    %v5752 = vunpack.c.l.b16 %v820
    %v5753 = vunpack.c.l.b16 %v821
    %v5754 = vunpack.c.l.b16 %v822
    %v5755 = vunpack.c.l.b16 %v823
    %v5756 = vunpack.c.l.b16 %v824
    %v5757 = vunpack.c.l.b16 %v825
    %v5758 = vunpack.c.l.b16 %v826
    %v5759 = vunpack.c.l.b16 %v827
    %v5760 = vunpack.c.l.b16 %v828
    %v5761 = vunpack.c.l.b16 %v829
    %v5762 = vunpack.c.l.b16 %v830
    %v5763 = vunpack.c.l.b16 %v831
    %v5764 = vunpack.c.l.b16 %v832
    %v5765 = vunpack.c.l.b16 %v833
    %v5766 = vunpack.c.l.b16 %v834
    %v5767 = vunpack.c.l.b16 %v835
    %v5768 = vunpack.c.l.b16 %v836
    %v5769 = vunpack.c.l.b16 %v837
    %v5770 = vunpack.c.l.b16 %v838
    %v5771 = vunpack.c.l.b16 %v839
    %v5772 = vunpack.c.l.b16 %v840
    %v5773 = vunpack.c.l.b16 %v841
    %v5774 = vunpack.c.l.b16 %v842
    %v5775 = vunpack.c.l.b16 %v843
    %v5776 = vunpack.c.l.b16 %v844
    %v5777 = vunpack.c.l.b16 %v845
    %v5778 = vunpack.c.l.b16 %v846
    %v5779 = vunpack.c.l.b16 %v847
    %v5780 = vunpack.c.l.b16 %v848
    %v5781 = vunpack.c.l.b16 %v849
    %v5782 = vunpack.c.l.b16 %v850
    %v5783 = vunpack.c.l.b16 %v851
    %v5784 = vunpack.c.l.b16 %v852
    %v5785 = vunpack.c.l.b16 %v853
    %v5786 = vunpack.c.l.b16 %v854
    %v5787 = vunpack.c.l.b16 %v855
    %v5788 = vunpack.c.l.b16 %v856
    %v5789 = vunpack.c.l.b16 %v857
    %v5790 = vunpack.c.l.b16 %v858
    %v5791 = vunpack.c.l.b16 %v859
    %v5792 = vunpack.c.l.b16 %v860
    %v5793 = vunpack.c.l.b16 %v861
    %v5794 = vunpack.c.l.b16 %v862
    %v5795 = vunpack.c.l.b16 %v863
    %v5796 = vunpack.c.l.b16 %v864
    %v5797 = vunpack.c.l.b16 %v865
    %v5798 = vunpack.c.l.b16 %v866
    %v5799 = vunpack.c.l.b16 %v867
    %v5800 = vunpack.c.l.b16 %v868
    %v5801 = vunpack.c.l.b16 %v869
    %v5802 = vunpack.c.l.b16 %v870
    %v5803 = vunpack.c.l.b16 %v871
    %v5804 = vunpack.c.l.b16 %v872
    %v5805 = vunpack.c.l.b16 %v873
    %v5806 = vunpack.c.l.b16 %v874
    %v5807 = vunpack.c.l.b16 %v875
    %v5808 = vunpack.c.l.b16 %v876
    %v5809 = vunpack.c.l.b16 %v877
    %v5810 = vunpack.c.l.b16 %v878
    %v5811 = vunpack.c.l.b16 %v879
    %v5812 = vunpack.c.l.b16 %v880
    %v5813 = vunpack.c.l.b16 %v881
    %v5814 = vunpack.c.l.b16 %v882
    %v5815 = vunpack.c.l.b16 %v883
    %v5816 = vunpack.c.l.b16 %v884
    %v5817 = vunpack.c.l.b16 %v885
    %v5818 = vunpack.c.l.b16 %v886
    %v5819 = vunpack.c.l.b16 %v887
    %v5820 = vunpack.c.l.b16 %v888
    %v5821 = vunpack.c.l.b16 %v889
    %v5822 = vunpack.c.l.b16 %v890
    %v5823 = vunpack.c.l.b16 %v891
    %v5824 = vunpack.c.l.b16 %v892
    %v5825 = vunpack.c.l.b16 %v893
    %v5826 = vunpack.c.l.b16 %v894
    %v5827 = vunpack.c.l.b16 %v895
    %v5828 = vunpack.c.l.b16 %v896
    %v5829 = vunpack.c.l.b16 %v897
    %v5830 = vunpack.c.l.b16 %v898
    %v5831 = vunpack.c.l.b16 %v899
    %v5832 = vunpack.c.l.b16 %v900
    %v5833 = vunpack.c.l.b16 %v901
    %v5834 = vunpack.c.l.b16 %v902
    %v5835 = vunpack.c.l.b16 %v903
    %v5836 = vunpack.c.l.b16 %v904
    %v5837 = vunpack.c.l.b16 %v905
    %v5838 = vunpack.c.l.b16 %v906
    %v5839 = vunpack.c.l.b16 %v907
    %v5840 = vunpack.c.l.b16 %v908
    %v5841 = vunpack.c.l.b16 %v909
    %v5842 = vunpack.c.l.b16 %v910
    %v5843 = vunpack.c.l.b16 %v911
    %v5844 = vunpack.c.l.b16 %v912
    %v5845 = vunpack.c.l.b16 %v913
    %v5846 = vunpack.c.l.b16 %v914
    %v5847 = vunpack.c.l.b16 %v915
    %v5848 = vunpack.c.l.b16 %v916
    %v5849 = vunpack.c.l.b16 %v917
    %v5850 = vunpack.c.l.b16 %v918
    %v5851 = vunpack.c.l.b16 %v919
    %v5852 = vunpack.c.l.b16 %v920
    %v5853 = vunpack.c.l.b16 %v921
    %v5854 = vunpack.c.l.b16 %v922
    %v5855 = vunpack.c.l.b16 %v923
    %v5856 = vunpack.c.l.b16 %v924
    %v5857 = vunpack.c.l.b16 %v925
    %v5858 = vunpack.c.l.b16 %v926
    %v5859 = vunpack.c.l.b16 %v927
    %v5860 = vunpack.c.l.b16 %v928
    %v5861 = vunpack.c.l.b16 %v929
    %v5862 = vunpack.c.l.b16 %v930
    %v5863 = vunpack.c.l.b16 %v931
    %v5864 = vunpack.c.l.b16 %v932
    %v5865 = vunpack.c.l.b16 %v933
    %v5866 = vunpack.c.l.b16 %v934
    %v5867 = vunpack.c.l.b16 %v935
    %v5868 = vunpack.c.l.b16 %v936
    %v5869 = vunpack.c.l.b16 %v937
    %v5870 = vunpack.c.l.b16 %v938
    %v5871 = vunpack.c.l.b16 %v939
    %v5872 = vunpack.c.l.b16 %v940
    %v5873 = vunpack.c.l.b16 %v941
    %v5874 = vunpack.c.l.b16 %v942
    %v5875 = vunpack.c.l.b16 %v943
    %v5876 = vunpack.c.l.b16 %v944
    %v5877 = vunpack.c.l.b16 %v945
    %v5878 = vunpack.c.l.b16 %v946
    %v5879 = vunpack.c.l.b16 %v947
    %v5880 = vunpack.c.l.b16 %v948
    %v5881 = vunpack.c.l.b16 %v949
    %v5882 = vunpack.c.l.b16 %v950
    %v5883 = vunpack.c.l.b16 %v951
    %v5884 = vunpack.c.l.b16 %v952
    %v5885 = vunpack.c.l.b16 %v953
    %v5886 = vunpack.c.l.b16 %v954
    %v5887 = vunpack.c.l.b16 %v955
    %v5888 = vunpack.c.l.b16 %v956
    %v5889 = vunpack.c.l.b16 %v957
    %v5890 = vunpack.c.l.b16 %v958
    %v5891 = vunpack.c.l.b16 %v959
    %v5892 = vunpack.c.l.b16 %v960
    %v5893 = vunpack.c.l.b16 %v961
    %v5894 = vunpack.c.l.b16 %v962
    %v5895 = vunpack.c.l.b16 %v963
    %v5896 = vunpack.c.l.b16 %v964
    %v5897 = vunpack.c.l.b16 %v965
    %v5898 = vunpack.c.l.b16 %v966
    %v5899 = vunpack.c.l.b16 %v967
    %v5900 = vunpack.c.l.b16 %v968
    %v5901 = vunpack.c.l.b16 %v969
    %v5902 = vunpack.c.l.b16 %v970
    %v5903 = vunpack.c.l.b16 %v971
    %v5904 = vunpack.c.l.b16 %v972
    %v5905 = vunpack.c.l.b16 %v973
    %v5906 = vunpack.c.l.b16 %v974
    %v5907 = vunpack.c.l.b16 %v975
    %v5908 = vunpack.c.l.b16 %v976
    %v5909 = vunpack.c.l.b16 %v977
    %v5910 = vunpack.c.l.b16 %v978
    %v5911 = vunpack.c.l.b16 %v979
    %v5912 = vunpack.c.l.b16 %v980
    %v5913 = vunpack.c.l.b16 %v981
    %v5914 = vunpack.c.l.b16 %v982
    %v5915 = vunpack.c.l.b16 %v983
    %v5916 = vunpack.c.l.b16 %v984
    %v5917 = vunpack.c.l.b16 %v985
    %v5918 = vunpack.c.l.b16 %v986
    %v5919 = vunpack.c.l.b16 %v987
    %v5920 = vunpack.c.l.b16 %v988
    %v5921 = vunpack.c.l.b16 %v989
    %v5922 = vunpack.c.l.b16 %v990
    %v5923 = vunpack.c.l.b16 %v991
    %v5924 = vunpack.c.l.b16 %v992
    %v5925 = vunpack.c.l.b16 %v993
    %v5926 = vunpack.c.l.b16 %v994
    %v5927 = vunpack.c.l.b16 %v995
    %v5928 = vunpack.c.l.b16 %v996
    %v5929 = vunpack.c.l.b16 %v997
    %v5930 = vunpack.c.l.b16 %v998
    %v5931 = vunpack.c.l.b16 %v999
    %v5932 = vunpack.c.l.b16 %v1000
    %v5933 = vunpack.c.l.b16 %v1001
    %v5934 = vunpack.c.l.b16 %v1002
    %v5935 = vunpack.c.l.b16 %v1003
    %v5936 = vunpack.c.l.b16 %v1004
    %v5937 = vunpack.c.l.b16 %v1005
    %v5938 = vunpack.c.l.b16 %v1006
    %v5939 = vunpack.c.l.b16 %v1007
    %v5940 = vunpack.c.l.b16 %v1008
    %v5941 = vunpack.c.l.b16 %v1009
    %v5942 = vunpack.c.l.b16 %v1010
    %v5943 = vunpack.c.l.b16 %v1011
    %v5944 = vunpack.c.l.b16 %v1012
    %v5945 = vunpack.c.l.b16 %v1013
    %v5946 = vunpack.c.l.b16 %v1014
    %v5947 = vunpack.c.l.b16 %v1015
    %v5948 = vunpack.c.l.b16 %v1016
    %v5949 = vunpack.c.l.b16 %v1017
    %v5950 = vunpack.c.l.b16 %v1018
    %v5951 = vunpack.c.l.b16 %v1019
    %v5952 = vunpack.c.l.b16 %v1020
    %v5953 = vunpack.c.l.b16 %v1021
    %v5954 = vunpack.c.l.b16 %v1022
    %v5955 = vunpack.c.l.b16 %v1023
    %v5956 = vunpack.c.l.b16 %v1024
    %v5957 = vunpack.c.l.b16 %v1025
    %v5958 = vunpack.c.l.b16 %v1026
    %v5959 = vunpack.c.l.b16 %v1027
    %v5960 = vunpack.c.l.b16 %v1028
    %v5961 = vunpack.c.l.b16 %v1029
    %v5962 = vunpack.c.l.b16 %v1030
    %v5963 = vunpack.c.l.b16 %v1031
    %v5964 = vunpack.c.l.b16 %v1032
    %v5965 = vunpack.c.l.b16 %v1033
    %v5966 = vunpack.c.l.b16 %v1034
    %v5967 = vunpack.c.l.b16 %v1035
    %v5968 = vunpack.c.l.b16 %v1036
    %v5969 = vunpack.c.l.b16 %v1037
    %v5970 = vunpack.c.l.b16 %v1038
    %v5971 = vunpack.c.l.b16 %v1039
    %v5972 = vunpack.c.l.b16 %v1040
    %v5973 = vunpack.c.l.b16 %v1041
    %v5974 = vunpack.c.l.b16 %v1042
    %v5975 = vunpack.c.l.b16 %v1043
    %v5976 = vunpack.c.l.b16 %v1044
    %v5977 = vunpack.c.l.b16 %v1045
    %v5978 = vunpack.c.l.b16 %v1046
    %v5979 = vunpack.c.l.b16 %v1047
    %v5980 = vunpack.c.l.b16 %v1048
    %v5981 = vunpack.c.l.b16 %v1049
    %v5982 = vunpack.c.l.b16 %v1050
    %v5983 = vunpack.c.l.b16 %v1051
    %v5984 = vunpack.c.l.b16 %v1052
    %v5985 = vunpack.c.l.b16 %v1053
    %v5986 = vunpack.c.l.b16 %v1054
    %v5987 = vunpack.c.l.b16 %v1055
    %v5988 = vunpack.c.l.b16 %v1056
    %v5989 = vunpack.c.l.b16 %v1057
    %v5990 = vunpack.c.l.b16 %v1058
    %v5991 = vunpack.c.l.b16 %v1059
    %v5992 = vunpack.c.l.b16 %v1060
    %v5993 = vunpack.c.l.b16 %v1061
    %v5994 = vunpack.c.l.b16 %v1062
    %v5995 = vunpack.c.l.b16 %v1063
    %v5996 = vunpack.c.l.b16 %v1064
    %v5997 = vunpack.c.l.b16 %v1065
    %v5998 = vunpack.c.l.b16 %v1066
    %v5999 = vunpack.c.l.b16 %v1067
    %v6000 = vunpack.c.l.b16 %v1068
    %v6001 = vunpack.c.l.b16 %v1069
    %v6002 = vunpack.c.l.b16 %v1070
    %v6003 = vunpack.c.l.b16 %v1071
    %v6004 = vunpack.c.l.b16 %v1072
    %v6005 = vunpack.c.l.b16 %v1073
    %v6006 = vunpack.c.l.b16 %v1074
    %v6007 = vunpack.c.l.b16 %v1075
    %v6008 = vunpack.c.l.b16 %v1076
    %v6009 = vunpack.c.l.b16 %v1077
    %v6010 = vunpack.c.l.b16 %v1078
    %v6011 = vunpack.c.l.b16 %v1079
    %v6012 = vunpack.c.l.b16 %v1080
    %v6013 = vunpack.c.l.b16 %v1081
    %v6014 = vunpack.c.l.b16 %v1082
    %v6015 = vunpack.c.l.b16 %v1083
    %v6016 = vunpack.c.l.b16 %v1084
    %v6017 = vunpack.c.l.b16 %v1085
    %v6018 = vunpack.c.l.b16 %v1086
    %v6019 = vunpack.c.l.b16 %v1087
    %v6020 = vunpack.c.l.b16 %v1088
    %v6021 = vunpack.c.l.b16 %v1089
    %v6022 = vunpack.c.l.b16 %v1090
    %v6023 = vunpack.c.l.b16 %v1091
    %v6024 = vunpack.c.l.b16 %v1092
    %v6025 = vunpack.c.l.b16 %v1093
    %v6026 = vunpack.c.l.b16 %v1094
    %v6027 = vunpack.c.l.b16 %v1095
    %v6028 = vunpack.c.l.b16 %v1096
    %v6029 = vunpack.c.l.b16 %v1097
    %v6030 = vunpack.c.l.b16 %v1098
    %v6031 = vunpack.c.l.b16 %v1099
    %v6032 = vunpack.c.l.b16 %v1100
    %v6033 = vunpack.c.l.b16 %v1101
    %v6034 = vunpack.c.l.b16 %v1102
    %v6035 = vunpack.c.l.b16 %v1103
    %v6036 = vunpack.c.l.b16 %v1104
    %v6037 = vunpack.c.l.b16 %v1105
    %v6038 = vunpack.c.l.b16 %v1106
    %v6039 = vunpack.c.l.b16 %v1107
    %v6040 = vunpack.c.l.b16 %v1108
    %v6041 = vunpack.c.l.b16 %v1109
    %v6042 = vunpack.c.l.b16 %v1110
    %v6043 = vunpack.c.l.b16 %v1111
    %v6044 = vunpack.c.l.b16 %v1112
    %v6045 = vunpack.c.l.b16 %v1113
    %v6046 = vunpack.c.l.b16 %v1114
    %v6047 = vunpack.c.l.b16 %v1115
    %v6048 = vunpack.c.l.b16 %v1116
    %v6049 = vunpack.c.l.b16 %v1117
    %v6050 = vunpack.c.l.b16 %v1118
    %v6051 = vunpack.c.l.b16 %v1119
    %v6052 = vunpack.c.l.b16 %v1120
    %v6053 = vunpack.c.l.b16 %v1121
    %v6054 = vunpack.c.l.b16 %v1122
    %v6055 = vunpack.c.l.b16 %v1123
    %v6056 = vunpack.c.l.b16 %v1124
    %v6057 = vunpack.c.l.b16 %v1125
    %v6058 = vunpack.c.l.b16 %v1126
    %v6059 = vunpack.c.l.b16 %v1127
    %v6060 = vunpack.c.l.b16 %v1128
    %v6061 = vunpack.c.l.b16 %v1129
    %v6062 = vunpack.c.l.b16 %v1130
    %v6063 = vunpack.c.l.b16 %v1131
    %v6064 = vunpack.c.l.b16 %v1132
    %v6065 = vunpack.c.l.b16 %v1133
    %v6066 = vunpack.c.l.b16 %v1134
    %v6067 = vunpack.c.l.b16 %v1135
    %v6068 = vunpack.c.l.b16 %v1136
    %v6069 = vunpack.c.l.b16 %v1137
    %v6070 = vunpack.c.l.b16 %v1138
    %v6071 = vunpack.c.l.b16 %v1139
    %v6072 = vunpack.c.l.b16 %v1140
    %v6073 = vunpack.c.l.b16 %v1141
    %v6074 = vunpack.c.l.b16 %v1142
    %v6075 = vunpack.c.l.b16 %v1143
    %v6076 = vunpack.c.l.b16 %v1144
    %v6077 = vunpack.c.l.b16 %v1145
    %v6078 = vunpack.c.l.b16 %v1146
    %v6079 = vunpack.c.l.b16 %v1147
    %v6080 = vunpack.c.l.b16 %v1148
    %v6081 = vunpack.c.l.b16 %v1149
    %v6082 = vunpack.c.l.b16 %v1150
    %v6083 = vunpack.c.l.b16 %v1151
    %v6084 = vunpack.c.l.b16 %v1152
    %v6085 = vunpack.c.l.b16 %v1153
    %v6086 = vunpack.c.l.b16 %v1154
    %v6087 = vunpack.c.l.b16 %v1155
    %v6088 = vunpack.c.l.b16 %v1156
    %v6089 = vunpack.c.l.b16 %v1157
    %v6090 = vunpack.c.l.b16 %v1158
    %v6091 = vunpack.c.l.b16 %v1159
    %v6092 = vunpack.c.l.b16 %v1160
    %v6093 = vunpack.c.l.b16 %v1161
    %v6094 = vunpack.c.l.b16 %v1162
    %v6095 = vunpack.c.l.b16 %v1163
    %v6096 = vunpack.c.l.b16 %v1164
    %v6097 = vunpack.c.l.b16 %v1165
    %v6098 = vunpack.c.l.b16 %v1166
    %v6099 = vunpack.c.l.b16 %v1167
    %v6100 = vunpack.c.l.b16 %v1168
    %v6101 = vunpack.c.l.b16 %v1169
    %v6102 = vunpack.c.l.b16 %v1170
    %v6103 = vunpack.c.l.b16 %v1171
    %v6104 = vunpack.c.l.b16 %v1172
    %v6105 = vunpack.c.l.b16 %v1173
    %v6106 = vunpack.c.l.b16 %v1174
    %v6107 = vunpack.c.l.b16 %v1175
    %v6108 = vunpack.c.l.b16 %v1176
    %v6109 = vunpack.c.l.b16 %v1177
    %v6110 = vunpack.c.l.b16 %v1178
    %v6111 = vunpack.c.l.b16 %v1179
    %v6112 = vunpack.c.l.b16 %v1180
    %v6113 = vunpack.c.l.b16 %v1181
    %v6114 = vunpack.c.l.b16 %v1182
    %v6115 = vunpack.c.l.b16 %v1183
    %v6116 = vunpack.c.l.b16 %v1184
    %v6117 = vunpack.c.l.b16 %v1185
    %v6118 = vunpack.c.l.b16 %v1186
    %v6119 = vunpack.c.l.b16 %v1187
    %v6120 = vunpack.c.l.b16 %v1188
    %v6121 = vunpack.c.l.b16 %v1189
    %v6122 = vunpack.c.l.b16 %v1190
    %v6123 = vunpack.c.l.b16 %v1191
    %v6124 = vunpack.c.l.b16 %v1192
    %v6125 = vunpack.c.l.b16 %v1193
    %v6126 = vunpack.c.l.b16 %v1194
    %v6127 = vunpack.c.l.b16 %v1195
    %v6128 = vunpack.c.l.b16 %v1196
    %v6129 = vunpack.c.l.b16 %v1197
    %v6130 = vunpack.c.l.b16 %v1198
    %v6131 = vunpack.c.l.b16 %v1199
    %v6132 = vunpack.c.l.b16 %v1200
    %v6133 = vunpack.c.l.b16 %v1201
    %v6134 = vunpack.c.l.b16 %v1202
    %v6135 = vunpack.c.l.b16 %v1203
    %v6136 = vunpack.c.l.b16 %v1204
    %v6137 = vunpack.c.l.b16 %v1205
    %v6138 = vunpack.c.l.b16 %v1206
    %v6139 = vunpack.c.l.b16 %v1207
    %v6140 = vunpack.c.l.b16 %v1208
    %v6141 = vunpack.c.l.b16 %v1209
    %v6142 = vunpack.c.l.b16 %v1210
    %v6143 = vunpack.c.l.b16 %v1211
    %v6144 = vunpack.c.l.b16 %v1212
    %v6145 = vunpack.c.l.b16 %v1213
    %v6146 = vunpack.c.l.b16 %v1214
    %v6147 = vunpack.c.l.b16 %v1215
    %v6148 = vunpack.c.l.b16 %v1216
    %v6149 = vunpack.c.l.b16 %v1217
    %v6150 = vunpack.c.l.b16 %v1218
    %v6151 = vunpack.c.l.b16 %v1219
    %v6152 = vunpack.c.l.b16 %v1220
    %v6153 = vunpack.c.l.b16 %v1221
    %v6154 = vunpack.c.l.b16 %v1222
    %v6155 = vunpack.c.l.b16 %v1223
    %v6156 = vunpack.c.l.b16 %v1224
    %v6157 = vunpack.c.l.b16 %v1225
    %v6158 = vunpack.c.l.b16 %v1226
    %v6159 = vunpack.c.l.b16 %v1227
    %v6160 = vunpack.c.l.b16 %v1228
    %v6161 = vunpack.c.l.b16 %v1229
    %v6162 = vunpack.c.l.b16 %v1230
    %v6163 = vunpack.c.l.b16 %v1231
    %v6164 = vunpack.c.l.b16 %v1232
    %v6165 = vunpack.c.l.b16 %v1233
    %v6166 = vunpack.c.l.b16 %v1234
    %v6167 = vunpack.c.l.b16 %v1235
    %v6168 = vunpack.c.l.b16 %v1236
    %v6169 = vunpack.c.l.b16 %v1237
    %v6170 = vunpack.c.l.b16 %v1238
    %v6171 = vunpack.c.l.b16 %v1239
    %v6172 = vunpack.c.l.b16 %v1240
    %v6173 = vunpack.c.l.b16 %v1241
    %v6174 = vunpack.c.l.b16 %v1242
    %v6175 = vunpack.c.l.b16 %v1243
    %v6176 = vunpack.c.l.b16 %v1244
    %v6177 = vunpack.c.l.b16 %v1245
    %v6178 = vunpack.c.l.b16 %v1246
    %v6179 = vunpack.c.l.b16 %v1247
    %v6180 = vunpack.c.l.b16 %v1248
    %v6181 = vunpack.c.l.b16 %v1249
    %v6182 = vunpack.c.l.b16 %v1250
    %v6183 = vunpack.c.l.b16 %v1251
    %v6184 = vunpack.c.l.b16 %v1252
    %v6185 = vunpack.c.l.b16 %v1253
    %v6186 = vunpack.c.l.b16 %v1254
    %v6187 = vunpack.c.l.b16 %v1255
    %v6188 = vunpack.c.l.b16 %v1256
    %v6189 = vunpack.c.l.b16 %v1257
    %v6190 = vunpack.c.l.b16 %v1258
    %v6191 = vunpack.c.l.b16 %v1259
    %v6192 = vunpack.c.l.b16 %v1260
    %v6193 = vunpack.c.l.b16 %v1261
    %v6194 = vunpack.c.l.b16 %v1262
    %v6195 = vunpack.c.l.b16 %v1263
    %v6196 = vunpack.c.l.b16 %v1264
    %v6197 = vunpack.c.l.b16 %v1265
    %v6198 = vunpack.c.l.b16 %v1266
    %v6199 = vunpack.c.l.b16 %v1267
    %v6200 = vunpack.c.l.b16 %v1268
    %v6201 = vunpack.c.l.b16 %v1269
    %v6202 = vunpack.c.l.b16 %v1270
    %v6203 = vunpack.c.l.b16 %v1271
    %v6204 = vunpack.c.l.b16 %v1272
    %v6205 = vunpack.c.l.b16 %v1273
    %v6206 = vunpack.c.l.b16 %v1274
    %v6207 = vunpack.c.l.b16 %v1275
    %v6208 = vunpack.c.l.b16 %v1276
    %v6209 = vunpack.c.l.b16 %v1277
    %v6210 = vunpack.c.l.b16 %v1278
    %v6211 = vunpack.c.l.b16 %v1279
    %v6212 = vunpack.c.l.b16 %v1280
    %v6213 = vunpack.c.l.b16 %v1281
    %v6214 = vunpack.c.l.b16 %v1282
    %v6215 = vunpack.c.l.b16 %v1283
    %v6216 = vunpack.c.l.b16 %v1284
    %v6217 = vunpack.c.l.b16 %v1285
    %v6218 = vunpack.c.l.b16 %v1286
    %v6219 = vunpack.c.l.b16 %v1287
    %v6220 = vunpack.c.l.b16 %v1288
    %v6221 = vunpack.c.l.b16 %v1289
    %v6222 = vunpack.c.l.b16 %v1290
    %v6223 = vunpack.c.l.b16 %v1291
    %v6224 = vunpack.c.l.b16 %v1292
    %v6225 = vunpack.c.l.b16 %v1293
    %v6226 = vunpack.c.l.b16 %v1294
    %v6227 = vunpack.c.l.b16 %v1295
    %v6228 = vunpack.c.l.b16 %v1296
    %v6229 = vunpack.c.l.b16 %v1297
    %v6230 = vunpack.c.l.b16 %v1298
    %v6231 = vunpack.c.l.b16 %v1299
    %v6232 = vunpack.c.l.b16 %v1300
    %v6233 = vunpack.c.l.b16 %v1301
    %v6234 = vunpack.c.l.b16 %v1302
    %v6235 = vunpack.c.l.b16 %v1303
    %v6236 = vunpack.c.l.b16 %v1304
    %v6237 = vunpack.c.l.b16 %v1305
    %v6238 = vunpack.c.l.b16 %v1306
    %v6239 = vunpack.c.l.b16 %v1307
    %v6240 = vunpack.c.l.b16 %v1308
    %v6241 = vunpack.c.l.b16 %v1309
    %v6242 = vunpack.c.l.b16 %v1310
    %v6243 = vunpack.c.l.b16 %v1311
    %v6244 = vunpack.c.l.b16 %v1312
    %v6245 = vunpack.c.l.b16 %v1313
    %v6246 = vunpack.c.l.b16 %v1314
    %v6247 = vunpack.c.l.b16 %v1315
    %v6248 = vunpack.c.l.b16 %v1316
    %v6249 = vunpack.c.l.b16 %v1317
    %v6250 = vunpack.c.l.b16 %v1318
    %v6251 = vunpack.c.l.b16 %v1319
    %v6252 = vunpack.c.l.b16 %v1320
    %v6253 = vunpack.c.l.b16 %v1321
    %v6254 = vunpack.c.l.b16 %v1322
    %v6255 = vunpack.c.l.b16 %v1323
    %v6256 = vunpack.c.l.b16 %v1324
    %v6257 = vunpack.c.l.b16 %v1325
    %v6258 = vunpack.c.l.b16 %v1326
    %v6259 = vunpack.c.l.b16 %v1327
    %v6260 = vunpack.c.l.b16 %v1328
    %v6261 = vunpack.c.l.b16 %v1329
    %v6262 = vunpack.c.l.b16 %v1330
    %v6263 = vunpack.c.l.b16 %v1331
    %v6264 = vunpack.c.l.b16 %v1332
    %v6265 = vunpack.c.l.b16 %v1333
    %v6266 = vunpack.c.l.b16 %v1334
    %v6267 = vunpack.c.l.b16 %v1335
    %v6268 = vunpack.c.l.b16 %v1336
    %v6269 = vunpack.c.l.b16 %v1337
    %v6270 = vunpack.c.l.b16 %v1338
    %v6271 = vunpack.c.l.b16 %v1339
    %v6272 = vunpack.c.l.b16 %v1340
    %v6273 = vunpack.c.l.b16 %v1341
    %v6274 = vunpack.c.l.b16 %v1342
    %v6275 = vunpack.c.l.b16 %v1343
    %v6276 = vunpack.c.l.b16 %v1344
    %v6277 = vunpack.c.l.b16 %v1345
    %v6278 = vunpack.c.l.b16 %v1346
    %v6279 = vunpack.c.l.b16 %v1347
    %v6280 = vunpack.c.l.b16 %v1348
    %v6281 = vunpack.c.l.b16 %v1349
    %v6282 = vunpack.c.l.b16 %v1350
    %v6283 = vunpack.c.l.b16 %v1351
    %v6284 = vunpack.c.l.b16 %v1352
    %v6285 = vunpack.c.l.b16 %v1353
    %v6286 = vunpack.c.l.b16 %v1354
    %v6287 = vunpack.c.l.b16 %v1355
    %v6288 = vunpack.c.l.b16 %v1356
    %v6289 = vunpack.c.l.b16 %v1357
    %v6290 = vunpack.c.l.b16 %v1358
    %v6291 = vunpack.c.l.b16 %v1359
    %v6292 = vunpack.c.l.b16 %v1360
    %v6293 = vunpack.c.l.b16 %v1361
    %v6294 = vunpack.c.l.b16 %v1362
    %v6295 = vunpack.c.l.b16 %v1363
    %v6296 = vunpack.c.l.b16 %v1364
    %v6297 = vunpack.c.l.b16 %v1365
    %v6298 = vunpack.c.l.b16 %v1366
    %v6299 = vunpack.c.l.b16 %v1367
    %v6300 = vunpack.c.l.b16 %v1368
    %v6301 = vunpack.c.l.b16 %v1369
    %v6302 = vunpack.c.l.b16 %v1370
    %v6303 = vunpack.c.l.b16 %v1371
    %v6304 = vunpack.c.l.b16 %v1372
    %v6305 = vunpack.c.l.b16 %v1373
    %v6306 = vunpack.c.l.b16 %v1374
    %v6307 = vunpack.c.l.b16 %v1375
    %v6308 = vunpack.c.l.b16 %v1376
    %v6309 = vunpack.c.l.b16 %v1377
    %v6310 = vunpack.c.l.b16 %v1378
    %v6311 = vunpack.c.l.b16 %v1379
    %v6312 = vunpack.c.l.b16 %v1380
    %v6313 = vunpack.c.l.b16 %v1381
    %v6314 = vunpack.c.l.b16 %v1382
    %v6315 = vunpack.c.l.b16 %v1383
    %v6316 = vunpack.c.l.b16 %v1384
    %v6317 = vunpack.c.l.b16 %v1385
    %v6318 = vunpack.c.l.b16 %v1386
    %v6319 = vunpack.c.l.b16 %v1387
    %v6320 = vunpack.c.l.b16 %v1388
    %v6321 = vunpack.c.l.b16 %v1389
    %v6322 = vunpack.c.l.b16 %v1390
    %v6323 = vunpack.c.l.b16 %v1391
    %v6324 = vunpack.c.l.b16 %v1392
    %v6325 = vunpack.c.l.b16 %v1393
    %v6326 = vunpack.c.l.b16 %v1394
    %v6327 = vunpack.c.l.b16 %v1395
    %v6328 = vunpack.c.l.b16 %v1396
    %v6329 = vunpack.c.l.b16 %v1397
    %v6330 = vunpack.c.l.b16 %v1398
    %v6331 = vunpack.c.l.b16 %v1399
    %v6332 = vunpack.c.l.b16 %v1400
    %v6333 = vunpack.c.l.b16 %v1401
    %v6334 = vunpack.c.l.b16 %v1402
    %v6335 = vunpack.c.l.b16 %v1403
    %v6336 = vunpack.c.l.b16 %v1404
    %v6337 = vunpack.c.l.b16 %v1405
    %v6338 = vunpack.c.l.b16 %v1406
    %v6339 = vunpack.c.l.b16 %v1407
    %v6340 = vunpack.c.l.b16 %v1408
    %v6341 = vunpack.c.l.b16 %v1409
    %v6342 = vunpack.c.l.b16 %v1410
    %v6343 = vunpack.c.l.b16 %v1411
    %v6344 = vunpack.c.l.b16 %v1412
    %v6345 = vunpack.c.l.b16 %v1413
    %v6346 = vunpack.c.l.b16 %v1414
    %v6347 = vunpack.c.l.b16 %v1415
    %v6348 = vunpack.c.l.b16 %v1416
    %v6349 = vunpack.c.l.b16 %v1417
    %v6350 = vunpack.c.l.b16 %v1418
    %v6351 = vunpack.c.l.b16 %v1419
    %v6352 = vunpack.c.l.b16 %v1420
    %v6353 = vunpack.c.l.b16 %v1421
    %v6354 = vunpack.c.l.b16 %v1422
    %v6355 = vunpack.c.l.b16 %v1423
    %v6356 = vunpack.c.l.b16 %v1424
    %v6357 = vunpack.c.l.b16 %v1425
    %v6358 = vunpack.c.l.b16 %v1426
    %v6359 = vunpack.c.l.b16 %v1427
    %v6360 = vunpack.c.l.b16 %v1428
    %v6361 = vunpack.c.l.b16 %v1429
    %v6362 = vunpack.c.l.b16 %v1430
    %v6363 = vunpack.c.l.b16 %v1431
    %v6364 = vunpack.c.l.b16 %v1432
    %v6365 = vunpack.c.l.b16 %v1433
    %v6366 = vunpack.c.l.b16 %v1434
    %v6367 = vunpack.c.l.b16 %v1435
    %v6368 = vunpack.c.l.b16 %v1436
    %v6369 = vunpack.c.l.b16 %v1437
    %v6370 = vunpack.c.l.b16 %v1438
    %v6371 = vunpack.c.l.b16 %v1439
    %v6372 = vunpack.c.l.b16 %v1440
    %v6373 = vunpack.c.l.b16 %v1441
    %v6374 = vunpack.c.l.b16 %v1442
    %v6375 = vunpack.c.l.b16 %v1443
    %v6376 = vunpack.c.l.b16 %v1444
    %v6377 = vunpack.c.l.b16 %v1445
    %v6378 = vunpack.c.l.b16 %v1446
    %v6379 = vunpack.c.l.b16 %v1447
    %v6380 = vunpack.c.l.b16 %v1448
    %v6381 = vunpack.c.l.b16 %v1449
    %v6382 = vunpack.c.l.b16 %v1450
    %v6383 = vunpack.c.l.b16 %v1451
    %v6384 = vunpack.c.l.b16 %v1452
    %v6385 = vunpack.c.l.b16 %v1453
    %v6386 = vunpack.c.l.b16 %v1454
    %v6387 = vunpack.c.l.b16 %v1455
    %v6388 = vunpack.c.l.b16 %v1456
    %v6389 = vunpack.c.l.b16 %v1457
    %v6390 = vunpack.c.l.b16 %v1458
    %v6391 = vunpack.c.l.b16 %v1459
    %v6392 = vunpack.c.l.b16 %v1460
    %v6393 = vunpack.c.l.b16 %v1461
    %v6394 = vunpack.c.l.b16 %v1462
    %v6395 = vunpack.c.l.b16 %v1463
    %v6396 = vunpack.c.l.b16 %v1464
    %v6397 = vunpack.c.l.b16 %v1465
    %v6398 = vunpack.c.l.b16 %v1466
    %v6399 = vunpack.c.l.b16 %v1467
    %v6400 = vunpack.c.l.b16 %v1468
    %v6401 = vunpack.c.l.b16 %v1469
    %v6402 = vunpack.c.l.b16 %v1470
    %v6403 = vunpack.c.l.b16 %v1471
    %v6404 = vunpack.c.l.b16 %v1472
    %v6405 = vunpack.c.l.b16 %v1473
    %v6406 = vunpack.c.l.b16 %v1474
    %v6407 = vunpack.c.l.b16 %v1475
    %v6408 = vunpack.c.l.b16 %v1476
    %v6409 = vunpack.c.l.b16 %v1477
    %v6410 = vunpack.c.l.b16 %v1478
    %v6411 = vunpack.c.l.b16 %v1479
    %v6412 = vunpack.c.l.b16 %v1480
    %v6413 = vunpack.c.l.b16 %v1481
    %v6414 = vunpack.c.l.b16 %v1482
    %v6415 = vunpack.c.l.b16 %v1483
    %v6416 = vunpack.c.l.b16 %v1484
    %v6417 = vunpack.c.l.b16 %v1485
    %v6418 = vunpack.c.l.b16 %v1486
    %v6419 = vunpack.c.l.b16 %v1487
    %v6420 = vunpack.c.l.b16 %v1488
    %v6421 = vunpack.c.l.b16 %v1489
    %v6422 = vunpack.c.l.b16 %v1490
    %v6423 = vunpack.c.l.b16 %v1491
    %v6424 = vunpack.c.l.b16 %v1492
    %v6425 = vunpack.c.l.b16 %v1493
    %v6426 = vunpack.c.l.b16 %v1494
    %v6427 = vunpack.c.l.b16 %v1495
    %v6428 = vunpack.c.l.b16 %v1496
    %v6429 = vunpack.c.l.b16 %v1497
    %v6430 = vunpack.c.l.b16 %v1498
    %v6431 = vunpack.c.l.b16 %v1499
    %v6432 = vunpack.c.l.b16 %v1500
    %v6433 = vunpack.c.l.b16 %v1501
    %v6434 = vunpack.c.l.b16 %v1502
    %v6435 = vunpack.c.l.b16 %v1503
    %v6436 = vunpack.c.l.b16 %v1504
    %v6437 = vunpack.c.l.b16 %v1505
    %v6438 = vunpack.c.l.b16 %v1506
    %v6439 = vunpack.c.l.b16 %v1507
    %v6440 = vunpack.c.l.b16 %v1508
    %v6441 = vunpack.c.l.b16 %v1509
    %v6442 = vunpack.c.l.b16 %v1510
    %v6443 = vunpack.c.l.b16 %v1511
    %v6444 = vunpack.c.l.b16 %v1512
    %v6445 = vunpack.c.l.b16 %v1513
    %v6446 = vunpack.c.l.b16 %v1514
    %v6447 = vunpack.c.l.b16 %v1515
    %v6448 = vunpack.c.l.b16 %v1516
    %v6449 = vunpack.c.l.b16 %v1517
    %v6450 = vunpack.c.l.b16 %v1518
    %v6451 = vunpack.c.l.b16 %v1519
    %v6452 = vunpack.c.l.b16 %v1520
    %v6453 = vunpack.c.l.b16 %v1521
    %v6454 = vunpack.c.l.b16 %v1522
    %v6455 = vunpack.c.l.b16 %v1523
    %v6456 = vunpack.c.l.b16 %v1524
    %v6457 = vunpack.c.l.b16 %v1525
    %v6458 = vunpack.c.l.b16 %v1526
    %v6459 = vunpack.c.l.b16 %v1527
    %v6460 = vunpack.c.l.b16 %v1528
    %v6461 = vunpack.c.l.b16 %v1529
    %v6462 = vunpack.c.l.b16 %v1530
    %v6463 = vunpack.c.l.b16 %v1531
    %v6464 = vunpack.c.l.b16 %v1532
    %v6465 = vunpack.c.l.b16 %v1533
    %v6466 = vunpack.c.l.b16 %v1534
    %v6467 = vunpack.c.l.b16 %v1535
    %v6468 = vunpack.c.l.b16 %v1536
    %v6469 = vunpack.c.l.b16 %v1537
    %v6470 = vunpack.c.l.b16 %v1538
    %v6471 = vunpack.c.l.b16 %v1539
    %v6472 = vunpack.c.l.b16 %v1540
    %v6473 = vunpack.c.l.b16 %v1541
    %v6474 = vunpack.c.l.b16 %v1542
    %v6475 = vunpack.c.l.b16 %v1543
    %v6476 = vunpack.c.l.b16 %v1544
    %v6477 = vunpack.c.l.b16 %v1545
    %v6478 = vunpack.c.l.b16 %v1546
    %v6479 = vunpack.c.l.b16 %v1547
    %v6480 = vunpack.c.l.b16 %v1548
    %v6481 = vunpack.c.l.b16 %v1549
    %v6482 = vunpack.c.l.b16 %v1550
    %v6483 = vunpack.c.l.b16 %v1551
    %v6484 = vunpack.c.l.b16 %v1552
    %v6485 = vunpack.c.l.b16 %v1553
    %v6486 = vunpack.c.l.b16 %v1554
    %v6487 = vunpack.c.l.b16 %v1555
    %v6488 = vunpack.c.l.b16 %v1556
    %v6489 = vunpack.c.l.b16 %v1557
    %v6490 = vunpack.c.l.b16 %v1558
    %v6491 = vunpack.c.l.b16 %v1559
    %v6492 = vunpack.c.l.b16 %v1560
    %v6493 = vunpack.c.l.b16 %v1561
    %v6494 = vunpack.c.l.b16 %v1562
    %v6495 = vunpack.c.l.b16 %v1563
    %v6496 = vunpack.c.l.b16 %v1564
    %v6497 = vunpack.c.l.b16 %v1565
    %v6498 = vunpack.c.l.b16 %v1566
    %v6499 = vunpack.c.l.b16 %v1567
    %v6500 = vunpack.c.l.b16 %v1568
    %v6501 = vunpack.c.l.b16 %v1569
    %v6502 = vunpack.c.l.b16 %v1570
    %v6503 = vunpack.c.l.b16 %v1571
    %v6504 = vunpack.c.l.b16 %v1572
    %v6505 = vunpack.c.l.b16 %v1573
    %v6506 = vunpack.c.l.b16 %v1574
    %v6507 = vunpack.c.l.b16 %v1575
    %v6508 = vunpack.c.l.b16 %v1576
    %v6509 = vunpack.c.l.b16 %v1577
    %v6510 = vunpack.c.l.b16 %v1578
    %v6511 = vunpack.c.l.b16 %v1579
    %v6512 = vunpack.c.l.b16 %v1580
    %v6513 = vunpack.c.l.b16 %v1581
    %v6514 = vunpack.c.l.b16 %v1582
    %v6515 = vunpack.c.l.b16 %v1583
    %v6516 = vunpack.c.l.b16 %v1584
    %v6517 = vunpack.c.l.b16 %v1585
    %v6518 = vunpack.c.l.b16 %v1586
    %v6519 = vunpack.c.l.b16 %v1587
    %v6520 = vunpack.c.l.b16 %v1588
    %v6521 = vunpack.c.l.b16 %v1589
    %v6522 = vunpack.c.l.b16 %v1590
    %v6523 = vunpack.c.l.b16 %v1591
    %v6524 = vunpack.c.l.b16 %v1592
    %v6525 = vunpack.c.l.b16 %v1593
    %v6526 = vunpack.c.l.b16 %v1594
    %v6527 = vunpack.c.l.b16 %v1595
    %v6528 = vunpack.c.l.b16 %v1596
    %v6529 = vunpack.c.l.b16 %v1597
    %v6530 = vunpack.c.l.b16 %v1598
    %v6531 = vunpack.c.l.b16 %v1599
    %v6532 = vunpack.c.l.b16 %v1600
    %v6533 = vunpack.c.l.b16 %v1601
    %v6534 = vunpack.c.l.b16 %v1602
    %v6535 = vunpack.c.l.b16 %v1603
    %v6536 = vunpack.c.l.b16 %v1604
    %v6537 = vunpack.c.l.b16 %v1605
    %v6538 = vunpack.c.l.b16 %v1606
    %v6539 = vunpack.c.l.b16 %v1607
    %v6540 = vunpack.c.l.b16 %v1608
    %v6541 = vunpack.c.l.b16 %v1609
    %v6542 = vunpack.c.l.b16 %v1610
    %v6543 = vunpack.c.l.b16 %v1611
    %v6544 = vunpack.c.l.b16 %v1612
    %v6545 = vunpack.c.l.b16 %v1613
    %v6546 = vunpack.c.l.b16 %v1614
    %v6547 = vunpack.c.l.b16 %v1615
    %v6548 = vunpack.c.l.b16 %v1616
    %v6549 = vunpack.c.l.b16 %v1617
    %v6550 = vunpack.c.l.b16 %v1618
    %v6551 = vunpack.c.l.b16 %v1619
    %v6552 = vunpack.c.l.b16 %v1620
    %v6553 = vunpack.c.l.b16 %v1621
    %v6554 = vunpack.c.l.b16 %v1622
    %v6555 = vunpack.c.l.b16 %v1623
    %v6556 = vunpack.c.l.b16 %v1624
    %v6557 = vunpack.c.l.b16 %v1625
    %v6558 = vunpack.c.l.b16 %v1626
    %v6559 = vunpack.c.l.b16 %v1627
    %v6560 = vunpack.c.l.b16 %v1628
    %v6561 = vunpack.c.l.b16 %v1629
    %v6562 = vunpack.c.l.b16 %v1630
    %v6563 = vunpack.c.l.b16 %v1631
    %v6564 = vunpack.c.l.b16 %v1632
    %v6565 = vunpack.c.l.b16 %v1633
    %v6566 = vunpack.c.l.b16 %v1634
    %v6567 = vunpack.c.l.b16 %v1635
    %v6568 = vunpack.c.l.b16 %v1636
    %v6569 = vunpack.c.l.b16 %v1637
    %v6570 = vunpack.c.l.b16 %v1638
    %v6571 = vunpack.c.l.b16 %v1639
    %v6572 = vunpack.c.l.b16 %v1640
    %v6573 = vunpack.c.l.b16 %v1641
    %v6574 = vunpack.c.l.b16 %v1642
    %v6575 = vunpack.c.l.b16 %v1643
    %v6576 = vunpack.c.l.b16 %v1644
    %v6577 = vunpack.c.l.b16 %v1645
    %v6578 = vunpack.c.l.b16 %v1646
    %v6579 = vunpack.c.l.b16 %v1647
    %v6580 = vunpack.c.l.b16 %v1648
    %v6581 = vunpack.c.l.b16 %v1649
    %v6582 = vunpack.c.l.b16 %v1650
    %v6583 = vunpack.c.l.b16 %v1651
    %v6584 = vunpack.c.l.b16 %v1652
    %v6585 = vunpack.c.l.b16 %v1653
    %v6586 = vunpack.c.l.b16 %v1654
    %v6587 = vunpack.c.l.b16 %v1655
    %v6588 = vunpack.c.l.b16 %v1656
    %v6589 = vunpack.c.l.b16 %v1657
    %v6590 = vunpack.c.l.b16 %v1658
    %v6591 = vunpack.c.l.b16 %v1659
    %v6592 = vunpack.c.l.b16 %v1660
    %v6593 = vunpack.c.l.b16 %v1661
    %v6594 = vunpack.c.l.b16 %v1662
    %v6595 = vunpack.c.l.b16 %v1663
    %v6596 = vunpack.c.l.b16 %v1664
    %v6597 = vunpack.c.l.b16 %v1665
    %v6598 = vunpack.c.l.b16 %v1666
    %v6599 = vunpack.c.l.b16 %v1667
    %v6600 = vunpack.c.l.b16 %v1668
    %v6601 = vunpack.c.l.b16 %v1669
    %v6602 = vunpack.c.l.b16 %v1670
    %v6603 = vunpack.c.l.b16 %v1671
    %v6604 = vunpack.c.l.b16 %v1672
    %v6605 = vunpack.c.l.b16 %v1673
    %v6606 = vunpack.c.l.b16 %v1674
    %v6607 = vunpack.c.l.b16 %v1675
    %v6608 = vunpack.c.l.b16 %v1676
    %v6609 = vunpack.c.l.b16 %v1677
    %v6610 = vunpack.c.l.b16 %v1678
    %v6611 = vunpack.c.l.b16 %v1679
    %v6612 = vunpack.c.l.b16 %v1680
    %v6613 = vunpack.c.l.b16 %v1681
    %v6614 = vunpack.c.l.b16 %v1682
    %v6615 = vunpack.c.l.b16 %v1683
    %v6616 = vunpack.c.l.b16 %v1684
    %v6617 = vunpack.c.l.b16 %v1685
    %v6618 = vunpack.c.l.b16 %v1686
    %v6619 = vunpack.c.l.b16 %v1687
    %v6620 = vunpack.c.l.b16 %v1688
    %v6621 = vunpack.c.l.b16 %v1689
    %v6622 = vunpack.c.l.b16 %v1690
    %v6623 = vunpack.c.l.b16 %v1691
    %v6624 = vunpack.c.l.b16 %v1692
    %v6625 = vunpack.c.l.b16 %v1693
    %v6626 = vunpack.c.l.b16 %v1694
    %v6627 = vunpack.c.l.b16 %v1695
    %v6628 = vunpack.c.l.b16 %v1696
    %v6629 = vunpack.c.l.b16 %v1697
    %v6630 = vunpack.c.l.b16 %v1698
    %v6631 = vunpack.c.l.b16 %v1699
    %v6632 = vunpack.c.l.b16 %v1700
    %v6633 = vunpack.c.l.b16 %v1701
    %v6634 = vunpack.c.l.b16 %v1702
    %v6635 = vunpack.c.l.b16 %v1703
    %v6636 = vunpack.c.l.b16 %v1704
    %v6637 = vunpack.c.l.b16 %v1705
    %v6638 = vunpack.c.l.b16 %v1706
    %v6639 = vunpack.c.l.b16 %v1707
    %v6640 = vunpack.c.l.b16 %v1708
    %v6641 = vunpack.c.l.b16 %v1709
    %v6642 = vunpack.c.l.b16 %v1710
    %v6643 = vunpack.c.l.b16 %v1711
    %v6644 = vunpack.c.l.b16 %v1712
    %v6645 = vunpack.c.l.b16 %v1713
    %v6646 = vunpack.c.l.b16 %v1714
    %v6647 = vunpack.c.l.b16 %v1715
    %v6648 = vunpack.c.l.b16 %v1716
    %v6649 = vunpack.c.l.b16 %v1717
    %v6650 = vunpack.c.l.b16 %v1718
    %v6651 = vunpack.c.l.b16 %v1719
    %v6652 = vunpack.c.l.b16 %v1720
    %v6653 = vunpack.c.l.b16 %v1721
    %v6654 = vunpack.c.l.b16 %v1722
    %v6655 = vunpack.c.l.b16 %v1723
    %v6656 = vunpack.c.l.b16 %v1724
    %v6657 = vunpack.c.l.b16 %v1725
    %v6658 = vunpack.c.l.b16 %v1726
    %v6659 = vunpack.c.l.b16 %v1727
    %v6660 = vunpack.c.l.b16 %v1728
    %v6661 = vunpack.c.l.b16 %v1729
    %v6662 = vunpack.c.l.b16 %v1730
    %v6663 = vunpack.c.l.b16 %v1731
    %v6664 = vunpack.c.l.b16 %v1732
    %v6665 = vunpack.c.l.b16 %v1733
    %v6666 = vunpack.c.l.b16 %v1734
    %v6667 = vunpack.c.l.b16 %v1735
    %v6668 = vunpack.c.l.b16 %v1736
    %v6669 = vunpack.c.l.b16 %v1737
    %v6670 = vunpack.c.l.b16 %v1738
    %v6671 = vunpack.c.l.b16 %v1739
    %v6672 = vunpack.c.l.b16 %v1740
    %v6673 = vunpack.c.l.b16 %v1741
    %v6674 = vunpack.c.l.b16 %v1742
    %v6675 = vunpack.c.l.b16 %v1743
    %v6676 = vunpack.c.l.b16 %v1744
    %v6677 = vunpack.c.l.b16 %v1745
    %v6678 = vunpack.c.l.b16 %v1746
    %v6679 = vunpack.c.l.b16 %v1747
    %v6680 = vunpack.c.l.b16 %v1748
    %v6681 = vunpack.c.l.b16 %v1749
    %v6682 = vunpack.c.l.b16 %v1750
    %v6683 = vunpack.c.l.b16 %v1751
    %v6684 = vunpack.c.l.b16 %v1752
    %v6685 = vunpack.c.l.b16 %v1753
    %v6686 = vunpack.c.l.b16 %v1754
    %v6687 = vunpack.c.l.b16 %v1755
    %v6688 = vunpack.c.l.b16 %v1756
    %v6689 = vunpack.c.l.b16 %v1757
    %v6690 = vunpack.c.l.b16 %v1758
    %v6691 = vunpack.c.l.b16 %v1759
    %v6692 = vunpack.c.l.b16 %v1760
    %v6693 = vunpack.c.l.b16 %v1761
    %v6694 = vunpack.c.l.b16 %v1762
    %v6695 = vunpack.c.l.b16 %v1763
    %v6696 = vunpack.c.l.b16 %v1764
    %v6697 = vunpack.c.l.b16 %v1765
    %v6698 = vunpack.c.l.b16 %v1766
    %v6699 = vunpack.c.l.b16 %v1767
    %v6700 = vunpack.c.l.b16 %v1768
    %v6701 = vunpack.c.l.b16 %v1769
    %v6702 = vunpack.c.l.b16 %v1770
    %v6703 = vunpack.c.l.b16 %v1771
    %v6704 = vunpack.c.l.b16 %v1772
    %v6705 = vunpack.c.l.b16 %v1773
    %v6706 = vunpack.c.l.b16 %v1774
    %v6707 = vunpack.c.l.b16 %v1775
    %v6708 = vunpack.c.l.b16 %v1776
    %v6709 = vunpack.c.l.b16 %v1777
    %v6710 = vunpack.c.l.b16 %v1778
    %v6711 = vunpack.c.l.b16 %v1779
    %v6712 = vunpack.c.l.b16 %v1780
    %v6713 = vunpack.c.l.b16 %v1781
    %v6714 = vunpack.c.l.b16 %v1782
    %v6715 = vunpack.c.l.b16 %v1783
    %v6716 = vunpack.c.l.b16 %v1784
    %v6717 = vunpack.c.l.b16 %v1785
    %v6718 = vunpack.c.l.b16 %v1786
    %v6719 = vunpack.c.l.b16 %v1787
    %v6720 = vunpack.c.l.b16 %v1788
    %v6721 = vunpack.c.l.b16 %v1789
    %v6722 = vunpack.c.l.b16 %v1790
    %v6723 = vunpack.c.l.b16 %v1791
    %v6724 = vunpack.c.l.b16 %v1792
    %v6725 = vunpack.c.l.b16 %v1793
    %v6726 = vunpack.c.l.b16 %v1794
    %v6727 = vunpack.c.l.b16 %v1795
    %v6728 = vunpack.c.l.b16 %v1796
    %v6729 = vunpack.c.l.b16 %v1797
    %v6730 = vunpack.c.l.b16 %v1798
    %v6731 = vunpack.c.l.b16 %v1799
    %v6732 = vunpack.c.l.b16 %v1800
    %v6733 = vunpack.c.l.b16 %v1801
    %v6734 = vunpack.c.l.b16 %v1802
    %v6735 = vunpack.c.l.b16 %v1803
    %v6736 = vunpack.c.l.b16 %v1804
    %v6737 = vunpack.c.l.b16 %v1805
    %v6738 = vunpack.c.l.b16 %v1806
    %v6739 = vunpack.c.l.b16 %v1807
    %v6740 = vunpack.c.l.b16 %v1808
    %v6741 = vunpack.c.l.b16 %v1809
    %v6742 = vunpack.c.l.b16 %v1810
    %v6743 = vunpack.c.l.b16 %v1811
    %v6744 = vunpack.c.l.b16 %v1812
    %v6745 = vunpack.c.l.b16 %v1813
    %v6746 = vunpack.c.l.b16 %v1814
    %v6747 = vunpack.c.l.b16 %v1815
    %v6748 = vunpack.c.l.b16 %v1816
    %v6749 = vunpack.c.l.b16 %v1817
    %v6750 = vunpack.c.l.b16 %v1818
    %v6751 = vunpack.c.l.b16 %v1819
    %v6752 = vunpack.c.l.b16 %v1820
    %v6753 = vunpack.c.l.b16 %v1821
    %v6754 = vunpack.c.l.b16 %v1822
    %v6755 = vunpack.c.l.b16 %v1823
    %v6756 = vunpack.c.l.b16 %v1824
    %v6757 = vunpack.c.l.b16 %v1825
    %v6758 = vunpack.c.l.b16 %v1826
    %v6759 = vunpack.c.l.b16 %v1827
    %v6760 = vunpack.c.l.b16 %v1828
    %v6761 = vunpack.c.l.b16 %v1829
    %v6762 = vunpack.c.l.b16 %v1830
    %v6763 = vunpack.c.l.b16 %v1831
    %v6764 = vunpack.c.l.b16 %v1832
    %v6765 = vunpack.c.l.b16 %v1833
    %v6766 = vunpack.c.l.b16 %v1834
    %v6767 = vunpack.c.l.b16 %v1835
    %v6768 = vunpack.c.l.b16 %v1836
    %v6769 = vunpack.c.l.b16 %v1837
    %v6770 = vunpack.c.l.b16 %v1838
    %v6771 = vunpack.c.l.b16 %v1839
    %v6772 = vunpack.c.l.b16 %v1840
    %v6773 = vunpack.c.l.b16 %v1841
    %v6774 = vunpack.c.l.b16 %v1842
    %v6775 = vunpack.c.l.b16 %v1843
    %v6776 = vunpack.c.l.b16 %v1844
    %v6777 = vunpack.c.l.b16 %v1845
    %v6778 = vunpack.c.l.b16 %v1846
    %v6779 = vunpack.c.l.b16 %v1847
    %v6780 = vunpack.c.l.b16 %v1848
    %v6781 = vunpack.c.l.b16 %v1849
    %v6782 = vunpack.c.l.b16 %v1850
    %v6783 = vunpack.c.l.b16 %v1851
    %v6784 = vunpack.c.l.b16 %v1852
    %v6785 = vunpack.c.l.b16 %v1853
    %v6786 = vunpack.c.l.b16 %v1854
    %v6787 = vunpack.c.l.b16 %v1855
    %v6788 = vunpack.c.l.b16 %v1856
    %v6789 = vunpack.c.l.b16 %v1857
    %v6790 = vunpack.c.l.b16 %v1858
    %v6791 = vunpack.c.l.b16 %v1859
    %v6792 = vunpack.c.l.b16 %v1860
    %v6793 = vunpack.c.l.b16 %v1861
    %v6794 = vunpack.c.l.b16 %v1862
    %v6795 = vunpack.c.l.b16 %v1863
    %v6796 = vunpack.c.l.b16 %v1864
    %v6797 = vunpack.c.l.b16 %v1865
    %v6798 = vunpack.c.l.b16 %v1866
    %v6799 = vunpack.c.l.b16 %v1867
    %v6800 = vunpack.c.l.b16 %v1868
    %v6801 = vunpack.c.l.b16 %v1869
    %v6802 = vunpack.c.l.b16 %v1870
    %v6803 = vunpack.c.l.b16 %v1871
    %v6804 = vunpack.c.l.b16 %v1872
    %v6805 = vunpack.c.l.b16 %v1873
    %v6806 = vunpack.c.l.b16 %v1874
    %v6807 = vunpack.c.l.b16 %v1875
    %v6808 = vunpack.c.l.b16 %v1876
    %v6809 = vunpack.c.l.b16 %v1877
    %v6810 = vunpack.c.l.b16 %v1878
    %v6811 = vunpack.c.l.b16 %v1879
    %v6812 = vunpack.c.l.b16 %v1880
    %v6813 = vunpack.c.l.b16 %v1881
    %v6814 = vunpack.c.l.b16 %v1882
    %v6815 = vunpack.c.l.b16 %v1883
    %v6816 = vunpack.c.l.b16 %v1884
    %v6817 = vunpack.c.l.b16 %v1885
    %v6818 = vunpack.c.l.b16 %v1886
    %v6819 = vunpack.c.l.b16 %v1887
    %v6820 = vunpack.c.l.b16 %v1888
    %v6821 = vunpack.c.l.b16 %v1889
    %v6822 = vunpack.c.l.b16 %v1890
    %v6823 = vunpack.c.l.b16 %v1891
    %v6824 = vunpack.c.l.b16 %v1892
    %v6825 = vunpack.c.l.b16 %v1893
    %v6826 = vunpack.c.l.b16 %v1894
    %v6827 = vunpack.c.l.b16 %v1895
    %v6828 = vunpack.c.l.b16 %v1896
    %v6829 = vunpack.c.l.b16 %v1897
    %v6830 = vunpack.c.l.b16 %v1898
    %v6831 = vunpack.c.l.b16 %v1899
    %v6832 = vunpack.c.l.b16 %v1900
    %v6833 = vunpack.c.l.b16 %v1901
    %v6834 = vunpack.c.l.b16 %v1902
    %v6835 = vunpack.c.l.b16 %v1903
    %v6836 = vunpack.c.l.b16 %v1904
    %v6837 = vunpack.c.l.b16 %v1905
    %v6838 = vunpack.c.l.b16 %v1906
    %v6839 = vunpack.c.l.b16 %v1907
    %v6840 = vunpack.c.l.b16 %v1908
    %v6841 = vunpack.c.l.b16 %v1909
    %v6842 = vunpack.c.l.b16 %v1910
    %v6843 = vunpack.c.l.b16 %v1911
    %v6844 = vunpack.c.l.b16 %v1912
    %v6845 = vunpack.c.l.b16 %v1913
    %v6846 = vunpack.c.l.b16 %v1914
    %v6847 = vunpack.c.l.b16 %v1915
    %v6848 = vunpack.c.l.b16 %v1916
    %v6849 = vunpack.c.l.b16 %v1917
    %v6850 = vunpack.c.l.b16 %v1918
    %v6851 = vunpack.c.l.b16 %v1919
    %v6852 = vunpack.c.l.b16 %v1920
    %v6853 = vunpack.c.l.b16 %v1921
    %v6854 = vunpack.c.l.b16 %v1922
    %v6855 = vunpack.c.l.b16 %v1923
    %v6856 = vunpack.c.l.b16 %v1924
    %v6857 = vunpack.c.l.b16 %v1925
    %v6858 = vunpack.c.l.b16 %v1926
    %v6859 = vunpack.c.l.b16 %v1927
    %v6860 = vunpack.c.l.b16 %v1928
    %v6861 = vunpack.c.l.b16 %v1929
    %v6862 = vunpack.c.l.b16 %v1930
    %v6863 = vunpack.c.l.b16 %v1931
    %v6864 = vunpack.c.l.b16 %v1932
    %v6865 = vunpack.c.l.b16 %v1933
    %v6866 = vunpack.c.l.b16 %v1934
    %v6867 = vunpack.c.l.b16 %v1935
    %v6868 = vunpack.c.l.b16 %v1936
    %v6869 = vunpack.c.l.b16 %v1937
    %v6870 = vunpack.c.l.b16 %v1938
    %v6871 = vunpack.c.l.b16 %v1939
    %v6872 = vunpack.c.l.b16 %v1940
    %v6873 = vunpack.c.l.b16 %v1941
    %v6874 = vunpack.c.l.b16 %v1942
    %v6875 = vunpack.c.l.b16 %v1943
    %v6876 = vunpack.c.l.b16 %v1944
    %v6877 = vunpack.c.l.b16 %v1945
    %v6878 = vunpack.c.l.b16 %v1946
    %v6879 = vunpack.c.l.b16 %v1947
    %v6880 = vunpack.c.l.b16 %v1948
    %v6881 = vunpack.c.l.b16 %v1949
    %v6882 = vunpack.c.l.b16 %v1950
    %v6883 = vunpack.c.l.b16 %v1951
    %v6884 = vunpack.c.l.b16 %v1952
    %v6885 = vunpack.c.l.b16 %v1953
    %v6886 = vunpack.c.l.b16 %v1954
    %v6887 = vunpack.c.l.b16 %v1955
    %v6888 = vunpack.c.l.b16 %v1956
    %v6889 = vunpack.c.l.b16 %v1957
    %v6890 = vunpack.c.l.b16 %v1958
    %v6891 = vunpack.c.l.b16 %v1959
    %v6892 = vunpack.c.l.b16 %v1960
    %v6893 = vunpack.c.l.b16 %v1961
    %v6894 = vunpack.c.l.b16 %v1962
    %v6895 = vunpack.c.l.b16 %v1963
    %v6896 = vunpack.c.l.b16 %v1964
    %v6897 = vunpack.c.l.b16 %v1965
    %v6898 = vunpack.c.l.b16 %v1966
    %v6899 = vunpack.c.l.b16 %v1967
    %v6900 = vunpack.c.l.b16 %v1968
    %v6901 = vunpack.c.l.b16 %v1969
    %v6902 = vunpack.c.l.b16 %v1970
    %v6903 = vunpack.c.l.b16 %v1971
    %v6904 = vunpack.c.l.b16 %v1972
    %v6905 = vunpack.c.l.b16 %v1973
    %v6906 = vunpack.c.l.b16 %v1974
    %v6907 = vunpack.c.l.b16 %v1975
    %v6908 = vunpack.c.l.b16 %v1976
    %v6909 = vunpack.c.l.b16 %v1977
    %v6910 = vunpack.c.l.b16 %v1978
    %v6911 = vunpack.c.l.b16 %v1979
    %v6912 = vunpack.c.l.b16 %v1980
    %v6913 = vunpack.c.l.b16 %v1981
    %v6914 = vunpack.c.l.b16 %v1982
    %v6915 = vunpack.c.l.b16 %v1983
    %v6916 = vunpack.c.l.b16 %v1984
    %v6917 = vunpack.c.l.b16 %v1985
    %v6918 = vunpack.c.l.b16 %v1986
    %v6919 = vunpack.c.l.b16 %v1987
    %v6920 = vunpack.c.l.b16 %v1988
    %v6921 = vunpack.c.l.b16 %v1989
    %v6922 = vunpack.c.l.b16 %v1990
    %v6923 = vunpack.c.l.b16 %v1991
    %v6924 = vunpack.c.l.b16 %v1992
    %v6925 = vunpack.c.l.b16 %v1993
    %v6926 = vunpack.c.l.b16 %v1994
    %v6927 = vunpack.c.l.b16 %v1995
    %v6928 = vunpack.c.l.b16 %v1996
    %v6929 = vunpack.c.l.b16 %v1997
    %v6930 = vunpack.c.l.b16 %v1998
    %v6931 = vunpack.c.l.b16 %v1999
    %v6932 = vunpack.c.l.b16 %v2000
    %v6933 = vunpack.c.l.b16 %v2001
    %v6934 = vunpack.c.l.b16 %v2002
    %v6935 = vunpack.c.l.b16 %v2003
    %v6936 = vunpack.c.l.b16 %v2004
    %v6937 = vunpack.c.l.b16 %v2005
    %v6938 = vunpack.c.l.b16 %v2006
    %v6939 = vunpack.c.l.b16 %v2007
    %v6940 = vunpack.c.l.b16 %v2008
    %v6941 = vunpack.c.l.b16 %v2009
    %v6942 = vunpack.c.l.b16 %v2010
    %v6943 = vunpack.c.l.b16 %v2011
    %v6944 = vunpack.c.l.b16 %v2012
    %v6945 = vunpack.c.l.b16 %v2013
    %v6946 = vunpack.c.l.b16 %v2014
    %v6947 = vunpack.c.l.b16 %v2015
    %v6948 = vunpack.c.l.b16 %v2016
    %v6949 = vunpack.c.l.b16 %v2017
    %v6950 = vunpack.c.l.b16 %v2018
    %v6951 = vunpack.c.l.b16 %v2019
    %v6952 = vunpack.c.l.b16 %v2020
    %v6953 = vunpack.c.l.b16 %v2021
    %v6954 = vunpack.c.l.b16 %v2022
    %v6955 = vunpack.c.l.b16 %v2023
    %v6956 = vunpack.c.l.b16 %v2024
    %v6957 = vunpack.c.l.b16 %v2025
    %v6958 = vunpack.c.l.b16 %v2026
    %v6959 = vunpack.c.l.b16 %v2027
    %v6960 = vunpack.c.l.b16 %v2028
    %v6961 = vunpack.c.l.b16 %v2029
    %v6962 = vunpack.c.l.b16 %v2030
    %v6963 = vunpack.c.l.b16 %v2031
    %v6964 = vunpack.c.l.b16 %v2032
    %v6965 = vunpack.c.l.b16 %v2033
    %v6966 = vunpack.c.l.b16 %v2034
    %v6967 = vunpack.c.l.b16 %v2035
    %v6968 = vunpack.c.l.b16 %v2036
    %v6969 = vunpack.c.l.b16 %v2037
    %v6970 = vunpack.c.l.b16 %v2038
    %v6971 = vunpack.c.l.b16 %v2039
    %v6972 = vunpack.c.l.b16 %v2040
    %v6973 = vunpack.c.l.b16 %v2041
    %v6974 = vunpack.c.l.b16 %v2042
    %v6975 = vunpack.c.l.b16 %v2043
    %v6976 = vunpack.c.l.b16 %v2044
    %v6977 = vunpack.c.l.b16 %v2045
    %v6978 = vunpack.c.l.b16 %v2046
    %v6979 = vunpack.c.l.b16 %v2047
    %v6980 = vunpack.c.l.b16 %v2048
    %v6981 = vunpack.c.l.b16 %v2049
    %v6982 = vunpack.c.l.b16 %v2050
    %v6983 = vunpack.c.l.b16 %v2051
    %v6984 = vunpack.c.l.b16 %v2052
    %v6985 = vunpack.c.l.b16 %v2053
    %v6986 = vunpack.c.l.b16 %v2054
    %v6987 = vunpack.c.l.b16 %v2055
    %v6988 = vunpack.c.l.b16 %v2056
    %v6989 = vunpack.c.l.b16 %v2057
    %v6990 = vunpack.c.l.b16 %v2058
    %v6991 = vunpack.c.l.b16 %v2059
    %v6992 = vunpack.c.l.b16 %v2060
    %v6993 = vunpack.c.l.b16 %v2061
    %v6994 = vunpack.c.l.b16 %v2062
    %v6995 = vunpack.c.l.b16 %v2063
    %v6996 = vunpack.c.l.b16 %v2064
    %v6997 = vunpack.c.l.b16 %v2065
    %v6998 = vunpack.c.l.b16 %v2066
    %v6999 = vunpack.c.l.b16 %v2067
    %v7000 = vunpack.c.l.b16 %v2068
    %v7001 = vunpack.c.l.b16 %v2069
    %v7002 = vunpack.c.l.b16 %v2070
    %v7003 = vunpack.c.l.b16 %v2071
    %v7004 = vunpack.c.l.b16 %v2072
    %v7005 = vunpack.c.l.b16 %v2073
    %v7006 = vunpack.c.l.b16 %v2074
    %v7007 = vunpack.c.l.b16 %v2075
    %v7008 = vunpack.c.l.b16 %v2076
    %v7009 = vunpack.c.l.b16 %v2077
    %v7010 = vunpack.c.l.b16 %v2078
    %v7011 = vunpack.c.l.b16 %v2079
    %v7012 = vunpack.c.l.b16 %v2080
    %v7013 = vunpack.c.l.b16 %v2081
    %v7014 = vunpack.c.l.b16 %v2082
    %v7015 = vunpack.c.l.b16 %v2083
    %v7016 = vunpack.c.l.b16 %v2084
    %v7017 = vunpack.c.l.b16 %v2085
    %v7018 = vunpack.c.l.b16 %v2086
    %v7019 = vunpack.c.l.b16 %v2087
    %v7020 = vunpack.c.l.b16 %v2088
    %v7021 = vunpack.c.l.b16 %v2089
    %v7022 = vunpack.c.l.b16 %v2090
    %v7023 = vunpack.c.l.b16 %v2091
    %v7024 = vunpack.c.l.b16 %v2092
    %v7025 = vunpack.c.l.b16 %v2093
    %v7026 = vunpack.c.l.b16 %v2094
    %v7027 = vunpack.c.l.b16 %v2095
    %v7028 = vunpack.c.l.b16 %v2096
    %v7029 = vunpack.c.l.b16 %v2097
    %v7030 = vunpack.c.l.b16 %v2098
    %v7031 = vunpack.c.l.b16 %v2099
    %v7032 = vunpack.c.l.b16 %v2100
    %v7033 = vunpack.c.l.b16 %v2101
    %v7034 = vunpack.c.l.b16 %v2102
    %v7035 = vunpack.c.l.b16 %v2103
    %v7036 = vunpack.c.l.b16 %v2104
    %v7037 = vunpack.c.l.b16 %v2105
    %v7038 = vunpack.c.l.b16 %v2106
    %v7039 = vunpack.c.l.b16 %v2107
    %v7040 = vunpack.c.l.b16 %v2108
    %v7041 = vunpack.c.l.b16 %v2109
    %v7042 = vunpack.c.l.b16 %v2110
    %v7043 = vunpack.c.l.b16 %v2111
    %v7044 = vunpack.c.l.b16 %v2112
    %v7045 = vunpack.c.l.b16 %v2113
    %v7046 = vunpack.c.l.b16 %v2114
    %v7047 = vunpack.c.l.b16 %v2115
    %v7048 = vunpack.c.l.b16 %v2116
    %v7049 = vunpack.c.l.b16 %v2117
    %v7050 = vunpack.c.l.b16 %v2118
    %v7051 = vunpack.c.l.b16 %v2119
    %v7052 = vunpack.c.l.b16 %v2120
    %v7053 = vunpack.c.l.b16 %v2121
    %v7054 = vunpack.c.l.b16 %v2122
    %v7055 = vunpack.c.l.b16 %v2123
    %v7056 = vunpack.c.l.b16 %v2124
    %v7057 = vunpack.c.l.b16 %v2125
    %v7058 = vunpack.c.l.b16 %v2126
    %v7059 = vunpack.c.l.b16 %v2127
    %v7060 = vunpack.c.l.b16 %v2128
    %v7061 = vunpack.c.l.b16 %v2129
    %v7062 = vunpack.c.l.b16 %v2130
    %v7063 = vunpack.c.l.b16 %v2131
    %v7064 = vunpack.c.l.b16 %v2132
    %v7065 = vunpack.c.l.b16 %v2133
    %v7066 = vunpack.c.l.b16 %v2134
    %v7067 = vunpack.c.l.b16 %v2135
    %v7068 = vunpack.c.l.b16 %v2136
    %v7069 = vunpack.c.l.b16 %v2137
    %v7070 = vunpack.c.l.b16 %v2138
    %v7071 = vunpack.c.l.b16 %v2139
    %v7072 = vunpack.c.l.b16 %v2140
    %v7073 = vunpack.c.l.b16 %v2141
    %v7074 = vunpack.c.l.b16 %v2142
    %v7075 = vunpack.c.l.b16 %v2143
    %v7076 = vunpack.c.l.b16 %v2144
    %v7077 = vunpack.c.l.b16 %v2145
    %v7078 = vunpack.c.l.b16 %v2146
    %v7079 = vunpack.c.l.b16 %v2147
    %v7080 = vunpack.c.l.b16 %v2148
    %v7081 = vunpack.c.l.b16 %v2149
    %v7082 = vunpack.c.l.b16 %v2150
    %v7083 = vunpack.c.l.b16 %v2151
    %v7084 = vunpack.c.l.b16 %v2152
    %v7085 = vunpack.c.l.b16 %v2153
    %v7086 = vunpack.c.l.b16 %v2154
    %v7087 = vunpack.c.l.b16 %v2155
    %v7088 = vunpack.c.l.b16 %v2156
    %v7089 = vunpack.c.l.b16 %v2157
    %v7090 = vunpack.c.l.b16 %v2158
    %v7091 = vunpack.c.l.b16 %v2159
    %v7092 = vunpack.c.l.b16 %v2160
    %v7093 = vunpack.c.l.b16 %v2161
    %v7094 = vunpack.c.l.b16 %v2162
    %v7095 = vunpack.c.l.b16 %v2163
    %v7096 = vunpack.c.l.b16 %v2164
    %v7097 = vunpack.c.l.b16 %v2165
    %v7098 = vunpack.c.l.b16 %v2166
    %v7099 = vunpack.c.l.b16 %v2167
    %v7100 = vunpack.c.l.b16 %v2168
    %v7101 = vunpack.c.l.b16 %v2169
    %v7102 = vunpack.c.l.b16 %v2170
    %v7103 = vunpack.c.l.b16 %v2171
    %v7104 = vunpack.c.l.b16 %v2172
    %v7105 = vunpack.c.l.b16 %v2173
    %v7106 = vunpack.c.l.b16 %v2174
    %v7107 = vunpack.c.l.b16 %v2175
    %v7108 = vunpack.c.l.b16 %v2176
    %v7109 = vunpack.c.l.b16 %v2177
    %v7110 = vunpack.c.l.b16 %v2178
    %v7111 = vunpack.c.l.b16 %v2179
    %v7112 = vunpack.c.l.b16 %v2180
    %v7113 = vunpack.c.l.b16 %v2181
    %v7114 = vunpack.c.l.b16 %v2182
    %v7115 = vunpack.c.l.b16 %v2183
    %v7116 = vunpack.c.l.b16 %v2184
    %v7117 = vunpack.c.l.b16 %v2185
    %v7118 = vunpack.c.l.b16 %v2186
    %v7119 = vunpack.c.l.b16 %v2187
    %v7120 = vunpack.c.l.b16 %v2188
    %v7121 = vunpack.c.l.b16 %v2189
    %v7122 = vunpack.c.l.b16 %v2190
    %v7123 = vunpack.c.l.b16 %v2191
    %v7124 = vunpack.c.l.b16 %v2192
    %v7125 = vunpack.c.l.b16 %v2193
    %v7126 = vunpack.c.l.b16 %v2194
    %v7127 = vunpack.c.l.b16 %v2195
    %v7128 = vunpack.c.l.b16 %v2196
    %v7129 = vunpack.c.l.b16 %v2197
    %v7130 = vunpack.c.l.b16 %v2198
    %v7131 = vunpack.c.l.b16 %v2199
    %v7132 = vunpack.c.l.b16 %v2200
    %v7133 = vunpack.c.l.b16 %v2201
    %v7134 = vunpack.c.l.b16 %v2202
    %v7135 = vunpack.c.l.b16 %v2203
    %v7136 = vunpack.c.l.b16 %v2204
    %v7137 = vunpack.c.l.b16 %v2205
    %v7138 = vunpack.c.l.b16 %v2206
    %v7139 = vunpack.c.l.b16 %v2207
    %v7140 = vunpack.c.l.b16 %v2208
    %v7141 = vunpack.c.l.b16 %v2209
    %v7142 = vunpack.c.l.b16 %v2210
    %v7143 = vunpack.c.l.b16 %v2211
    %v7144 = vunpack.c.l.b16 %v2212
    %v7145 = vunpack.c.l.b16 %v2213
    %v7146 = vunpack.c.l.b16 %v2214
    %v7147 = vunpack.c.l.b16 %v2215
    %v7148 = vunpack.c.l.b16 %v2216
    %v7149 = vunpack.c.l.b16 %v2217
    %v7150 = vunpack.c.l.b16 %v2218
    %v7151 = vunpack.c.l.b16 %v2219
    %v7152 = vunpack.c.l.b16 %v2220
    %v7153 = vunpack.c.l.b16 %v2221
    %v7154 = vunpack.c.l.b16 %v2222
    %v7155 = vunpack.c.l.b16 %v2223
    %v7156 = vunpack.c.l.b16 %v2224
    %v7157 = vunpack.c.l.b16 %v2225
    %v7158 = vunpack.c.l.b16 %v2226
    %v7159 = vunpack.c.l.b16 %v2227
    %v7160 = vunpack.c.l.b16 %v2228
    %v7161 = vunpack.c.l.b16 %v2229
    %v7162 = vunpack.c.l.b16 %v2230
    %v7163 = vunpack.c.l.b16 %v2231
    %v7164 = vunpack.c.l.b16 %v2232
    %v7165 = vunpack.c.l.b16 %v2233
    %v7166 = vunpack.c.l.b16 %v2234
    %v7167 = vunpack.c.l.b16 %v2235
    %v7168 = vunpack.c.l.b16 %v2236
    %v7169 = vunpack.c.l.b16 %v2237
    %v7170 = vunpack.c.l.b16 %v2238
    %v7171 = vunpack.c.l.b16 %v2239
    %v7172 = vunpack.c.l.b16 %v2240
    %v7173 = vunpack.c.l.b16 %v2241
    %v7174 = vunpack.c.l.b16 %v2242
    %v7175 = vunpack.c.l.b16 %v2243
    %v7176 = vunpack.c.l.b16 %v2244
    %v7177 = vunpack.c.l.b16 %v2245
    %v7178 = vunpack.c.l.b16 %v2246
    %v7179 = vunpack.c.l.b16 %v2247
    %v7180 = vunpack.c.l.b16 %v2248
    %v7181 = vunpack.c.l.b16 %v2249
    %v7182 = vunpack.c.l.b16 %v2250
    %v7183 = vunpack.c.l.b16 %v2251
    %v7184 = vunpack.c.l.b16 %v2252
    %v7185 = vunpack.c.l.b16 %v2253
    %v7186 = vunpack.c.l.b16 %v2254
    %v7187 = vunpack.c.l.b16 %v2255
    %v7188 = vunpack.c.l.b16 %v2256
    %v7189 = vunpack.c.l.b16 %v2257
    %v7190 = vunpack.c.l.b16 %v2258
    %v7191 = vunpack.c.l.b16 %v2259
    %v7192 = vunpack.c.l.b16 %v2260
    %v7193 = vunpack.c.l.b16 %v2261
    %v7194 = vunpack.c.l.b16 %v2262
    %v7195 = vunpack.c.l.b16 %v2263
    %v7196 = vunpack.c.l.b16 %v2264
    %v7197 = vunpack.c.l.b16 %v2265
    %v7198 = vunpack.c.l.b16 %v2266
    %v7199 = vunpack.c.l.b16 %v2267
    %v7200 = vunpack.c.l.b16 %v2268
    %v7201 = vunpack.c.l.b16 %v2269
    %v7202 = vunpack.c.l.b16 %v2270
    %v7203 = vunpack.c.l.b16 %v2271
    %v7204 = vunpack.c.l.b16 %v2272
    %v7205 = vunpack.c.l.b16 %v2273
    %v7206 = vunpack.c.l.b16 %v2274
    %v7207 = vunpack.c.l.b16 %v2275
    %v7208 = vunpack.c.l.b16 %v2276
    %v7209 = vunpack.c.l.b16 %v2277
    %v7210 = vunpack.c.l.b16 %v2278
    %v7211 = vunpack.c.l.b16 %v2279
    %v7212 = vunpack.c.l.b16 %v2280
    %v7213 = vunpack.c.l.b16 %v2281
    %v7214 = vunpack.c.l.b16 %v2282
    %v7215 = vunpack.c.l.b16 %v2283
    %v7216 = vunpack.c.l.b16 %v2284
    %v7217 = vunpack.c.l.b16 %v2285
    %v7218 = vunpack.c.l.b16 %v2286
    %v7219 = vunpack.c.l.b16 %v2287
    %v7220 = vunpack.c.l.b16 %v2288
    %v7221 = vunpack.c.l.b16 %v2289
    %v7222 = vunpack.c.l.b16 %v2290
    %v7223 = vunpack.c.l.b16 %v2291
    %v7224 = vunpack.c.l.b16 %v2292
    %v7225 = vunpack.c.l.b16 %v2293
    %v7226 = vunpack.c.l.b16 %v2294
    %v7227 = vunpack.c.l.b16 %v2295
    %v7228 = vunpack.c.l.b16 %v2296
    %v7229 = vunpack.c.l.b16 %v2297
    %v7230 = vunpack.c.l.b16 %v2298
    %v7231 = vunpack.c.l.b16 %v2299
    %v7232 = vunpack.c.l.b16 %v2300
    %v7233 = vunpack.c.l.b16 %v2301
    %v7234 = vunpack.c.l.b16 %v2302
    %v7235 = vunpack.c.l.b16 %v2303
    %v7236 = vunpack.c.l.b16 %v2304
    %v7237 = vunpack.c.l.b16 %v2305
    %v7238 = vunpack.c.l.b16 %v2306
    %v7239 = vunpack.c.l.b16 %v2307
    %v7240 = vunpack.c.l.b16 %v2308
    %v7241 = vunpack.c.l.b16 %v2309
    %v7242 = vunpack.c.l.b16 %v2310
    %v7243 = vunpack.c.l.b16 %v2311
    %v7244 = vunpack.c.l.b16 %v2312
    %v7245 = vunpack.c.l.b16 %v2313
    %v7246 = vunpack.c.l.b16 %v2314
    %v7247 = vunpack.c.l.b16 %v2315
    %v7248 = vunpack.c.l.b16 %v2316
    %v7249 = vunpack.c.l.b16 %v2317
    %v7250 = vunpack.c.l.b16 %v2318
    %v7251 = vunpack.c.l.b16 %v2319
    %v7252 = vunpack.c.l.b16 %v2320
    %v7253 = vunpack.c.l.b16 %v2321
    %v7254 = vunpack.c.l.b16 %v2322
    %v7255 = vunpack.c.l.b16 %v2323
    %v7256 = vunpack.c.l.b16 %v2324
    %v7257 = vunpack.c.l.b16 %v2325
    %v7258 = vunpack.c.l.b16 %v2326
    %v7259 = vunpack.c.l.b16 %v2327
    %v7260 = vunpack.c.l.b16 %v2328
    %v7261 = vunpack.c.l.b16 %v2329
    %v7262 = vunpack.c.l.b16 %v2330
    %v7263 = vunpack.c.l.b16 %v2331
    %v7264 = vunpack.c.l.b16 %v2332
    %v7265 = vunpack.c.l.b16 %v2333
    %v7266 = vunpack.c.l.b16 %v2334
    %v7267 = vunpack.c.l.b16 %v2335
    %v7268 = vunpack.c.l.b16 %v2336
    %v7269 = vunpack.c.l.b16 %v2337
    %v7270 = vunpack.c.l.b16 %v2338
    %v7271 = vunpack.c.l.b16 %v2339
    %v7272 = vunpack.c.l.b16 %v2340
    %v7273 = vunpack.c.l.b16 %v2341
    %v7274 = vunpack.c.l.b16 %v2342
    %v7275 = vunpack.c.l.b16 %v2343
    %v7276 = vunpack.c.l.b16 %v2344
    %v7277 = vunpack.c.l.b16 %v2345
    %v7278 = vunpack.c.l.b16 %v2346
    %v7279 = vunpack.c.l.b16 %v2347
    %v7280 = vunpack.c.l.b16 %v2348
    %v7281 = vunpack.c.l.b16 %v2349
    %v7282 = vunpack.c.l.b16 %v2350
    %v7283 = vunpack.c.l.b16 %v2351
    %v7284 = vunpack.c.l.b16 %v2352
    %v7285 = vunpack.c.l.b16 %v2353
    %v7286 = vunpack.c.l.b16 %v2354
    %v7287 = vunpack.c.l.b16 %v2355
    %v7288 = vunpack.c.l.b16 %v2356
    %v7289 = vunpack.c.l.b16 %v2357
    %v7290 = vunpack.c.l.b16 %v2358
    %v7291 = vunpack.c.l.b16 %v2359
    %v7292 = vunpack.c.l.b16 %v2360
    %v7293 = vunpack.c.l.b16 %v2361
    %v7294 = vunpack.c.l.b16 %v2362
    %v7295 = vunpack.c.l.b16 %v2363
    %v7296 = vunpack.c.l.b16 %v2364
    %v7297 = vunpack.c.l.b16 %v2365
    %v7298 = vunpack.c.l.b16 %v2366
    %v7299 = vunpack.c.l.b16 %v2367
    %v7300 = vunpack.c.l.b16 %v2368
    %v7301 = vunpack.c.l.b16 %v2369
    %v7302 = vunpack.c.l.b16 %v2370
    %v7303 = vunpack.c.l.b16 %v2371
    %v7304 = vunpack.c.l.b16 %v2372
    %v7305 = vunpack.c.l.b16 %v2373
    %v7306 = vunpack.c.l.b16 %v2374
    %v7307 = vunpack.c.l.b16 %v2375
    %v7308 = vunpack.c.l.b16 %v2376
    %v7309 = vunpack.c.l.b16 %v2377
    %v7310 = vunpack.c.l.b16 %v2378
    %v7311 = vunpack.c.l.b16 %v2379
    %v7312 = vunpack.c.l.b16 %v2380
    %v7313 = vunpack.c.l.b16 %v2381
    %v7314 = vunpack.c.l.b16 %v2382
    %v7315 = vunpack.c.l.b16 %v2383
    %v7316 = vunpack.c.l.b16 %v2384
    %v7317 = vunpack.c.l.b16 %v2385
    %v7318 = vunpack.c.l.b16 %v2386
    %v7319 = vunpack.c.l.b16 %v2387
    %v7320 = vunpack.c.l.b16 %v2388
    %v7321 = vunpack.c.l.b16 %v2389
    %v7322 = vunpack.c.l.b16 %v2390
    %v7323 = vunpack.c.l.b16 %v2391
    %v7324 = vunpack.c.l.b16 %v2392
    %v7325 = vunpack.c.l.b16 %v2393
    %v7326 = vunpack.c.l.b16 %v2394
    %v7327 = vunpack.c.l.b16 %v2395
    %v7328 = vunpack.c.l.b16 %v2396
    %v7329 = vunpack.c.l.b16 %v2397
    %v7330 = vunpack.c.l.b16 %v2398
    %v7331 = vunpack.c.l.b16 %v2399
    %v7332 = vunpack.c.l.b16 %v2400
    %v7333 = vunpack.c.l.b16 %v2401
    %v7334 = vunpack.c.l.b16 %v2402
    %v7335 = vunpack.c.l.b16 %v2403
    %v7336 = vunpack.c.l.b16 %v2404
    %v7337 = vunpack.c.l.b16 %v2405
    %v7338 = vunpack.c.l.b16 %v2406
    %v7339 = vunpack.c.l.b16 %v2407
    %v7340 = vunpack.c.l.b16 %v2408
    %v7341 = vunpack.c.l.b16 %v2409
    %v7342 = vunpack.c.l.b16 %v2410
    %v7343 = vunpack.c.l.b16 %v2411
    %v7344 = vunpack.c.l.b16 %v2412
    %v7345 = vunpack.c.l.b16 %v2413
    %v7346 = vunpack.c.l.b16 %v2414
    %v7347 = vunpack.c.l.b16 %v2415
    %v7348 = vunpack.c.l.b16 %v2416
    %v7349 = vunpack.c.l.b16 %v2417
    %v7350 = vunpack.c.l.b16 %v2418
    %v7351 = vunpack.c.l.b16 %v2419
    %v7352 = vunpack.c.l.b16 %v2420
    %v7353 = vunpack.c.l.b16 %v2421
    %v7354 = vunpack.c.l.b16 %v2422
    %v7355 = vunpack.c.l.b16 %v2423
    %v7356 = vunpack.c.l.b16 %v2424
    %v7357 = vunpack.c.l.b16 %v2425
    %v7358 = vunpack.c.l.b16 %v2426
    %v7359 = vunpack.c.l.b16 %v2427
    %v7360 = vunpack.c.l.b16 %v2428
    %v7361 = vunpack.c.l.b16 %v2429
    %v7362 = vunpack.c.l.b16 %v2430
    %v7363 = vunpack.c.l.b16 %v2431
    %v7364 = vunpack.c.l.b16 %v2432
    %v7365 = vunpack.c.l.b16 %v2433
    %v7366 = vunpack.c.l.b16 %v2434
    %v7367 = vunpack.c.l.b16 %v2435
    %v7368 = vunpack.c.l.b16 %v2436
    %v7369 = vunpack.c.l.b16 %v2437
    %v7370 = vunpack.c.l.b16 %v2438
    %v7371 = vunpack.c.l.b16 %v2439
    %v7372 = vunpack.c.l.b16 %v2440
    %v7373 = vunpack.c.l.b16 %v2441
    %v7374 = vunpack.c.l.b16 %v2442
    %v7375 = vunpack.c.l.b16 %v2443
    %v7376 = vunpack.c.l.b16 %v2444
    %v7377 = vunpack.c.l.b16 %v2445
    %v7378 = vunpack.c.l.b16 %v2446
    %v7379 = vunpack.c.l.b16 %v2447
    %v7380 = vunpack.c.l.b16 %v2448
    %v7381 = vunpack.c.l.b16 %v2449
    %v7382 = vunpack.c.l.b16 %v2450
    %v7383 = vunpack.c.l.b16 %v2451
    %v7384 = vunpack.c.l.b16 %v2452
    %v7385 = vunpack.c.l.b16 %v2453
    %v7386 = vunpack.c.l.b16 %v2454
    %v7387 = vunpack.c.l.b16 %v2455
    %v7388 = vunpack.c.l.b16 %v2456
    %v7389 = vunpack.c.l.b16 %v2457
    %v7390 = vunpack.c.l.b16 %v2458
    %v7391 = vunpack.c.l.b16 %v2459
    %v7392 = vunpack.c.l.b16 %v2460
    %v7393 = vunpack.c.l.b16 %v2461
    %v7394 = vunpack.c.l.b16 %v2462
    %v7395 = vunpack.c.l.b16 %v2463
    %v7396 = vunpack.c.l.b16 %v2464
    %v7397 = vunpack.c.l.b16 %v2465
    %v7398 = vunpack.c.l.b16 %v2466
    %v7399 = vunpack.c.l.b16 %v2467
    %v7400 = vunpack.c.l.b16 %v2468
    %v7401 = vunpack.c.l.b16 %v2469
    %v7402 = vunpack.c.l.b16 %v2470
    %v7403 = vunpack.c.l.b16 %v2471
    %v7404 = vunpack.c.l.b16 %v2472
    %v7405 = vunpack.c.l.b16 %v2473
    %v7406 = vunpack.c.l.b16 %v2474
    %v7407 = vunpack.c.l.b16 %v2475
    %v7408 = vunpack.c.l.b16 %v2476
    %v7409 = vunpack.c.l.b16 %v2477
    %v7410 = vunpack.c.l.b16 %v2478
    %v7411 = vunpack.c.l.b16 %v2479
    %v7412 = vunpack.c.l.b16 %v2480
    %v7413 = vunpack.c.l.b16 %v2481
    %v7414 = vunpack.c.l.b16 %v2482
    %v7415 = vunpack.c.l.b16 %v2483
    %v7416 = vunpack.c.l.b16 %v2484
    %v7417 = vunpack.c.l.b16 %v2485
    %v7418 = vunpack.c.l.b16 %v2486
    %v7419 = vunpack.c.l.b16 %v2487
    %v7420 = vunpack.c.l.b16 %v2488
    %v7421 = vunpack.c.l.b16 %v2489
    %v7422 = vunpack.c.l.b16 %v2490
    %v7423 = vunpack.c.l.b16 %v2491
    %v7424 = vunpack.c.l.b16 %v2492
    %v7425 = vunpack.c.l.b16 %v2493
    %v7426 = vunpack.c.l.b16 %v2494
    %v7427 = vunpack.c.l.b16 %v2495
    %v7428 = vunpack.c.l.b16 %v2496
    %v7429 = vunpack.c.l.b16 %v2497
    %v7430 = vunpack.c.l.b16 %v2498
    %v7431 = vunpack.c.l.b16 %v2499
    %v7432 = vunpack.c.l.b16 %v2500
    %v7433 = vunpack.c.l.b16 %v2501
    %v7434 = vunpack.c.l.b16 %v2502
    %v7435 = vunpack.c.l.b16 %v2503
    %v7436 = vunpack.c.l.b16 %v2504
    %v7437 = vunpack.c.l.b16 %v2505
    %v7438 = vunpack.c.l.b16 %v2506
    %v7439 = vunpack.c.l.b16 %v2507
    %v7440 = vunpack.c.l.b16 %v2508
    %v7441 = vunpack.c.l.b16 %v2509
    %v7442 = vunpack.c.l.b16 %v2510
    %v7443 = vunpack.c.l.b16 %v2511
    %v7444 = vunpack.c.l.b16 %v2512
    %v7445 = vunpack.c.l.b16 %v2513
    %v7446 = vunpack.c.l.b16 %v2514
    %v7447 = vunpack.c.l.b16 %v2515
    %v7448 = vunpack.c.l.b16 %v2516
    %v7449 = vunpack.c.l.b16 %v2517
    %v7450 = vunpack.c.l.b16 %v2518
    %v7451 = vunpack.c.l.b16 %v2519
    %v7452 = vunpack.c.l.b16 %v2520
    %v7453 = vunpack.c.l.b16 %v2521
    %v7454 = vunpack.c.l.b16 %v2522
    %v7455 = vunpack.c.l.b16 %v2523
    %v7456 = vunpack.c.l.b16 %v2524
    %v7457 = vunpack.c.l.b16 %v2525
    %v7458 = vunpack.c.l.b16 %v2526
    %v7459 = vunpack.c.l.b16 %v2527
    %v7460 = vunpack.c.l.b16 %v2528
    %v7461 = vunpack.c.l.b16 %v2529
    %v7462 = vunpack.c.l.b16 %v2530
    %v7463 = vunpack.c.l.b16 %v2531
    %v7464 = vunpack.c.l.b16 %v2532
    %v7465 = vunpack.c.l.b16 %v2533
    %v7466 = vunpack.c.l.b16 %v2534
    %v7467 = vunpack.c.l.b16 %v2535
    %v7468 = vunpack.c.l.b16 %v2536
    %v7469 = vunpack.c.l.b16 %v2537
    %v7470 = vunpack.c.l.b16 %v2538
    %v7471 = vunpack.c.l.b16 %v2539
    %v7472 = vunpack.c.l.b16 %v2540
    %v7473 = vunpack.c.l.b16 %v2541
    %v7474 = vunpack.c.l.b16 %v2542
    %v7475 = vunpack.c.l.b16 %v2543
    %v7476 = vunpack.c.l.b16 %v2544
    %v7477 = vunpack.c.l.b16 %v2545
    %v7478 = vunpack.c.l.b16 %v2546
    %v7479 = vunpack.c.l.b16 %v2547
    %v7480 = vunpack.c.l.b16 %v2548
    %v7481 = vunpack.c.l.b16 %v2549
    %v7482 = vunpack.c.l.b16 %v2550
    %v7483 = vunpack.c.l.b16 %v2551
    %v7484 = vunpack.c.l.b16 %v2552
    %v7485 = vunpack.c.l.b16 %v2553
    %v7486 = vunpack.c.l.b16 %v2554
    %v7487 = vunpack.c.l.b16 %v2555
    %v7488 = vunpack.c.l.b16 %v2556
    %v7489 = vunpack.c.l.b16 %v2557
    %v7490 = vunpack.c.l.b16 %v2558
    %v7491 = vunpack.c.l.b16 %v2559
    %v7492 = vunpack.c.l.b16 %v2560
    %v7493 = vunpack.c.l.b16 %v2561
    %v7494 = vunpack.c.l.b16 %v2562
    %v7495 = vunpack.c.l.b16 %v2563
    %v7496 = vunpack.c.l.b16 %v2564
    %v7497 = vunpack.c.l.b16 %v2565
    %v7498 = vunpack.c.l.b16 %v2566
    %v7499 = vunpack.c.l.b16 %v2567
    %v7500 = vunpack.c.l.b16 %v2568
    %v7501 = vunpack.c.l.b16 %v2569
    %v7502 = vunpack.c.l.b16 %v2570
    %v7503 = vunpack.c.l.b16 %v2571
    %v7504 = vunpack.c.l.b16 %v2572
    %v7505 = vunpack.c.l.b16 %v2573
    %v7506 = vunpack.c.l.b16 %v2574
    %v7507 = vunpack.c.l.b16 %v2575
    %v7508 = vunpack.c.l.b16 %v2576
    %v7509 = vunpack.c.l.b16 %v2577
    %v7510 = vunpack.c.l.b16 %v2578
    %v7511 = vunpack.c.l.b16 %v2579
    %v7512 = vunpack.c.l.b16 %v2580
    %v7513 = vunpack.c.l.b16 %v2581
    %v7514 = vunpack.c.l.b16 %v2582
    %v7515 = vunpack.c.l.b16 %v2583
    %v7516 = vunpack.c.l.b16 %v2584
    %v7517 = vunpack.c.l.b16 %v2585
    %v7518 = vunpack.c.l.b16 %v2586
    %v7519 = vunpack.c.l.b16 %v2587
    %v7520 = vunpack.c.l.b16 %v2588
    %v7521 = vunpack.c.l.b16 %v2589
    %v7522 = vunpack.c.l.b16 %v2590
    %v7523 = vunpack.c.l.b16 %v2591
    %v7524 = vunpack.c.l.b16 %v2592
    %v7525 = vunpack.c.l.b16 %v2593
    %v7526 = vunpack.c.l.b16 %v2594
    %v7527 = vunpack.c.l.b16 %v2595
    %v7528 = vunpack.c.l.b16 %v2596
    %v7529 = vunpack.c.l.b16 %v2597
    %v7530 = vunpack.c.l.b16 %v2598
    %v7531 = vunpack.c.l.b16 %v2599
    %v7532 = vunpack.c.l.b16 %v2600
    %v7533 = vunpack.c.l.b16 %v2601
    %v7534 = vunpack.c.l.b16 %v2602
    %v7535 = vunpack.c.l.b16 %v2603
    %v7536 = vunpack.c.l.b16 %v2604
    %v7537 = vunpack.c.l.b16 %v2605
    %v7538 = vunpack.c.l.b16 %v2606
    %v7539 = vunpack.c.l.b16 %v2607
    %v7540 = vunpack.c.l.b16 %v2608
    %v7541 = vunpack.c.l.b16 %v2609
    %v7542 = vunpack.c.l.b16 %v2610
    %v7543 = vunpack.c.l.b16 %v2611
    %v7544 = vunpack.c.l.b16 %v2612
    %v7545 = vunpack.c.l.b16 %v2613
    %v7546 = vunpack.c.l.b16 %v2614
    %v7547 = vunpack.c.l.b16 %v2615
    %v7548 = vunpack.c.l.b16 %v2616
    %v7549 = vunpack.c.l.b16 %v2617
    %v7550 = vunpack.c.l.b16 %v2618
    %v7551 = vunpack.c.l.b16 %v2619
    %v7552 = vunpack.c.l.b16 %v2620
    %v7553 = vunpack.c.l.b16 %v2621
    %v7554 = vunpack.c.l.b16 %v2622
    %v7555 = vunpack.c.l.b16 %v2623
    %v7556 = vunpack.c.l.b16 %v2624
    %v7557 = vunpack.c.l.b16 %v2625
    %v7558 = vunpack.c.l.b16 %v2626
    %v7559 = vunpack.c.l.b16 %v2627
    %v7560 = vunpack.c.l.b16 %v2628
    %v7561 = vunpack.c.l.b16 %v2629
    %v7562 = vunpack.c.l.b16 %v2630
    %v7563 = vunpack.c.l.b16 %v2631
    %v7564 = vunpack.c.l.b16 %v2632
    %v7565 = vunpack.c.l.b16 %v2633
    %v7566 = vunpack.c.l.b16 %v2634
    %v7567 = vunpack.c.l.b16 %v2635
    %v7568 = vunpack.c.l.b16 %v2636
    %v7569 = vunpack.c.l.b16 %v2637
    %v7570 = vunpack.c.l.b16 %v2638
    %v7571 = vunpack.c.l.b16 %v2639
    %v7572 = vunpack.c.l.b16 %v2640
    %v7573 = vunpack.c.l.b16 %v2641
    %v7574 = vunpack.c.l.b16 %v2642
    %v7575 = vunpack.c.l.b16 %v2643
    %v7576 = vunpack.c.l.b16 %v2644
    %v7577 = vunpack.c.l.b16 %v2645
    %v7578 = vunpack.c.l.b16 %v2646
    %v7579 = vunpack.c.l.b16 %v2647
    %v7580 = vunpack.c.l.b16 %v2648
    %v7581 = vunpack.c.l.b16 %v2649
    %v7582 = vunpack.c.l.b16 %v2650
    %v7583 = vunpack.c.l.b16 %v2651
    %v7584 = vunpack.c.l.b16 %v2652
    %v7585 = vunpack.c.l.b16 %v2653
    %v7586 = vunpack.c.l.b16 %v2654
    %v7587 = vunpack.c.l.b16 %v2655
    %v7588 = vunpack.c.l.b16 %v2656
    %v7589 = vunpack.c.l.b16 %v2657
    %v7590 = vunpack.c.l.b16 %v2658
    %v7591 = vunpack.c.l.b16 %v2659
    %v7592 = vunpack.c.l.b16 %v2660
    %v7593 = vunpack.c.l.b16 %v2661
    %v7594 = vunpack.c.l.b16 %v2662
    %v7595 = vunpack.c.l.b16 %v2663
    %v7596 = vunpack.c.l.b16 %v2664
    %v7597 = vunpack.c.l.b16 %v2665
    %v7598 = vunpack.c.l.b16 %v2666
    %v7599 = vunpack.c.l.b16 %v2667
    %v7600 = vunpack.c.l.b16 %v2668
    %v7601 = vunpack.c.l.b16 %v2669
    %v7602 = vunpack.c.l.b16 %v2670
    %v7603 = vunpack.c.l.b16 %v2671
    %v7604 = vunpack.c.l.b16 %v2672
    %v7605 = vunpack.c.l.b16 %v2673
    %v7606 = vunpack.c.l.b16 %v2674
    %v7607 = vunpack.c.l.b16 %v2675
    %v7608 = vunpack.c.l.b16 %v2676
    %v7609 = vunpack.c.l.b16 %v2677
    %v7610 = vunpack.c.l.b16 %v2678
    %v7611 = vunpack.c.l.b16 %v2679
    %v7612 = vunpack.c.l.b16 %v2680
    %v7613 = vunpack.c.l.b16 %v2681
    %v7614 = vunpack.c.l.b16 %v2682
    %v7615 = vunpack.c.l.b16 %v2683
    %v7616 = vunpack.c.l.b16 %v2684
    %v7617 = vunpack.c.l.b16 %v2685
    %v7618 = vunpack.c.l.b16 %v2686
    %v7619 = vunpack.c.l.b16 %v2687
    %v7620 = vunpack.c.l.b16 %v2688
    %v7621 = vunpack.c.l.b16 %v2689
    %v7622 = vunpack.c.l.b16 %v2690
    %v7623 = vunpack.c.l.b16 %v2691
    %v7624 = vunpack.c.l.b16 %v2692
    %v7625 = vunpack.c.l.b16 %v2693
    %v7626 = vunpack.c.l.b16 %v2694
    %v7627 = vunpack.c.l.b16 %v2695
    %v7628 = vunpack.c.l.b16 %v2696
    %v7629 = vunpack.c.l.b16 %v2697
    %v7630 = vunpack.c.l.b16 %v2698
    %v7631 = vunpack.c.l.b16 %v2699
    %v7632 = vunpack.c.l.b16 %v2700
    %v7633 = vunpack.c.l.b16 %v2701
    %v7634 = vunpack.c.l.b16 %v2702
    %v7635 = vunpack.c.l.b16 %v2703
    %v7636 = vunpack.c.l.b16 %v2704
    %v7637 = vunpack.c.l.b16 %v2705
    %v7638 = vunpack.c.l.b16 %v2706
    %v7639 = vunpack.c.l.b16 %v2707
    %v7640 = vunpack.c.l.b16 %v2708
    %v7641 = vunpack.c.l.b16 %v2709
    %v7642 = vunpack.c.l.b16 %v2710
    %v7643 = vunpack.c.l.b16 %v2711
    %v7644 = vunpack.c.l.b16 %v2712
    %v7645 = vunpack.c.l.b16 %v2713
    %v7646 = vunpack.c.l.b16 %v2714
    %v7647 = vunpack.c.l.b16 %v2715
    %v7648 = vunpack.c.l.b16 %v2716
    %v7649 = vunpack.c.l.b16 %v2717
    %v7650 = vunpack.c.l.b16 %v2718
    %v7651 = vunpack.c.l.b16 %v2719
    %v7652 = vunpack.c.l.b16 %v2720
    %v7653 = vunpack.c.l.b16 %v2721
    %v7654 = vunpack.c.l.b16 %v2722
    %v7655 = vunpack.c.l.b16 %v2723
    %v7656 = vunpack.c.l.b16 %v2724
    %v7657 = vunpack.c.l.b16 %v2725
    %v7658 = vunpack.c.l.b16 %v2726
    %v7659 = vunpack.c.l.b16 %v2727
    %v7660 = vunpack.c.l.b16 %v2728
    %v7661 = vunpack.c.l.b16 %v2729
    %v7662 = vunpack.c.l.b16 %v2730
    %v7663 = vunpack.c.l.b16 %v2731
    %v7664 = vunpack.c.l.b16 %v2732
    %v7665 = vunpack.c.l.b16 %v2733
    %v7666 = vunpack.c.l.b16 %v2734
    %v7667 = vunpack.c.l.b16 %v2735
    %v7668 = vunpack.c.l.b16 %v2736
    %v7669 = vunpack.c.l.b16 %v2737
    %v7670 = vunpack.c.l.b16 %v2738
    %v7671 = vunpack.c.l.b16 %v2739
    %v7672 = vunpack.c.l.b16 %v2740
    %v7673 = vunpack.c.l.b16 %v2741
    %v7674 = vunpack.c.l.b16 %v2742
    %v7675 = vunpack.c.l.b16 %v2743
    %v7676 = vunpack.c.l.b16 %v2744
    %v7677 = vunpack.c.l.b16 %v2745
    %v7678 = vunpack.c.l.b16 %v2746
    %v7679 = vunpack.c.l.b16 %v2747
    %v7680 = vunpack.c.l.b16 %v2748
    %v7681 = vunpack.c.l.b16 %v2749
    %v7682 = vunpack.c.l.b16 %v2750
    %v7683 = vunpack.c.l.b16 %v2751
    %v7684 = vunpack.c.l.b16 %v2752
    %v7685 = vunpack.c.l.b16 %v2753
    %v7686 = vunpack.c.l.b16 %v2754
    %v7687 = vunpack.c.l.b16 %v2755
    %v7688 = vunpack.c.l.b16 %v2756
    %v7689 = vunpack.c.l.b16 %v2757
    %v7690 = vunpack.c.l.b16 %v2758
    %v7691 = vunpack.c.l.b16 %v2759
    %v7692 = vunpack.c.l.b16 %v2760
    %v7693 = vunpack.c.l.b16 %v2761
    %v7694 = vunpack.c.l.b16 %v2762
    %v7695 = vunpack.c.l.b16 %v2763
    %v7696 = vunpack.c.l.b16 %v2764
    %v7697 = vunpack.c.l.b16 %v2765
    %v7698 = vunpack.c.l.b16 %v2766
    %v7699 = vunpack.c.l.b16 %v2767
    %v7700 = vunpack.c.l.b16 %v2768
    %v7701 = vunpack.c.l.b16 %v2769
    %v7702 = vunpack.c.l.b16 %v2770
    %v7703 = vunpack.c.l.b16 %v2771
    %v7704 = vunpack.c.l.b16 %v2772
    %v7705 = vunpack.c.l.b16 %v2773
    %v7706 = vunpack.c.l.b16 %v2774
    %v7707 = vunpack.c.l.b16 %v2775
    %v7708 = vunpack.c.l.b16 %v2776
    %v7709 = vunpack.c.l.b16 %v2777
    %v7710 = vunpack.c.l.b16 %v2778
    %v7711 = vunpack.c.l.b16 %v2779
    %v7712 = vunpack.c.l.b16 %v2780
    %v7713 = vunpack.c.l.b16 %v2781
    %v7714 = vunpack.c.l.b16 %v2782
    %v7715 = vunpack.c.l.b16 %v2783
    %v7716 = vunpack.c.l.b16 %v2784
    %v7717 = vunpack.c.l.b16 %v2785
    %v7718 = vunpack.c.l.b16 %v2786
    %v7719 = vunpack.c.l.b16 %v2787
    %v7720 = vunpack.c.l.b16 %v2788
    %v7721 = vunpack.c.l.b16 %v2789
    %v7722 = vunpack.c.l.b16 %v2790
    %v7723 = vunpack.c.l.b16 %v2791
    %v7724 = vunpack.c.l.b16 %v2792
    %v7725 = vunpack.c.l.b16 %v2793
    %v7726 = vunpack.c.l.b16 %v2794
    %v7727 = vunpack.c.l.b16 %v2795
    %v7728 = vunpack.c.l.b16 %v2796
    %v7729 = vunpack.c.l.b16 %v2797
    %v7730 = vunpack.c.l.b16 %v2798
    %v7731 = vunpack.c.l.b16 %v2799
    %v7732 = vunpack.c.l.b16 %v2800
    %v7733 = vunpack.c.l.b16 %v2801
    %v7734 = vunpack.c.l.b16 %v2802
    %v7735 = vunpack.c.l.b16 %v2803
    %v7736 = vunpack.c.l.b16 %v2804
    %v7737 = vunpack.c.l.b16 %v2805
    %v7738 = vunpack.c.l.b16 %v2806
    %v7739 = vunpack.c.l.b16 %v2807
    %v7740 = vunpack.c.l.b16 %v2808
    %v7741 = vunpack.c.l.b16 %v2809
    %v7742 = vunpack.c.l.b16 %v2810
    %v7743 = vunpack.c.l.b16 %v2811
    %v7744 = vunpack.c.l.b16 %v2812
    %v7745 = vunpack.c.l.b16 %v2813
    %v7746 = vunpack.c.l.b16 %v2814
    %v7747 = vunpack.c.l.b16 %v2815
    %v7748 = vunpack.c.l.b16 %v2816
    %v7749 = vunpack.c.l.b16 %v2817
    %v7750 = vunpack.c.l.b16 %v2818
    %v7751 = vunpack.c.l.b16 %v2819
    %v7752 = vunpack.c.l.b16 %v2820
    %v7753 = vunpack.c.l.b16 %v2821
    %v7754 = vunpack.c.l.b16 %v2822
    %v7755 = vunpack.c.l.b16 %v2823
    %v7756 = vunpack.c.l.b16 %v2824
    %v7757 = vunpack.c.l.b16 %v2825
    %v7758 = vunpack.c.l.b16 %v2826
    %v7759 = vunpack.c.l.b16 %v2827
    %v7760 = vunpack.c.l.b16 %v2828
    %v7761 = vunpack.c.l.b16 %v2829
    %v7762 = vunpack.c.l.b16 %v2830
    %v7763 = vunpack.c.l.b16 %v2831
    %v7764 = vunpack.c.l.b16 %v2832
    %v7765 = vunpack.c.l.b16 %v2833
    %v7766 = vunpack.c.l.b16 %v2834
    %v7767 = vunpack.c.l.b16 %v2835
    %v7768 = vunpack.c.l.b16 %v2836
    %v7769 = vunpack.c.l.b16 %v2837
    %v7770 = vunpack.c.l.b16 %v2838
    %v7771 = vunpack.c.l.b16 %v2839
    %v7772 = vunpack.c.l.b16 %v2840
    %v7773 = vunpack.c.l.b16 %v2841
    %v7774 = vunpack.c.l.b16 %v2842
    %v7775 = vunpack.c.l.b16 %v2843
    %v7776 = vunpack.c.l.b16 %v2844
    %v7777 = vunpack.c.l.b16 %v2845
    %v7778 = vunpack.c.l.b16 %v2846
    %v7779 = vunpack.c.l.b16 %v2847
    %v7780 = vunpack.c.l.b16 %v2848
    %v7781 = vunpack.c.l.b16 %v2849
    %v7782 = vunpack.c.l.b16 %v2850
    %v7783 = vunpack.c.l.b16 %v2851
    %v7784 = vunpack.c.l.b16 %v2852
    %v7785 = vunpack.c.l.b16 %v2853
    %v7786 = vunpack.c.l.b16 %v2854
    %v7787 = vunpack.c.l.b16 %v2855
    %v7788 = vunpack.c.l.b16 %v2856
    %v7789 = vunpack.c.l.b16 %v2857
    %v7790 = vunpack.c.l.b16 %v2858
    %v7791 = vunpack.c.l.b16 %v2859
    %v7792 = vunpack.c.l.b16 %v2860
    %v7793 = vunpack.c.l.b16 %v2861
    %v7794 = vunpack.c.l.b16 %v2862
    %v7795 = vunpack.c.l.b16 %v2863
    %v7796 = vunpack.c.l.b16 %v2864
    %v7797 = vunpack.c.l.b16 %v2865
    %v7798 = vunpack.c.l.b16 %v2866
    %v7799 = vunpack.c.l.b16 %v2867
    %v7800 = vunpack.c.l.b16 %v2868
    %v7801 = vunpack.c.l.b16 %v2869
    %v7802 = vunpack.c.l.b16 %v2870
    %v7803 = vunpack.c.l.b16 %v2871
    %v7804 = vunpack.c.l.b16 %v2872
    %v7805 = vunpack.c.l.b16 %v2873
    %v7806 = vunpack.c.l.b16 %v2874
    %v7807 = vunpack.c.l.b16 %v2875
    %v7808 = vunpack.c.l.b16 %v2876
    %v7809 = vunpack.c.l.b16 %v2877
    %v7810 = vunpack.c.l.b16 %v2878
    %v7811 = vunpack.c.l.b16 %v2879
    %v7812 = vunpack.c.l.b16 %v2880
    %v7813 = vunpack.c.l.b16 %v2881
    %v7814 = vunpack.c.l.b16 %v2882
    %v7815 = vunpack.c.l.b16 %v2883
    %v7816 = vunpack.c.l.b16 %v2884
    %v7817 = vunpack.c.l.b16 %v2885
    %v7818 = vunpack.c.l.b16 %v2886
    %v7819 = vunpack.c.l.b16 %v2887
    %v7820 = vunpack.c.l.b16 %v2888
    %v7821 = vunpack.c.l.b16 %v2889
    %v7822 = vunpack.c.l.b16 %v2890
    %v7823 = vunpack.c.l.b16 %v2891
    %v7824 = vunpack.c.l.b16 %v2892
    %v7825 = vunpack.c.l.b16 %v2893
    %v7826 = vunpack.c.l.b16 %v2894
    %v7827 = vunpack.c.l.b16 %v2895
    %v7828 = vunpack.c.l.b16 %v2896
    %v7829 = vunpack.c.l.b16 %v2897
    %v7830 = vunpack.c.l.b16 %v2898
    %v7831 = vunpack.c.l.b16 %v2899
    %v7832 = vunpack.c.l.b16 %v2900
    %v7833 = vunpack.c.l.b16 %v2901
    %v7834 = vunpack.c.l.b16 %v2902
    %v7835 = vunpack.c.l.b16 %v2903
    %v7836 = vunpack.c.l.b16 %v2904
    %v7837 = vunpack.c.l.b16 %v2905
    %v7838 = vunpack.c.l.b16 %v2906
    %v7839 = vunpack.c.l.b16 %v2907
    %v7840 = vunpack.c.l.b16 %v2908
    %v7841 = vunpack.c.l.b16 %v2909
    %v7842 = vunpack.c.l.b16 %v2910
    %v7843 = vunpack.c.l.b16 %v2911
    %v7844 = vunpack.c.l.b16 %v2912
    %v7845 = vunpack.c.l.b16 %v2913
    %v7846 = vunpack.c.l.b16 %v2914
    %v7847 = vunpack.c.l.b16 %v2915
    %v7848 = vunpack.c.l.b16 %v2916
    %v7849 = vunpack.c.l.b16 %v2917
    %v7850 = vunpack.c.l.b16 %v2918
    %v7851 = vunpack.c.l.b16 %v2919
    %v7852 = vunpack.c.l.b16 %v2920
    %v7853 = vunpack.c.l.b16 %v2921
    %v7854 = vunpack.c.l.b16 %v2922
    %v7855 = vunpack.c.l.b16 %v2923
    %v7856 = vunpack.c.l.b16 %v2924
    %v7857 = vunpack.c.l.b16 %v2925
    %v7858 = vunpack.c.l.b16 %v2926
    %v7859 = vunpack.c.l.b16 %v2927
    %v7860 = vunpack.c.l.b16 %v2928
    %v7861 = vunpack.c.l.b16 %v2929
    %v7862 = vunpack.c.l.b16 %v2930
    %v7863 = vunpack.c.l.b16 %v2931
    %v7864 = vunpack.c.l.b16 %v2932
    %v7865 = vunpack.c.l.b16 %v2933
    %v7866 = vunpack.c.l.b16 %v2934
    %v7867 = vunpack.c.l.b16 %v2935
    %v7868 = vunpack.c.l.b16 %v2936
    %v7869 = vunpack.c.l.b16 %v2937
    %v7870 = vunpack.c.l.b16 %v2938
    %v7871 = vunpack.c.l.b16 %v2939
    %v7872 = vunpack.c.l.b16 %v2940
    %v7873 = vunpack.c.l.b16 %v2941
    %v7874 = vunpack.c.l.b16 %v2942
    %v7875 = vunpack.c.l.b16 %v2943
    %v7876 = vunpack.c.l.b16 %v2944
    %v7877 = vunpack.c.l.b16 %v2945
    %v7878 = vunpack.c.l.b16 %v2946
    %v7879 = vunpack.c.l.b16 %v2947
    %v7880 = vunpack.c.l.b16 %v2948
    %v7881 = vunpack.c.l.b16 %v2949
    %v7882 = vunpack.c.l.b16 %v2950
    %v7883 = vunpack.c.l.b16 %v2951
    %v7884 = vunpack.c.l.b16 %v2952
    %v7885 = vunpack.c.l.b16 %v2953
    %v7886 = vunpack.c.l.b16 %v2954
    %v7887 = vunpack.c.l.b16 %v2955
    %v7888 = vunpack.c.l.b16 %v2956
    %v7889 = vunpack.c.l.b16 %v2957
    %v7890 = vunpack.c.l.b16 %v2958
    %v7891 = vunpack.c.l.b16 %v2959
    %v7892 = vunpack.c.l.b16 %v2960
    %v7893 = vunpack.c.l.b16 %v2961
    %v7894 = vunpack.c.l.b16 %v2962
    %v7895 = vunpack.c.l.b16 %v2963
    %v7896 = vunpack.c.l.b16 %v2964
    %v7897 = vunpack.c.l.b16 %v2965
    %v7898 = vunpack.c.l.b16 %v2966
    %v7899 = vunpack.c.l.b16 %v2967
    %v7900 = vunpack.c.l.b16 %v2968
    %v7901 = vunpack.c.l.b16 %v2969
    %v7902 = vunpack.c.l.b16 %v2970
    %v7903 = vunpack.c.l.b16 %v2971
    %v7904 = vunpack.c.l.b16 %v2972
    %v7905 = vunpack.c.l.b16 %v2973
    %v7906 = vunpack.c.l.b16 %v2974
    %v7907 = vunpack.c.l.b16 %v2975
    %v7908 = vunpack.c.l.b16 %v2976
    %v7909 = vunpack.c.l.b16 %v2977
    %v7910 = vunpack.c.l.b16 %v2978
    %v7911 = vunpack.c.l.b16 %v2979
    %v7912 = vunpack.c.l.b16 %v2980
    %v7913 = vunpack.c.l.b16 %v2981
    %v7914 = vunpack.c.l.b16 %v2982
    %v7915 = vunpack.c.l.b16 %v2983
    %v7916 = vunpack.c.l.b16 %v2984
    %v7917 = vunpack.c.l.b16 %v2985
    %v7918 = vunpack.c.l.b16 %v2986
    %v7919 = vunpack.c.l.b16 %v2987
    %v7920 = vunpack.c.l.b16 %v2988
    %v7921 = vunpack.c.l.b16 %v2989
    %v7922 = vunpack.c.l.b16 %v2990
    %v7923 = vunpack.c.l.b16 %v2991
    %v7924 = vunpack.c.l.b16 %v2992
    %v7925 = vunpack.c.l.b16 %v2993
    %v7926 = vunpack.c.l.b16 %v2994
    %v7927 = vunpack.c.l.b16 %v2995
    %v7928 = vunpack.c.l.b16 %v2996
    %v7929 = vunpack.c.l.b16 %v2997
    %v7930 = vunpack.c.l.b16 %v2998
    %v7931 = vunpack.c.l.b16 %v2999
    %v7932 = vunpack.c.l.b16 %v3000
    %v7933 = vunpack.c.l.b16 %v3001
    %v7934 = vunpack.c.l.b16 %v3002
    %v7935 = vunpack.c.l.b16 %v3003
    %v7936 = vunpack.c.l.b16 %v3004
    %v7937 = vunpack.c.l.b16 %v3005
    %v7938 = vunpack.c.l.b16 %v3006
    %v7939 = vunpack.c.l.b16 %v3007
    %v7940 = vunpack.c.l.b16 %v3008
    %v7941 = vunpack.c.l.b16 %v3009
    %v7942 = vunpack.c.l.b16 %v3010
    %v7943 = vunpack.c.l.b16 %v3011
    %v7944 = vunpack.c.l.b16 %v3012
    %v7945 = vunpack.c.l.b16 %v3013
    %v7946 = vunpack.c.l.b16 %v3014
    %v7947 = vunpack.c.l.b16 %v3015
    %v7948 = vunpack.c.l.b16 %v3016
    %v7949 = vunpack.c.l.b16 %v3017
    %v7950 = vunpack.c.l.b16 %v3018
    %v7951 = vunpack.c.l.b16 %v3019
    %v7952 = vunpack.c.l.b16 %v3020
    %v7953 = vunpack.c.l.b16 %v3021
    %v7954 = vunpack.c.l.b16 %v3022
    %v7955 = vunpack.c.l.b16 %v3023
    %v7956 = vunpack.c.l.b16 %v3024
    %v7957 = vunpack.c.l.b16 %v3025
    %v7958 = vunpack.c.l.b16 %v3026
    %v7959 = vunpack.c.l.b16 %v3027
    %v7960 = vunpack.c.l.b16 %v3028
    %v7961 = vunpack.c.l.b16 %v3029
    %v7962 = vunpack.c.l.b16 %v3030
    %v7963 = vunpack.c.l.b16 %v3031
    %v7964 = vunpack.c.l.b16 %v3032
    %v7965 = vunpack.c.l.b16 %v3033
    %v7966 = vunpack.c.l.b16 %v3034
    %v7967 = vunpack.c.l.b16 %v3035
    %v7968 = vunpack.c.l.b16 %v3036
    %v7969 = vunpack.c.l.b16 %v3037
    %v7970 = vunpack.c.l.b16 %v3038
    %v7971 = vunpack.c.l.b16 %v3039
    %v7972 = vunpack.c.l.b16 %v3040
    %v7973 = vunpack.c.l.b16 %v3041
    %v7974 = vunpack.c.l.b16 %v3042
    %v7975 = vunpack.c.l.b16 %v3043
    %v7976 = vunpack.c.l.b16 %v3044
    %v7977 = vunpack.c.l.b16 %v3045
    %v7978 = vunpack.c.l.b16 %v3046
    %v7979 = vunpack.c.l.b16 %v3047
    %v7980 = vunpack.c.l.b16 %v3048
    %v7981 = vunpack.c.l.b16 %v3049
    %v7982 = vunpack.c.l.b16 %v3050
    %v7983 = vunpack.c.l.b16 %v3051
    %v7984 = vunpack.c.l.b16 %v3052
    %v7985 = vunpack.c.l.b16 %v3053
    %v7986 = vunpack.c.l.b16 %v3054
    %v7987 = vunpack.c.l.b16 %v3055
    %v7988 = vunpack.c.l.b16 %v3056
    %v7989 = vunpack.c.l.b16 %v3057
    %v7990 = vunpack.c.l.b16 %v3058
    %v7991 = vpack.c.b16 %v5528, %v5527
    %v7992 = vpack.c.b16 %v5530, %v5529
    %v7993 = vpack.c.b16 %v5532, %v5531
    %v7994 = vpack.c.b16 %v5534, %v5533
    %v7995 = vpack.c.b16 %v5536, %v5535
    %v7996 = vpack.c.b16 %v5538, %v5537
    %v7997 = vpack.c.b16 %v5540, %v5539
    %v7998 = vpack.c.b16 %v5542, %v5541
    %v7999 = vpack.c.b16 %v5544, %v5543
    %v8000 = vpack.c.b16 %v5546, %v5545
    %v8001 = vpack.c.b16 %v5548, %v5547
    %v8002 = vpack.c.b16 %v5550, %v5549
    %v8003 = vpack.c.b16 %v5552, %v5551
    %v8004 = vpack.c.b16 %v5554, %v5553
    %v8005 = vpack.c.b16 %v5556, %v5555
    %v8006 = vpack.c.b16 %v5558, %v5557
    %v8007 = vpack.c.b16 %v5560, %v5559
    %v8008 = vpack.c.b16 %v5562, %v5561
    %v8009 = vpack.c.b16 %v5564, %v5563
    %v8010 = vpack.c.b16 %v5566, %v5565
    %v8011 = vpack.c.b16 %v5568, %v5567
    %v8012 = vpack.c.b16 %v5570, %v5569
    %v8013 = vpack.c.b16 %v5572, %v5571
    %v8014 = vpack.c.b16 %v5574, %v5573
    %v8015 = vpack.c.b16 %v5576, %v5575
    %v8016 = vpack.c.b16 %v5578, %v5577
    %v8017 = vpack.c.b16 %v5580, %v5579
    %v8018 = vpack.c.b16 %v5582, %v5581
    %v8019 = vpack.c.b16 %v5584, %v5583
    %v8020 = vpack.c.b16 %v5586, %v5585
    %v8021 = vpack.c.b16 %v5588, %v5587
    %v8022 = vpack.c.b16 %v5590, %v5589
    %v8023 = vpack.c.b16 %v5592, %v5591
    %v8024 = vpack.c.b16 %v5594, %v5593
    %v8025 = vpack.c.b16 %v5596, %v5595
    %v8026 = vpack.c.b16 %v5598, %v5597
    %v8027 = vpack.c.b16 %v5600, %v5599
    %v8028 = vpack.c.b16 %v5602, %v5601
    %v8029 = vpack.c.b16 %v5604, %v5603
    %v8030 = vpack.c.b16 %v5606, %v5605
    %v8031 = vpack.c.b16 %v5608, %v5607
    %v8032 = vpack.c.b16 %v5610, %v5609
    %v8033 = vpack.c.b16 %v5612, %v5611
    %v8034 = vpack.c.b16 %v5614, %v5613
    %v8035 = vpack.c.b16 %v5616, %v5615
    %v8036 = vpack.c.b16 %v5618, %v5617
    %v8037 = vpack.c.b16 %v5620, %v5619
    %v8038 = vpack.c.b16 %v5622, %v5621
    %v8039 = vpack.c.b16 %v5624, %v5623
    %v8040 = vpack.c.b16 %v5626, %v5625
    %v8041 = vpack.c.b16 %v5628, %v5627
    %v8042 = vpack.c.b16 %v5630, %v5629
    %v8043 = vpack.c.b16 %v5632, %v5631
    %v8044 = vpack.c.b16 %v5634, %v5633
    %v8045 = vpack.c.b16 %v5636, %v5635
    %v8046 = vpack.c.b16 %v5638, %v5637
    %v8047 = vpack.c.b16 %v5640, %v5639
    %v8048 = vpack.c.b16 %v5642, %v5641
    %v8049 = vpack.c.b16 %v5644, %v5643
    %v8050 = vpack.c.b16 %v5646, %v5645
    %v8051 = vpack.c.b16 %v5648, %v5647
    %v8052 = vpack.c.b16 %v5650, %v5649
    %v8053 = vpack.c.b16 %v5652, %v5651
    %v8054 = vpack.c.b16 %v5654, %v5653
    %v8055 = vpack.c.b16 %v5656, %v5655
    %v8056 = vpack.c.b16 %v5658, %v5657
    %v8057 = vpack.c.b16 %v5660, %v5659
    %v8058 = vpack.c.b16 %v5662, %v5661
    %v8059 = vpack.c.b16 %v5664, %v5663
    %v8060 = vpack.c.b16 %v5666, %v5665
    %v8061 = vpack.c.b16 %v5668, %v5667
    %v8062 = vpack.c.b16 %v5670, %v5669
    %v8063 = vpack.c.b16 %v5672, %v5671
    %v8064 = vpack.c.b16 %v5674, %v5673
    %v8065 = vpack.c.b16 %v5676, %v5675
    %v8066 = vpack.c.b16 %v5678, %v5677
    %v8067 = vpack.c.b16 %v5680, %v5679
    %v8068 = vpack.c.b16 %v5682, %v5681
    %v8069 = vpack.c.b16 %v5684, %v5683
    %v8070 = vpack.c.b16 %v5686, %v5685
    %v8071 = vpack.c.b16 %v5688, %v5687
    %v8072 = vpack.c.b16 %v5690, %v5689
    %v8073 = vpack.c.b16 %v5692, %v5691
    %v8074 = vpack.c.b16 %v5694, %v5693
    %v8075 = vpack.c.b16 %v5696, %v5695
    %v8076 = vpack.c.b16 %v5698, %v5697
    %v8077 = vpack.c.b16 %v5700, %v5699
    %v8078 = vpack.c.b16 %v5702, %v5701
    %v8079 = vpack.c.b16 %v5704, %v5703
    %v8080 = vpack.c.b16 %v5706, %v5705
    %v8081 = vpack.c.b16 %v5708, %v5707
    %v8082 = vpack.c.b16 %v5710, %v5709
    %v8083 = vpack.c.b16 %v5712, %v5711
    %v8084 = vpack.c.b16 %v5714, %v5713
    %v8085 = vpack.c.b16 %v5716, %v5715
    %v8086 = vpack.c.b16 %v5718, %v5717
    %v8087 = vpack.c.b16 %v5720, %v5719
    %v8088 = vpack.c.b16 %v5722, %v5721
    %v8089 = vpack.c.b16 %v5724, %v5723
    %v8090 = vpack.c.b16 %v5726, %v5725
    %v8091 = vpack.c.b16 %v5728, %v5727
    %v8092 = vpack.c.b16 %v5730, %v5729
    %v8093 = vpack.c.b16 %v5732, %v5731
    %v8094 = vpack.c.b16 %v5734, %v5733
    %v8095 = vpack.c.b16 %v5736, %v5735
    %v8096 = vpack.c.b16 %v5738, %v5737
    %v8097 = vpack.c.b16 %v5740, %v5739
    %v8098 = vpack.c.b16 %v5742, %v5741
    %v8099 = vpack.c.b16 %v5744, %v5743
    %v8100 = vpack.c.b16 %v5746, %v5745
    %v8101 = vpack.c.b16 %v5748, %v5747
    %v8102 = vpack.c.b16 %v5750, %v5749
    %v8103 = vpack.c.b16 %v5752, %v5751
    %v8104 = vpack.c.b16 %v5754, %v5753
    %v8105 = vpack.c.b16 %v5756, %v5755
    %v8106 = vpack.c.b16 %v5758, %v5757
    %v8107 = vpack.c.b16 %v5760, %v5759
    %v8108 = vpack.c.b16 %v5762, %v5761
    %v8109 = vpack.c.b16 %v5764, %v5763
    %v8110 = vpack.c.b16 %v5766, %v5765
    %v8111 = vpack.c.b16 %v5768, %v5767
    %v8112 = vpack.c.b16 %v5770, %v5769
    %v8113 = vpack.c.b16 %v5772, %v5771
    %v8114 = vpack.c.b16 %v5774, %v5773
    %v8115 = vpack.c.b16 %v5776, %v5775
    %v8116 = vpack.c.b16 %v5778, %v5777
    %v8117 = vpack.c.b16 %v5780, %v5779
    %v8118 = vpack.c.b16 %v5782, %v5781
    %v8119 = vpack.c.b16 %v5784, %v5783
    %v8120 = vpack.c.b16 %v5786, %v5785
    %v8121 = vpack.c.b16 %v5788, %v5787
    %v8122 = vpack.c.b16 %v5790, %v5789
    %v8123 = vpack.c.b16 %v5792, %v5791
    %v8124 = vpack.c.b16 %v5794, %v5793
    %v8125 = vpack.c.b16 %v5796, %v5795
    %v8126 = vpack.c.b16 %v5798, %v5797
    %v8127 = vpack.c.b16 %v5800, %v5799
    %v8128 = vpack.c.b16 %v5802, %v5801
    %v8129 = vpack.c.b16 %v5804, %v5803
    %v8130 = vpack.c.b16 %v5806, %v5805
    %v8131 = vpack.c.b16 %v5808, %v5807
    %v8132 = vpack.c.b16 %v5810, %v5809
    %v8133 = vpack.c.b16 %v5812, %v5811
    %v8134 = vpack.c.b16 %v5814, %v5813
    %v8135 = vpack.c.b16 %v5816, %v5815
    %v8136 = vpack.c.b16 %v5818, %v5817
    %v8137 = vpack.c.b16 %v5820, %v5819
    %v8138 = vpack.c.b16 %v5822, %v5821
    %v8139 = vpack.c.b16 %v5824, %v5823
    %v8140 = vpack.c.b16 %v5826, %v5825
    %v8141 = vpack.c.b16 %v5828, %v5827
    %v8142 = vpack.c.b16 %v5830, %v5829
    %v8143 = vpack.c.b16 %v5832, %v5831
    %v8144 = vpack.c.b16 %v5834, %v5833
    %v8145 = vpack.c.b16 %v5836, %v5835
    %v8146 = vpack.c.b16 %v5838, %v5837
    %v8147 = vpack.c.b16 %v5840, %v5839
    %v8148 = vpack.c.b16 %v5842, %v5841
    %v8149 = vpack.c.b16 %v5844, %v5843
    %v8150 = vpack.c.b16 %v5846, %v5845
    %v8151 = vpack.c.b16 %v5848, %v5847
    %v8152 = vpack.c.b16 %v5850, %v5849
    %v8153 = vpack.c.b16 %v5852, %v5851
    %v8154 = vpack.c.b16 %v5854, %v5853
    %v8155 = vpack.c.b16 %v5856, %v5855
    %v8156 = vpack.c.b16 %v5858, %v5857
    %v8157 = vpack.c.b16 %v5860, %v5859
    %v8158 = vpack.c.b16 %v5862, %v5861
    %v8159 = vpack.c.b16 %v5864, %v5863
    %v8160 = vpack.c.b16 %v5866, %v5865
    %v8161 = vpack.c.b16 %v5868, %v5867
    %v8162 = vpack.c.b16 %v5870, %v5869
    %v8163 = vpack.c.b16 %v5872, %v5871
    %v8164 = vpack.c.b16 %v5874, %v5873
    %v8165 = vpack.c.b16 %v5876, %v5875
    %v8166 = vpack.c.b16 %v5878, %v5877
    %v8167 = vpack.c.b16 %v5880, %v5879
    %v8168 = vpack.c.b16 %v5882, %v5881
    %v8169 = vpack.c.b16 %v5884, %v5883
    %v8170 = vpack.c.b16 %v5886, %v5885
    %v8171 = vpack.c.b16 %v5888, %v5887
    %v8172 = vpack.c.b16 %v5890, %v5889
    %v8173 = vpack.c.b16 %v5892, %v5891
    %v8174 = vpack.c.b16 %v5894, %v5893
    %v8175 = vpack.c.b16 %v5896, %v5895
    %v8176 = vpack.c.b16 %v5898, %v5897
    %v8177 = vpack.c.b16 %v5900, %v5899
    %v8178 = vpack.c.b16 %v5902, %v5901
    %v8179 = vpack.c.b16 %v5904, %v5903
    %v8180 = vpack.c.b16 %v5906, %v5905
    %v8181 = vpack.c.b16 %v5908, %v5907
    %v8182 = vpack.c.b16 %v5910, %v5909
    %v8183 = vpack.c.b16 %v5912, %v5911
    %v8184 = vpack.c.b16 %v5914, %v5913
    %v8185 = vpack.c.b16 %v5916, %v5915
    %v8186 = vpack.c.b16 %v5918, %v5917
    %v8187 = vpack.c.b16 %v5920, %v5919
    %v8188 = vpack.c.b16 %v5922, %v5921
    %v8189 = vpack.c.b16 %v5924, %v5923
    %v8190 = vpack.c.b16 %v5926, %v5925
    %v8191 = vpack.c.b16 %v5928, %v5927
    %v8192 = vpack.c.b16 %v5930, %v5929
    %v8193 = vpack.c.b16 %v5932, %v5931
    %v8194 = vpack.c.b16 %v5934, %v5933
    %v8195 = vpack.c.b16 %v5936, %v5935
    %v8196 = vpack.c.b16 %v5938, %v5937
    %v8197 = vpack.c.b16 %v5940, %v5939
    %v8198 = vpack.c.b16 %v5942, %v5941
    %v8199 = vpack.c.b16 %v5944, %v5943
    %v8200 = vpack.c.b16 %v5946, %v5945
    %v8201 = vpack.c.b16 %v5948, %v5947
    %v8202 = vpack.c.b16 %v5950, %v5949
    %v8203 = vpack.c.b16 %v5952, %v5951
    %v8204 = vpack.c.b16 %v5954, %v5953
    %v8205 = vpack.c.b16 %v5956, %v5955
    %v8206 = vpack.c.b16 %v5958, %v5957
    %v8207 = vpack.c.b16 %v5960, %v5959
    %v8208 = vpack.c.b16 %v5962, %v5961
    %v8209 = vpack.c.b16 %v5964, %v5963
    %v8210 = vpack.c.b16 %v5966, %v5965
    %v8211 = vpack.c.b16 %v5968, %v5967
    %v8212 = vpack.c.b16 %v5970, %v5969
    %v8213 = vpack.c.b16 %v5972, %v5971
    %v8214 = vpack.c.b16 %v5974, %v5973
    %v8215 = vpack.c.b16 %v5976, %v5975
    %v8216 = vpack.c.b16 %v5978, %v5977
    %v8217 = vpack.c.b16 %v5980, %v5979
    %v8218 = vpack.c.b16 %v5982, %v5981
    %v8219 = vpack.c.b16 %v5984, %v5983
    %v8220 = vpack.c.b16 %v5986, %v5985
    %v8221 = vpack.c.b16 %v5988, %v5987
    %v8222 = vpack.c.b16 %v5990, %v5989
    %v8223 = vpack.c.b16 %v5992, %v5991
    %v8224 = vpack.c.b16 %v5994, %v5993
    %v8225 = vpack.c.b16 %v5996, %v5995
    %v8226 = vpack.c.b16 %v5998, %v5997
    %v8227 = vpack.c.b16 %v6000, %v5999
    %v8228 = vpack.c.b16 %v6002, %v6001
    %v8229 = vpack.c.b16 %v6004, %v6003
    %v8230 = vpack.c.b16 %v6006, %v6005
    %v8231 = vpack.c.b16 %v6008, %v6007
    %v8232 = vpack.c.b16 %v6010, %v6009
    %v8233 = vpack.c.b16 %v6012, %v6011
    %v8234 = vpack.c.b16 %v6014, %v6013
    %v8235 = vpack.c.b16 %v6016, %v6015
    %v8236 = vpack.c.b16 %v6018, %v6017
    %v8237 = vpack.c.b16 %v6020, %v6019
    %v8238 = vpack.c.b16 %v6022, %v6021
    %v8239 = vpack.c.b16 %v6024, %v6023
    %v8240 = vpack.c.b16 %v6026, %v6025
    %v8241 = vpack.c.b16 %v6028, %v6027
    %v8242 = vpack.c.b16 %v6030, %v6029
    %v8243 = vpack.c.b16 %v6032, %v6031
    %v8244 = vpack.c.b16 %v6034, %v6033
    %v8245 = vpack.c.b16 %v6036, %v6035
    %v8246 = vpack.c.b16 %v6038, %v6037
    %v8247 = vpack.c.b16 %v6040, %v6039
    %v8248 = vpack.c.b16 %v6042, %v6041
    %v8249 = vpack.c.b16 %v6044, %v6043
    %v8250 = vpack.c.b16 %v6046, %v6045
    %v8251 = vpack.c.b16 %v6048, %v6047
    %v8252 = vpack.c.b16 %v6050, %v6049
    %v8253 = vpack.c.b16 %v6052, %v6051
    %v8254 = vpack.c.b16 %v6054, %v6053
    %v8255 = vpack.c.b16 %v6056, %v6055
    %v8256 = vpack.c.b16 %v6058, %v6057
    %v8257 = vpack.c.b16 %v6060, %v6059
    %v8258 = vpack.c.b16 %v6062, %v6061
    %v8259 = vpack.c.b16 %v6064, %v6063
    %v8260 = vpack.c.b16 %v6066, %v6065
    %v8261 = vpack.c.b16 %v6068, %v6067
    %v8262 = vpack.c.b16 %v6070, %v6069
    %v8263 = vpack.c.b16 %v6072, %v6071
    %v8264 = vpack.c.b16 %v6074, %v6073
    %v8265 = vpack.c.b16 %v6076, %v6075
    %v8266 = vpack.c.b16 %v6078, %v6077
    %v8267 = vpack.c.b16 %v6080, %v6079
    %v8268 = vpack.c.b16 %v6082, %v6081
    %v8269 = vpack.c.b16 %v6084, %v6083
    %v8270 = vpack.c.b16 %v6086, %v6085
    %v8271 = vpack.c.b16 %v6088, %v6087
    %v8272 = vpack.c.b16 %v6090, %v6089
    %v8273 = vpack.c.b16 %v6092, %v6091
    %v8274 = vpack.c.b16 %v6094, %v6093
    %v8275 = vpack.c.b16 %v6096, %v6095
    %v8276 = vpack.c.b16 %v6098, %v6097
    %v8277 = vpack.c.b16 %v6100, %v6099
    %v8278 = vpack.c.b16 %v6102, %v6101
    %v8279 = vpack.c.b16 %v6104, %v6103
    %v8280 = vpack.c.b16 %v6106, %v6105
    %v8281 = vpack.c.b16 %v6108, %v6107
    %v8282 = vpack.c.b16 %v6110, %v6109
    %v8283 = vpack.c.b16 %v6112, %v6111
    %v8284 = vpack.c.b16 %v6114, %v6113
    %v8285 = vpack.c.b16 %v6116, %v6115
    %v8286 = vpack.c.b16 %v6118, %v6117
    %v8287 = vpack.c.b16 %v6120, %v6119
    %v8288 = vpack.c.b16 %v6122, %v6121
    %v8289 = vpack.c.b16 %v6124, %v6123
    %v8290 = vpack.c.b16 %v6126, %v6125
    %v8291 = vpack.c.b16 %v6128, %v6127
    %v8292 = vpack.c.b16 %v6130, %v6129
    %v8293 = vpack.c.b16 %v6132, %v6131
    %v8294 = vpack.c.b16 %v6134, %v6133
    %v8295 = vpack.c.b16 %v6136, %v6135
    %v8296 = vpack.c.b16 %v6138, %v6137
    %v8297 = vpack.c.b16 %v6140, %v6139
    %v8298 = vpack.c.b16 %v6142, %v6141
    %v8299 = vpack.c.b16 %v6144, %v6143
    %v8300 = vpack.c.b16 %v6146, %v6145
    %v8301 = vpack.c.b16 %v6148, %v6147
    %v8302 = vpack.c.b16 %v6150, %v6149
    %v8303 = vpack.c.b16 %v6152, %v6151
    %v8304 = vpack.c.b16 %v6154, %v6153
    %v8305 = vpack.c.b16 %v6156, %v6155
    %v8306 = vpack.c.b16 %v6158, %v6157
    %v8307 = vpack.c.b16 %v6160, %v6159
    %v8308 = vpack.c.b16 %v6162, %v6161
    %v8309 = vpack.c.b16 %v6164, %v6163
    %v8310 = vpack.c.b16 %v6166, %v6165
    %v8311 = vpack.c.b16 %v6168, %v6167
    %v8312 = vpack.c.b16 %v6170, %v6169
    %v8313 = vpack.c.b16 %v6172, %v6171
    %v8314 = vpack.c.b16 %v6174, %v6173
    %v8315 = vpack.c.b16 %v6176, %v6175
    %v8316 = vpack.c.b16 %v6178, %v6177
    %v8317 = vpack.c.b16 %v6180, %v6179
    %v8318 = vpack.c.b16 %v6182, %v6181
    %v8319 = vpack.c.b16 %v6184, %v6183
    %v8320 = vpack.c.b16 %v6186, %v6185
    %v8321 = vpack.c.b16 %v6188, %v6187
    %v8322 = vpack.c.b16 %v6190, %v6189
    %v8323 = vpack.c.b16 %v6192, %v6191
    %v8324 = vpack.c.b16 %v6194, %v6193
    %v8325 = vpack.c.b16 %v6196, %v6195
    %v8326 = vpack.c.b16 %v6198, %v6197
    %v8327 = vpack.c.b16 %v6200, %v6199
    %v8328 = vpack.c.b16 %v6202, %v6201
    %v8329 = vpack.c.b16 %v6204, %v6203
    %v8330 = vpack.c.b16 %v6206, %v6205
    %v8331 = vpack.c.b16 %v6208, %v6207
    %v8332 = vpack.c.b16 %v6210, %v6209
    %v8333 = vpack.c.b16 %v6212, %v6211
    %v8334 = vpack.c.b16 %v6214, %v6213
    %v8335 = vpack.c.b16 %v6216, %v6215
    %v8336 = vpack.c.b16 %v6218, %v6217
    %v8337 = vpack.c.b16 %v6220, %v6219
    %v8338 = vpack.c.b16 %v6222, %v6221
    %v8339 = vpack.c.b16 %v6224, %v6223
    %v8340 = vpack.c.b16 %v6226, %v6225
    %v8341 = vpack.c.b16 %v6228, %v6227
    %v8342 = vpack.c.b16 %v6230, %v6229
    %v8343 = vpack.c.b16 %v6232, %v6231
    %v8344 = vpack.c.b16 %v6234, %v6233
    %v8345 = vpack.c.b16 %v6236, %v6235
    %v8346 = vpack.c.b16 %v6238, %v6237
    %v8347 = vpack.c.b16 %v6240, %v6239
    %v8348 = vpack.c.b16 %v6242, %v6241
    %v8349 = vpack.c.b16 %v6244, %v6243
    %v8350 = vpack.c.b16 %v6246, %v6245
    %v8351 = vpack.c.b16 %v6248, %v6247
    %v8352 = vpack.c.b16 %v6250, %v6249
    %v8353 = vpack.c.b16 %v6252, %v6251
    %v8354 = vpack.c.b16 %v6254, %v6253
    %v8355 = vpack.c.b16 %v6256, %v6255
    %v8356 = vpack.c.b16 %v6258, %v6257
    %v8357 = vpack.c.b16 %v6260, %v6259
    %v8358 = vpack.c.b16 %v6262, %v6261
    %v8359 = vpack.c.b16 %v6264, %v6263
    %v8360 = vpack.c.b16 %v6266, %v6265
    %v8361 = vpack.c.b16 %v6268, %v6267
    %v8362 = vpack.c.b16 %v6270, %v6269
    %v8363 = vpack.c.b16 %v6272, %v6271
    %v8364 = vpack.c.b16 %v6274, %v6273
    %v8365 = vpack.c.b16 %v6276, %v6275
    %v8366 = vpack.c.b16 %v6278, %v6277
    %v8367 = vpack.c.b16 %v6280, %v6279
    %v8368 = vpack.c.b16 %v6282, %v6281
    %v8369 = vpack.c.b16 %v6284, %v6283
    %v8370 = vpack.c.b16 %v6286, %v6285
    %v8371 = vpack.c.b16 %v6288, %v6287
    %v8372 = vpack.c.b16 %v6290, %v6289
    %v8373 = vpack.c.b16 %v6292, %v6291
    %v8374 = vpack.c.b16 %v6294, %v6293
    %v8375 = vpack.c.b16 %v6296, %v6295
    %v8376 = vpack.c.b16 %v6298, %v6297
    %v8377 = vpack.c.b16 %v6300, %v6299
    %v8378 = vpack.c.b16 %v6302, %v6301
    %v8379 = vpack.c.b16 %v6304, %v6303
    %v8380 = vpack.c.b16 %v6306, %v6305
    %v8381 = vpack.c.b16 %v6308, %v6307
    %v8382 = vpack.c.b16 %v6310, %v6309
    %v8383 = vpack.c.b16 %v6312, %v6311
    %v8384 = vpack.c.b16 %v6314, %v6313
    %v8385 = vpack.c.b16 %v6316, %v6315
    %v8386 = vpack.c.b16 %v6318, %v6317
    %v8387 = vpack.c.b16 %v6320, %v6319
    %v8388 = vpack.c.b16 %v6322, %v6321
    %v8389 = vpack.c.b16 %v6324, %v6323
    %v8390 = vpack.c.b16 %v6326, %v6325
    %v8391 = vpack.c.b16 %v6328, %v6327
    %v8392 = vpack.c.b16 %v6330, %v6329
    %v8393 = vpack.c.b16 %v6332, %v6331
    %v8394 = vpack.c.b16 %v6334, %v6333
    %v8395 = vpack.c.b16 %v6336, %v6335
    %v8396 = vpack.c.b16 %v6338, %v6337
    %v8397 = vpack.c.b16 %v6340, %v6339
    %v8398 = vpack.c.b16 %v6342, %v6341
    %v8399 = vpack.c.b16 %v6344, %v6343
    %v8400 = vpack.c.b16 %v6346, %v6345
    %v8401 = vpack.c.b16 %v6348, %v6347
    %v8402 = vpack.c.b16 %v6350, %v6349
    %v8403 = vpack.c.b16 %v6352, %v6351
    %v8404 = vpack.c.b16 %v6354, %v6353
    %v8405 = vpack.c.b16 %v6356, %v6355
    %v8406 = vpack.c.b16 %v6358, %v6357
    %v8407 = vpack.c.b16 %v6360, %v6359
    %v8408 = vpack.c.b16 %v6362, %v6361
    %v8409 = vpack.c.b16 %v6364, %v6363
    %v8410 = vpack.c.b16 %v6366, %v6365
    %v8411 = vpack.c.b16 %v6368, %v6367
    %v8412 = vpack.c.b16 %v6370, %v6369
    %v8413 = vpack.c.b16 %v6372, %v6371
    %v8414 = vpack.c.b16 %v6374, %v6373
    %v8415 = vpack.c.b16 %v6376, %v6375
    %v8416 = vpack.c.b16 %v6378, %v6377
    %v8417 = vpack.c.b16 %v6380, %v6379
    %v8418 = vpack.c.b16 %v6382, %v6381
    %v8419 = vpack.c.b16 %v6384, %v6383
    %v8420 = vpack.c.b16 %v6386, %v6385
    %v8421 = vpack.c.b16 %v6388, %v6387
    %v8422 = vpack.c.b16 %v6390, %v6389
    %v8423 = vpack.c.b16 %v6392, %v6391
    %v8424 = vpack.c.b16 %v6394, %v6393
    %v8425 = vpack.c.b16 %v6396, %v6395
    %v8426 = vpack.c.b16 %v6398, %v6397
    %v8427 = vpack.c.b16 %v6400, %v6399
    %v8428 = vpack.c.b16 %v6402, %v6401
    %v8429 = vpack.c.b16 %v6404, %v6403
    %v8430 = vpack.c.b16 %v6406, %v6405
    %v8431 = vpack.c.b16 %v6408, %v6407
    %v8432 = vpack.c.b16 %v6410, %v6409
    %v8433 = vpack.c.b16 %v6412, %v6411
    %v8434 = vpack.c.b16 %v6414, %v6413
    %v8435 = vpack.c.b16 %v6416, %v6415
    %v8436 = vpack.c.b16 %v6418, %v6417
    %v8437 = vpack.c.b16 %v6420, %v6419
    %v8438 = vpack.c.b16 %v6422, %v6421
    %v8439 = vpack.c.b16 %v6424, %v6423
    %v8440 = vpack.c.b16 %v6426, %v6425
    %v8441 = vpack.c.b16 %v6428, %v6427
    %v8442 = vpack.c.b16 %v6430, %v6429
    %v8443 = vpack.c.b16 %v6432, %v6431
    %v8444 = vpack.c.b16 %v6434, %v6433
    %v8445 = vpack.c.b16 %v6436, %v6435
    %v8446 = vpack.c.b16 %v6438, %v6437
    %v8447 = vpack.c.b16 %v6440, %v6439
    %v8448 = vpack.c.b16 %v6442, %v6441
    %v8449 = vpack.c.b16 %v6444, %v6443
    %v8450 = vpack.c.b16 %v6446, %v6445
    %v8451 = vpack.c.b16 %v6448, %v6447
    %v8452 = vpack.c.b16 %v6450, %v6449
    %v8453 = vpack.c.b16 %v6452, %v6451
    %v8454 = vpack.c.b16 %v6454, %v6453
    %v8455 = vpack.c.b16 %v6456, %v6455
    %v8456 = vpack.c.b16 %v6458, %v6457
    %v8457 = vpack.c.b16 %v6460, %v6459
    %v8458 = vpack.c.b16 %v6462, %v6461
    %v8459 = vpack.c.b16 %v6464, %v6463
    %v8460 = vpack.c.b16 %v6466, %v6465
    %v8461 = vpack.c.b16 %v6468, %v6467
    %v8462 = vpack.c.b16 %v6470, %v6469
    %v8463 = vpack.c.b16 %v6472, %v6471
    %v8464 = vpack.c.b16 %v6474, %v6473
    %v8465 = vpack.c.b16 %v6476, %v6475
    %v8466 = vpack.c.b16 %v6478, %v6477
    %v8467 = vpack.c.b16 %v6480, %v6479
    %v8468 = vpack.c.b16 %v6482, %v6481
    %v8469 = vpack.c.b16 %v6484, %v6483
    %v8470 = vpack.c.b16 %v6486, %v6485
    %v8471 = vpack.c.b16 %v6488, %v6487
    %v8472 = vpack.c.b16 %v6490, %v6489
    %v8473 = vpack.c.b16 %v6492, %v6491
    %v8474 = vpack.c.b16 %v6494, %v6493
    %v8475 = vpack.c.b16 %v6496, %v6495
    %v8476 = vpack.c.b16 %v6498, %v6497
    %v8477 = vpack.c.b16 %v6500, %v6499
    %v8478 = vpack.c.b16 %v6502, %v6501
    %v8479 = vpack.c.b16 %v6504, %v6503
    %v8480 = vpack.c.b16 %v6506, %v6505
    %v8481 = vpack.c.b16 %v6508, %v6507
    %v8482 = vpack.c.b16 %v6510, %v6509
    %v8483 = vpack.c.b16 %v6512, %v6511
    %v8484 = vpack.c.b16 %v6514, %v6513
    %v8485 = vpack.c.b16 %v6516, %v6515
    %v8486 = vpack.c.b16 %v6518, %v6517
    %v8487 = vpack.c.b16 %v6520, %v6519
    %v8488 = vpack.c.b16 %v6522, %v6521
    %v8489 = vpack.c.b16 %v6524, %v6523
    %v8490 = vpack.c.b16 %v6526, %v6525
    %v8491 = vpack.c.b16 %v6528, %v6527
    %v8492 = vpack.c.b16 %v6530, %v6529
    %v8493 = vpack.c.b16 %v6532, %v6531
    %v8494 = vpack.c.b16 %v6534, %v6533
    %v8495 = vpack.c.b16 %v6536, %v6535
    %v8496 = vpack.c.b16 %v6538, %v6537
    %v8497 = vpack.c.b16 %v6540, %v6539
    %v8498 = vpack.c.b16 %v6542, %v6541
    %v8499 = vpack.c.b16 %v6544, %v6543
    %v8500 = vpack.c.b16 %v6546, %v6545
    %v8501 = vpack.c.b16 %v6548, %v6547
    %v8502 = vpack.c.b16 %v6550, %v6549
    %v8503 = vpack.c.b16 %v6552, %v6551
    %v8504 = vpack.c.b16 %v6554, %v6553
    %v8505 = vpack.c.b16 %v6556, %v6555
    %v8506 = vpack.c.b16 %v6558, %v6557
    %v8507 = vpack.c.b16 %v6560, %v6559
    %v8508 = vpack.c.b16 %v6562, %v6561
    %v8509 = vpack.c.b16 %v6564, %v6563
    %v8510 = vpack.c.b16 %v6566, %v6565
    %v8511 = vpack.c.b16 %v6568, %v6567
    %v8512 = vpack.c.b16 %v6570, %v6569
    %v8513 = vpack.c.b16 %v6572, %v6571
    %v8514 = vpack.c.b16 %v6574, %v6573
    %v8515 = vpack.c.b16 %v6576, %v6575
    %v8516 = vpack.c.b16 %v6578, %v6577
    %v8517 = vpack.c.b16 %v6580, %v6579
    %v8518 = vpack.c.b16 %v6582, %v6581
    %v8519 = vpack.c.b16 %v6584, %v6583
    %v8520 = vpack.c.b16 %v6586, %v6585
    %v8521 = vpack.c.b16 %v6588, %v6587
    %v8522 = vpack.c.b16 %v6590, %v6589
    %v8523 = vpack.c.b16 %v6592, %v6591
    %v8524 = vpack.c.b16 %v6594, %v6593
    %v8525 = vpack.c.b16 %v6596, %v6595
    %v8526 = vpack.c.b16 %v6598, %v6597
    %v8527 = vpack.c.b16 %v6600, %v6599
    %v8528 = vpack.c.b16 %v6602, %v6601
    %v8529 = vpack.c.b16 %v6604, %v6603
    %v8530 = vpack.c.b16 %v6606, %v6605
    %v8531 = vpack.c.b16 %v6608, %v6607
    %v8532 = vpack.c.b16 %v6610, %v6609
    %v8533 = vpack.c.b16 %v6612, %v6611
    %v8534 = vpack.c.b16 %v6614, %v6613
    %v8535 = vpack.c.b16 %v6616, %v6615
    %v8536 = vpack.c.b16 %v6618, %v6617
    %v8537 = vpack.c.b16 %v6620, %v6619
    %v8538 = vpack.c.b16 %v6622, %v6621
    %v8539 = vpack.c.b16 %v6624, %v6623
    %v8540 = vpack.c.b16 %v6626, %v6625
    %v8541 = vpack.c.b16 %v6628, %v6627
    %v8542 = vpack.c.b16 %v6630, %v6629
    %v8543 = vpack.c.b16 %v6632, %v6631
    %v8544 = vpack.c.b16 %v6634, %v6633
    %v8545 = vpack.c.b16 %v6636, %v6635
    %v8546 = vpack.c.b16 %v6638, %v6637
    %v8547 = vpack.c.b16 %v6640, %v6639
    %v8548 = vpack.c.b16 %v6642, %v6641
    %v8549 = vpack.c.b16 %v6644, %v6643
    %v8550 = vpack.c.b16 %v6646, %v6645
    %v8551 = vpack.c.b16 %v6648, %v6647
    %v8552 = vpack.c.b16 %v6650, %v6649
    %v8553 = vpack.c.b16 %v6652, %v6651
    %v8554 = vpack.c.b16 %v6654, %v6653
    %v8555 = vpack.c.b16 %v6656, %v6655
    %v8556 = vpack.c.b16 %v6658, %v6657
    %v8557 = vpack.c.b16 %v6660, %v6659
    %v8558 = vpack.c.b16 %v6662, %v6661
    %v8559 = vpack.c.b16 %v6664, %v6663
    %v8560 = vpack.c.b16 %v6666, %v6665
    %v8561 = vpack.c.b16 %v6668, %v6667
    %v8562 = vpack.c.b16 %v6670, %v6669
    %v8563 = vpack.c.b16 %v6672, %v6671
    %v8564 = vpack.c.b16 %v6674, %v6673
    %v8565 = vpack.c.b16 %v6676, %v6675
    %v8566 = vpack.c.b16 %v6678, %v6677
    %v8567 = vpack.c.b16 %v6680, %v6679
    %v8568 = vpack.c.b16 %v6682, %v6681
    %v8569 = vpack.c.b16 %v6684, %v6683
    %v8570 = vpack.c.b16 %v6686, %v6685
    %v8571 = vpack.c.b16 %v6688, %v6687
    %v8572 = vpack.c.b16 %v6690, %v6689
    %v8573 = vpack.c.b16 %v6692, %v6691
    %v8574 = vpack.c.b16 %v6694, %v6693
    %v8575 = vpack.c.b16 %v6696, %v6695
    %v8576 = vpack.c.b16 %v6698, %v6697
    %v8577 = vpack.c.b16 %v6700, %v6699
    %v8578 = vpack.c.b16 %v6702, %v6701
    %v8579 = vpack.c.b16 %v6704, %v6703
    %v8580 = vpack.c.b16 %v6706, %v6705
    %v8581 = vpack.c.b16 %v6708, %v6707
    %v8582 = vpack.c.b16 %v6710, %v6709
    %v8583 = vpack.c.b16 %v6712, %v6711
    %v8584 = vpack.c.b16 %v6714, %v6713
    %v8585 = vpack.c.b16 %v6716, %v6715
    %v8586 = vpack.c.b16 %v6718, %v6717
    %v8587 = vpack.c.b16 %v6720, %v6719
    %v8588 = vpack.c.b16 %v6722, %v6721
    %v8589 = vpack.c.b16 %v6724, %v6723
    %v8590 = vpack.c.b16 %v6726, %v6725
    %v8591 = vpack.c.b16 %v6728, %v6727
    %v8592 = vpack.c.b16 %v6730, %v6729
    %v8593 = vpack.c.b16 %v6732, %v6731
    %v8594 = vpack.c.b16 %v6734, %v6733
    %v8595 = vpack.c.b16 %v6736, %v6735
    %v8596 = vpack.c.b16 %v6738, %v6737
    %v8597 = vpack.c.b16 %v6740, %v6739
    %v8598 = vpack.c.b16 %v6742, %v6741
    %v8599 = vpack.c.b16 %v6744, %v6743
    %v8600 = vpack.c.b16 %v6746, %v6745
    %v8601 = vpack.c.b16 %v6748, %v6747
    %v8602 = vpack.c.b16 %v6750, %v6749
    %v8603 = vpack.c.b16 %v6752, %v6751
    %v8604 = vpack.c.b16 %v6754, %v6753
    %v8605 = vpack.c.b16 %v6756, %v6755
    %v8606 = vpack.c.b16 %v6758, %v6757
    %v8607 = vpack.c.b16 %v6760, %v6759
    %v8608 = vpack.c.b16 %v6762, %v6761
    %v8609 = vpack.c.b16 %v6764, %v6763
    %v8610 = vpack.c.b16 %v6766, %v6765
    %v8611 = vpack.c.b16 %v6768, %v6767
    %v8612 = vpack.c.b16 %v6770, %v6769
    %v8613 = vpack.c.b16 %v6772, %v6771
    %v8614 = vpack.c.b16 %v6774, %v6773
    %v8615 = vpack.c.b16 %v6776, %v6775
    %v8616 = vpack.c.b16 %v6778, %v6777
    %v8617 = vpack.c.b16 %v6780, %v6779
    %v8618 = vpack.c.b16 %v6782, %v6781
    %v8619 = vpack.c.b16 %v6784, %v6783
    %v8620 = vpack.c.b16 %v6786, %v6785
    %v8621 = vpack.c.b16 %v6788, %v6787
    %v8622 = vpack.c.b16 %v6790, %v6789
    %v8623 = vpack.c.b16 %v6792, %v6791
    %v8624 = vpack.c.b16 %v6794, %v6793
    %v8625 = vpack.c.b16 %v6796, %v6795
    %v8626 = vpack.c.b16 %v6798, %v6797
    %v8627 = vpack.c.b16 %v6800, %v6799
    %v8628 = vpack.c.b16 %v6802, %v6801
    %v8629 = vpack.c.b16 %v6804, %v6803
    %v8630 = vpack.c.b16 %v6806, %v6805
    %v8631 = vpack.c.b16 %v6808, %v6807
    %v8632 = vpack.c.b16 %v6810, %v6809
    %v8633 = vpack.c.b16 %v6812, %v6811
    %v8634 = vpack.c.b16 %v6814, %v6813
    %v8635 = vpack.c.b16 %v6816, %v6815
    %v8636 = vpack.c.b16 %v6818, %v6817
    %v8637 = vpack.c.b16 %v6820, %v6819
    %v8638 = vpack.c.b16 %v6822, %v6821
    %v8639 = vpack.c.b16 %v6824, %v6823
    %v8640 = vpack.c.b16 %v6826, %v6825
    %v8641 = vpack.c.b16 %v6828, %v6827
    %v8642 = vpack.c.b16 %v6830, %v6829
    %v8643 = vpack.c.b16 %v6832, %v6831
    %v8644 = vpack.c.b16 %v6834, %v6833
    %v8645 = vpack.c.b16 %v6836, %v6835
    %v8646 = vpack.c.b16 %v6838, %v6837
    %v8647 = vpack.c.b16 %v6840, %v6839
    %v8648 = vpack.c.b16 %v6842, %v6841
    %v8649 = vpack.c.b16 %v6844, %v6843
    %v8650 = vpack.c.b16 %v6846, %v6845
    %v8651 = vpack.c.b16 %v6848, %v6847
    %v8652 = vpack.c.b16 %v6850, %v6849
    %v8653 = vpack.c.b16 %v6852, %v6851
    %v8654 = vpack.c.b16 %v6854, %v6853
    %v8655 = vpack.c.b16 %v6856, %v6855
    %v8656 = vpack.c.b16 %v6858, %v6857
    %v8657 = vpack.c.b16 %v6860, %v6859
    %v8658 = vpack.c.b16 %v6862, %v6861
    %v8659 = vpack.c.b16 %v6864, %v6863
    %v8660 = vpack.c.b16 %v6866, %v6865
    %v8661 = vpack.c.b16 %v6868, %v6867
    %v8662 = vpack.c.b16 %v6870, %v6869
    %v8663 = vpack.c.b16 %v6872, %v6871
    %v8664 = vpack.c.b16 %v6874, %v6873
    %v8665 = vpack.c.b16 %v6876, %v6875
    %v8666 = vpack.c.b16 %v6878, %v6877
    %v8667 = vpack.c.b16 %v6880, %v6879
    %v8668 = vpack.c.b16 %v6882, %v6881
    %v8669 = vpack.c.b16 %v6884, %v6883
    %v8670 = vpack.c.b16 %v6886, %v6885
    %v8671 = vpack.c.b16 %v6888, %v6887
    %v8672 = vpack.c.b16 %v6890, %v6889
    %v8673 = vpack.c.b16 %v6892, %v6891
    %v8674 = vpack.c.b16 %v6894, %v6893
    %v8675 = vpack.c.b16 %v6896, %v6895
    %v8676 = vpack.c.b16 %v6898, %v6897
    %v8677 = vpack.c.b16 %v6900, %v6899
    %v8678 = vpack.c.b16 %v6902, %v6901
    %v8679 = vpack.c.b16 %v6904, %v6903
    %v8680 = vpack.c.b16 %v6906, %v6905
    %v8681 = vpack.c.b16 %v6908, %v6907
    %v8682 = vpack.c.b16 %v6910, %v6909
    %v8683 = vpack.c.b16 %v6912, %v6911
    %v8684 = vpack.c.b16 %v6914, %v6913
    %v8685 = vpack.c.b16 %v6916, %v6915
    %v8686 = vpack.c.b16 %v6918, %v6917
    %v8687 = vpack.c.b16 %v6920, %v6919
    %v8688 = vpack.c.b16 %v6922, %v6921
    %v8689 = vpack.c.b16 %v6924, %v6923
    %v8690 = vpack.c.b16 %v6926, %v6925
    %v8691 = vpack.c.b16 %v6928, %v6927
    %v8692 = vpack.c.b16 %v6930, %v6929
    %v8693 = vpack.c.b16 %v6932, %v6931
    %v8694 = vpack.c.b16 %v6934, %v6933
    %v8695 = vpack.c.b16 %v6936, %v6935
    %v8696 = vpack.c.b16 %v6938, %v6937
    %v8697 = vpack.c.b16 %v6940, %v6939
    %v8698 = vpack.c.b16 %v6942, %v6941
    %v8699 = vpack.c.b16 %v6944, %v6943
    %v8700 = vpack.c.b16 %v6946, %v6945
    %v8701 = vpack.c.b16 %v6948, %v6947
    %v8702 = vpack.c.b16 %v6950, %v6949
    %v8703 = vpack.c.b16 %v6952, %v6951
    %v8704 = vpack.c.b16 %v6954, %v6953
    %v8705 = vpack.c.b16 %v6956, %v6955
    %v8706 = vpack.c.b16 %v6958, %v6957
    %v8707 = vpack.c.b16 %v6960, %v6959
    %v8708 = vpack.c.b16 %v6962, %v6961
    %v8709 = vpack.c.b16 %v6964, %v6963
    %v8710 = vpack.c.b16 %v6966, %v6965
    %v8711 = vpack.c.b16 %v6968, %v6967
    %v8712 = vpack.c.b16 %v6970, %v6969
    %v8713 = vpack.c.b16 %v6972, %v6971
    %v8714 = vpack.c.b16 %v6974, %v6973
    %v8715 = vpack.c.b16 %v6976, %v6975
    %v8716 = vpack.c.b16 %v6978, %v6977
    %v8717 = vpack.c.b16 %v6980, %v6979
    %v8718 = vpack.c.b16 %v6982, %v6981
    %v8719 = vpack.c.b16 %v6984, %v6983
    %v8720 = vpack.c.b16 %v6986, %v6985
    %v8721 = vpack.c.b16 %v6988, %v6987
    %v8722 = vpack.c.b16 %v6990, %v6989
    %v8723 = vpack.c.b16 %v6992, %v6991
    %v8724 = vpack.c.b16 %v6994, %v6993
    %v8725 = vpack.c.b16 %v6996, %v6995
    %v8726 = vpack.c.b16 %v6998, %v6997
    %v8727 = vpack.c.b16 %v7000, %v6999
    %v8728 = vpack.c.b16 %v7002, %v7001
    %v8729 = vpack.c.b16 %v7004, %v7003
    %v8730 = vpack.c.b16 %v7006, %v7005
    %v8731 = vpack.c.b16 %v7008, %v7007
    %v8732 = vpack.c.b16 %v7010, %v7009
    %v8733 = vpack.c.b16 %v7012, %v7011
    %v8734 = vpack.c.b16 %v7014, %v7013
    %v8735 = vpack.c.b16 %v7016, %v7015
    %v8736 = vpack.c.b16 %v7018, %v7017
    %v8737 = vpack.c.b16 %v7020, %v7019
    %v8738 = vpack.c.b16 %v7022, %v7021
    %v8739 = vpack.c.b16 %v7024, %v7023
    %v8740 = vpack.c.b16 %v7026, %v7025
    %v8741 = vpack.c.b16 %v7028, %v7027
    %v8742 = vpack.c.b16 %v7030, %v7029
    %v8743 = vpack.c.b16 %v7032, %v7031
    %v8744 = vpack.c.b16 %v7034, %v7033
    %v8745 = vpack.c.b16 %v7036, %v7035
    %v8746 = vpack.c.b16 %v7038, %v7037
    %v8747 = vpack.c.b16 %v7040, %v7039
    %v8748 = vpack.c.b16 %v7042, %v7041
    %v8749 = vpack.c.b16 %v7044, %v7043
    %v8750 = vpack.c.b16 %v7046, %v7045
    %v8751 = vpack.c.b16 %v7048, %v7047
    %v8752 = vpack.c.b16 %v7050, %v7049
    %v8753 = vpack.c.b16 %v7052, %v7051
    %v8754 = vpack.c.b16 %v7054, %v7053
    %v8755 = vpack.c.b16 %v7056, %v7055
    %v8756 = vpack.c.b16 %v7058, %v7057
    %v8757 = vpack.c.b16 %v7060, %v7059
    %v8758 = vpack.c.b16 %v7062, %v7061
    %v8759 = vpack.c.b16 %v7064, %v7063
    %v8760 = vpack.c.b16 %v7066, %v7065
    %v8761 = vpack.c.b16 %v7068, %v7067
    %v8762 = vpack.c.b16 %v7070, %v7069
    %v8763 = vpack.c.b16 %v7072, %v7071
    %v8764 = vpack.c.b16 %v7074, %v7073
    %v8765 = vpack.c.b16 %v7076, %v7075
    %v8766 = vpack.c.b16 %v7078, %v7077
    %v8767 = vpack.c.b16 %v7080, %v7079
    %v8768 = vpack.c.b16 %v7082, %v7081
    %v8769 = vpack.c.b16 %v7084, %v7083
    %v8770 = vpack.c.b16 %v7086, %v7085
    %v8771 = vpack.c.b16 %v7088, %v7087
    %v8772 = vpack.c.b16 %v7090, %v7089
    %v8773 = vpack.c.b16 %v7092, %v7091
    %v8774 = vpack.c.b16 %v7094, %v7093
    %v8775 = vpack.c.b16 %v7096, %v7095
    %v8776 = vpack.c.b16 %v7098, %v7097
    %v8777 = vpack.c.b16 %v7100, %v7099
    %v8778 = vpack.c.b16 %v7102, %v7101
    %v8779 = vpack.c.b16 %v7104, %v7103
    %v8780 = vpack.c.b16 %v7106, %v7105
    %v8781 = vpack.c.b16 %v7108, %v7107
    %v8782 = vpack.c.b16 %v7110, %v7109
    %v8783 = vpack.c.b16 %v7112, %v7111
    %v8784 = vpack.c.b16 %v7114, %v7113
    %v8785 = vpack.c.b16 %v7116, %v7115
    %v8786 = vpack.c.b16 %v7118, %v7117
    %v8787 = vpack.c.b16 %v7120, %v7119
    %v8788 = vpack.c.b16 %v7122, %v7121
    %v8789 = vpack.c.b16 %v7124, %v7123
    %v8790 = vpack.c.b16 %v7126, %v7125
    %v8791 = vpack.c.b16 %v7128, %v7127
    %v8792 = vpack.c.b16 %v7130, %v7129
    %v8793 = vpack.c.b16 %v7132, %v7131
    %v8794 = vpack.c.b16 %v7134, %v7133
    %v8795 = vpack.c.b16 %v7136, %v7135
    %v8796 = vpack.c.b16 %v7138, %v7137
    %v8797 = vpack.c.b16 %v7140, %v7139
    %v8798 = vpack.c.b16 %v7142, %v7141
    %v8799 = vpack.c.b16 %v7144, %v7143
    %v8800 = vpack.c.b16 %v7146, %v7145
    %v8801 = vpack.c.b16 %v7148, %v7147
    %v8802 = vpack.c.b16 %v7150, %v7149
    %v8803 = vpack.c.b16 %v7152, %v7151
    %v8804 = vpack.c.b16 %v7154, %v7153
    %v8805 = vpack.c.b16 %v7156, %v7155
    %v8806 = vpack.c.b16 %v7158, %v7157
    %v8807 = vpack.c.b16 %v7160, %v7159
    %v8808 = vpack.c.b16 %v7162, %v7161
    %v8809 = vpack.c.b16 %v7164, %v7163
    %v8810 = vpack.c.b16 %v7166, %v7165
    %v8811 = vpack.c.b16 %v7168, %v7167
    %v8812 = vpack.c.b16 %v7170, %v7169
    %v8813 = vpack.c.b16 %v7172, %v7171
    %v8814 = vpack.c.b16 %v7174, %v7173
    %v8815 = vpack.c.b16 %v7176, %v7175
    %v8816 = vpack.c.b16 %v7178, %v7177
    %v8817 = vpack.c.b16 %v7180, %v7179
    %v8818 = vpack.c.b16 %v7182, %v7181
    %v8819 = vpack.c.b16 %v7184, %v7183
    %v8820 = vpack.c.b16 %v7186, %v7185
    %v8821 = vpack.c.b16 %v7188, %v7187
    %v8822 = vpack.c.b16 %v7190, %v7189
    %v8823 = vpack.c.b16 %v7192, %v7191
    %v8824 = vpack.c.b16 %v7194, %v7193
    %v8825 = vpack.c.b16 %v7196, %v7195
    %v8826 = vpack.c.b16 %v7198, %v7197
    %v8827 = vpack.c.b16 %v7200, %v7199
    %v8828 = vpack.c.b16 %v7202, %v7201
    %v8829 = vpack.c.b16 %v7204, %v7203
    %v8830 = vpack.c.b16 %v7206, %v7205
    %v8831 = vpack.c.b16 %v7208, %v7207
    %v8832 = vpack.c.b16 %v7210, %v7209
    %v8833 = vpack.c.b16 %v7212, %v7211
    %v8834 = vpack.c.b16 %v7214, %v7213
    %v8835 = vpack.c.b16 %v7216, %v7215
    %v8836 = vpack.c.b16 %v7218, %v7217
    %v8837 = vpack.c.b16 %v7220, %v7219
    %v8838 = vpack.c.b16 %v7222, %v7221
    %v8839 = vpack.c.b16 %v7224, %v7223
    %v8840 = vpack.c.b16 %v7226, %v7225
    %v8841 = vpack.c.b16 %v7228, %v7227
    %v8842 = vpack.c.b16 %v7230, %v7229
    %v8843 = vpack.c.b16 %v7232, %v7231
    %v8844 = vpack.c.b16 %v7234, %v7233
    %v8845 = vpack.c.b16 %v7236, %v7235
    %v8846 = vpack.c.b16 %v7238, %v7237
    %v8847 = vpack.c.b16 %v7240, %v7239
    %v8848 = vpack.c.b16 %v7242, %v7241
    %v8849 = vpack.c.b16 %v7244, %v7243
    %v8850 = vpack.c.b16 %v7246, %v7245
    %v8851 = vpack.c.b16 %v7248, %v7247
    %v8852 = vpack.c.b16 %v7250, %v7249
    %v8853 = vpack.c.b16 %v7252, %v7251
    %v8854 = vpack.c.b16 %v7254, %v7253
    %v8855 = vpack.c.b16 %v7256, %v7255
    %v8856 = vpack.c.b16 %v7258, %v7257
    %v8857 = vpack.c.b16 %v7260, %v7259
    %v8858 = vpack.c.b16 %v7262, %v7261
    %v8859 = vpack.c.b16 %v7264, %v7263
    %v8860 = vpack.c.b16 %v7266, %v7265
    %v8861 = vpack.c.b16 %v7268, %v7267
    %v8862 = vpack.c.b16 %v7270, %v7269
    %v8863 = vpack.c.b16 %v7272, %v7271
    %v8864 = vpack.c.b16 %v7274, %v7273
    %v8865 = vpack.c.b16 %v7276, %v7275
    %v8866 = vpack.c.b16 %v7278, %v7277
    %v8867 = vpack.c.b16 %v7280, %v7279
    %v8868 = vpack.c.b16 %v7282, %v7281
    %v8869 = vpack.c.b16 %v7284, %v7283
    %v8870 = vpack.c.b16 %v7286, %v7285
    %v8871 = vpack.c.b16 %v7288, %v7287
    %v8872 = vpack.c.b16 %v7290, %v7289
    %v8873 = vpack.c.b16 %v7292, %v7291
    %v8874 = vpack.c.b16 %v7294, %v7293
    %v8875 = vpack.c.b16 %v7296, %v7295
    %v8876 = vpack.c.b16 %v7298, %v7297
    %v8877 = vpack.c.b16 %v7300, %v7299
    %v8878 = vpack.c.b16 %v7302, %v7301
    %v8879 = vpack.c.b16 %v7304, %v7303
    %v8880 = vpack.c.b16 %v7306, %v7305
    %v8881 = vpack.c.b16 %v7308, %v7307
    %v8882 = vpack.c.b16 %v7310, %v7309
    %v8883 = vpack.c.b16 %v7312, %v7311
    %v8884 = vpack.c.b16 %v7314, %v7313
    %v8885 = vpack.c.b16 %v7316, %v7315
    %v8886 = vpack.c.b16 %v7318, %v7317
    %v8887 = vpack.c.b16 %v7320, %v7319
    %v8888 = vpack.c.b16 %v7322, %v7321
    %v8889 = vpack.c.b16 %v7324, %v7323
    %v8890 = vpack.c.b16 %v7326, %v7325
    %v8891 = vpack.c.b16 %v7328, %v7327
    %v8892 = vpack.c.b16 %v7330, %v7329
    %v8893 = vpack.c.b16 %v7332, %v7331
    %v8894 = vpack.c.b16 %v7334, %v7333
    %v8895 = vpack.c.b16 %v7336, %v7335
    %v8896 = vpack.c.b16 %v7338, %v7337
    %v8897 = vpack.c.b16 %v7340, %v7339
    %v8898 = vpack.c.b16 %v7342, %v7341
    %v8899 = vpack.c.b16 %v7344, %v7343
    %v8900 = vpack.c.b16 %v7346, %v7345
    %v8901 = vpack.c.b16 %v7348, %v7347
    %v8902 = vpack.c.b16 %v7350, %v7349
    %v8903 = vpack.c.b16 %v7352, %v7351
    %v8904 = vpack.c.b16 %v7354, %v7353
    %v8905 = vpack.c.b16 %v7356, %v7355
    %v8906 = vpack.c.b16 %v7358, %v7357
    %v8907 = vpack.c.b16 %v7360, %v7359
    %v8908 = vpack.c.b16 %v7362, %v7361
    %v8909 = vpack.c.b16 %v7364, %v7363
    %v8910 = vpack.c.b16 %v7366, %v7365
    %v8911 = vpack.c.b16 %v7368, %v7367
    %v8912 = vpack.c.b16 %v7370, %v7369
    %v8913 = vpack.c.b16 %v7372, %v7371
    %v8914 = vpack.c.b16 %v7374, %v7373
    %v8915 = vpack.c.b16 %v7376, %v7375
    %v8916 = vpack.c.b16 %v7378, %v7377
    %v8917 = vpack.c.b16 %v7380, %v7379
    %v8918 = vpack.c.b16 %v7382, %v7381
    %v8919 = vpack.c.b16 %v7384, %v7383
    %v8920 = vpack.c.b16 %v7386, %v7385
    %v8921 = vpack.c.b16 %v7388, %v7387
    %v8922 = vpack.c.b16 %v7390, %v7389
    %v8923 = vpack.c.b16 %v7392, %v7391
    %v8924 = vpack.c.b16 %v7394, %v7393
    %v8925 = vpack.c.b16 %v7396, %v7395
    %v8926 = vpack.c.b16 %v7398, %v7397
    %v8927 = vpack.c.b16 %v7400, %v7399
    %v8928 = vpack.c.b16 %v7402, %v7401
    %v8929 = vpack.c.b16 %v7404, %v7403
    %v8930 = vpack.c.b16 %v7406, %v7405
    %v8931 = vpack.c.b16 %v7408, %v7407
    %v8932 = vpack.c.b16 %v7410, %v7409
    %v8933 = vpack.c.b16 %v7412, %v7411
    %v8934 = vpack.c.b16 %v7414, %v7413
    %v8935 = vpack.c.b16 %v7416, %v7415
    %v8936 = vpack.c.b16 %v7418, %v7417
    %v8937 = vpack.c.b16 %v7420, %v7419
    %v8938 = vpack.c.b16 %v7422, %v7421
    %v8939 = vpack.c.b16 %v7424, %v7423
    %v8940 = vpack.c.b16 %v7426, %v7425
    %v8941 = vpack.c.b16 %v7428, %v7427
    %v8942 = vpack.c.b16 %v7430, %v7429
    %v8943 = vpack.c.b16 %v7432, %v7431
    %v8944 = vpack.c.b16 %v7434, %v7433
    %v8945 = vpack.c.b16 %v7436, %v7435
    %v8946 = vpack.c.b16 %v7438, %v7437
    %v8947 = vpack.c.b16 %v7440, %v7439
    %v8948 = vpack.c.b16 %v7442, %v7441
    %v8949 = vpack.c.b16 %v7444, %v7443
    %v8950 = vpack.c.b16 %v7446, %v7445
    %v8951 = vpack.c.b16 %v7448, %v7447
    %v8952 = vpack.c.b16 %v7450, %v7449
    %v8953 = vpack.c.b16 %v7452, %v7451
    %v8954 = vpack.c.b16 %v7454, %v7453
    %v8955 = vpack.c.b16 %v7456, %v7455
    %v8956 = vpack.c.b16 %v7458, %v7457
    %v8957 = vpack.c.b16 %v7460, %v7459
    %v8958 = vpack.c.b16 %v7462, %v7461
    %v8959 = vpack.c.b16 %v7464, %v7463
    %v8960 = vpack.c.b16 %v7466, %v7465
    %v8961 = vpack.c.b16 %v7468, %v7467
    %v8962 = vpack.c.b16 %v7470, %v7469
    %v8963 = vpack.c.b16 %v7472, %v7471
    %v8964 = vpack.c.b16 %v7474, %v7473
    %v8965 = vpack.c.b16 %v7476, %v7475
    %v8966 = vpack.c.b16 %v7478, %v7477
    %v8967 = vpack.c.b16 %v7480, %v7479
    %v8968 = vpack.c.b16 %v7482, %v7481
    %v8969 = vpack.c.b16 %v7484, %v7483
    %v8970 = vpack.c.b16 %v7486, %v7485
    %v8971 = vpack.c.b16 %v7488, %v7487
    %v8972 = vpack.c.b16 %v7490, %v7489
    %v8973 = vpack.c.b16 %v7492, %v7491
    %v8974 = vpack.c.b16 %v7494, %v7493
    %v8975 = vpack.c.b16 %v7496, %v7495
    %v8976 = vpack.c.b16 %v7498, %v7497
    %v8977 = vpack.c.b16 %v7500, %v7499
    %v8978 = vpack.c.b16 %v7502, %v7501
    %v8979 = vpack.c.b16 %v7504, %v7503
    %v8980 = vpack.c.b16 %v7506, %v7505
    %v8981 = vpack.c.b16 %v7508, %v7507
    %v8982 = vpack.c.b16 %v7510, %v7509
    %v8983 = vpack.c.b16 %v7512, %v7511
    %v8984 = vpack.c.b16 %v7514, %v7513
    %v8985 = vpack.c.b16 %v7516, %v7515
    %v8986 = vpack.c.b16 %v7518, %v7517
    %v8987 = vpack.c.b16 %v7520, %v7519
    %v8988 = vpack.c.b16 %v7522, %v7521
    %v8989 = vpack.c.b16 %v7524, %v7523
    %v8990 = vpack.c.b16 %v7526, %v7525
    %v8991 = vpack.c.b16 %v7528, %v7527
    %v8992 = vpack.c.b16 %v7530, %v7529
    %v8993 = vpack.c.b16 %v7532, %v7531
    %v8994 = vpack.c.b16 %v7534, %v7533
    %v8995 = vpack.c.b16 %v7536, %v7535
    %v8996 = vpack.c.b16 %v7538, %v7537
    %v8997 = vpack.c.b16 %v7540, %v7539
    %v8998 = vpack.c.b16 %v7542, %v7541
    %v8999 = vpack.c.b16 %v7544, %v7543
    %v9000 = vpack.c.b16 %v7546, %v7545
    %v9001 = vpack.c.b16 %v7548, %v7547
    %v9002 = vpack.c.b16 %v7550, %v7549
    %v9003 = vpack.c.b16 %v7552, %v7551
    %v9004 = vpack.c.b16 %v7554, %v7553
    %v9005 = vpack.c.b16 %v7556, %v7555
    %v9006 = vpack.c.b16 %v7558, %v7557
    %v9007 = vpack.c.b16 %v7560, %v7559
    %v9008 = vpack.c.b16 %v7562, %v7561
    %v9009 = vpack.c.b16 %v7564, %v7563
    %v9010 = vpack.c.b16 %v7566, %v7565
    %v9011 = vpack.c.b16 %v7568, %v7567
    %v9012 = vpack.c.b16 %v7570, %v7569
    %v9013 = vpack.c.b16 %v7572, %v7571
    %v9014 = vpack.c.b16 %v7574, %v7573
    %v9015 = vpack.c.b16 %v7576, %v7575
    %v9016 = vpack.c.b16 %v7578, %v7577
    %v9017 = vpack.c.b16 %v7580, %v7579
    %v9018 = vpack.c.b16 %v7582, %v7581
    %v9019 = vpack.c.b16 %v7584, %v7583
    %v9020 = vpack.c.b16 %v7586, %v7585
    %v9021 = vpack.c.b16 %v7588, %v7587
    %v9022 = vpack.c.b16 %v7590, %v7589
    %v9023 = vpack.c.b16 %v7592, %v7591
    %v9024 = vpack.c.b16 %v7594, %v7593
    %v9025 = vpack.c.b16 %v7596, %v7595
    %v9026 = vpack.c.b16 %v7598, %v7597
    %v9027 = vpack.c.b16 %v7600, %v7599
    %v9028 = vpack.c.b16 %v7602, %v7601
    %v9029 = vpack.c.b16 %v7604, %v7603
    %v9030 = vpack.c.b16 %v7606, %v7605
    %v9031 = vpack.c.b16 %v7608, %v7607
    %v9032 = vpack.c.b16 %v7610, %v7609
    %v9033 = vpack.c.b16 %v7612, %v7611
    %v9034 = vpack.c.b16 %v7614, %v7613
    %v9035 = vpack.c.b16 %v7616, %v7615
    %v9036 = vpack.c.b16 %v7618, %v7617
    %v9037 = vpack.c.b16 %v7620, %v7619
    %v9038 = vpack.c.b16 %v7622, %v7621
    %v9039 = vpack.c.b16 %v7624, %v7623
    %v9040 = vpack.c.b16 %v7626, %v7625
    %v9041 = vpack.c.b16 %v7628, %v7627
    %v9042 = vpack.c.b16 %v7630, %v7629
    %v9043 = vpack.c.b16 %v7632, %v7631
    %v9044 = vpack.c.b16 %v7634, %v7633
    %v9045 = vpack.c.b16 %v7636, %v7635
    %v9046 = vpack.c.b16 %v7638, %v7637
    %v9047 = vpack.c.b16 %v7640, %v7639
    %v9048 = vpack.c.b16 %v7642, %v7641
    %v9049 = vpack.c.b16 %v7644, %v7643
    %v9050 = vpack.c.b16 %v7646, %v7645
    %v9051 = vpack.c.b16 %v7648, %v7647
    %v9052 = vpack.c.b16 %v7650, %v7649
    %v9053 = vpack.c.b16 %v7652, %v7651
    %v9054 = vpack.c.b16 %v7654, %v7653
    %v9055 = vpack.c.b16 %v7656, %v7655
    %v9056 = vpack.c.b16 %v7658, %v7657
    %v9057 = vpack.c.b16 %v7660, %v7659
    %v9058 = vpack.c.b16 %v7662, %v7661
    %v9059 = vpack.c.b16 %v7664, %v7663
    %v9060 = vpack.c.b16 %v7666, %v7665
    %v9061 = vpack.c.b16 %v7668, %v7667
    %v9062 = vpack.c.b16 %v7670, %v7669
    %v9063 = vpack.c.b16 %v7672, %v7671
    %v9064 = vpack.c.b16 %v7674, %v7673
    %v9065 = vpack.c.b16 %v7676, %v7675
    %v9066 = vpack.c.b16 %v7678, %v7677
    %v9067 = vpack.c.b16 %v7680, %v7679
    %v9068 = vpack.c.b16 %v7682, %v7681
    %v9069 = vpack.c.b16 %v7684, %v7683
    %v9070 = vpack.c.b16 %v7686, %v7685
    %v9071 = vpack.c.b16 %v7688, %v7687
    %v9072 = vpack.c.b16 %v7690, %v7689
    %v9073 = vpack.c.b16 %v7692, %v7691
    %v9074 = vpack.c.b16 %v7694, %v7693
    %v9075 = vpack.c.b16 %v7696, %v7695
    %v9076 = vpack.c.b16 %v7698, %v7697
    %v9077 = vpack.c.b16 %v7700, %v7699
    %v9078 = vpack.c.b16 %v7702, %v7701
    %v9079 = vpack.c.b16 %v7704, %v7703
    %v9080 = vpack.c.b16 %v7706, %v7705
    %v9081 = vpack.c.b16 %v7708, %v7707
    %v9082 = vpack.c.b16 %v7710, %v7709
    %v9083 = vpack.c.b16 %v7712, %v7711
    %v9084 = vpack.c.b16 %v7714, %v7713
    %v9085 = vpack.c.b16 %v7716, %v7715
    %v9086 = vpack.c.b16 %v7718, %v7717
    %v9087 = vpack.c.b16 %v7720, %v7719
    %v9088 = vpack.c.b16 %v7722, %v7721
    %v9089 = vpack.c.b16 %v7724, %v7723
    %v9090 = vpack.c.b16 %v7726, %v7725
    %v9091 = vpack.c.b16 %v7728, %v7727
    %v9092 = vpack.c.b16 %v7730, %v7729
    %v9093 = vpack.c.b16 %v7732, %v7731
    %v9094 = vpack.c.b16 %v7734, %v7733
    %v9095 = vpack.c.b16 %v7736, %v7735
    %v9096 = vpack.c.b16 %v7738, %v7737
    %v9097 = vpack.c.b16 %v7740, %v7739
    %v9098 = vpack.c.b16 %v7742, %v7741
    %v9099 = vpack.c.b16 %v7744, %v7743
    %v9100 = vpack.c.b16 %v7746, %v7745
    %v9101 = vpack.c.b16 %v7748, %v7747
    %v9102 = vpack.c.b16 %v7750, %v7749
    %v9103 = vpack.c.b16 %v7752, %v7751
    %v9104 = vpack.c.b16 %v7754, %v7753
    %v9105 = vpack.c.b16 %v7756, %v7755
    %v9106 = vpack.c.b16 %v7758, %v7757
    %v9107 = vpack.c.b16 %v7760, %v7759
    %v9108 = vpack.c.b16 %v7762, %v7761
    %v9109 = vpack.c.b16 %v7764, %v7763
    %v9110 = vpack.c.b16 %v7766, %v7765
    %v9111 = vpack.c.b16 %v7768, %v7767
    %v9112 = vpack.c.b16 %v7770, %v7769
    %v9113 = vpack.c.b16 %v7772, %v7771
    %v9114 = vpack.c.b16 %v7774, %v7773
    %v9115 = vpack.c.b16 %v7776, %v7775
    %v9116 = vpack.c.b16 %v7778, %v7777
    %v9117 = vpack.c.b16 %v7780, %v7779
    %v9118 = vpack.c.b16 %v7782, %v7781
    %v9119 = vpack.c.b16 %v7784, %v7783
    %v9120 = vpack.c.b16 %v7786, %v7785
    %v9121 = vpack.c.b16 %v7788, %v7787
    %v9122 = vpack.c.b16 %v7790, %v7789
    %v9123 = vpack.c.b16 %v7792, %v7791
    %v9124 = vpack.c.b16 %v7794, %v7793
    %v9125 = vpack.c.b16 %v7796, %v7795
    %v9126 = vpack.c.b16 %v7798, %v7797
    %v9127 = vpack.c.b16 %v7800, %v7799
    %v9128 = vpack.c.b16 %v7802, %v7801
    %v9129 = vpack.c.b16 %v7804, %v7803
    %v9130 = vpack.c.b16 %v7806, %v7805
    %v9131 = vpack.c.b16 %v7808, %v7807
    %v9132 = vpack.c.b16 %v7810, %v7809
    %v9133 = vpack.c.b16 %v7812, %v7811
    %v9134 = vpack.c.b16 %v7814, %v7813
    %v9135 = vpack.c.b16 %v7816, %v7815
    %v9136 = vpack.c.b16 %v7818, %v7817
    %v9137 = vpack.c.b16 %v7820, %v7819
    %v9138 = vpack.c.b16 %v7822, %v7821
    %v9139 = vpack.c.b16 %v7824, %v7823
    %v9140 = vpack.c.b16 %v7826, %v7825
    %v9141 = vpack.c.b16 %v7828, %v7827
    %v9142 = vpack.c.b16 %v7830, %v7829
    %v9143 = vpack.c.b16 %v7832, %v7831
    %v9144 = vpack.c.b16 %v7834, %v7833
    %v9145 = vpack.c.b16 %v7836, %v7835
    %v9146 = vpack.c.b16 %v7838, %v7837
    %v9147 = vpack.c.b16 %v7840, %v7839
    %v9148 = vpack.c.b16 %v7842, %v7841
    %v9149 = vpack.c.b16 %v7844, %v7843
    %v9150 = vpack.c.b16 %v7846, %v7845
    %v9151 = vpack.c.b16 %v7848, %v7847
    %v9152 = vpack.c.b16 %v7850, %v7849
    %v9153 = vpack.c.b16 %v7852, %v7851
    %v9154 = vpack.c.b16 %v7854, %v7853
    %v9155 = vpack.c.b16 %v7856, %v7855
    %v9156 = vpack.c.b16 %v7858, %v7857
    %v9157 = vpack.c.b16 %v7860, %v7859
    %v9158 = vpack.c.b16 %v7862, %v7861
    %v9159 = vpack.c.b16 %v7864, %v7863
    %v9160 = vpack.c.b16 %v7866, %v7865
    %v9161 = vpack.c.b16 %v7868, %v7867
    %v9162 = vpack.c.b16 %v7870, %v7869
    %v9163 = vpack.c.b16 %v7872, %v7871
    %v9164 = vpack.c.b16 %v7874, %v7873
    %v9165 = vpack.c.b16 %v7876, %v7875
    %v9166 = vpack.c.b16 %v7878, %v7877
    %v9167 = vpack.c.b16 %v7880, %v7879
    %v9168 = vpack.c.b16 %v7882, %v7881
    %v9169 = vpack.c.b16 %v7884, %v7883
    %v9170 = vpack.c.b16 %v7886, %v7885
    %v9171 = vpack.c.b16 %v7888, %v7887
    %v9172 = vpack.c.b16 %v7890, %v7889
    %v9173 = vpack.c.b16 %v7892, %v7891
    %v9174 = vpack.c.b16 %v7894, %v7893
    %v9175 = vpack.c.b16 %v7896, %v7895
    %v9176 = vpack.c.b16 %v7898, %v7897
    %v9177 = vpack.c.b16 %v7900, %v7899
    %v9178 = vpack.c.b16 %v7902, %v7901
    %v9179 = vpack.c.b16 %v7904, %v7903
    %v9180 = vpack.c.b16 %v7906, %v7905
    %v9181 = vpack.c.b16 %v7908, %v7907
    %v9182 = vpack.c.b16 %v7910, %v7909
    %v9183 = vpack.c.b16 %v7912, %v7911
    %v9184 = vpack.c.b16 %v7914, %v7913
    %v9185 = vpack.c.b16 %v7916, %v7915
    %v9186 = vpack.c.b16 %v7918, %v7917
    %v9187 = vpack.c.b16 %v7920, %v7919
    %v9188 = vpack.c.b16 %v7922, %v7921
    %v9189 = vpack.c.b16 %v7924, %v7923
    %v9190 = vpack.c.b16 %v7926, %v7925
    %v9191 = vpack.c.b16 %v7928, %v7927
    %v9192 = vpack.c.b16 %v7930, %v7929
    %v9193 = vpack.c.b16 %v7932, %v7931
    %v9194 = vpack.c.b16 %v7934, %v7933
    %v9195 = vpack.c.b16 %v7936, %v7935
    %v9196 = vpack.c.b16 %v7938, %v7937
    %v9197 = vpack.c.b16 %v7940, %v7939
    %v9198 = vpack.c.b16 %v7942, %v7941
    %v9199 = vpack.c.b16 %v7944, %v7943
    %v9200 = vpack.c.b16 %v7946, %v7945
    %v9201 = vpack.c.b16 %v7948, %v7947
    %v9202 = vpack.c.b16 %v7950, %v7949
    %v9203 = vpack.c.b16 %v7952, %v7951
    %v9204 = vpack.c.b16 %v7954, %v7953
    %v9205 = vpack.c.b16 %v7956, %v7955
    %v9206 = vpack.c.b16 %v7958, %v7957
    %v9207 = vpack.c.b16 %v7960, %v7959
    %v9208 = vpack.c.b16 %v7962, %v7961
    %v9209 = vpack.c.b16 %v7964, %v7963
    %v9210 = vpack.c.b16 %v7966, %v7965
    %v9211 = vpack.c.b16 %v7968, %v7967
    %v9212 = vpack.c.b16 %v7970, %v7969
    %v9213 = vpack.c.b16 %v7972, %v7971
    %v9214 = vpack.c.b16 %v7974, %v7973
    %v9215 = vpack.c.b16 %v7976, %v7975
    %v9216 = vpack.c.b16 %v7978, %v7977
    %v9217 = vpack.c.b16 %v7980, %v7979
    %v9218 = vpack.c.b16 %v7982, %v7981
    %v9219 = vpack.c.b16 %v7984, %v7983
    %v9220 = vpack.c.b16 %v7986, %v7985
    %v9221 = vpack.c.b16 %v7988, %v7987
    %v9222 = vpack.c.b16 %v7990, %v7989
    %10455 = vmatpush.bf16.msra.mxu0 %v7998
    %10456 = vmatpush.bf16.msra.mxu0 %v7997
    %10457 = vmatpush.bf16.msra.mxu0 %v7996
    %10458 = vmatpush.bf16.msra.mxu0 %v7995
    %10459 = vmatpush.bf16.msra.mxu0 %v7994
    %10460 = vmatpush.bf16.msra.mxu0 %v7993
    %10461 = vmatpush.bf16.msra.mxu0 %v7992
    %10462 = vmatpush.bf16.msra.mxu0 %v7991
    %10463 = vmatmul.bf16.gmra.mxu0 %v441
    %v10464 = vpop.f32.mrf.mxu0
    %v10465 = vadd.f32 %v3061, %v10464
    %v10466 = vpop.f32.mrf.mxu0
    %10467 = vdwg.mxu0
    %10468 = vmatpush.bf16.msra.mxu0 %v8006
    %10469 = vmatpush.bf16.msra.mxu0 %v8005
    %10470 = vmatpush.bf16.msra.mxu0 %v8004
    %10471 = vmatpush.bf16.msra.mxu0 %v8003
    %10472 = vmatpush.bf16.msra.mxu0 %v8002
    %10473 = vmatpush.bf16.msra.mxu0 %v8001
    %10474 = vmatpush.bf16.msra.mxu0 %v8000
    %10475 = vmatpush.bf16.msra.mxu0 %v7999
    %10476 = vmatmul.bf16.gmra.mxu0 %v442
    %v10477 = vpop.f32.mrf.mxu0
    %v10478 = vadd.f32 %v10465, %v10477
    %v10479 = vpop.f32.mrf.mxu0
    %10480 = vdwg.mxu0
    %10481 = vmatpush.bf16.msra.mxu0 %v8014
    %10482 = vmatpush.bf16.msra.mxu0 %v8013
    %10483 = vmatpush.bf16.msra.mxu0 %v8012
    %10484 = vmatpush.bf16.msra.mxu0 %v8011
    %10485 = vmatpush.bf16.msra.mxu0 %v8010
    %10486 = vmatpush.bf16.msra.mxu0 %v8009
    %10487 = vmatpush.bf16.msra.mxu0 %v8008
    %10488 = vmatpush.bf16.msra.mxu0 %v8007
    %10489 = vmatmul.bf16.gmra.mxu0 %v443
    %v10490 = vpop.f32.mrf.mxu0
    %v10491 = vadd.f32 %v10478, %v10490
    %v10492 = vpop.f32.mrf.mxu0
    %10493 = vdwg.mxu0
    %10494 = vmatpush.bf16.msra.mxu0 %v8022
    %10495 = vmatpush.bf16.msra.mxu0 %v8021
    %10496 = vmatpush.bf16.msra.mxu0 %v8020
    %10497 = vmatpush.bf16.msra.mxu0 %v8019
    %10498 = vmatpush.bf16.msra.mxu0 %v8018
    %10499 = vmatpush.bf16.msra.mxu0 %v8017
    %10500 = vmatpush.bf16.msra.mxu0 %v8016
    %10501 = vmatpush.bf16.msra.mxu0 %v8015
    %10502 = vmatmul.bf16.gmra.mxu0 %v444
    %v10503 = vpop.f32.mrf.mxu0
    %v10504 = vadd.f32 %v10491, %v10503
    %v10505 = vpop.f32.mrf.mxu0
    %10506 = vdwg.mxu0
    %10507 = vmatpush.bf16.msra.mxu0 %v8030
    %10508 = vmatpush.bf16.msra.mxu0 %v8029
    %10509 = vmatpush.bf16.msra.mxu0 %v8028
    %10510 = vmatpush.bf16.msra.mxu0 %v8027
    %10511 = vmatpush.bf16.msra.mxu0 %v8026
    %10512 = vmatpush.bf16.msra.mxu0 %v8025
    %10513 = vmatpush.bf16.msra.mxu0 %v8024
    %10514 = vmatpush.bf16.msra.mxu0 %v8023
    %10515 = vmatmul.bf16.gmra.mxu0 %v445
    %v10516 = vpop.f32.mrf.mxu0
    %v10517 = vadd.f32 %v10504, %v10516
    %v10518 = vpop.f32.mrf.mxu0
    %10519 = vdwg.mxu0
    %10520 = vmatpush.bf16.msra.mxu0 %v8038
    %10521 = vmatpush.bf16.msra.mxu0 %v8037
    %10522 = vmatpush.bf16.msra.mxu0 %v8036
    %10523 = vmatpush.bf16.msra.mxu0 %v8035
    %10524 = vmatpush.bf16.msra.mxu0 %v8034
    %10525 = vmatpush.bf16.msra.mxu0 %v8033
    %10526 = vmatpush.bf16.msra.mxu0 %v8032
    %10527 = vmatpush.bf16.msra.mxu0 %v8031
    %10528 = vmatmul.bf16.gmra.mxu0 %v446
    %v10529 = vpop.f32.mrf.mxu0
    %v10530 = vadd.f32 %v10517, %v10529
    %v10531 = vpop.f32.mrf.mxu0
    %10532 = vdwg.mxu0
    %10533 = vmatpush.bf16.msra.mxu0 %v8046
    %10534 = vmatpush.bf16.msra.mxu0 %v8045
    %10535 = vmatpush.bf16.msra.mxu0 %v8044
    %10536 = vmatpush.bf16.msra.mxu0 %v8043
    %10537 = vmatpush.bf16.msra.mxu0 %v8042
    %10538 = vmatpush.bf16.msra.mxu0 %v8041
    %10539 = vmatpush.bf16.msra.mxu0 %v8040
    %10540 = vmatpush.bf16.msra.mxu0 %v8039
    %10541 = vmatmul.bf16.gmra.mxu0 %v447
    %v10542 = vpop.f32.mrf.mxu0
    %v10543 = vadd.f32 %v10530, %v10542
    %v10544 = vpop.f32.mrf.mxu0
    %10545 = vdwg.mxu0
    %10546 = vmatpush.bf16.msra.mxu0 %v8054
    %10547 = vmatpush.bf16.msra.mxu0 %v8053
    %10548 = vmatpush.bf16.msra.mxu0 %v8052
    %10549 = vmatpush.bf16.msra.mxu0 %v8051
    %10550 = vmatpush.bf16.msra.mxu0 %v8050
    %10551 = vmatpush.bf16.msra.mxu0 %v8049
    %10552 = vmatpush.bf16.msra.mxu0 %v8048
    %10553 = vmatpush.bf16.msra.mxu0 %v8047
    %10554 = vmatmul.bf16.gmra.mxu0 %v448
    %v10555 = vpop.f32.mrf.mxu0
    %v10556 = vadd.f32 %v10543, %v10555
    %v10557 = vpop.f32.mrf.mxu0
    %10558 = vdwg.mxu0
    %10559 = vmatpush.bf16.msra.mxu0 %v8062
    %10560 = vmatpush.bf16.msra.mxu0 %v8061
    %10561 = vmatpush.bf16.msra.mxu0 %v8060
    %10562 = vmatpush.bf16.msra.mxu0 %v8059
    %10563 = vmatpush.bf16.msra.mxu0 %v8058
    %10564 = vmatpush.bf16.msra.mxu0 %v8057
    %10565 = vmatpush.bf16.msra.mxu0 %v8056
    %10566 = vmatpush.bf16.msra.mxu0 %v8055
    %10567 = vmatmul.bf16.gmra.mxu0 %v449
    %v10568 = vpop.f32.mrf.mxu0
    %v10569 = vadd.f32 %v10556, %v10568
    %v10570 = vpop.f32.mrf.mxu0
    %10571 = vdwg.mxu0
    %10572 = vmatpush.bf16.msra.mxu0 %v8070
    %10573 = vmatpush.bf16.msra.mxu0 %v8069
    %10574 = vmatpush.bf16.msra.mxu0 %v8068
    %10575 = vmatpush.bf16.msra.mxu0 %v8067
    %10576 = vmatpush.bf16.msra.mxu0 %v8066
    %10577 = vmatpush.bf16.msra.mxu0 %v8065
    %10578 = vmatpush.bf16.msra.mxu0 %v8064
    %10579 = vmatpush.bf16.msra.mxu0 %v8063
    %10580 = vmatmul.bf16.gmra.mxu0 %v450
    %v10581 = vpop.f32.mrf.mxu0
    %v10582 = vadd.f32 %v10569, %v10581
    %v10583 = vpop.f32.mrf.mxu0
    %10584 = vdwg.mxu0
    %10585 = vmatpush.bf16.msra.mxu0 %v8078
    %10586 = vmatpush.bf16.msra.mxu0 %v8077
    %10587 = vmatpush.bf16.msra.mxu0 %v8076
    %10588 = vmatpush.bf16.msra.mxu0 %v8075
    %10589 = vmatpush.bf16.msra.mxu0 %v8074
    %10590 = vmatpush.bf16.msra.mxu0 %v8073
    %10591 = vmatpush.bf16.msra.mxu0 %v8072
    %10592 = vmatpush.bf16.msra.mxu0 %v8071
    %10593 = vmatmul.bf16.gmra.mxu0 %v451
    %v10594 = vpop.f32.mrf.mxu0
    %v10595 = vadd.f32 %v10582, %v10594
    %v10596 = vpop.f32.mrf.mxu0
    %10597 = vdwg.mxu0
    %10598 = vmatpush.bf16.msra.mxu0 %v8086
    %10599 = vmatpush.bf16.msra.mxu0 %v8085
    %10600 = vmatpush.bf16.msra.mxu0 %v8084
    %10601 = vmatpush.bf16.msra.mxu0 %v8083
    %10602 = vmatpush.bf16.msra.mxu0 %v8082
    %10603 = vmatpush.bf16.msra.mxu0 %v8081
    %10604 = vmatpush.bf16.msra.mxu0 %v8080
    %10605 = vmatpush.bf16.msra.mxu0 %v8079
    %10606 = vmatmul.bf16.gmra.mxu0 %v452
    %v10607 = vpop.f32.mrf.mxu0
    %v10608 = vadd.f32 %v10595, %v10607
    %v10609 = vpop.f32.mrf.mxu0
    %10610 = vdwg.mxu0
    %10611 = vmatpush.bf16.msra.mxu0 %v8094
    %10612 = vmatpush.bf16.msra.mxu0 %v8093
    %10613 = vmatpush.bf16.msra.mxu0 %v8092
    %10614 = vmatpush.bf16.msra.mxu0 %v8091
    %10615 = vmatpush.bf16.msra.mxu0 %v8090
    %10616 = vmatpush.bf16.msra.mxu0 %v8089
    %10617 = vmatpush.bf16.msra.mxu0 %v8088
    %10618 = vmatpush.bf16.msra.mxu0 %v8087
    %10619 = vmatmul.bf16.gmra.mxu0 %v453
    %v10620 = vpop.f32.mrf.mxu0
    %v10621 = vadd.f32 %v10608, %v10620
    %v10622 = vpop.f32.mrf.mxu0
    %10623 = vdwg.mxu0
    %10624 = vmatpush.bf16.msra.mxu0 %v8102
    %10625 = vmatpush.bf16.msra.mxu0 %v8101
    %10626 = vmatpush.bf16.msra.mxu0 %v8100
    %10627 = vmatpush.bf16.msra.mxu0 %v8099
    %10628 = vmatpush.bf16.msra.mxu0 %v8098
    %10629 = vmatpush.bf16.msra.mxu0 %v8097
    %10630 = vmatpush.bf16.msra.mxu0 %v8096
    %10631 = vmatpush.bf16.msra.mxu0 %v8095
    %10632 = vmatmul.bf16.gmra.mxu0 %v454
    %v10633 = vpop.f32.mrf.mxu0
    %v10634 = vadd.f32 %v10621, %v10633
    %v10635 = vpop.f32.mrf.mxu0
    %10636 = vdwg.mxu0
    %10637 = vmatpush.bf16.msra.mxu0 %v8110
    %10638 = vmatpush.bf16.msra.mxu0 %v8109
    %10639 = vmatpush.bf16.msra.mxu0 %v8108
    %10640 = vmatpush.bf16.msra.mxu0 %v8107
    %10641 = vmatpush.bf16.msra.mxu0 %v8106
    %10642 = vmatpush.bf16.msra.mxu0 %v8105
    %10643 = vmatpush.bf16.msra.mxu0 %v8104
    %10644 = vmatpush.bf16.msra.mxu0 %v8103
    %10645 = vmatmul.bf16.gmra.mxu0 %v455
    %v10646 = vpop.f32.mrf.mxu0
    %v10647 = vadd.f32 %v10634, %v10646
    %v10648 = vpop.f32.mrf.mxu0
    %10649 = vdwg.mxu0
    %10650 = vmatpush.bf16.msra.mxu0 %v8118
    %10651 = vmatpush.bf16.msra.mxu0 %v8117
    %10652 = vmatpush.bf16.msra.mxu0 %v8116
    %10653 = vmatpush.bf16.msra.mxu0 %v8115
    %10654 = vmatpush.bf16.msra.mxu0 %v8114
    %10655 = vmatpush.bf16.msra.mxu0 %v8113
    %10656 = vmatpush.bf16.msra.mxu0 %v8112
    %10657 = vmatpush.bf16.msra.mxu0 %v8111
    %10658 = vmatmul.bf16.gmra.mxu0 %v456
    %v10659 = vpop.f32.mrf.mxu0
    %v10660 = vadd.f32 %v10647, %v10659
    %v10661 = vpop.f32.mrf.mxu0
    %10662 = vdwg.mxu0
    %10663 = vmatpush.bf16.msra.mxu0 %v8126
    %10664 = vmatpush.bf16.msra.mxu0 %v8125
    %10665 = vmatpush.bf16.msra.mxu0 %v8124
    %10666 = vmatpush.bf16.msra.mxu0 %v8123
    %10667 = vmatpush.bf16.msra.mxu0 %v8122
    %10668 = vmatpush.bf16.msra.mxu0 %v8121
    %10669 = vmatpush.bf16.msra.mxu0 %v8120
    %10670 = vmatpush.bf16.msra.mxu0 %v8119
    %10671 = vmatmul.bf16.gmra.mxu0 %v457
    %v10672 = vpop.f32.mrf.mxu0
    %v10673 = vadd.f32 %v10660, %v10672
    %v10674 = vpop.f32.mrf.mxu0
    %10675 = vdwg.mxu0
    %10676 = vmatpush.bf16.msra.mxu0 %v8134
    %10677 = vmatpush.bf16.msra.mxu0 %v8133
    %10678 = vmatpush.bf16.msra.mxu0 %v8132
    %10679 = vmatpush.bf16.msra.mxu0 %v8131
    %10680 = vmatpush.bf16.msra.mxu0 %v8130
    %10681 = vmatpush.bf16.msra.mxu0 %v8129
    %10682 = vmatpush.bf16.msra.mxu0 %v8128
    %10683 = vmatpush.bf16.msra.mxu0 %v8127
    %10684 = vmatmul.bf16.gmra.mxu0 %v458
    %v10685 = vpop.f32.mrf.mxu0
    %v10686 = vadd.f32 %v10673, %v10685
    %v10687 = vpop.f32.mrf.mxu0
    %10688 = vdwg.mxu0
    %10689 = vmatpush.bf16.msra.mxu0 %v8142
    %10690 = vmatpush.bf16.msra.mxu0 %v8141
    %10691 = vmatpush.bf16.msra.mxu0 %v8140
    %10692 = vmatpush.bf16.msra.mxu0 %v8139
    %10693 = vmatpush.bf16.msra.mxu0 %v8138
    %10694 = vmatpush.bf16.msra.mxu0 %v8137
    %10695 = vmatpush.bf16.msra.mxu0 %v8136
    %10696 = vmatpush.bf16.msra.mxu0 %v8135
    %10697 = vmatmul.bf16.gmra.mxu0 %v459
    %v10698 = vpop.f32.mrf.mxu0
    %v10699 = vadd.f32 %v10686, %v10698
    %v10700 = vpop.f32.mrf.mxu0
    %10701 = vdwg.mxu0
    %10702 = vmatpush.bf16.msra.mxu0 %v8150
    %10703 = vmatpush.bf16.msra.mxu0 %v8149
    %10704 = vmatpush.bf16.msra.mxu0 %v8148
    %10705 = vmatpush.bf16.msra.mxu0 %v8147
    %10706 = vmatpush.bf16.msra.mxu0 %v8146
    %10707 = vmatpush.bf16.msra.mxu0 %v8145
    %10708 = vmatpush.bf16.msra.mxu0 %v8144
    %10709 = vmatpush.bf16.msra.mxu0 %v8143
    %10710 = vmatmul.bf16.gmra.mxu0 %v460
    %v10711 = vpop.f32.mrf.mxu0
    %v10712 = vadd.f32 %v10699, %v10711
    %v10713 = vpop.f32.mrf.mxu0
    %10714 = vdwg.mxu0
    %10715 = vmatpush.bf16.msra.mxu0 %v8158
    %10716 = vmatpush.bf16.msra.mxu0 %v8157
    %10717 = vmatpush.bf16.msra.mxu0 %v8156
    %10718 = vmatpush.bf16.msra.mxu0 %v8155
    %10719 = vmatpush.bf16.msra.mxu0 %v8154
    %10720 = vmatpush.bf16.msra.mxu0 %v8153
    %10721 = vmatpush.bf16.msra.mxu0 %v8152
    %10722 = vmatpush.bf16.msra.mxu0 %v8151
    %10723 = vmatmul.bf16.gmra.mxu0 %v461
    %v10724 = vpop.f32.mrf.mxu0
    %v10725 = vadd.f32 %v10712, %v10724
    %v10726 = vpop.f32.mrf.mxu0
    %10727 = vdwg.mxu0
    %10728 = vmatpush.bf16.msra.mxu0 %v8166
    %10729 = vmatpush.bf16.msra.mxu0 %v8165
    %10730 = vmatpush.bf16.msra.mxu0 %v8164
    %10731 = vmatpush.bf16.msra.mxu0 %v8163
    %10732 = vmatpush.bf16.msra.mxu0 %v8162
    %10733 = vmatpush.bf16.msra.mxu0 %v8161
    %10734 = vmatpush.bf16.msra.mxu0 %v8160
    %10735 = vmatpush.bf16.msra.mxu0 %v8159
    %10736 = vmatmul.bf16.gmra.mxu0 %v462
    %v10737 = vpop.f32.mrf.mxu0
    %v10738 = vadd.f32 %v10725, %v10737
    %v10739 = vpop.f32.mrf.mxu0
    %10740 = vdwg.mxu0
    %10741 = vmatpush.bf16.msra.mxu0 %v8174
    %10742 = vmatpush.bf16.msra.mxu0 %v8173
    %10743 = vmatpush.bf16.msra.mxu0 %v8172
    %10744 = vmatpush.bf16.msra.mxu0 %v8171
    %10745 = vmatpush.bf16.msra.mxu0 %v8170
    %10746 = vmatpush.bf16.msra.mxu0 %v8169
    %10747 = vmatpush.bf16.msra.mxu0 %v8168
    %10748 = vmatpush.bf16.msra.mxu0 %v8167
    %10749 = vmatmul.bf16.gmra.mxu0 %v463
    %v10750 = vpop.f32.mrf.mxu0
    %v10751 = vadd.f32 %v10738, %v10750
    %v10752 = vpop.f32.mrf.mxu0
    %10753 = vdwg.mxu0
    %10754 = vmatpush.bf16.msra.mxu0 %v8182
    %10755 = vmatpush.bf16.msra.mxu0 %v8181
    %10756 = vmatpush.bf16.msra.mxu0 %v8180
    %10757 = vmatpush.bf16.msra.mxu0 %v8179
    %10758 = vmatpush.bf16.msra.mxu0 %v8178
    %10759 = vmatpush.bf16.msra.mxu0 %v8177
    %10760 = vmatpush.bf16.msra.mxu0 %v8176
    %10761 = vmatpush.bf16.msra.mxu0 %v8175
    %10762 = vmatmul.bf16.gmra.mxu0 %v464
    %v10763 = vpop.f32.mrf.mxu0
    %v10764 = vadd.f32 %v10751, %v10763
    %v10765 = vpop.f32.mrf.mxu0
    %10766 = vdwg.mxu0
    %10767 = vmatpush.bf16.msra.mxu0 %v8190
    %10768 = vmatpush.bf16.msra.mxu0 %v8189
    %10769 = vmatpush.bf16.msra.mxu0 %v8188
    %10770 = vmatpush.bf16.msra.mxu0 %v8187
    %10771 = vmatpush.bf16.msra.mxu0 %v8186
    %10772 = vmatpush.bf16.msra.mxu0 %v8185
    %10773 = vmatpush.bf16.msra.mxu0 %v8184
    %10774 = vmatpush.bf16.msra.mxu0 %v8183
    %10775 = vmatmul.bf16.gmra.mxu0 %v465
    %v10776 = vpop.f32.mrf.mxu0
    %v10777 = vadd.f32 %v10764, %v10776
    %v10778 = vpop.f32.mrf.mxu0
    %10779 = vdwg.mxu0
    %10780 = vmatpush.bf16.msra.mxu0 %v8198
    %10781 = vmatpush.bf16.msra.mxu0 %v8197
    %10782 = vmatpush.bf16.msra.mxu0 %v8196
    %10783 = vmatpush.bf16.msra.mxu0 %v8195
    %10784 = vmatpush.bf16.msra.mxu0 %v8194
    %10785 = vmatpush.bf16.msra.mxu0 %v8193
    %10786 = vmatpush.bf16.msra.mxu0 %v8192
    %10787 = vmatpush.bf16.msra.mxu0 %v8191
    %10788 = vmatmul.bf16.gmra.mxu0 %v466
    %v10789 = vpop.f32.mrf.mxu0
    %v10790 = vadd.f32 %v10777, %v10789
    %v10791 = vpop.f32.mrf.mxu0
    %10792 = vdwg.mxu0
    %10793 = vmatpush.bf16.msra.mxu0 %v8206
    %10794 = vmatpush.bf16.msra.mxu0 %v8205
    %10795 = vmatpush.bf16.msra.mxu0 %v8204
    %10796 = vmatpush.bf16.msra.mxu0 %v8203
    %10797 = vmatpush.bf16.msra.mxu0 %v8202
    %10798 = vmatpush.bf16.msra.mxu0 %v8201
    %10799 = vmatpush.bf16.msra.mxu0 %v8200
    %10800 = vmatpush.bf16.msra.mxu0 %v8199
    %10801 = vmatmul.bf16.gmra.mxu0 %v467
    %v10802 = vpop.f32.mrf.mxu0
    %v10803 = vadd.f32 %v10790, %v10802
    %v10804 = vpop.f32.mrf.mxu0
    %10805 = vdwg.mxu0
    %10806 = vmatpush.bf16.msra.mxu0 %v8214
    %10807 = vmatpush.bf16.msra.mxu0 %v8213
    %10808 = vmatpush.bf16.msra.mxu0 %v8212
    %10809 = vmatpush.bf16.msra.mxu0 %v8211
    %10810 = vmatpush.bf16.msra.mxu0 %v8210
    %10811 = vmatpush.bf16.msra.mxu0 %v8209
    %10812 = vmatpush.bf16.msra.mxu0 %v8208
    %10813 = vmatpush.bf16.msra.mxu0 %v8207
    %10814 = vmatmul.bf16.gmra.mxu0 %v468
    %v10815 = vpop.f32.mrf.mxu0
    %v10816 = vadd.f32 %v10803, %v10815
    %v10817 = vpop.f32.mrf.mxu0
    %10818 = vdwg.mxu0
    %10819 = vmatpush.bf16.msra.mxu0 %v8222
    %10820 = vmatpush.bf16.msra.mxu0 %v8221
    %10821 = vmatpush.bf16.msra.mxu0 %v8220
    %10822 = vmatpush.bf16.msra.mxu0 %v8219
    %10823 = vmatpush.bf16.msra.mxu0 %v8218
    %10824 = vmatpush.bf16.msra.mxu0 %v8217
    %10825 = vmatpush.bf16.msra.mxu0 %v8216
    %10826 = vmatpush.bf16.msra.mxu0 %v8215
    %10827 = vmatmul.bf16.gmra.mxu0 %v469
    %v10828 = vpop.f32.mrf.mxu0
    %v10829 = vadd.f32 %v10816, %v10828
    %v10830 = vpop.f32.mrf.mxu0
    %10831 = vdwg.mxu0
    %10832 = vmatpush.bf16.msra.mxu0 %v8230
    %10833 = vmatpush.bf16.msra.mxu0 %v8229
    %10834 = vmatpush.bf16.msra.mxu0 %v8228
    %10835 = vmatpush.bf16.msra.mxu0 %v8227
    %10836 = vmatpush.bf16.msra.mxu0 %v8226
    %10837 = vmatpush.bf16.msra.mxu0 %v8225
    %10838 = vmatpush.bf16.msra.mxu0 %v8224
    %10839 = vmatpush.bf16.msra.mxu0 %v8223
    %10840 = vmatmul.bf16.gmra.mxu0 %v470
    %v10841 = vpop.f32.mrf.mxu0
    %v10842 = vadd.f32 %v10829, %v10841
    %v10843 = vpop.f32.mrf.mxu0
    %10844 = vdwg.mxu0
    %10845 = vmatpush.bf16.msra.mxu0 %v8238
    %10846 = vmatpush.bf16.msra.mxu0 %v8237
    %10847 = vmatpush.bf16.msra.mxu0 %v8236
    %10848 = vmatpush.bf16.msra.mxu0 %v8235
    %10849 = vmatpush.bf16.msra.mxu0 %v8234
    %10850 = vmatpush.bf16.msra.mxu0 %v8233
    %10851 = vmatpush.bf16.msra.mxu0 %v8232
    %10852 = vmatpush.bf16.msra.mxu0 %v8231
    %10853 = vmatmul.bf16.gmra.mxu0 %v471
    %v10854 = vpop.f32.mrf.mxu0
    %v10855 = vadd.f32 %v10842, %v10854
    %v10856 = vpop.f32.mrf.mxu0
    %10857 = vdwg.mxu0
    %10858 = vmatpush.bf16.msra.mxu0 %v8246
    %10859 = vmatpush.bf16.msra.mxu0 %v8245
    %10860 = vmatpush.bf16.msra.mxu0 %v8244
    %10861 = vmatpush.bf16.msra.mxu0 %v8243
    %10862 = vmatpush.bf16.msra.mxu0 %v8242
    %10863 = vmatpush.bf16.msra.mxu0 %v8241
    %10864 = vmatpush.bf16.msra.mxu0 %v8240
    %10865 = vmatpush.bf16.msra.mxu0 %v8239
    %10866 = vmatmul.bf16.gmra.mxu0 %v472
    %v10867 = vpop.f32.mrf.mxu0
    %v10868 = vadd.f32 %v10855, %v10867
    %v10869 = vpop.f32.mrf.mxu0
    %10870 = vdwg.mxu0
    %10871 = vmatpush.bf16.msra.mxu0 %v8254
    %10872 = vmatpush.bf16.msra.mxu0 %v8253
    %10873 = vmatpush.bf16.msra.mxu0 %v8252
    %10874 = vmatpush.bf16.msra.mxu0 %v8251
    %10875 = vmatpush.bf16.msra.mxu0 %v8250
    %10876 = vmatpush.bf16.msra.mxu0 %v8249
    %10877 = vmatpush.bf16.msra.mxu0 %v8248
    %10878 = vmatpush.bf16.msra.mxu0 %v8247
    %10879 = vmatmul.bf16.gmra.mxu0 %v473
    %v10880 = vpop.f32.mrf.mxu0
    %v10881 = vadd.f32 %v10868, %v10880
    %v10882 = vpop.f32.mrf.mxu0
    %10883 = vdwg.mxu0
    %10884 = vmatpush.bf16.msra.mxu0 %v8262
    %10885 = vmatpush.bf16.msra.mxu0 %v8261
    %10886 = vmatpush.bf16.msra.mxu0 %v8260
    %10887 = vmatpush.bf16.msra.mxu0 %v8259
    %10888 = vmatpush.bf16.msra.mxu0 %v8258
    %10889 = vmatpush.bf16.msra.mxu0 %v8257
    %10890 = vmatpush.bf16.msra.mxu0 %v8256
    %10891 = vmatpush.bf16.msra.mxu0 %v8255
    %10892 = vmatmul.bf16.gmra.mxu0 %v474
    %v10893 = vpop.f32.mrf.mxu0
    %v10894 = vadd.f32 %v10881, %v10893
    %v10895 = vpop.f32.mrf.mxu0
    %10896 = vdwg.mxu0
    %10897 = vmatpush.bf16.msra.mxu0 %v8270
    %10898 = vmatpush.bf16.msra.mxu0 %v8269
    %10899 = vmatpush.bf16.msra.mxu0 %v8268
    %10900 = vmatpush.bf16.msra.mxu0 %v8267
    %10901 = vmatpush.bf16.msra.mxu0 %v8266
    %10902 = vmatpush.bf16.msra.mxu0 %v8265
    %10903 = vmatpush.bf16.msra.mxu0 %v8264
    %10904 = vmatpush.bf16.msra.mxu0 %v8263
    %10905 = vmatmul.bf16.gmra.mxu0 %v475
    %v10906 = vpop.f32.mrf.mxu0
    %v10907 = vadd.f32 %v10894, %v10906
    %v10908 = vpop.f32.mrf.mxu0
    %10909 = vdwg.mxu0
    %10910 = vmatpush.bf16.msra.mxu0 %v8278
    %10911 = vmatpush.bf16.msra.mxu0 %v8277
    %10912 = vmatpush.bf16.msra.mxu0 %v8276
    %10913 = vmatpush.bf16.msra.mxu0 %v8275
    %10914 = vmatpush.bf16.msra.mxu0 %v8274
    %10915 = vmatpush.bf16.msra.mxu0 %v8273
    %10916 = vmatpush.bf16.msra.mxu0 %v8272
    %10917 = vmatpush.bf16.msra.mxu0 %v8271
    %10918 = vmatmul.bf16.gmra.mxu0 %v476
    %v10919 = vpop.f32.mrf.mxu0
    %v10920 = vadd.f32 %v10907, %v10919
    %v10921 = vpop.f32.mrf.mxu0
    %10922 = vdwg.mxu0
    %10923 = vmatpush.bf16.msra.mxu0 %v8286
    %10924 = vmatpush.bf16.msra.mxu0 %v8285
    %10925 = vmatpush.bf16.msra.mxu0 %v8284
    %10926 = vmatpush.bf16.msra.mxu0 %v8283
    %10927 = vmatpush.bf16.msra.mxu0 %v8282
    %10928 = vmatpush.bf16.msra.mxu0 %v8281
    %10929 = vmatpush.bf16.msra.mxu0 %v8280
    %10930 = vmatpush.bf16.msra.mxu0 %v8279
    %10931 = vmatmul.bf16.gmra.mxu0 %v477
    %v10932 = vpop.f32.mrf.mxu0
    %v10933 = vadd.f32 %v10920, %v10932
    %v10934 = vpop.f32.mrf.mxu0
    %10935 = vdwg.mxu0
    %10936 = vmatpush.bf16.msra.mxu0 %v8294
    %10937 = vmatpush.bf16.msra.mxu0 %v8293
    %10938 = vmatpush.bf16.msra.mxu0 %v8292
    %10939 = vmatpush.bf16.msra.mxu0 %v8291
    %10940 = vmatpush.bf16.msra.mxu0 %v8290
    %10941 = vmatpush.bf16.msra.mxu0 %v8289
    %10942 = vmatpush.bf16.msra.mxu0 %v8288
    %10943 = vmatpush.bf16.msra.mxu0 %v8287
    %10944 = vmatmul.bf16.gmra.mxu0 %v478
    %v10945 = vpop.f32.mrf.mxu0
    %v10946 = vadd.f32 %v10933, %v10945
    %v10947 = vpop.f32.mrf.mxu0
    %10948 = vdwg.mxu0
    %10949 = vmatpush.bf16.msra.mxu0 %v8302
    %10950 = vmatpush.bf16.msra.mxu0 %v8301
    %10951 = vmatpush.bf16.msra.mxu0 %v8300
    %10952 = vmatpush.bf16.msra.mxu0 %v8299
    %10953 = vmatpush.bf16.msra.mxu0 %v8298
    %10954 = vmatpush.bf16.msra.mxu0 %v8297
    %10955 = vmatpush.bf16.msra.mxu0 %v8296
    %10956 = vmatpush.bf16.msra.mxu0 %v8295
    %10957 = vmatmul.bf16.gmra.mxu0 %v479
    %v10958 = vpop.f32.mrf.mxu0
    %v10959 = vadd.f32 %v10946, %v10958
    %v10960 = vpop.f32.mrf.mxu0
    %10961 = vdwg.mxu0
    %10962 = vmatpush.bf16.msra.mxu0 %v8310
    %10963 = vmatpush.bf16.msra.mxu0 %v8309
    %10964 = vmatpush.bf16.msra.mxu0 %v8308
    %10965 = vmatpush.bf16.msra.mxu0 %v8307
    %10966 = vmatpush.bf16.msra.mxu0 %v8306
    %10967 = vmatpush.bf16.msra.mxu0 %v8305
    %10968 = vmatpush.bf16.msra.mxu0 %v8304
    %10969 = vmatpush.bf16.msra.mxu0 %v8303
    %10970 = vmatmul.bf16.gmra.mxu0 %v480
    %v10971 = vpop.f32.mrf.mxu0
    %v10972 = vadd.f32 %v10959, %v10971
    %v10973 = vpop.f32.mrf.mxu0
    %10974 = vdwg.mxu0
    %10975 = vmatpush.bf16.msra.mxu0 %v8318
    %10976 = vmatpush.bf16.msra.mxu0 %v8317
    %10977 = vmatpush.bf16.msra.mxu0 %v8316
    %10978 = vmatpush.bf16.msra.mxu0 %v8315
    %10979 = vmatpush.bf16.msra.mxu0 %v8314
    %10980 = vmatpush.bf16.msra.mxu0 %v8313
    %10981 = vmatpush.bf16.msra.mxu0 %v8312
    %10982 = vmatpush.bf16.msra.mxu0 %v8311
    %10983 = vmatmul.bf16.gmra.mxu0 %v481
    %v10984 = vpop.f32.mrf.mxu0
    %v10985 = vadd.f32 %v10972, %v10984
    %v10986 = vpop.f32.mrf.mxu0
    %10987 = vdwg.mxu0
    %10988 = vmatpush.bf16.msra.mxu0 %v8326
    %10989 = vmatpush.bf16.msra.mxu0 %v8325
    %10990 = vmatpush.bf16.msra.mxu0 %v8324
    %10991 = vmatpush.bf16.msra.mxu0 %v8323
    %10992 = vmatpush.bf16.msra.mxu0 %v8322
    %10993 = vmatpush.bf16.msra.mxu0 %v8321
    %10994 = vmatpush.bf16.msra.mxu0 %v8320
    %10995 = vmatpush.bf16.msra.mxu0 %v8319
    %10996 = vmatmul.bf16.gmra.mxu0 %v482
    %v10997 = vpop.f32.mrf.mxu0
    %v10998 = vadd.f32 %v10985, %v10997
    %v10999 = vpop.f32.mrf.mxu0
    %11000 = vdwg.mxu0
    %11001 = vmatpush.bf16.msra.mxu0 %v8334
    %11002 = vmatpush.bf16.msra.mxu0 %v8333
    %11003 = vmatpush.bf16.msra.mxu0 %v8332
    %11004 = vmatpush.bf16.msra.mxu0 %v8331
    %11005 = vmatpush.bf16.msra.mxu0 %v8330
    %11006 = vmatpush.bf16.msra.mxu0 %v8329
    %11007 = vmatpush.bf16.msra.mxu0 %v8328
    %11008 = vmatpush.bf16.msra.mxu0 %v8327
    %11009 = vmatmul.bf16.gmra.mxu0 %v483
    %v11010 = vpop.f32.mrf.mxu0
    %v11011 = vadd.f32 %v10998, %v11010
    %v11012 = vpop.f32.mrf.mxu0
    %11013 = vdwg.mxu0
    %11014 = vmatpush.bf16.msra.mxu0 %v8342
    %11015 = vmatpush.bf16.msra.mxu0 %v8341
    %11016 = vmatpush.bf16.msra.mxu0 %v8340
    %11017 = vmatpush.bf16.msra.mxu0 %v8339
    %11018 = vmatpush.bf16.msra.mxu0 %v8338
    %11019 = vmatpush.bf16.msra.mxu0 %v8337
    %11020 = vmatpush.bf16.msra.mxu0 %v8336
    %11021 = vmatpush.bf16.msra.mxu0 %v8335
    %11022 = vmatmul.bf16.gmra.mxu0 %v484
    %v11023 = vpop.f32.mrf.mxu0
    %v11024 = vadd.f32 %v11011, %v11023
    %v11025 = vpop.f32.mrf.mxu0
    %11026 = vdwg.mxu0
    %11027 = vmatpush.bf16.msra.mxu0 %v8350
    %11028 = vmatpush.bf16.msra.mxu0 %v8349
    %11029 = vmatpush.bf16.msra.mxu0 %v8348
    %11030 = vmatpush.bf16.msra.mxu0 %v8347
    %11031 = vmatpush.bf16.msra.mxu0 %v8346
    %11032 = vmatpush.bf16.msra.mxu0 %v8345
    %11033 = vmatpush.bf16.msra.mxu0 %v8344
    %11034 = vmatpush.bf16.msra.mxu0 %v8343
    %11035 = vmatmul.bf16.gmra.mxu0 %v485
    %v11036 = vpop.f32.mrf.mxu0
    %v11037 = vadd.f32 %v11024, %v11036
    %v11038 = vpop.f32.mrf.mxu0
    %11039 = vdwg.mxu0
    %11040 = vmatpush.bf16.msra.mxu0 %v8358
    %11041 = vmatpush.bf16.msra.mxu0 %v8357
    %11042 = vmatpush.bf16.msra.mxu0 %v8356
    %11043 = vmatpush.bf16.msra.mxu0 %v8355
    %11044 = vmatpush.bf16.msra.mxu0 %v8354
    %11045 = vmatpush.bf16.msra.mxu0 %v8353
    %11046 = vmatpush.bf16.msra.mxu0 %v8352
    %11047 = vmatpush.bf16.msra.mxu0 %v8351
    %11048 = vmatmul.bf16.gmra.mxu0 %v486
    %v11049 = vpop.f32.mrf.mxu0
    %v11050 = vadd.f32 %v11037, %v11049
    %v11051 = vpop.f32.mrf.mxu0
    %11052 = vdwg.mxu0
    %11053 = vmatpush.bf16.msra.mxu0 %v8366
    %11054 = vmatpush.bf16.msra.mxu0 %v8365
    %11055 = vmatpush.bf16.msra.mxu0 %v8364
    %11056 = vmatpush.bf16.msra.mxu0 %v8363
    %11057 = vmatpush.bf16.msra.mxu0 %v8362
    %11058 = vmatpush.bf16.msra.mxu0 %v8361
    %11059 = vmatpush.bf16.msra.mxu0 %v8360
    %11060 = vmatpush.bf16.msra.mxu0 %v8359
    %11061 = vmatmul.bf16.gmra.mxu0 %v487
    %v11062 = vpop.f32.mrf.mxu0
    %v11063 = vadd.f32 %v11050, %v11062
    %v11064 = vpop.f32.mrf.mxu0
    %11065 = vdwg.mxu0
    %11066 = vmatpush.bf16.msra.mxu0 %v8374
    %11067 = vmatpush.bf16.msra.mxu0 %v8373
    %11068 = vmatpush.bf16.msra.mxu0 %v8372
    %11069 = vmatpush.bf16.msra.mxu0 %v8371
    %11070 = vmatpush.bf16.msra.mxu0 %v8370
    %11071 = vmatpush.bf16.msra.mxu0 %v8369
    %11072 = vmatpush.bf16.msra.mxu0 %v8368
    %11073 = vmatpush.bf16.msra.mxu0 %v8367
    %11074 = vmatmul.bf16.gmra.mxu0 %v488
    %v11075 = vpop.f32.mrf.mxu0
    %v11076 = vadd.f32 %v11063, %v11075
    %v11077 = vpop.f32.mrf.mxu0
    %11078 = vdwg.mxu0
    %11079 = vmatpush.bf16.msra.mxu0 %v8382
    %11080 = vmatpush.bf16.msra.mxu0 %v8381
    %11081 = vmatpush.bf16.msra.mxu0 %v8380
    %11082 = vmatpush.bf16.msra.mxu0 %v8379
    %11083 = vmatpush.bf16.msra.mxu0 %v8378
    %11084 = vmatpush.bf16.msra.mxu0 %v8377
    %11085 = vmatpush.bf16.msra.mxu0 %v8376
    %11086 = vmatpush.bf16.msra.mxu0 %v8375
    %11087 = vmatmul.bf16.gmra.mxu0 %v489
    %v11088 = vpop.f32.mrf.mxu0
    %v11089 = vadd.f32 %v11076, %v11088
    %v11090 = vpop.f32.mrf.mxu0
    %11091 = vdwg.mxu0
    %11092 = vmatpush.bf16.msra.mxu0 %v8390
    %11093 = vmatpush.bf16.msra.mxu0 %v8389
    %11094 = vmatpush.bf16.msra.mxu0 %v8388
    %11095 = vmatpush.bf16.msra.mxu0 %v8387
    %11096 = vmatpush.bf16.msra.mxu0 %v8386
    %11097 = vmatpush.bf16.msra.mxu0 %v8385
    %11098 = vmatpush.bf16.msra.mxu0 %v8384
    %11099 = vmatpush.bf16.msra.mxu0 %v8383
    %11100 = vmatmul.bf16.gmra.mxu0 %v490
    %v11101 = vpop.f32.mrf.mxu0
    %v11102 = vadd.f32 %v11089, %v11101
    %v11103 = vpop.f32.mrf.mxu0
    %11104 = vdwg.mxu0
    %11105 = vmatpush.bf16.msra.mxu0 %v8398
    %11106 = vmatpush.bf16.msra.mxu0 %v8397
    %11107 = vmatpush.bf16.msra.mxu0 %v8396
    %11108 = vmatpush.bf16.msra.mxu0 %v8395
    %11109 = vmatpush.bf16.msra.mxu0 %v8394
    %11110 = vmatpush.bf16.msra.mxu0 %v8393
    %11111 = vmatpush.bf16.msra.mxu0 %v8392
    %11112 = vmatpush.bf16.msra.mxu0 %v8391
    %11113 = vmatmul.bf16.gmra.mxu0 %v491
    %v11114 = vpop.f32.mrf.mxu0
    %v11115 = vadd.f32 %v11102, %v11114
    %v11116 = vpop.f32.mrf.mxu0
    %11117 = vdwg.mxu0
    %11118 = vmatpush.bf16.msra.mxu0 %v8406
    %11119 = vmatpush.bf16.msra.mxu0 %v8405
    %11120 = vmatpush.bf16.msra.mxu0 %v8404
    %11121 = vmatpush.bf16.msra.mxu0 %v8403
    %11122 = vmatpush.bf16.msra.mxu0 %v8402
    %11123 = vmatpush.bf16.msra.mxu0 %v8401
    %11124 = vmatpush.bf16.msra.mxu0 %v8400
    %11125 = vmatpush.bf16.msra.mxu0 %v8399
    %11126 = vmatmul.bf16.gmra.mxu0 %v492
    %v11127 = vpop.f32.mrf.mxu0
    %v11128 = vadd.f32 %v11115, %v11127
    %v11129 = vpop.f32.mrf.mxu0
    %11130 = vdwg.mxu0
    %11131 = vmatpush.bf16.msra.mxu0 %v8414
    %11132 = vmatpush.bf16.msra.mxu0 %v8413
    %11133 = vmatpush.bf16.msra.mxu0 %v8412
    %11134 = vmatpush.bf16.msra.mxu0 %v8411
    %11135 = vmatpush.bf16.msra.mxu0 %v8410
    %11136 = vmatpush.bf16.msra.mxu0 %v8409
    %11137 = vmatpush.bf16.msra.mxu0 %v8408
    %11138 = vmatpush.bf16.msra.mxu0 %v8407
    %11139 = vmatmul.bf16.gmra.mxu0 %v493
    %v11140 = vpop.f32.mrf.mxu0
    %v11141 = vadd.f32 %v11128, %v11140
    %v11142 = vpop.f32.mrf.mxu0
    %11143 = vdwg.mxu0
    %11144 = vmatpush.bf16.msra.mxu0 %v8422
    %11145 = vmatpush.bf16.msra.mxu0 %v8421
    %11146 = vmatpush.bf16.msra.mxu0 %v8420
    %11147 = vmatpush.bf16.msra.mxu0 %v8419
    %11148 = vmatpush.bf16.msra.mxu0 %v8418
    %11149 = vmatpush.bf16.msra.mxu0 %v8417
    %11150 = vmatpush.bf16.msra.mxu0 %v8416
    %11151 = vmatpush.bf16.msra.mxu0 %v8415
    %11152 = vmatmul.bf16.gmra.mxu0 %v494
    %v11153 = vpop.f32.mrf.mxu0
    %v11154 = vadd.f32 %v11141, %v11153
    %v11155 = vpop.f32.mrf.mxu0
    %11156 = vdwg.mxu0
    %11157 = vmatpush.bf16.msra.mxu0 %v8430
    %11158 = vmatpush.bf16.msra.mxu0 %v8429
    %11159 = vmatpush.bf16.msra.mxu0 %v8428
    %11160 = vmatpush.bf16.msra.mxu0 %v8427
    %11161 = vmatpush.bf16.msra.mxu0 %v8426
    %11162 = vmatpush.bf16.msra.mxu0 %v8425
    %11163 = vmatpush.bf16.msra.mxu0 %v8424
    %11164 = vmatpush.bf16.msra.mxu0 %v8423
    %11165 = vmatmul.bf16.gmra.mxu0 %v495
    %v11166 = vpop.f32.mrf.mxu0
    %v11167 = vadd.f32 %v11154, %v11166
    %v11168 = vpop.f32.mrf.mxu0
    %11169 = vdwg.mxu0
    %11170 = vmatpush.bf16.msra.mxu0 %v8438
    %11171 = vmatpush.bf16.msra.mxu0 %v8437
    %11172 = vmatpush.bf16.msra.mxu0 %v8436
    %11173 = vmatpush.bf16.msra.mxu0 %v8435
    %11174 = vmatpush.bf16.msra.mxu0 %v8434
    %11175 = vmatpush.bf16.msra.mxu0 %v8433
    %11176 = vmatpush.bf16.msra.mxu0 %v8432
    %11177 = vmatpush.bf16.msra.mxu0 %v8431
    %11178 = vmatmul.bf16.gmra.mxu0 %v496
    %v11179 = vpop.f32.mrf.mxu0
    %v11180 = vadd.f32 %v11167, %v11179
    %v11181 = vpop.f32.mrf.mxu0
    %11182 = vdwg.mxu0
    %11183 = vmatpush.bf16.msra.mxu0 %v8446
    %11184 = vmatpush.bf16.msra.mxu0 %v8445
    %11185 = vmatpush.bf16.msra.mxu0 %v8444
    %11186 = vmatpush.bf16.msra.mxu0 %v8443
    %11187 = vmatpush.bf16.msra.mxu0 %v8442
    %11188 = vmatpush.bf16.msra.mxu0 %v8441
    %11189 = vmatpush.bf16.msra.mxu0 %v8440
    %11190 = vmatpush.bf16.msra.mxu0 %v8439
    %11191 = vmatmul.bf16.gmra.mxu0 %v497
    %v11192 = vpop.f32.mrf.mxu0
    %v11193 = vadd.f32 %v11180, %v11192
    %v11194 = vpop.f32.mrf.mxu0
    %11195 = vdwg.mxu0
    %11196 = vmatpush.bf16.msra.mxu0 %v8454
    %11197 = vmatpush.bf16.msra.mxu0 %v8453
    %11198 = vmatpush.bf16.msra.mxu0 %v8452
    %11199 = vmatpush.bf16.msra.mxu0 %v8451
    %11200 = vmatpush.bf16.msra.mxu0 %v8450
    %11201 = vmatpush.bf16.msra.mxu0 %v8449
    %11202 = vmatpush.bf16.msra.mxu0 %v8448
    %11203 = vmatpush.bf16.msra.mxu0 %v8447
    %11204 = vmatmul.bf16.gmra.mxu0 %v498
    %v11205 = vpop.f32.mrf.mxu0
    %v11206 = vadd.f32 %v11193, %v11205
    %v11207 = vpop.f32.mrf.mxu0
    %11208 = vdwg.mxu0
    %11209 = vmatpush.bf16.msra.mxu0 %v8462
    %11210 = vmatpush.bf16.msra.mxu0 %v8461
    %11211 = vmatpush.bf16.msra.mxu0 %v8460
    %11212 = vmatpush.bf16.msra.mxu0 %v8459
    %11213 = vmatpush.bf16.msra.mxu0 %v8458
    %11214 = vmatpush.bf16.msra.mxu0 %v8457
    %11215 = vmatpush.bf16.msra.mxu0 %v8456
    %11216 = vmatpush.bf16.msra.mxu0 %v8455
    %11217 = vmatmul.bf16.gmra.mxu0 %v499
    %v11218 = vpop.f32.mrf.mxu0
    %v11219 = vadd.f32 %v11206, %v11218
    %v11220 = vpop.f32.mrf.mxu0
    %11221 = vdwg.mxu0
    %11222 = vmatpush.bf16.msra.mxu0 %v8470
    %11223 = vmatpush.bf16.msra.mxu0 %v8469
    %11224 = vmatpush.bf16.msra.mxu0 %v8468
    %11225 = vmatpush.bf16.msra.mxu0 %v8467
    %11226 = vmatpush.bf16.msra.mxu0 %v8466
    %11227 = vmatpush.bf16.msra.mxu0 %v8465
    %11228 = vmatpush.bf16.msra.mxu0 %v8464
    %11229 = vmatpush.bf16.msra.mxu0 %v8463
    %11230 = vmatmul.bf16.gmra.mxu0 %v500
    %v11231 = vpop.f32.mrf.mxu0
    %v11232 = vadd.f32 %v11219, %v11231
    %v11233 = vpop.f32.mrf.mxu0
    %11234 = vdwg.mxu0
    %11235 = vmatpush.bf16.msra.mxu0 %v8478
    %11236 = vmatpush.bf16.msra.mxu0 %v8477
    %11237 = vmatpush.bf16.msra.mxu0 %v8476
    %11238 = vmatpush.bf16.msra.mxu0 %v8475
    %11239 = vmatpush.bf16.msra.mxu0 %v8474
    %11240 = vmatpush.bf16.msra.mxu0 %v8473
    %11241 = vmatpush.bf16.msra.mxu0 %v8472
    %11242 = vmatpush.bf16.msra.mxu0 %v8471
    %11243 = vmatmul.bf16.gmra.mxu0 %v501
    %v11244 = vpop.f32.mrf.mxu0
    %v11245 = vadd.f32 %v11232, %v11244
    %v11246 = vpop.f32.mrf.mxu0
    %11247 = vdwg.mxu0
    %11248 = vmatpush.bf16.msra.mxu0 %v8486
    %11249 = vmatpush.bf16.msra.mxu0 %v8485
    %11250 = vmatpush.bf16.msra.mxu0 %v8484
    %11251 = vmatpush.bf16.msra.mxu0 %v8483
    %11252 = vmatpush.bf16.msra.mxu0 %v8482
    %11253 = vmatpush.bf16.msra.mxu0 %v8481
    %11254 = vmatpush.bf16.msra.mxu0 %v8480
    %11255 = vmatpush.bf16.msra.mxu0 %v8479
    %11256 = vmatmul.bf16.gmra.mxu0 %v502
    %v11257 = vpop.f32.mrf.mxu0
    %v11258 = vadd.f32 %v11245, %v11257
    %v11259 = vpop.f32.mrf.mxu0
    %11260 = vdwg.mxu0
    %11261 = vmatpush.bf16.msra.mxu0 %v8494
    %11262 = vmatpush.bf16.msra.mxu0 %v8493
    %11263 = vmatpush.bf16.msra.mxu0 %v8492
    %11264 = vmatpush.bf16.msra.mxu0 %v8491
    %11265 = vmatpush.bf16.msra.mxu0 %v8490
    %11266 = vmatpush.bf16.msra.mxu0 %v8489
    %11267 = vmatpush.bf16.msra.mxu0 %v8488
    %11268 = vmatpush.bf16.msra.mxu0 %v8487
    %11269 = vmatmul.bf16.gmra.mxu0 %v503
    %v11270 = vpop.f32.mrf.mxu0
    %v11271 = vadd.f32 %v11258, %v11270
    %v11272 = vpop.f32.mrf.mxu0
    %11273 = vdwg.mxu0
    %11274 = vmatpush.bf16.msra.mxu0 %v8502
    %11275 = vmatpush.bf16.msra.mxu0 %v8501
    %11276 = vmatpush.bf16.msra.mxu0 %v8500
    %11277 = vmatpush.bf16.msra.mxu0 %v8499
    %11278 = vmatpush.bf16.msra.mxu0 %v8498
    %11279 = vmatpush.bf16.msra.mxu0 %v8497
    %11280 = vmatpush.bf16.msra.mxu0 %v8496
    %11281 = vmatpush.bf16.msra.mxu0 %v8495
    %11282 = vmatmul.bf16.gmra.mxu0 %v504
    %v11283 = vpop.f32.mrf.mxu0
    %v11284 = vadd.f32 %v11271, %v11283
    %v11285 = vpop.f32.mrf.mxu0
    %11286 = vdwg.mxu0
    %11287 = vmatpush.bf16.msra.mxu0 %v8510
    %11288 = vmatpush.bf16.msra.mxu0 %v8509
    %11289 = vmatpush.bf16.msra.mxu0 %v8508
    %11290 = vmatpush.bf16.msra.mxu0 %v8507
    %11291 = vmatpush.bf16.msra.mxu0 %v8506
    %11292 = vmatpush.bf16.msra.mxu0 %v8505
    %11293 = vmatpush.bf16.msra.mxu0 %v8504
    %11294 = vmatpush.bf16.msra.mxu0 %v8503
    %11295 = vmatmul.bf16.gmra.mxu0 %v505
    %v11296 = vpop.f32.mrf.mxu0
    %v11297 = vadd.f32 %v11284, %v11296
    %v11298 = vpop.f32.mrf.mxu0
    %11299 = vdwg.mxu0
    %11300 = vmatpush.bf16.msra.mxu0 %v8518
    %11301 = vmatpush.bf16.msra.mxu0 %v8517
    %11302 = vmatpush.bf16.msra.mxu0 %v8516
    %11303 = vmatpush.bf16.msra.mxu0 %v8515
    %11304 = vmatpush.bf16.msra.mxu0 %v8514
    %11305 = vmatpush.bf16.msra.mxu0 %v8513
    %11306 = vmatpush.bf16.msra.mxu0 %v8512
    %11307 = vmatpush.bf16.msra.mxu0 %v8511
    %11308 = vmatmul.bf16.gmra.mxu0 %v506
    %v11309 = vpop.f32.mrf.mxu0
    %v11310 = vadd.f32 %v11297, %v11309
    %v11311 = vpop.f32.mrf.mxu0
    %11312 = vdwg.mxu0
    %11313 = vmatpush.bf16.msra.mxu0 %v8526
    %11314 = vmatpush.bf16.msra.mxu0 %v8525
    %11315 = vmatpush.bf16.msra.mxu0 %v8524
    %11316 = vmatpush.bf16.msra.mxu0 %v8523
    %11317 = vmatpush.bf16.msra.mxu0 %v8522
    %11318 = vmatpush.bf16.msra.mxu0 %v8521
    %11319 = vmatpush.bf16.msra.mxu0 %v8520
    %11320 = vmatpush.bf16.msra.mxu0 %v8519
    %11321 = vmatmul.bf16.gmra.mxu0 %v507
    %v11322 = vpop.f32.mrf.mxu0
    %v11323 = vadd.f32 %v11310, %v11322
    %v11324 = vpop.f32.mrf.mxu0
    %11325 = vdwg.mxu0
    %11326 = vmatpush.bf16.msra.mxu0 %v8534
    %11327 = vmatpush.bf16.msra.mxu0 %v8533
    %11328 = vmatpush.bf16.msra.mxu0 %v8532
    %11329 = vmatpush.bf16.msra.mxu0 %v8531
    %11330 = vmatpush.bf16.msra.mxu0 %v8530
    %11331 = vmatpush.bf16.msra.mxu0 %v8529
    %11332 = vmatpush.bf16.msra.mxu0 %v8528
    %11333 = vmatpush.bf16.msra.mxu0 %v8527
    %11334 = vmatmul.bf16.gmra.mxu0 %v508
    %v11335 = vpop.f32.mrf.mxu0
    %v11336 = vadd.f32 %v11323, %v11335
    %v11337 = vpop.f32.mrf.mxu0
    %11338 = vdwg.mxu0
    %11339 = vmatpush.bf16.msra.mxu0 %v8542
    %11340 = vmatpush.bf16.msra.mxu0 %v8541
    %11341 = vmatpush.bf16.msra.mxu0 %v8540
    %11342 = vmatpush.bf16.msra.mxu0 %v8539
    %11343 = vmatpush.bf16.msra.mxu0 %v8538
    %11344 = vmatpush.bf16.msra.mxu0 %v8537
    %11345 = vmatpush.bf16.msra.mxu0 %v8536
    %11346 = vmatpush.bf16.msra.mxu0 %v8535
    %11347 = vmatmul.bf16.gmra.mxu0 %v509
    %v11348 = vpop.f32.mrf.mxu0
    %v11349 = vadd.f32 %v11336, %v11348
    %v11350 = vpop.f32.mrf.mxu0
    %11351 = vdwg.mxu0
    %11352 = vmatpush.bf16.msra.mxu0 %v8550
    %11353 = vmatpush.bf16.msra.mxu0 %v8549
    %11354 = vmatpush.bf16.msra.mxu0 %v8548
    %11355 = vmatpush.bf16.msra.mxu0 %v8547
    %11356 = vmatpush.bf16.msra.mxu0 %v8546
    %11357 = vmatpush.bf16.msra.mxu0 %v8545
    %11358 = vmatpush.bf16.msra.mxu0 %v8544
    %11359 = vmatpush.bf16.msra.mxu0 %v8543
    %11360 = vmatmul.bf16.gmra.mxu0 %v510
    %v11361 = vpop.f32.mrf.mxu0
    %v11362 = vadd.f32 %v11349, %v11361
    %v11363 = vpop.f32.mrf.mxu0
    %11364 = vdwg.mxu0
    %11365 = vmatpush.bf16.msra.mxu0 %v8558
    %11366 = vmatpush.bf16.msra.mxu0 %v8557
    %11367 = vmatpush.bf16.msra.mxu0 %v8556
    %11368 = vmatpush.bf16.msra.mxu0 %v8555
    %11369 = vmatpush.bf16.msra.mxu0 %v8554
    %11370 = vmatpush.bf16.msra.mxu0 %v8553
    %11371 = vmatpush.bf16.msra.mxu0 %v8552
    %11372 = vmatpush.bf16.msra.mxu0 %v8551
    %11373 = vmatmul.bf16.gmra.mxu0 %v511
    %v11374 = vpop.f32.mrf.mxu0
    %v11375 = vadd.f32 %v11362, %v11374
    %v11376 = vpop.f32.mrf.mxu0
    %11377 = vdwg.mxu0
    %11378 = vmatpush.bf16.msra.mxu0 %v8566
    %11379 = vmatpush.bf16.msra.mxu0 %v8565
    %11380 = vmatpush.bf16.msra.mxu0 %v8564
    %11381 = vmatpush.bf16.msra.mxu0 %v8563
    %11382 = vmatpush.bf16.msra.mxu0 %v8562
    %11383 = vmatpush.bf16.msra.mxu0 %v8561
    %11384 = vmatpush.bf16.msra.mxu0 %v8560
    %11385 = vmatpush.bf16.msra.mxu0 %v8559
    %11386 = vmatmul.bf16.gmra.mxu0 %v512
    %v11387 = vpop.f32.mrf.mxu0
    %v11388 = vadd.f32 %v11375, %v11387
    %v11389 = vpop.f32.mrf.mxu0
    %11390 = vdwg.mxu0
    %11391 = vmatpush.bf16.msra.mxu0 %v8574
    %11392 = vmatpush.bf16.msra.mxu0 %v8573
    %11393 = vmatpush.bf16.msra.mxu0 %v8572
    %11394 = vmatpush.bf16.msra.mxu0 %v8571
    %11395 = vmatpush.bf16.msra.mxu0 %v8570
    %11396 = vmatpush.bf16.msra.mxu0 %v8569
    %11397 = vmatpush.bf16.msra.mxu0 %v8568
    %11398 = vmatpush.bf16.msra.mxu0 %v8567
    %11399 = vmatmul.bf16.gmra.mxu0 %v513
    %v11400 = vpop.f32.mrf.mxu0
    %v11401 = vadd.f32 %v11388, %v11400
    %v11402 = vpop.f32.mrf.mxu0
    %11403 = vdwg.mxu0
    %11404 = vmatpush.bf16.msra.mxu0 %v8582
    %11405 = vmatpush.bf16.msra.mxu0 %v8581
    %11406 = vmatpush.bf16.msra.mxu0 %v8580
    %11407 = vmatpush.bf16.msra.mxu0 %v8579
    %11408 = vmatpush.bf16.msra.mxu0 %v8578
    %11409 = vmatpush.bf16.msra.mxu0 %v8577
    %11410 = vmatpush.bf16.msra.mxu0 %v8576
    %11411 = vmatpush.bf16.msra.mxu0 %v8575
    %11412 = vmatmul.bf16.gmra.mxu0 %v514
    %v11413 = vpop.f32.mrf.mxu0
    %v11414 = vadd.f32 %v11401, %v11413
    %v11415 = vpop.f32.mrf.mxu0
    %11416 = vdwg.mxu0
    %11417 = vmatpush.bf16.msra.mxu0 %v8590
    %11418 = vmatpush.bf16.msra.mxu0 %v8589
    %11419 = vmatpush.bf16.msra.mxu0 %v8588
    %11420 = vmatpush.bf16.msra.mxu0 %v8587
    %11421 = vmatpush.bf16.msra.mxu0 %v8586
    %11422 = vmatpush.bf16.msra.mxu0 %v8585
    %11423 = vmatpush.bf16.msra.mxu0 %v8584
    %11424 = vmatpush.bf16.msra.mxu0 %v8583
    %11425 = vmatmul.bf16.gmra.mxu0 %v515
    %v11426 = vpop.f32.mrf.mxu0
    %v11427 = vadd.f32 %v11414, %v11426
    %v11428 = vpop.f32.mrf.mxu0
    %11429 = vdwg.mxu0
    %11430 = vmatpush.bf16.msra.mxu0 %v8598
    %11431 = vmatpush.bf16.msra.mxu0 %v8597
    %11432 = vmatpush.bf16.msra.mxu0 %v8596
    %11433 = vmatpush.bf16.msra.mxu0 %v8595
    %11434 = vmatpush.bf16.msra.mxu0 %v8594
    %11435 = vmatpush.bf16.msra.mxu0 %v8593
    %11436 = vmatpush.bf16.msra.mxu0 %v8592
    %11437 = vmatpush.bf16.msra.mxu0 %v8591
    %11438 = vmatmul.bf16.gmra.mxu0 %v516
    %v11439 = vpop.f32.mrf.mxu0
    %v11440 = vadd.f32 %v11427, %v11439
    %v11441 = vpop.f32.mrf.mxu0
    %11442 = vdwg.mxu0
    %11443 = vmatpush.bf16.msra.mxu0 %v8606
    %11444 = vmatpush.bf16.msra.mxu0 %v8605
    %11445 = vmatpush.bf16.msra.mxu0 %v8604
    %11446 = vmatpush.bf16.msra.mxu0 %v8603
    %11447 = vmatpush.bf16.msra.mxu0 %v8602
    %11448 = vmatpush.bf16.msra.mxu0 %v8601
    %11449 = vmatpush.bf16.msra.mxu0 %v8600
    %11450 = vmatpush.bf16.msra.mxu0 %v8599
    %11451 = vmatmul.bf16.gmra.mxu0 %v517
    %v11452 = vpop.f32.mrf.mxu0
    %v11453 = vadd.f32 %v11440, %v11452
    %v11454 = vpop.f32.mrf.mxu0
    %11455 = vdwg.mxu0
    %11456 = vmatpush.bf16.msra.mxu0 %v8614
    %11457 = vmatpush.bf16.msra.mxu0 %v8613
    %11458 = vmatpush.bf16.msra.mxu0 %v8612
    %11459 = vmatpush.bf16.msra.mxu0 %v8611
    %11460 = vmatpush.bf16.msra.mxu0 %v8610
    %11461 = vmatpush.bf16.msra.mxu0 %v8609
    %11462 = vmatpush.bf16.msra.mxu0 %v8608
    %11463 = vmatpush.bf16.msra.mxu0 %v8607
    %11464 = vmatmul.bf16.gmra.mxu0 %v518
    %v11465 = vpop.f32.mrf.mxu0
    %v11466 = vadd.f32 %v11453, %v11465
    %v11467 = vpop.f32.mrf.mxu0
    %11468 = vdwg.mxu0
    %11469 = vmatpush.bf16.msra.mxu0 %v8622
    %11470 = vmatpush.bf16.msra.mxu0 %v8621
    %11471 = vmatpush.bf16.msra.mxu0 %v8620
    %11472 = vmatpush.bf16.msra.mxu0 %v8619
    %11473 = vmatpush.bf16.msra.mxu0 %v8618
    %11474 = vmatpush.bf16.msra.mxu0 %v8617
    %11475 = vmatpush.bf16.msra.mxu0 %v8616
    %11476 = vmatpush.bf16.msra.mxu0 %v8615
    %11477 = vmatmul.bf16.gmra.mxu0 %v519
    %v11478 = vpop.f32.mrf.mxu0
    %v11479 = vadd.f32 %v11466, %v11478
    %v11480 = vpop.f32.mrf.mxu0
    %11481 = vdwg.mxu0
    %11482 = vmatpush.bf16.msra.mxu0 %v8630
    %11483 = vmatpush.bf16.msra.mxu0 %v8629
    %11484 = vmatpush.bf16.msra.mxu0 %v8628
    %11485 = vmatpush.bf16.msra.mxu0 %v8627
    %11486 = vmatpush.bf16.msra.mxu0 %v8626
    %11487 = vmatpush.bf16.msra.mxu0 %v8625
    %11488 = vmatpush.bf16.msra.mxu0 %v8624
    %11489 = vmatpush.bf16.msra.mxu0 %v8623
    %11490 = vmatmul.bf16.gmra.mxu0 %v520
    %v11491 = vpop.f32.mrf.mxu0
    %v11492 = vadd.f32 %v11479, %v11491
    %v11493 = vpop.f32.mrf.mxu0
    %11494 = vdwg.mxu0
    %11495 = vmatpush.bf16.msra.mxu0 %v8638
    %11496 = vmatpush.bf16.msra.mxu0 %v8637
    %11497 = vmatpush.bf16.msra.mxu0 %v8636
    %11498 = vmatpush.bf16.msra.mxu0 %v8635
    %11499 = vmatpush.bf16.msra.mxu0 %v8634
    %11500 = vmatpush.bf16.msra.mxu0 %v8633
    %11501 = vmatpush.bf16.msra.mxu0 %v8632
    %11502 = vmatpush.bf16.msra.mxu0 %v8631
    %11503 = vmatmul.bf16.gmra.mxu0 %v521
    %v11504 = vpop.f32.mrf.mxu0
    %v11505 = vadd.f32 %v11492, %v11504
    %v11506 = vpop.f32.mrf.mxu0
    %11507 = vdwg.mxu0
    %11508 = vmatpush.bf16.msra.mxu0 %v8646
    %11509 = vmatpush.bf16.msra.mxu0 %v8645
    %11510 = vmatpush.bf16.msra.mxu0 %v8644
    %11511 = vmatpush.bf16.msra.mxu0 %v8643
    %11512 = vmatpush.bf16.msra.mxu0 %v8642
    %11513 = vmatpush.bf16.msra.mxu0 %v8641
    %11514 = vmatpush.bf16.msra.mxu0 %v8640
    %11515 = vmatpush.bf16.msra.mxu0 %v8639
    %11516 = vmatmul.bf16.gmra.mxu0 %v522
    %v11517 = vpop.f32.mrf.mxu0
    %v11518 = vadd.f32 %v11505, %v11517
    %v11519 = vpop.f32.mrf.mxu0
    %11520 = vdwg.mxu0
    %11521 = vmatpush.bf16.msra.mxu0 %v8654
    %11522 = vmatpush.bf16.msra.mxu0 %v8653
    %11523 = vmatpush.bf16.msra.mxu0 %v8652
    %11524 = vmatpush.bf16.msra.mxu0 %v8651
    %11525 = vmatpush.bf16.msra.mxu0 %v8650
    %11526 = vmatpush.bf16.msra.mxu0 %v8649
    %11527 = vmatpush.bf16.msra.mxu0 %v8648
    %11528 = vmatpush.bf16.msra.mxu0 %v8647
    %11529 = vmatmul.bf16.gmra.mxu0 %v523
    %v11530 = vpop.f32.mrf.mxu0
    %v11531 = vadd.f32 %v11518, %v11530
    %v11532 = vpop.f32.mrf.mxu0
    %11533 = vdwg.mxu0
    %11534 = vmatpush.bf16.msra.mxu0 %v8662
    %11535 = vmatpush.bf16.msra.mxu0 %v8661
    %11536 = vmatpush.bf16.msra.mxu0 %v8660
    %11537 = vmatpush.bf16.msra.mxu0 %v8659
    %11538 = vmatpush.bf16.msra.mxu0 %v8658
    %11539 = vmatpush.bf16.msra.mxu0 %v8657
    %11540 = vmatpush.bf16.msra.mxu0 %v8656
    %11541 = vmatpush.bf16.msra.mxu0 %v8655
    %11542 = vmatmul.bf16.gmra.mxu0 %v524
    %v11543 = vpop.f32.mrf.mxu0
    %v11544 = vadd.f32 %v11531, %v11543
    %v11545 = vpop.f32.mrf.mxu0
    %11546 = vdwg.mxu0
    %11547 = vmatpush.bf16.msra.mxu0 %v8670
    %11548 = vmatpush.bf16.msra.mxu0 %v8669
    %11549 = vmatpush.bf16.msra.mxu0 %v8668
    %11550 = vmatpush.bf16.msra.mxu0 %v8667
    %11551 = vmatpush.bf16.msra.mxu0 %v8666
    %11552 = vmatpush.bf16.msra.mxu0 %v8665
    %11553 = vmatpush.bf16.msra.mxu0 %v8664
    %11554 = vmatpush.bf16.msra.mxu0 %v8663
    %11555 = vmatmul.bf16.gmra.mxu0 %v525
    %v11556 = vpop.f32.mrf.mxu0
    %v11557 = vadd.f32 %v11544, %v11556
    %v11558 = vpop.f32.mrf.mxu0
    %11559 = vdwg.mxu0
    %11560 = vmatpush.bf16.msra.mxu0 %v8678
    %11561 = vmatpush.bf16.msra.mxu0 %v8677
    %11562 = vmatpush.bf16.msra.mxu0 %v8676
    %11563 = vmatpush.bf16.msra.mxu0 %v8675
    %11564 = vmatpush.bf16.msra.mxu0 %v8674
    %11565 = vmatpush.bf16.msra.mxu0 %v8673
    %11566 = vmatpush.bf16.msra.mxu0 %v8672
    %11567 = vmatpush.bf16.msra.mxu0 %v8671
    %11568 = vmatmul.bf16.gmra.mxu0 %v526
    %v11569 = vpop.f32.mrf.mxu0
    %v11570 = vadd.f32 %v11557, %v11569
    %v11571 = vpop.f32.mrf.mxu0
    %11572 = vdwg.mxu0
    %11573 = vmatpush.bf16.msra.mxu0 %v8686
    %11574 = vmatpush.bf16.msra.mxu0 %v8685
    %11575 = vmatpush.bf16.msra.mxu0 %v8684
    %11576 = vmatpush.bf16.msra.mxu0 %v8683
    %11577 = vmatpush.bf16.msra.mxu0 %v8682
    %11578 = vmatpush.bf16.msra.mxu0 %v8681
    %11579 = vmatpush.bf16.msra.mxu0 %v8680
    %11580 = vmatpush.bf16.msra.mxu0 %v8679
    %11581 = vmatmul.bf16.gmra.mxu0 %v527
    %v11582 = vpop.f32.mrf.mxu0
    %v11583 = vadd.f32 %v11570, %v11582
    %v11584 = vpop.f32.mrf.mxu0
    %11585 = vdwg.mxu0
    %11586 = vmatpush.bf16.msra.mxu0 %v8694
    %11587 = vmatpush.bf16.msra.mxu0 %v8693
    %11588 = vmatpush.bf16.msra.mxu0 %v8692
    %11589 = vmatpush.bf16.msra.mxu0 %v8691
    %11590 = vmatpush.bf16.msra.mxu0 %v8690
    %11591 = vmatpush.bf16.msra.mxu0 %v8689
    %11592 = vmatpush.bf16.msra.mxu0 %v8688
    %11593 = vmatpush.bf16.msra.mxu0 %v8687
    %11594 = vmatmul.bf16.gmra.mxu0 %v528
    %v11595 = vpop.f32.mrf.mxu0
    %v11596 = vadd.f32 %v11583, %v11595
    %v11597 = vpop.f32.mrf.mxu0
    %11598 = vdwg.mxu0
    %11599 = vmatpush.bf16.msra.mxu0 %v8702
    %11600 = vmatpush.bf16.msra.mxu0 %v8701
    %11601 = vmatpush.bf16.msra.mxu0 %v8700
    %11602 = vmatpush.bf16.msra.mxu0 %v8699
    %11603 = vmatpush.bf16.msra.mxu0 %v8698
    %11604 = vmatpush.bf16.msra.mxu0 %v8697
    %11605 = vmatpush.bf16.msra.mxu0 %v8696
    %11606 = vmatpush.bf16.msra.mxu0 %v8695
    %11607 = vmatmul.bf16.gmra.mxu0 %v529
    %v11608 = vpop.f32.mrf.mxu0
    %v11609 = vadd.f32 %v11596, %v11608
    %v11610 = vpop.f32.mrf.mxu0
    %11611 = vdwg.mxu0
    %11612 = vmatpush.bf16.msra.mxu0 %v8710
    %11613 = vmatpush.bf16.msra.mxu0 %v8709
    %11614 = vmatpush.bf16.msra.mxu0 %v8708
    %11615 = vmatpush.bf16.msra.mxu0 %v8707
    %11616 = vmatpush.bf16.msra.mxu0 %v8706
    %11617 = vmatpush.bf16.msra.mxu0 %v8705
    %11618 = vmatpush.bf16.msra.mxu0 %v8704
    %11619 = vmatpush.bf16.msra.mxu0 %v8703
    %11620 = vmatmul.bf16.gmra.mxu0 %v530
    %v11621 = vpop.f32.mrf.mxu0
    %v11622 = vadd.f32 %v11609, %v11621
    %v11623 = vpop.f32.mrf.mxu0
    %11624 = vdwg.mxu0
    %11625 = vmatpush.bf16.msra.mxu0 %v8718
    %11626 = vmatpush.bf16.msra.mxu0 %v8717
    %11627 = vmatpush.bf16.msra.mxu0 %v8716
    %11628 = vmatpush.bf16.msra.mxu0 %v8715
    %11629 = vmatpush.bf16.msra.mxu0 %v8714
    %11630 = vmatpush.bf16.msra.mxu0 %v8713
    %11631 = vmatpush.bf16.msra.mxu0 %v8712
    %11632 = vmatpush.bf16.msra.mxu0 %v8711
    %11633 = vmatmul.bf16.gmra.mxu0 %v531
    %v11634 = vpop.f32.mrf.mxu0
    %v11635 = vadd.f32 %v11622, %v11634
    %v11636 = vpop.f32.mrf.mxu0
    %11637 = vdwg.mxu0
    %11638 = vmatpush.bf16.msra.mxu0 %v8726
    %11639 = vmatpush.bf16.msra.mxu0 %v8725
    %11640 = vmatpush.bf16.msra.mxu0 %v8724
    %11641 = vmatpush.bf16.msra.mxu0 %v8723
    %11642 = vmatpush.bf16.msra.mxu0 %v8722
    %11643 = vmatpush.bf16.msra.mxu0 %v8721
    %11644 = vmatpush.bf16.msra.mxu0 %v8720
    %11645 = vmatpush.bf16.msra.mxu0 %v8719
    %11646 = vmatmul.bf16.gmra.mxu0 %v532
    %v11647 = vpop.f32.mrf.mxu0
    %v11648 = vadd.f32 %v11635, %v11647
    %v11649 = vpop.f32.mrf.mxu0
    %11650 = vdwg.mxu0
    %11651 = vmatpush.bf16.msra.mxu0 %v8734
    %11652 = vmatpush.bf16.msra.mxu0 %v8733
    %11653 = vmatpush.bf16.msra.mxu0 %v8732
    %11654 = vmatpush.bf16.msra.mxu0 %v8731
    %11655 = vmatpush.bf16.msra.mxu0 %v8730
    %11656 = vmatpush.bf16.msra.mxu0 %v8729
    %11657 = vmatpush.bf16.msra.mxu0 %v8728
    %11658 = vmatpush.bf16.msra.mxu0 %v8727
    %11659 = vmatmul.bf16.gmra.mxu0 %v533
    %v11660 = vpop.f32.mrf.mxu0
    %v11661 = vadd.f32 %v11648, %v11660
    %v11662 = vpop.f32.mrf.mxu0
    %11663 = vdwg.mxu0
    %11664 = vmatpush.bf16.msra.mxu0 %v8742
    %11665 = vmatpush.bf16.msra.mxu0 %v8741
    %11666 = vmatpush.bf16.msra.mxu0 %v8740
    %11667 = vmatpush.bf16.msra.mxu0 %v8739
    %11668 = vmatpush.bf16.msra.mxu0 %v8738
    %11669 = vmatpush.bf16.msra.mxu0 %v8737
    %11670 = vmatpush.bf16.msra.mxu0 %v8736
    %11671 = vmatpush.bf16.msra.mxu0 %v8735
    %11672 = vmatmul.bf16.gmra.mxu0 %v534
    %v11673 = vpop.f32.mrf.mxu0
    %v11674 = vadd.f32 %v11661, %v11673
    %v11675 = vpop.f32.mrf.mxu0
    %11676 = vdwg.mxu0
    %11677 = vmatpush.bf16.msra.mxu0 %v8750
    %11678 = vmatpush.bf16.msra.mxu0 %v8749
    %11679 = vmatpush.bf16.msra.mxu0 %v8748
    %11680 = vmatpush.bf16.msra.mxu0 %v8747
    %11681 = vmatpush.bf16.msra.mxu0 %v8746
    %11682 = vmatpush.bf16.msra.mxu0 %v8745
    %11683 = vmatpush.bf16.msra.mxu0 %v8744
    %11684 = vmatpush.bf16.msra.mxu0 %v8743
    %11685 = vmatmul.bf16.gmra.mxu0 %v535
    %v11686 = vpop.f32.mrf.mxu0
    %v11687 = vadd.f32 %v11674, %v11686
    %v11688 = vpop.f32.mrf.mxu0
    %11689 = vdwg.mxu0
    %11690 = vmatpush.bf16.msra.mxu0 %v8758
    %11691 = vmatpush.bf16.msra.mxu0 %v8757
    %11692 = vmatpush.bf16.msra.mxu0 %v8756
    %11693 = vmatpush.bf16.msra.mxu0 %v8755
    %11694 = vmatpush.bf16.msra.mxu0 %v8754
    %11695 = vmatpush.bf16.msra.mxu0 %v8753
    %11696 = vmatpush.bf16.msra.mxu0 %v8752
    %11697 = vmatpush.bf16.msra.mxu0 %v8751
    %11698 = vmatmul.bf16.gmra.mxu0 %v536
    %v11699 = vpop.f32.mrf.mxu0
    %v11700 = vadd.f32 %v11687, %v11699
    %v11701 = vpop.f32.mrf.mxu0
    %11702 = vdwg.mxu0
    %11703 = vmatpush.bf16.msra.mxu0 %v8766
    %11704 = vmatpush.bf16.msra.mxu0 %v8765
    %11705 = vmatpush.bf16.msra.mxu0 %v8764
    %11706 = vmatpush.bf16.msra.mxu0 %v8763
    %11707 = vmatpush.bf16.msra.mxu0 %v8762
    %11708 = vmatpush.bf16.msra.mxu0 %v8761
    %11709 = vmatpush.bf16.msra.mxu0 %v8760
    %11710 = vmatpush.bf16.msra.mxu0 %v8759
    %11711 = vmatmul.bf16.gmra.mxu0 %v537
    %v11712 = vpop.f32.mrf.mxu0
    %v11713 = vadd.f32 %v11700, %v11712
    %v11714 = vpop.f32.mrf.mxu0
    %11715 = vdwg.mxu0
    %11716 = vmatpush.bf16.msra.mxu0 %v8774
    %11717 = vmatpush.bf16.msra.mxu0 %v8773
    %11718 = vmatpush.bf16.msra.mxu0 %v8772
    %11719 = vmatpush.bf16.msra.mxu0 %v8771
    %11720 = vmatpush.bf16.msra.mxu0 %v8770
    %11721 = vmatpush.bf16.msra.mxu0 %v8769
    %11722 = vmatpush.bf16.msra.mxu0 %v8768
    %11723 = vmatpush.bf16.msra.mxu0 %v8767
    %11724 = vmatmul.bf16.gmra.mxu0 %v538
    %v11725 = vpop.f32.mrf.mxu0
    %v11726 = vadd.f32 %v11713, %v11725
    %v11727 = vpop.f32.mrf.mxu0
    %11728 = vdwg.mxu0
    %11729 = vmatpush.bf16.msra.mxu0 %v8782
    %11730 = vmatpush.bf16.msra.mxu0 %v8781
    %11731 = vmatpush.bf16.msra.mxu0 %v8780
    %11732 = vmatpush.bf16.msra.mxu0 %v8779
    %11733 = vmatpush.bf16.msra.mxu0 %v8778
    %11734 = vmatpush.bf16.msra.mxu0 %v8777
    %11735 = vmatpush.bf16.msra.mxu0 %v8776
    %11736 = vmatpush.bf16.msra.mxu0 %v8775
    %11737 = vmatmul.bf16.gmra.mxu0 %v539
    %v11738 = vpop.f32.mrf.mxu0
    %v11739 = vadd.f32 %v11726, %v11738
    %v11740 = vpop.f32.mrf.mxu0
    %11741 = vdwg.mxu0
    %11742 = vmatpush.bf16.msra.mxu0 %v8790
    %11743 = vmatpush.bf16.msra.mxu0 %v8789
    %11744 = vmatpush.bf16.msra.mxu0 %v8788
    %11745 = vmatpush.bf16.msra.mxu0 %v8787
    %11746 = vmatpush.bf16.msra.mxu0 %v8786
    %11747 = vmatpush.bf16.msra.mxu0 %v8785
    %11748 = vmatpush.bf16.msra.mxu0 %v8784
    %11749 = vmatpush.bf16.msra.mxu0 %v8783
    %11750 = vmatmul.bf16.gmra.mxu0 %v540
    %v11751 = vpop.f32.mrf.mxu0
    %v11752 = vadd.f32 %v11739, %v11751
    %v11753 = vpop.f32.mrf.mxu0
    %11754 = vdwg.mxu0
    %11755 = vmatpush.bf16.msra.mxu0 %v8798
    %11756 = vmatpush.bf16.msra.mxu0 %v8797
    %11757 = vmatpush.bf16.msra.mxu0 %v8796
    %11758 = vmatpush.bf16.msra.mxu0 %v8795
    %11759 = vmatpush.bf16.msra.mxu0 %v8794
    %11760 = vmatpush.bf16.msra.mxu0 %v8793
    %11761 = vmatpush.bf16.msra.mxu0 %v8792
    %11762 = vmatpush.bf16.msra.mxu0 %v8791
    %11763 = vmatmul.bf16.gmra.mxu0 %v541
    %v11764 = vpop.f32.mrf.mxu0
    %v11765 = vadd.f32 %v11752, %v11764
    %v11766 = vpop.f32.mrf.mxu0
    %11767 = vdwg.mxu0
    %11768 = vmatpush.bf16.msra.mxu0 %v8806
    %11769 = vmatpush.bf16.msra.mxu0 %v8805
    %11770 = vmatpush.bf16.msra.mxu0 %v8804
    %11771 = vmatpush.bf16.msra.mxu0 %v8803
    %11772 = vmatpush.bf16.msra.mxu0 %v8802
    %11773 = vmatpush.bf16.msra.mxu0 %v8801
    %11774 = vmatpush.bf16.msra.mxu0 %v8800
    %11775 = vmatpush.bf16.msra.mxu0 %v8799
    %11776 = vmatmul.bf16.gmra.mxu0 %v542
    %v11777 = vpop.f32.mrf.mxu0
    %v11778 = vadd.f32 %v11765, %v11777
    %v11779 = vpop.f32.mrf.mxu0
    %11780 = vdwg.mxu0
    %11781 = vmatpush.bf16.msra.mxu0 %v8814
    %11782 = vmatpush.bf16.msra.mxu0 %v8813
    %11783 = vmatpush.bf16.msra.mxu0 %v8812
    %11784 = vmatpush.bf16.msra.mxu0 %v8811
    %11785 = vmatpush.bf16.msra.mxu0 %v8810
    %11786 = vmatpush.bf16.msra.mxu0 %v8809
    %11787 = vmatpush.bf16.msra.mxu0 %v8808
    %11788 = vmatpush.bf16.msra.mxu0 %v8807
    %11789 = vmatmul.bf16.gmra.mxu0 %v543
    %v11790 = vpop.f32.mrf.mxu0
    %v11791 = vadd.f32 %v11778, %v11790
    %v11792 = vpop.f32.mrf.mxu0
    %11793 = vdwg.mxu0
    %11794 = vmatpush.bf16.msra.mxu0 %v8822
    %11795 = vmatpush.bf16.msra.mxu0 %v8821
    %11796 = vmatpush.bf16.msra.mxu0 %v8820
    %11797 = vmatpush.bf16.msra.mxu0 %v8819
    %11798 = vmatpush.bf16.msra.mxu0 %v8818
    %11799 = vmatpush.bf16.msra.mxu0 %v8817
    %11800 = vmatpush.bf16.msra.mxu0 %v8816
    %11801 = vmatpush.bf16.msra.mxu0 %v8815
    %11802 = vmatmul.bf16.gmra.mxu0 %v544
    %v11803 = vpop.f32.mrf.mxu0
    %v11804 = vadd.f32 %v11791, %v11803
    %v11805 = vpop.f32.mrf.mxu0
    %11806 = vdwg.mxu0
    %11807 = vmatpush.bf16.msra.mxu0 %v8830
    %11808 = vmatpush.bf16.msra.mxu0 %v8829
    %11809 = vmatpush.bf16.msra.mxu0 %v8828
    %11810 = vmatpush.bf16.msra.mxu0 %v8827
    %11811 = vmatpush.bf16.msra.mxu0 %v8826
    %11812 = vmatpush.bf16.msra.mxu0 %v8825
    %11813 = vmatpush.bf16.msra.mxu0 %v8824
    %11814 = vmatpush.bf16.msra.mxu0 %v8823
    %11815 = vmatmul.bf16.gmra.mxu0 %v545
    %v11816 = vpop.f32.mrf.mxu0
    %v11817 = vadd.f32 %v11804, %v11816
    %v11818 = vpop.f32.mrf.mxu0
    %11819 = vdwg.mxu0
    %11820 = vmatpush.bf16.msra.mxu0 %v8838
    %11821 = vmatpush.bf16.msra.mxu0 %v8837
    %11822 = vmatpush.bf16.msra.mxu0 %v8836
    %11823 = vmatpush.bf16.msra.mxu0 %v8835
    %11824 = vmatpush.bf16.msra.mxu0 %v8834
    %11825 = vmatpush.bf16.msra.mxu0 %v8833
    %11826 = vmatpush.bf16.msra.mxu0 %v8832
    %11827 = vmatpush.bf16.msra.mxu0 %v8831
    %11828 = vmatmul.bf16.gmra.mxu0 %v546
    %v11829 = vpop.f32.mrf.mxu0
    %v11830 = vadd.f32 %v11817, %v11829
    %v11831 = vpop.f32.mrf.mxu0
    %11832 = vdwg.mxu0
    %11833 = vmatpush.bf16.msra.mxu0 %v8846
    %11834 = vmatpush.bf16.msra.mxu0 %v8845
    %11835 = vmatpush.bf16.msra.mxu0 %v8844
    %11836 = vmatpush.bf16.msra.mxu0 %v8843
    %11837 = vmatpush.bf16.msra.mxu0 %v8842
    %11838 = vmatpush.bf16.msra.mxu0 %v8841
    %11839 = vmatpush.bf16.msra.mxu0 %v8840
    %11840 = vmatpush.bf16.msra.mxu0 %v8839
    %11841 = vmatmul.bf16.gmra.mxu0 %v547
    %v11842 = vpop.f32.mrf.mxu0
    %v11843 = vadd.f32 %v11830, %v11842
    %v11844 = vpop.f32.mrf.mxu0
    %11845 = vdwg.mxu0
    %11846 = vmatpush.bf16.msra.mxu0 %v8854
    %11847 = vmatpush.bf16.msra.mxu0 %v8853
    %11848 = vmatpush.bf16.msra.mxu0 %v8852
    %11849 = vmatpush.bf16.msra.mxu0 %v8851
    %11850 = vmatpush.bf16.msra.mxu0 %v8850
    %11851 = vmatpush.bf16.msra.mxu0 %v8849
    %11852 = vmatpush.bf16.msra.mxu0 %v8848
    %11853 = vmatpush.bf16.msra.mxu0 %v8847
    %11854 = vmatmul.bf16.gmra.mxu0 %v548
    %v11855 = vpop.f32.mrf.mxu0
    %v11856 = vadd.f32 %v11843, %v11855
    %v11857 = vpop.f32.mrf.mxu0
    %11858 = vdwg.mxu0
    %11859 = vmatpush.bf16.msra.mxu0 %v8862
    %11860 = vmatpush.bf16.msra.mxu0 %v8861
    %11861 = vmatpush.bf16.msra.mxu0 %v8860
    %11862 = vmatpush.bf16.msra.mxu0 %v8859
    %11863 = vmatpush.bf16.msra.mxu0 %v8858
    %11864 = vmatpush.bf16.msra.mxu0 %v8857
    %11865 = vmatpush.bf16.msra.mxu0 %v8856
    %11866 = vmatpush.bf16.msra.mxu0 %v8855
    %11867 = vmatmul.bf16.gmra.mxu0 %v549
    %v11868 = vpop.f32.mrf.mxu0
    %v11869 = vadd.f32 %v11856, %v11868
    %v11870 = vpop.f32.mrf.mxu0
    %11871 = vdwg.mxu0
    %11872 = vmatpush.bf16.msra.mxu0 %v8870
    %11873 = vmatpush.bf16.msra.mxu0 %v8869
    %11874 = vmatpush.bf16.msra.mxu0 %v8868
    %11875 = vmatpush.bf16.msra.mxu0 %v8867
    %11876 = vmatpush.bf16.msra.mxu0 %v8866
    %11877 = vmatpush.bf16.msra.mxu0 %v8865
    %11878 = vmatpush.bf16.msra.mxu0 %v8864
    %11879 = vmatpush.bf16.msra.mxu0 %v8863
    %11880 = vmatmul.bf16.gmra.mxu0 %v550
    %v11881 = vpop.f32.mrf.mxu0
    %v11882 = vadd.f32 %v11869, %v11881
    %v11883 = vpop.f32.mrf.mxu0
    %11884 = vdwg.mxu0
    %11885 = vmatpush.bf16.msra.mxu0 %v8878
    %11886 = vmatpush.bf16.msra.mxu0 %v8877
    %11887 = vmatpush.bf16.msra.mxu0 %v8876
    %11888 = vmatpush.bf16.msra.mxu0 %v8875
    %11889 = vmatpush.bf16.msra.mxu0 %v8874
    %11890 = vmatpush.bf16.msra.mxu0 %v8873
    %11891 = vmatpush.bf16.msra.mxu0 %v8872
    %11892 = vmatpush.bf16.msra.mxu0 %v8871
    %11893 = vmatmul.bf16.gmra.mxu0 %v551
    %v11894 = vpop.f32.mrf.mxu0
    %v11895 = vadd.f32 %v11882, %v11894
    %v11896 = vpop.f32.mrf.mxu0
    %11897 = vdwg.mxu0
    %11898 = vmatpush.bf16.msra.mxu0 %v8886
    %11899 = vmatpush.bf16.msra.mxu0 %v8885
    %11900 = vmatpush.bf16.msra.mxu0 %v8884
    %11901 = vmatpush.bf16.msra.mxu0 %v8883
    %11902 = vmatpush.bf16.msra.mxu0 %v8882
    %11903 = vmatpush.bf16.msra.mxu0 %v8881
    %11904 = vmatpush.bf16.msra.mxu0 %v8880
    %11905 = vmatpush.bf16.msra.mxu0 %v8879
    %11906 = vmatmul.bf16.gmra.mxu0 %v552
    %v11907 = vpop.f32.mrf.mxu0
    %v11908 = vadd.f32 %v11895, %v11907
    %v11909 = vpop.f32.mrf.mxu0
    %11910 = vdwg.mxu0
    %11911 = vmatpush.bf16.msra.mxu0 %v8894
    %11912 = vmatpush.bf16.msra.mxu0 %v8893
    %11913 = vmatpush.bf16.msra.mxu0 %v8892
    %11914 = vmatpush.bf16.msra.mxu0 %v8891
    %11915 = vmatpush.bf16.msra.mxu0 %v8890
    %11916 = vmatpush.bf16.msra.mxu0 %v8889
    %11917 = vmatpush.bf16.msra.mxu0 %v8888
    %11918 = vmatpush.bf16.msra.mxu0 %v8887
    %11919 = vmatmul.bf16.gmra.mxu0 %v553
    %v11920 = vpop.f32.mrf.mxu0
    %v11921 = vadd.f32 %v11908, %v11920
    %v11922 = vpop.f32.mrf.mxu0
    %11923 = vdwg.mxu0
    %11924 = vmatpush.bf16.msra.mxu0 %v8902
    %11925 = vmatpush.bf16.msra.mxu0 %v8901
    %11926 = vmatpush.bf16.msra.mxu0 %v8900
    %11927 = vmatpush.bf16.msra.mxu0 %v8899
    %11928 = vmatpush.bf16.msra.mxu0 %v8898
    %11929 = vmatpush.bf16.msra.mxu0 %v8897
    %11930 = vmatpush.bf16.msra.mxu0 %v8896
    %11931 = vmatpush.bf16.msra.mxu0 %v8895
    %11932 = vmatmul.bf16.gmra.mxu0 %v554
    %v11933 = vpop.f32.mrf.mxu0
    %v11934 = vadd.f32 %v11921, %v11933
    %v11935 = vpop.f32.mrf.mxu0
    %11936 = vdwg.mxu0
    %11937 = vmatpush.bf16.msra.mxu0 %v8910
    %11938 = vmatpush.bf16.msra.mxu0 %v8909
    %11939 = vmatpush.bf16.msra.mxu0 %v8908
    %11940 = vmatpush.bf16.msra.mxu0 %v8907
    %11941 = vmatpush.bf16.msra.mxu0 %v8906
    %11942 = vmatpush.bf16.msra.mxu0 %v8905
    %11943 = vmatpush.bf16.msra.mxu0 %v8904
    %11944 = vmatpush.bf16.msra.mxu0 %v8903
    %11945 = vmatmul.bf16.gmra.mxu0 %v555
    %v11946 = vpop.f32.mrf.mxu0
    %v11947 = vadd.f32 %v11934, %v11946
    %v11948 = vpop.f32.mrf.mxu0
    %11949 = vdwg.mxu0
    %11950 = vmatpush.bf16.msra.mxu0 %v8918
    %11951 = vmatpush.bf16.msra.mxu0 %v8917
    %11952 = vmatpush.bf16.msra.mxu0 %v8916
    %11953 = vmatpush.bf16.msra.mxu0 %v8915
    %11954 = vmatpush.bf16.msra.mxu0 %v8914
    %11955 = vmatpush.bf16.msra.mxu0 %v8913
    %11956 = vmatpush.bf16.msra.mxu0 %v8912
    %11957 = vmatpush.bf16.msra.mxu0 %v8911
    %11958 = vmatmul.bf16.gmra.mxu0 %v556
    %v11959 = vpop.f32.mrf.mxu0
    %v11960 = vadd.f32 %v11947, %v11959
    %v11961 = vpop.f32.mrf.mxu0
    %11962 = vdwg.mxu0
    %11963 = vmatpush.bf16.msra.mxu0 %v8926
    %11964 = vmatpush.bf16.msra.mxu0 %v8925
    %11965 = vmatpush.bf16.msra.mxu0 %v8924
    %11966 = vmatpush.bf16.msra.mxu0 %v8923
    %11967 = vmatpush.bf16.msra.mxu0 %v8922
    %11968 = vmatpush.bf16.msra.mxu0 %v8921
    %11969 = vmatpush.bf16.msra.mxu0 %v8920
    %11970 = vmatpush.bf16.msra.mxu0 %v8919
    %11971 = vmatmul.bf16.gmra.mxu0 %v557
    %v11972 = vpop.f32.mrf.mxu0
    %v11973 = vadd.f32 %v11960, %v11972
    %v11974 = vpop.f32.mrf.mxu0
    %11975 = vdwg.mxu0
    %11976 = vmatpush.bf16.msra.mxu0 %v8934
    %11977 = vmatpush.bf16.msra.mxu0 %v8933
    %11978 = vmatpush.bf16.msra.mxu0 %v8932
    %11979 = vmatpush.bf16.msra.mxu0 %v8931
    %11980 = vmatpush.bf16.msra.mxu0 %v8930
    %11981 = vmatpush.bf16.msra.mxu0 %v8929
    %11982 = vmatpush.bf16.msra.mxu0 %v8928
    %11983 = vmatpush.bf16.msra.mxu0 %v8927
    %11984 = vmatmul.bf16.gmra.mxu0 %v558
    %v11985 = vpop.f32.mrf.mxu0
    %v11986 = vadd.f32 %v11973, %v11985
    %v11987 = vpop.f32.mrf.mxu0
    %11988 = vdwg.mxu0
    %11989 = vmatpush.bf16.msra.mxu0 %v8942
    %11990 = vmatpush.bf16.msra.mxu0 %v8941
    %11991 = vmatpush.bf16.msra.mxu0 %v8940
    %11992 = vmatpush.bf16.msra.mxu0 %v8939
    %11993 = vmatpush.bf16.msra.mxu0 %v8938
    %11994 = vmatpush.bf16.msra.mxu0 %v8937
    %11995 = vmatpush.bf16.msra.mxu0 %v8936
    %11996 = vmatpush.bf16.msra.mxu0 %v8935
    %11997 = vmatmul.bf16.gmra.mxu0 %v559
    %v11998 = vpop.f32.mrf.mxu0
    %v11999 = vadd.f32 %v11986, %v11998
    %v12000 = vpop.f32.mrf.mxu0
    %12001 = vdwg.mxu0
    %12002 = vmatpush.bf16.msra.mxu0 %v8950
    %12003 = vmatpush.bf16.msra.mxu0 %v8949
    %12004 = vmatpush.bf16.msra.mxu0 %v8948
    %12005 = vmatpush.bf16.msra.mxu0 %v8947
    %12006 = vmatpush.bf16.msra.mxu0 %v8946
    %12007 = vmatpush.bf16.msra.mxu0 %v8945
    %12008 = vmatpush.bf16.msra.mxu0 %v8944
    %12009 = vmatpush.bf16.msra.mxu0 %v8943
    %12010 = vmatmul.bf16.gmra.mxu0 %v560
    %v12011 = vpop.f32.mrf.mxu0
    %v12012 = vadd.f32 %v11999, %v12011
    %v12013 = vpop.f32.mrf.mxu0
    %12014 = vdwg.mxu0
    %12015 = vmatpush.bf16.msra.mxu0 %v8958
    %12016 = vmatpush.bf16.msra.mxu0 %v8957
    %12017 = vmatpush.bf16.msra.mxu0 %v8956
    %12018 = vmatpush.bf16.msra.mxu0 %v8955
    %12019 = vmatpush.bf16.msra.mxu0 %v8954
    %12020 = vmatpush.bf16.msra.mxu0 %v8953
    %12021 = vmatpush.bf16.msra.mxu0 %v8952
    %12022 = vmatpush.bf16.msra.mxu0 %v8951
    %12023 = vmatmul.bf16.gmra.mxu0 %v561
    %v12024 = vpop.f32.mrf.mxu0
    %v12025 = vadd.f32 %v12012, %v12024
    %v12026 = vpop.f32.mrf.mxu0
    %12027 = vdwg.mxu0
    %12028 = vmatpush.bf16.msra.mxu0 %v8966
    %12029 = vmatpush.bf16.msra.mxu0 %v8965
    %12030 = vmatpush.bf16.msra.mxu0 %v8964
    %12031 = vmatpush.bf16.msra.mxu0 %v8963
    %12032 = vmatpush.bf16.msra.mxu0 %v8962
    %12033 = vmatpush.bf16.msra.mxu0 %v8961
    %12034 = vmatpush.bf16.msra.mxu0 %v8960
    %12035 = vmatpush.bf16.msra.mxu0 %v8959
    %12036 = vmatmul.bf16.gmra.mxu0 %v562
    %v12037 = vpop.f32.mrf.mxu0
    %v12038 = vadd.f32 %v12025, %v12037
    %v12039 = vpop.f32.mrf.mxu0
    %12040 = vdwg.mxu0
    %12041 = vmatpush.bf16.msra.mxu0 %v8974
    %12042 = vmatpush.bf16.msra.mxu0 %v8973
    %12043 = vmatpush.bf16.msra.mxu0 %v8972
    %12044 = vmatpush.bf16.msra.mxu0 %v8971
    %12045 = vmatpush.bf16.msra.mxu0 %v8970
    %12046 = vmatpush.bf16.msra.mxu0 %v8969
    %12047 = vmatpush.bf16.msra.mxu0 %v8968
    %12048 = vmatpush.bf16.msra.mxu0 %v8967
    %12049 = vmatmul.bf16.gmra.mxu0 %v563
    %v12050 = vpop.f32.mrf.mxu0
    %v12051 = vadd.f32 %v12038, %v12050
    %v12052 = vpop.f32.mrf.mxu0
    %12053 = vdwg.mxu0
    %12054 = vmatpush.bf16.msra.mxu0 %v8982
    %12055 = vmatpush.bf16.msra.mxu0 %v8981
    %12056 = vmatpush.bf16.msra.mxu0 %v8980
    %12057 = vmatpush.bf16.msra.mxu0 %v8979
    %12058 = vmatpush.bf16.msra.mxu0 %v8978
    %12059 = vmatpush.bf16.msra.mxu0 %v8977
    %12060 = vmatpush.bf16.msra.mxu0 %v8976
    %12061 = vmatpush.bf16.msra.mxu0 %v8975
    %12062 = vmatmul.bf16.gmra.mxu0 %v564
    %v12063 = vpop.f32.mrf.mxu0
    %v12064 = vadd.f32 %v12051, %v12063
    %v12065 = vpop.f32.mrf.mxu0
    %12066 = vdwg.mxu0
    %12067 = vmatpush.bf16.msra.mxu0 %v8990
    %12068 = vmatpush.bf16.msra.mxu0 %v8989
    %12069 = vmatpush.bf16.msra.mxu0 %v8988
    %12070 = vmatpush.bf16.msra.mxu0 %v8987
    %12071 = vmatpush.bf16.msra.mxu0 %v8986
    %12072 = vmatpush.bf16.msra.mxu0 %v8985
    %12073 = vmatpush.bf16.msra.mxu0 %v8984
    %12074 = vmatpush.bf16.msra.mxu0 %v8983
    %12075 = vmatmul.bf16.gmra.mxu0 %v565
    %v12076 = vpop.f32.mrf.mxu0
    %v12077 = vadd.f32 %v12064, %v12076
    %v12078 = vpop.f32.mrf.mxu0
    %12079 = vdwg.mxu0
    %12080 = vmatpush.bf16.msra.mxu0 %v8998
    %12081 = vmatpush.bf16.msra.mxu0 %v8997
    %12082 = vmatpush.bf16.msra.mxu0 %v8996
    %12083 = vmatpush.bf16.msra.mxu0 %v8995
    %12084 = vmatpush.bf16.msra.mxu0 %v8994
    %12085 = vmatpush.bf16.msra.mxu0 %v8993
    %12086 = vmatpush.bf16.msra.mxu0 %v8992
    %12087 = vmatpush.bf16.msra.mxu0 %v8991
    %12088 = vmatmul.bf16.gmra.mxu0 %v566
    %v12089 = vpop.f32.mrf.mxu0
    %v12090 = vadd.f32 %v12077, %v12089
    %v12091 = vpop.f32.mrf.mxu0
    %12092 = vdwg.mxu0
    %12093 = vmatpush.bf16.msra.mxu0 %v9006
    %12094 = vmatpush.bf16.msra.mxu0 %v9005
    %12095 = vmatpush.bf16.msra.mxu0 %v9004
    %12096 = vmatpush.bf16.msra.mxu0 %v9003
    %12097 = vmatpush.bf16.msra.mxu0 %v9002
    %12098 = vmatpush.bf16.msra.mxu0 %v9001
    %12099 = vmatpush.bf16.msra.mxu0 %v9000
    %12100 = vmatpush.bf16.msra.mxu0 %v8999
    %12101 = vmatmul.bf16.gmra.mxu0 %v567
    %v12102 = vpop.f32.mrf.mxu0
    %v12103 = vadd.f32 %v12090, %v12102
    %v12104 = vpop.f32.mrf.mxu0
    %12105 = vdwg.mxu0
    %12106 = vmatpush.bf16.msra.mxu0 %v9014
    %12107 = vmatpush.bf16.msra.mxu0 %v9013
    %12108 = vmatpush.bf16.msra.mxu0 %v9012
    %12109 = vmatpush.bf16.msra.mxu0 %v9011
    %12110 = vmatpush.bf16.msra.mxu0 %v9010
    %12111 = vmatpush.bf16.msra.mxu0 %v9009
    %12112 = vmatpush.bf16.msra.mxu0 %v9008
    %12113 = vmatpush.bf16.msra.mxu0 %v9007
    %12114 = vmatmul.bf16.gmra.mxu0 %v568
    %v12115 = vpop.f32.mrf.mxu0
    %v12116 = vadd.f32 %v12103, %v12115
    %v12117 = vpop.f32.mrf.mxu0
    %12118 = vdwg.mxu0
    %12119 = vmatpush.bf16.msra.mxu0 %v9022
    %12120 = vmatpush.bf16.msra.mxu0 %v9021
    %12121 = vmatpush.bf16.msra.mxu0 %v9020
    %12122 = vmatpush.bf16.msra.mxu0 %v9019
    %12123 = vmatpush.bf16.msra.mxu0 %v9018
    %12124 = vmatpush.bf16.msra.mxu0 %v9017
    %12125 = vmatpush.bf16.msra.mxu0 %v9016
    %12126 = vmatpush.bf16.msra.mxu0 %v9015
    %12127 = vmatmul.bf16.gmra.mxu0 %v569
    %v12128 = vpop.f32.mrf.mxu0
    %v12129 = vadd.f32 %v12116, %v12128
    %v12130 = vpop.f32.mrf.mxu0
    %12131 = vdwg.mxu0
    %12132 = vmatpush.bf16.msra.mxu0 %v9030
    %12133 = vmatpush.bf16.msra.mxu0 %v9029
    %12134 = vmatpush.bf16.msra.mxu0 %v9028
    %12135 = vmatpush.bf16.msra.mxu0 %v9027
    %12136 = vmatpush.bf16.msra.mxu0 %v9026
    %12137 = vmatpush.bf16.msra.mxu0 %v9025
    %12138 = vmatpush.bf16.msra.mxu0 %v9024
    %12139 = vmatpush.bf16.msra.mxu0 %v9023
    %12140 = vmatmul.bf16.gmra.mxu0 %v570
    %v12141 = vpop.f32.mrf.mxu0
    %v12142 = vadd.f32 %v12129, %v12141
    %v12143 = vpop.f32.mrf.mxu0
    %12144 = vdwg.mxu0
    %12145 = vmatpush.bf16.msra.mxu0 %v9038
    %12146 = vmatpush.bf16.msra.mxu0 %v9037
    %12147 = vmatpush.bf16.msra.mxu0 %v9036
    %12148 = vmatpush.bf16.msra.mxu0 %v9035
    %12149 = vmatpush.bf16.msra.mxu0 %v9034
    %12150 = vmatpush.bf16.msra.mxu0 %v9033
    %12151 = vmatpush.bf16.msra.mxu0 %v9032
    %12152 = vmatpush.bf16.msra.mxu0 %v9031
    %12153 = vmatmul.bf16.gmra.mxu0 %v571
    %v12154 = vpop.f32.mrf.mxu0
    %v12155 = vadd.f32 %v12142, %v12154
    %v12156 = vpop.f32.mrf.mxu0
    %12157 = vdwg.mxu0
    %12158 = vmatpush.bf16.msra.mxu0 %v9046
    %12159 = vmatpush.bf16.msra.mxu0 %v9045
    %12160 = vmatpush.bf16.msra.mxu0 %v9044
    %12161 = vmatpush.bf16.msra.mxu0 %v9043
    %12162 = vmatpush.bf16.msra.mxu0 %v9042
    %12163 = vmatpush.bf16.msra.mxu0 %v9041
    %12164 = vmatpush.bf16.msra.mxu0 %v9040
    %12165 = vmatpush.bf16.msra.mxu0 %v9039
    %12166 = vmatmul.bf16.gmra.mxu0 %v572
    %v12167 = vpop.f32.mrf.mxu0
    %v12168 = vadd.f32 %v12155, %v12167
    %v12169 = vpop.f32.mrf.mxu0
    %12170 = vdwg.mxu0
    %12171 = vmatpush.bf16.msra.mxu0 %v9054
    %12172 = vmatpush.bf16.msra.mxu0 %v9053
    %12173 = vmatpush.bf16.msra.mxu0 %v9052
    %12174 = vmatpush.bf16.msra.mxu0 %v9051
    %12175 = vmatpush.bf16.msra.mxu0 %v9050
    %12176 = vmatpush.bf16.msra.mxu0 %v9049
    %12177 = vmatpush.bf16.msra.mxu0 %v9048
    %12178 = vmatpush.bf16.msra.mxu0 %v9047
    %12179 = vmatmul.bf16.gmra.mxu0 %v573
    %v12180 = vpop.f32.mrf.mxu0
    %v12181 = vadd.f32 %v12168, %v12180
    %v12182 = vpop.f32.mrf.mxu0
    %12183 = vdwg.mxu0
    %12184 = vmatpush.bf16.msra.mxu0 %v9062
    %12185 = vmatpush.bf16.msra.mxu0 %v9061
    %12186 = vmatpush.bf16.msra.mxu0 %v9060
    %12187 = vmatpush.bf16.msra.mxu0 %v9059
    %12188 = vmatpush.bf16.msra.mxu0 %v9058
    %12189 = vmatpush.bf16.msra.mxu0 %v9057
    %12190 = vmatpush.bf16.msra.mxu0 %v9056
    %12191 = vmatpush.bf16.msra.mxu0 %v9055
    %12192 = vmatmul.bf16.gmra.mxu0 %v574
    %v12193 = vpop.f32.mrf.mxu0
    %v12194 = vadd.f32 %v12181, %v12193
    %v12195 = vpop.f32.mrf.mxu0
    %12196 = vdwg.mxu0
    %12197 = vmatpush.bf16.msra.mxu0 %v9070
    %12198 = vmatpush.bf16.msra.mxu0 %v9069
    %12199 = vmatpush.bf16.msra.mxu0 %v9068
    %12200 = vmatpush.bf16.msra.mxu0 %v9067
    %12201 = vmatpush.bf16.msra.mxu0 %v9066
    %12202 = vmatpush.bf16.msra.mxu0 %v9065
    %12203 = vmatpush.bf16.msra.mxu0 %v9064
    %12204 = vmatpush.bf16.msra.mxu0 %v9063
    %12205 = vmatmul.bf16.gmra.mxu0 %v575
    %v12206 = vpop.f32.mrf.mxu0
    %v12207 = vadd.f32 %v12194, %v12206
    %v12208 = vpop.f32.mrf.mxu0
    %12209 = vdwg.mxu0
    %12210 = vmatpush.bf16.msra.mxu0 %v9078
    %12211 = vmatpush.bf16.msra.mxu0 %v9077
    %12212 = vmatpush.bf16.msra.mxu0 %v9076
    %12213 = vmatpush.bf16.msra.mxu0 %v9075
    %12214 = vmatpush.bf16.msra.mxu0 %v9074
    %12215 = vmatpush.bf16.msra.mxu0 %v9073
    %12216 = vmatpush.bf16.msra.mxu0 %v9072
    %12217 = vmatpush.bf16.msra.mxu0 %v9071
    %12218 = vmatmul.bf16.gmra.mxu0 %v576
    %v12219 = vpop.f32.mrf.mxu0
    %v12220 = vadd.f32 %v12207, %v12219
    %v12221 = vpop.f32.mrf.mxu0
    %12222 = vdwg.mxu0
    %12223 = vmatpush.bf16.msra.mxu0 %v9086
    %12224 = vmatpush.bf16.msra.mxu0 %v9085
    %12225 = vmatpush.bf16.msra.mxu0 %v9084
    %12226 = vmatpush.bf16.msra.mxu0 %v9083
    %12227 = vmatpush.bf16.msra.mxu0 %v9082
    %12228 = vmatpush.bf16.msra.mxu0 %v9081
    %12229 = vmatpush.bf16.msra.mxu0 %v9080
    %12230 = vmatpush.bf16.msra.mxu0 %v9079
    %12231 = vmatmul.bf16.gmra.mxu0 %v577
    %v12232 = vpop.f32.mrf.mxu0
    %v12233 = vadd.f32 %v12220, %v12232
    %v12234 = vpop.f32.mrf.mxu0
    %12235 = vdwg.mxu0
    %12236 = vmatpush.bf16.msra.mxu0 %v9094
    %12237 = vmatpush.bf16.msra.mxu0 %v9093
    %12238 = vmatpush.bf16.msra.mxu0 %v9092
    %12239 = vmatpush.bf16.msra.mxu0 %v9091
    %12240 = vmatpush.bf16.msra.mxu0 %v9090
    %12241 = vmatpush.bf16.msra.mxu0 %v9089
    %12242 = vmatpush.bf16.msra.mxu0 %v9088
    %12243 = vmatpush.bf16.msra.mxu0 %v9087
    %12244 = vmatmul.bf16.gmra.mxu0 %v578
    %v12245 = vpop.f32.mrf.mxu0
    %v12246 = vadd.f32 %v12233, %v12245
    %v12247 = vpop.f32.mrf.mxu0
    %12248 = vdwg.mxu0
    %12249 = vmatpush.bf16.msra.mxu0 %v9102
    %12250 = vmatpush.bf16.msra.mxu0 %v9101
    %12251 = vmatpush.bf16.msra.mxu0 %v9100
    %12252 = vmatpush.bf16.msra.mxu0 %v9099
    %12253 = vmatpush.bf16.msra.mxu0 %v9098
    %12254 = vmatpush.bf16.msra.mxu0 %v9097
    %12255 = vmatpush.bf16.msra.mxu0 %v9096
    %12256 = vmatpush.bf16.msra.mxu0 %v9095
    %12257 = vmatmul.bf16.gmra.mxu0 %v579
    %v12258 = vpop.f32.mrf.mxu0
    %v12259 = vadd.f32 %v12246, %v12258
    %v12260 = vpop.f32.mrf.mxu0
    %12261 = vdwg.mxu0
    %12262 = vmatpush.bf16.msra.mxu0 %v9110
    %12263 = vmatpush.bf16.msra.mxu0 %v9109
    %12264 = vmatpush.bf16.msra.mxu0 %v9108
    %12265 = vmatpush.bf16.msra.mxu0 %v9107
    %12266 = vmatpush.bf16.msra.mxu0 %v9106
    %12267 = vmatpush.bf16.msra.mxu0 %v9105
    %12268 = vmatpush.bf16.msra.mxu0 %v9104
    %12269 = vmatpush.bf16.msra.mxu0 %v9103
    %12270 = vmatmul.bf16.gmra.mxu0 %v580
    %v12271 = vpop.f32.mrf.mxu0
    %v12272 = vadd.f32 %v12259, %v12271
    %v12273 = vpop.f32.mrf.mxu0
    %12274 = vdwg.mxu0
    %12275 = vmatpush.bf16.msra.mxu0 %v9118
    %12276 = vmatpush.bf16.msra.mxu0 %v9117
    %12277 = vmatpush.bf16.msra.mxu0 %v9116
    %12278 = vmatpush.bf16.msra.mxu0 %v9115
    %12279 = vmatpush.bf16.msra.mxu0 %v9114
    %12280 = vmatpush.bf16.msra.mxu0 %v9113
    %12281 = vmatpush.bf16.msra.mxu0 %v9112
    %12282 = vmatpush.bf16.msra.mxu0 %v9111
    %12283 = vmatmul.bf16.gmra.mxu0 %v581
    %v12284 = vpop.f32.mrf.mxu0
    %v12285 = vadd.f32 %v12272, %v12284
    %v12286 = vpop.f32.mrf.mxu0
    %12287 = vdwg.mxu0
    %12288 = vmatpush.bf16.msra.mxu0 %v9126
    %12289 = vmatpush.bf16.msra.mxu0 %v9125
    %12290 = vmatpush.bf16.msra.mxu0 %v9124
    %12291 = vmatpush.bf16.msra.mxu0 %v9123
    %12292 = vmatpush.bf16.msra.mxu0 %v9122
    %12293 = vmatpush.bf16.msra.mxu0 %v9121
    %12294 = vmatpush.bf16.msra.mxu0 %v9120
    %12295 = vmatpush.bf16.msra.mxu0 %v9119
    %12296 = vmatmul.bf16.gmra.mxu0 %v582
    %v12297 = vpop.f32.mrf.mxu0
    %v12298 = vadd.f32 %v12285, %v12297
    %v12299 = vpop.f32.mrf.mxu0
    %12300 = vdwg.mxu0
    %12301 = vmatpush.bf16.msra.mxu0 %v9134
    %12302 = vmatpush.bf16.msra.mxu0 %v9133
    %12303 = vmatpush.bf16.msra.mxu0 %v9132
    %12304 = vmatpush.bf16.msra.mxu0 %v9131
    %12305 = vmatpush.bf16.msra.mxu0 %v9130
    %12306 = vmatpush.bf16.msra.mxu0 %v9129
    %12307 = vmatpush.bf16.msra.mxu0 %v9128
    %12308 = vmatpush.bf16.msra.mxu0 %v9127
    %12309 = vmatmul.bf16.gmra.mxu0 %v583
    %v12310 = vpop.f32.mrf.mxu0
    %v12311 = vadd.f32 %v12298, %v12310
    %v12312 = vpop.f32.mrf.mxu0
    %12313 = vdwg.mxu0
    %12314 = vmatpush.bf16.msra.mxu0 %v9142
    %12315 = vmatpush.bf16.msra.mxu0 %v9141
    %12316 = vmatpush.bf16.msra.mxu0 %v9140
    %12317 = vmatpush.bf16.msra.mxu0 %v9139
    %12318 = vmatpush.bf16.msra.mxu0 %v9138
    %12319 = vmatpush.bf16.msra.mxu0 %v9137
    %12320 = vmatpush.bf16.msra.mxu0 %v9136
    %12321 = vmatpush.bf16.msra.mxu0 %v9135
    %12322 = vmatmul.bf16.gmra.mxu0 %v584
    %v12323 = vpop.f32.mrf.mxu0
    %v12324 = vadd.f32 %v12311, %v12323
    %v12325 = vpop.f32.mrf.mxu0
    %12326 = vdwg.mxu0
    %12327 = vmatpush.bf16.msra.mxu0 %v9150
    %12328 = vmatpush.bf16.msra.mxu0 %v9149
    %12329 = vmatpush.bf16.msra.mxu0 %v9148
    %12330 = vmatpush.bf16.msra.mxu0 %v9147
    %12331 = vmatpush.bf16.msra.mxu0 %v9146
    %12332 = vmatpush.bf16.msra.mxu0 %v9145
    %12333 = vmatpush.bf16.msra.mxu0 %v9144
    %12334 = vmatpush.bf16.msra.mxu0 %v9143
    %12335 = vmatmul.bf16.gmra.mxu0 %v585
    %v12336 = vpop.f32.mrf.mxu0
    %v12337 = vadd.f32 %v12324, %v12336
    %v12338 = vpop.f32.mrf.mxu0
    %12339 = vdwg.mxu0
    %12340 = vmatpush.bf16.msra.mxu0 %v9158
    %12341 = vmatpush.bf16.msra.mxu0 %v9157
    %12342 = vmatpush.bf16.msra.mxu0 %v9156
    %12343 = vmatpush.bf16.msra.mxu0 %v9155
    %12344 = vmatpush.bf16.msra.mxu0 %v9154
    %12345 = vmatpush.bf16.msra.mxu0 %v9153
    %12346 = vmatpush.bf16.msra.mxu0 %v9152
    %12347 = vmatpush.bf16.msra.mxu0 %v9151
    %12348 = vmatmul.bf16.gmra.mxu0 %v586
    %v12349 = vpop.f32.mrf.mxu0
    %v12350 = vadd.f32 %v12337, %v12349
    %v12351 = vpop.f32.mrf.mxu0
    %12352 = vdwg.mxu0
    %12353 = vmatpush.bf16.msra.mxu0 %v9166
    %12354 = vmatpush.bf16.msra.mxu0 %v9165
    %12355 = vmatpush.bf16.msra.mxu0 %v9164
    %12356 = vmatpush.bf16.msra.mxu0 %v9163
    %12357 = vmatpush.bf16.msra.mxu0 %v9162
    %12358 = vmatpush.bf16.msra.mxu0 %v9161
    %12359 = vmatpush.bf16.msra.mxu0 %v9160
    %12360 = vmatpush.bf16.msra.mxu0 %v9159
    %12361 = vmatmul.bf16.gmra.mxu0 %v587
    %v12362 = vpop.f32.mrf.mxu0
    %v12363 = vadd.f32 %v12350, %v12362
    %v12364 = vpop.f32.mrf.mxu0
    %12365 = vdwg.mxu0
    %12366 = vmatpush.bf16.msra.mxu0 %v9174
    %12367 = vmatpush.bf16.msra.mxu0 %v9173
    %12368 = vmatpush.bf16.msra.mxu0 %v9172
    %12369 = vmatpush.bf16.msra.mxu0 %v9171
    %12370 = vmatpush.bf16.msra.mxu0 %v9170
    %12371 = vmatpush.bf16.msra.mxu0 %v9169
    %12372 = vmatpush.bf16.msra.mxu0 %v9168
    %12373 = vmatpush.bf16.msra.mxu0 %v9167
    %12374 = vmatmul.bf16.gmra.mxu0 %v588
    %v12375 = vpop.f32.mrf.mxu0
    %v12376 = vadd.f32 %v12363, %v12375
    %v12377 = vpop.f32.mrf.mxu0
    %12378 = vdwg.mxu0
    %12379 = vmatpush.bf16.msra.mxu0 %v9182
    %12380 = vmatpush.bf16.msra.mxu0 %v9181
    %12381 = vmatpush.bf16.msra.mxu0 %v9180
    %12382 = vmatpush.bf16.msra.mxu0 %v9179
    %12383 = vmatpush.bf16.msra.mxu0 %v9178
    %12384 = vmatpush.bf16.msra.mxu0 %v9177
    %12385 = vmatpush.bf16.msra.mxu0 %v9176
    %12386 = vmatpush.bf16.msra.mxu0 %v9175
    %12387 = vmatmul.bf16.gmra.mxu0 %v589
    %v12388 = vpop.f32.mrf.mxu0
    %v12389 = vadd.f32 %v12376, %v12388
    %v12390 = vpop.f32.mrf.mxu0
    %12391 = vdwg.mxu0
    %12392 = vmatpush.bf16.msra.mxu0 %v9190
    %12393 = vmatpush.bf16.msra.mxu0 %v9189
    %12394 = vmatpush.bf16.msra.mxu0 %v9188
    %12395 = vmatpush.bf16.msra.mxu0 %v9187
    %12396 = vmatpush.bf16.msra.mxu0 %v9186
    %12397 = vmatpush.bf16.msra.mxu0 %v9185
    %12398 = vmatpush.bf16.msra.mxu0 %v9184
    %12399 = vmatpush.bf16.msra.mxu0 %v9183
    %12400 = vmatmul.bf16.gmra.mxu0 %v590
    %v12401 = vpop.f32.mrf.mxu0
    %v12402 = vadd.f32 %v12389, %v12401
    %v12403 = vpop.f32.mrf.mxu0
    %12404 = vdwg.mxu0
    %12405 = vmatpush.bf16.msra.mxu0 %v9198
    %12406 = vmatpush.bf16.msra.mxu0 %v9197
    %12407 = vmatpush.bf16.msra.mxu0 %v9196
    %12408 = vmatpush.bf16.msra.mxu0 %v9195
    %12409 = vmatpush.bf16.msra.mxu0 %v9194
    %12410 = vmatpush.bf16.msra.mxu0 %v9193
    %12411 = vmatpush.bf16.msra.mxu0 %v9192
    %12412 = vmatpush.bf16.msra.mxu0 %v9191
    %12413 = vmatmul.bf16.gmra.mxu0 %v591
    %v12414 = vpop.f32.mrf.mxu0
    %v12415 = vadd.f32 %v12402, %v12414
    %v12416 = vpop.f32.mrf.mxu0
    %12417 = vdwg.mxu0
    %12418 = vmatpush.bf16.msra.mxu0 %v9206
    %12419 = vmatpush.bf16.msra.mxu0 %v9205
    %12420 = vmatpush.bf16.msra.mxu0 %v9204
    %12421 = vmatpush.bf16.msra.mxu0 %v9203
    %12422 = vmatpush.bf16.msra.mxu0 %v9202
    %12423 = vmatpush.bf16.msra.mxu0 %v9201
    %12424 = vmatpush.bf16.msra.mxu0 %v9200
    %12425 = vmatpush.bf16.msra.mxu0 %v9199
    %12426 = vmatmul.bf16.gmra.mxu0 %v592
    %v12427 = vpop.f32.mrf.mxu0
    %v12428 = vadd.f32 %v12415, %v12427
    %v12429 = vpop.f32.mrf.mxu0
    %12430 = vdwg.mxu0
    %12431 = vmatpush.bf16.msra.mxu0 %v9214
    %12432 = vmatpush.bf16.msra.mxu0 %v9213
    %12433 = vmatpush.bf16.msra.mxu0 %v9212
    %12434 = vmatpush.bf16.msra.mxu0 %v9211
    %12435 = vmatpush.bf16.msra.mxu0 %v9210
    %12436 = vmatpush.bf16.msra.mxu0 %v9209
    %12437 = vmatpush.bf16.msra.mxu0 %v9208
    %12438 = vmatpush.bf16.msra.mxu0 %v9207
    %12439 = vmatmul.bf16.gmra.mxu0 %v593
    %v12440 = vpop.f32.mrf.mxu0
    %v12441 = vadd.f32 %v12428, %v12440
    %v12442 = vpop.f32.mrf.mxu0
    %12443 = vdwg.mxu0
    %12444 = vmatpush.bf16.msra.mxu0 %v9222
    %12445 = vmatpush.bf16.msra.mxu0 %v9221
    %12446 = vmatpush.bf16.msra.mxu0 %v9220
    %12447 = vmatpush.bf16.msra.mxu0 %v9219
    %12448 = vmatpush.bf16.msra.mxu0 %v9218
    %12449 = vmatpush.bf16.msra.mxu0 %v9217
    %12450 = vmatpush.bf16.msra.mxu0 %v9216
    %12451 = vmatpush.bf16.msra.mxu0 %v9215
    %12452 = vmatmul.bf16.gmra.mxu0 %v594
    %v12453 = vpop.f32.mrf.mxu0
    %v12454 = vadd.f32 %v12441, %v12453
    %v12455 = vpop.f32.mrf.mxu0
    %12456 = vdwg.mxu0
    %vm12457 = vcmask 254976
    %12458 = vst.msk [vmem:[#allocation2] sm:$0x3] %vm12457, %v12454
    // Predicated region
    $region14: #{feature_extractor_forward.3} parent=1 // pred_check
      _
    $region15: #{feature_extractor_forward.3} parent=1 // pred_check_branch
      %12460 = sbr.rel (0) target = $region17
    $region16: #{feature_extractor_forward.3} parent=1 // pred_region
      %12462 = vsyncadd [#allocation3], 0
      %s12464 = sshll.u32 [#allocation2], 4
      %s12465 = int_to_ptr.vmem [resolvable:$true] %s12464
      %s12466 = sshll.u32 %s3, 4
      %s12467 = int_to_ptr.hbm [resolvable:$true] %s12466
      %12469 = dma.vmem_to_hbm [thread:$0]  %s12465, 32, %s12467, [#allocation3]
    $region17: #{feature_extractor_forward.3} parent=1 // pred_fallthru
      _
    // Predicated region
    $region18: #{feature_extractor_forward.3} parent=1 // pred_check
      _
    $region19: #{feature_extractor_forward.3} parent=1 // pred_check_branch
      %12471 = sbr.rel (0) target = $region21
    $region20: #{feature_extractor_forward.3} parent=1 // pred_region
      %12473 = dma.done [#allocation3], 32
    $region21: #{feature_extractor_forward.3} parent=1 // pred_fallthru
      _
    %12474 = vsyncpa [#allocation3], 1

</llo_original>
